<compile_context>
chip_gen: v5e
topology: v5e:2x2
jax: 0.10.0
libtpu: 0.0.40
codegen_flags: <defaults>
</compile_context>

<pallas_src>
import functools
import math

import jax
import jax.numpy as jnp
from jax.experimental import pallas as pl
from jax.experimental.pallas import tpu as pltpu


def _eres_kernel(x_ref, w1_ref, b1_ref, w2_ref, b2_ref, w3_ref, b3_ref,
                 o_ref, xpad_ref, hpad_ref, col_ref, *, dilation):
    """x_ref: (B_TILE, H, W, Cin); o_ref: (B_TILE, H, W, Cout)."""
    d = dilation
    B, H, W, Cin = x_ref.shape
    Cout = o_ref.shape[3]
    Hp, Wp = H + 2 * d, W + 2 * d

    def zero_halo(pad_ref, c):
        dt = pad_ref.dtype
        # Only the border strips -- the interior is overwritten every image.
        pad_ref[pl.ds(0, d), :, :] = jnp.zeros((d, Wp, c), dt)          # top
        pad_ref[pl.ds(d + H, d), :, :] = jnp.zeros((d, Wp, c), dt)      # bottom
        pad_ref[pl.ds(d, H), pl.ds(0, d), :] = jnp.zeros((H, d, c), dt)       # left
        pad_ref[pl.ds(d, H), pl.ds(d + W, d), :] = jnp.zeros((H, d, c), dt)   # right

    # Halos are always zero; zero them once per grid step (scratch persists,
    # but zeroing every step is cheap and correct under megacore splitting).
    zero_halo(xpad_ref, Cin)
    zero_halo(hpad_ref, Cout)

    def conv3x3_relu(pad_ref, w_ref, b_ref, cin):
        # im2col in VMEM: place the 9 dilated taps side by side along the
        # channel axis, then a single MXU matmul with K = 9*cin instead of
        # nine K=cin matmuls (fills the MXU contraction dim, one drain).
        for dy in range(3):
            for dx in range(3):
                k = dy * 3 + dx
                col_ref[:, :, pl.ds(k * cin, cin)] = (
                    pad_ref[pl.ds(dy * d, H), pl.ds(dx * d, W), :])
        patch = col_ref[...].reshape(H * W, 9 * cin)
        acc = jnp.dot(patch, w_ref[...], preferred_element_type=jnp.float32)
        acc = acc + b_ref[...].astype(jnp.float32)
        return jnp.maximum(acc, 0.0)                       # f32, (H*W, Cout)

    for b in range(B):                 # static unroll over packed images
        # Stage 0: input (also the residual source) into the padded interior.
        xpad_ref[pl.ds(d, H), pl.ds(d, W), :] = x_ref[b]
        # Stage 1: 3x3 conv + ReLU.
        h1 = conv3x3_relu(xpad_ref, w1_ref, b1_ref, Cin)
        hpad_ref[pl.ds(d, H), pl.ds(d, W), :] = (
            h1.reshape(H, W, Cout).astype(hpad_ref.dtype))
        # Stage 2: 3x3 conv + ReLU.
        h2 = conv3x3_relu(hpad_ref, w2_ref, b2_ref, Cout)
        # Stage 3: 1x1 conv + residual + ReLU.
        h3 = jnp.dot(h2.astype(w3_ref.dtype), w3_ref[...],
                     preferred_element_type=jnp.float32)
        h3 = h3 + b3_ref[...].astype(jnp.float32)
        out = h3.reshape(H, W, Cout) + x_ref[b].astype(jnp.float32)
        o_ref[b] = jnp.maximum(out, 0.0).astype(o_ref.dtype)


def _pack_conv3x3(w):
    """PyTorch (Cout, Cin, 3, 3) -> (9*Cin, Cout), row index = (dy*3+dx)*Cin + c."""
    cout, cin = w.shape[0], w.shape[1]
    return jnp.transpose(w, (2, 3, 1, 0)).reshape(9 * cin, cout)


def eresidual_block(x_nchw, params, *, dilation=1, group=1):
    """Forward pass of EResidualBlock.  Input/output are NCHW (PyTorch layout)."""
    if group != 1:
        raise NotImplementedError("group > 1 not supported")
    w1, b1, w2, b2, w3, b3 = params
    N, Cin, H, W = x_nchw.shape
    Cout = w1.shape[0]
    assert Cin == Cout, "residual add requires in_channels == out_channels"
    d = int(dilation)
    Hp, Wp = H + 2 * d, W + 2 * d

    x = jnp.transpose(x_nchw, (0, 2, 3, 1))            # NCHW -> NHWC
    w1p = _pack_conv3x3(w1)                            # (9*Cin , Cout)
    w2p = _pack_conv3x3(w2)                            # (9*Cout, Cout)
    w3p = jnp.transpose(w3[:, :, 0, 0], (1, 0))        # (Cout, Cout)
    b1p = b1.reshape(1, Cout)
    b2p = b2.reshape(1, Cout)
    b3p = b3.reshape(1, Cout)

    itemsize = jnp.dtype(x.dtype).itemsize
    w_itemsize = jnp.dtype(w1p.dtype).itemsize

    # Pack several images per grid step so each step has enough work to hide
    # the fixed per-step overhead (target >= ~256 KiB of activations).
    per_img = H * W * max(Cin, Cout) * itemsize
    max_pack = max(1, min(N, (256 * 1024) // max(per_img, 1)))
    b_tile = 1
    for cand in range(max_pack, 0, -1):
        if N % cand == 0:
            b_tile = cand
            break

    # VMEM budget: double-buffered I/O blocks + resident weights + padded
    # scratches + im2col scratch + headroom for the f32 matmul operands.
    io_bytes = 2 * b_tile * H * W * (Cin + Cout) * itemsize
    wgt_bytes = 2 * (w1p.size + w2p.size + w3p.size + 3 * Cout) * w_itemsize
    pad_bytes = (Hp * Wp * Cin + Hp * Wp * Cout) * itemsize
    col_bytes = H * W * 9 * Cin * itemsize
    tmp_bytes = 2 * H * W * (9 * max(Cin, Cout) + Cout) * 4
    est = io_bytes + wgt_bytes + pad_bytes + col_bytes + tmp_bytes
    vmem_limit = int(min(max(2 * est, 32 * 1024 * 1024), 96 * 1024 * 1024))

    flops = 2 * N * H * W * (9 * Cin * Cout + 9 * Cout * Cout + Cout * Cout)
    bytes_accessed = int(N * H * W * (Cin + Cout) * itemsize
                         + (w1p.size + w2p.size + w3p.size + 3 * Cout) * w_itemsize)

    kernel = functools.partial(_eres_kernel, dilation=d)
    out = pl.pallas_call(
        kernel,
        out_shape=jax.ShapeDtypeStruct((N, H, W, Cout), x.dtype),
        grid_spec=pltpu.PrefetchScalarGridSpec(
            num_scalar_prefetch=0,
            grid=(N // b_tile,),
            in_specs=[
                pl.BlockSpec((b_tile, H, W, Cin), lambda n: (n, 0, 0, 0)),
                pl.BlockSpec((9 * Cin, Cout), lambda n: (0, 0)),
                pl.BlockSpec((1, Cout), lambda n: (0, 0)),
                pl.BlockSpec((9 * Cout, Cout), lambda n: (0, 0)),
                pl.BlockSpec((1, Cout), lambda n: (0, 0)),
                pl.BlockSpec((Cout, Cout), lambda n: (0, 0)),
                pl.BlockSpec((1, Cout), lambda n: (0, 0)),
            ],
            out_specs=pl.BlockSpec((b_tile, H, W, Cout), lambda n: (n, 0, 0, 0)),
            scratch_shapes=[
                pltpu.VMEM((Hp, Wp, Cin), x.dtype),        # padded x
                pltpu.VMEM((Hp, Wp, Cout), x.dtype),       # padded h1
                pltpu.VMEM((H, W, 9 * Cin), x.dtype),      # im2col patch
            ],
        ),
        compiler_params=pltpu.CompilerParams(
            dimension_semantics=("parallel",),
            vmem_limit_bytes=vmem_limit),
        cost_estimate=pl.CostEstimate(
            flops=flops, transcendentals=0, bytes_accessed=bytes_accessed),
    )(x, w1p, b1p, w2p, b2p, w3p, b3p)
    return jnp.transpose(out, (0, 3, 1, 2))            # NHWC -> NCHW


# ----------------------------- reference & params -----------------------------

def _conv2d_ref(x, w, b, *, padding, dilation):
    y = jax.lax.conv_general_dilated(
        x, w, window_strides=(1, 1),
        padding=((padding, padding), (padding, padding)),
        rhs_dilation=(dilation, dilation),
        dimension_numbers=("NCHW", "OIHW", "NCHW"))
    return y + b[None, :, None, None]


def eresidual_block_ref(x, params, *, dilation=1):
    """Pure-JAX reference matching PyTorch Conv2d semantics."""
    w1, b1, w2, b2, w3, b3 = params
    h = jnp.maximum(_conv2d_ref(x, w1, b1, padding=dilation, dilation=dilation), 0.0)
    h = jnp.maximum(_conv2d_ref(h, w2, b2, padding=dilation, dilation=dilation), 0.0)
    h = _conv2d_ref(h, w3, b3, padding=0, dilation=1)
    return jnp.maximum(h + x, 0.0)


def make_params(key, in_channels, out_channels, dtype=jnp.float32):
    """Deterministic synthetic weights, PyTorch layout: (Cout, Cin, kh, kw), (Cout,)."""
    def conv_init(k, cout, cin, ksz):
        kw, kb = jax.random.split(k)
        bound = 1.0 / math.sqrt(cin * ksz * ksz)
        w = jax.random.uniform(kw, (cout, cin, ksz, ksz), dtype, -bound, bound)
        b = jax.random.uniform(kb, (cout,), dtype, -bound, bound)
        return w, b
    k1, k2, k3 = jax.random.split(key, 3)
    w1, b1 = conv_init(k1, out_channels, in_channels, 3)
    w2, b2 = conv_init(k2, out_channels, out_channels, 3)
    w3, b3 = conv_init(k3, out_channels, out_channels, 1)
    return (w1, b1, w2, b2, w3, b3)


if __name__ == "__main__":
    key = jax.random.PRNGKey(0)
    kx, kp = jax.random.split(key)

    N, C, H, W = 2, 4, 16, 16
    x = jax.random.normal(kx, (N, C, H, W), jnp.float32)
    params = make_params(kp, C, C)

    out = jax.block_until_ready(eresidual_block(x, params))
    assert out.shape == (N, C, H, W), out.shape

    ref = jax.block_until_ready(eresidual_block_ref(x, params))
    err = float(jnp.max(jnp.abs(out - ref)))
    assert jnp.allclose(out, ref, atol=1e-4, rtol=1e-4), err

    print("KERNEL_OK")
</pallas_src>

<mosaic_0001>
module attributes {stable_mosaic.version = 11 : i64} {
  func.func @_eres_kernel(%arg0: i32, %arg1: memref<2x16x16x4xf32, #tpu.memory_space<vmem>>, %arg2: memref<36x4xf32, #tpu.memory_space<vmem>>, %arg3: memref<1x4xf32, #tpu.memory_space<vmem>>, %arg4: memref<36x4xf32, #tpu.memory_space<vmem>>, %arg5: memref<1x4xf32, #tpu.memory_space<vmem>>, %arg6: memref<4x4xf32, #tpu.memory_space<vmem>>, %arg7: memref<1x4xf32, #tpu.memory_space<vmem>>, %arg8: memref<2x16x16x4xf32, #tpu.memory_space<vmem>>, %arg9: memref<18x18x4xf32, #tpu.memory_space<vmem>>, %arg10: memref<18x18x4xf32, #tpu.memory_space<vmem>>, %arg11: memref<16x16x36xf32, #tpu.memory_space<vmem>>) attributes {dimension_semantics = [#tpu.dimension_semantics<parallel>], iteration_bounds = array<i64: 1>, scalar_prefetch = 0 : i64, scratch_operands = 3 : i64, tpu.core_type = #tpu.core_type<tc>, window_params = [{transform_indices = @transform_0, window_bounds = array<i64: 2, 16, 16, 4>}, {pipeline_mode = #tpu.pipeline_mode<synchronous>, transform_indices = @transform_1, window_bounds = array<i64: 36, 4>}, {pipeline_mode = #tpu.pipeline_mode<synchronous>, transform_indices = @transform_2, window_bounds = array<i64: 1, 4>}, {pipeline_mode = #tpu.pipeline_mode<synchronous>, transform_indices = @transform_3, window_bounds = array<i64: 36, 4>}, {pipeline_mode = #tpu.pipeline_mode<synchronous>, transform_indices = @transform_4, window_bounds = array<i64: 1, 4>}, {pipeline_mode = #tpu.pipeline_mode<synchronous>, transform_indices = @transform_5, window_bounds = array<i64: 4, 4>}, {pipeline_mode = #tpu.pipeline_mode<synchronous>, transform_indices = @transform_6, window_bounds = array<i64: 1, 4>}, {transform_indices = @transform_7, window_bounds = array<i64: 2, 16, 16, 4>}]} {
    %cst = arith.constant 0.000000e+00 : f32
    %0 = vector.broadcast %cst : f32 to vector<1x18x4xf32>
    %c0 = arith.constant 0 : index
    %c0_0 = arith.constant 0 : index
    %c0_1 = arith.constant 0 : index
    %1 = vector.load %arg9[%c0, %c0_0, %c0_1] : memref<18x18x4xf32, #tpu.memory_space<vmem>>, vector<1x18x4xf32>
    tpu.vector_store %arg9[%c0, %c0_0, %c0_1], %0 {strides = array<i32>} : memref<18x18x4xf32, #tpu.memory_space<vmem>>, vector<1x18x4xf32>,
    %cst_2 = arith.constant 0.000000e+00 : f32
    %2 = vector.broadcast %cst_2 : f32 to vector<1x18x4xf32>
    %c17 = arith.constant 17 : index
    %c0_3 = arith.constant 0 : index
    %c0_4 = arith.constant 0 : index
    %3 = vector.load %arg9[%c17, %c0_3, %c0_4] : memref<18x18x4xf32, #tpu.memory_space<vmem>>, vector<1x18x4xf32>
    tpu.vector_store %arg9[%c17, %c0_3, %c0_4], %2 {strides = array<i32>} : memref<18x18x4xf32, #tpu.memory_space<vmem>>, vector<1x18x4xf32>,
    %cst_5 = arith.constant 0.000000e+00 : f32
    %4 = vector.broadcast %cst_5 : f32 to vector<16x1x4xf32>
    %c1 = arith.constant 1 : index
    %c0_6 = arith.constant 0 : index
    %c0_7 = arith.constant 0 : index
    %5 = vector.load %arg9[%c1, %c0_6, %c0_7] : memref<18x18x4xf32, #tpu.memory_space<vmem>>, vector<16x1x4xf32>
    tpu.vector_store %arg9[%c1, %c0_6, %c0_7], %4 {strides = array<i32>} : memref<18x18x4xf32, #tpu.memory_space<vmem>>, vector<16x1x4xf32>,
    %cst_8 = arith.constant 0.000000e+00 : f32
    %6 = vector.broadcast %cst_8 : f32 to vector<16x1x4xf32>
    %c1_9 = arith.constant 1 : index
    %c17_10 = arith.constant 17 : index
    %c0_11 = arith.constant 0 : index
    %7 = vector.load %arg9[%c1_9, %c17_10, %c0_11] : memref<18x18x4xf32, #tpu.memory_space<vmem>>, vector<16x1x4xf32>
    tpu.vector_store %arg9[%c1_9, %c17_10, %c0_11], %6 {strides = array<i32>} : memref<18x18x4xf32, #tpu.memory_space<vmem>>, vector<16x1x4xf32>,
    %cst_12 = arith.constant 0.000000e+00 : f32
    %8 = vector.broadcast %cst_12 : f32 to vector<1x18x4xf32>
    %c0_13 = arith.constant 0 : index
    %c0_14 = arith.constant 0 : index
    %c0_15 = arith.constant 0 : index
    %9 = vector.load %arg10[%c0_13, %c0_14, %c0_15] : memref<18x18x4xf32, #tpu.memory_space<vmem>>, vector<1x18x4xf32>
    tpu.vector_store %arg10[%c0_13, %c0_14, %c0_15], %8 {strides = array<i32>} : memref<18x18x4xf32, #tpu.memory_space<vmem>>, vector<1x18x4xf32>,
    %cst_16 = arith.constant 0.000000e+00 : f32
    %10 = vector.broadcast %cst_16 : f32 to vector<1x18x4xf32>
    %c17_17 = arith.constant 17 : index
    %c0_18 = arith.constant 0 : index
    %c0_19 = arith.constant 0 : index
    %11 = vector.load %arg10[%c17_17, %c0_18, %c0_19] : memref<18x18x4xf32, #tpu.memory_space<vmem>>, vector<1x18x4xf32>
    tpu.vector_store %arg10[%c17_17, %c0_18, %c0_19], %10 {strides = array<i32>} : memref<18x18x4xf32, #tpu.memory_space<vmem>>, vector<1x18x4xf32>,
    %cst_20 = arith.constant 0.000000e+00 : f32
    %12 = vector.broadcast %cst_20 : f32 to vector<16x1x4xf32>
    %c1_21 = arith.constant 1 : index
    %c0_22 = arith.constant 0 : index
    %c0_23 = arith.constant 0 : index
    %13 = vector.load %arg10[%c1_21, %c0_22, %c0_23] : memref<18x18x4xf32, #tpu.memory_space<vmem>>, vector<16x1x4xf32>
    tpu.vector_store %arg10[%c1_21, %c0_22, %c0_23], %12 {strides = array<i32>} : memref<18x18x4xf32, #tpu.memory_space<vmem>>, vector<16x1x4xf32>,
    %cst_24 = arith.constant 0.000000e+00 : f32
    %14 = vector.broadcast %cst_24 : f32 to vector<16x1x4xf32>
    %c1_25 = arith.constant 1 : index
    %c17_26 = arith.constant 17 : index
    %c0_27 = arith.constant 0 : index
    %15 = vector.load %arg10[%c1_25, %c17_26, %c0_27] : memref<18x18x4xf32, #tpu.memory_space<vmem>>, vector<16x1x4xf32>
    tpu.vector_store %arg10[%c1_25, %c17_26, %c0_27], %14 {strides = array<i32>} : memref<18x18x4xf32, #tpu.memory_space<vmem>>, vector<16x1x4xf32>,
    %c0_28 = arith.constant 0 : index
    %c0_29 = arith.constant 0 : index
    %c0_30 = arith.constant 0 : index
    %c0_31 = arith.constant 0 : index
    %16 = vector.load %arg1[%c0_28, %c0_29, %c0_30, %c0_31] : memref<2x16x16x4xf32, #tpu.memory_space<vmem>>, vector<1x16x16x4xf32>
    %17 = vector.shape_cast %16 : vector<1x16x16x4xf32> to vector<16x16x4xf32>
    %c1_32 = arith.constant 1 : index
    %c1_33 = arith.constant 1 : index
    %c0_34 = arith.constant 0 : index
    %18 = vector.load %arg9[%c1_32, %c1_33, %c0_34] : memref<18x18x4xf32, #tpu.memory_space<vmem>>, vector<16x16x4xf32>
    tpu.vector_store %arg9[%c1_32, %c1_33, %c0_34], %17 {strides = array<i32>} : memref<18x18x4xf32, #tpu.memory_space<vmem>>, vector<16x16x4xf32>,
    %c0_35 = arith.constant 0 : index
    %c0_36 = arith.constant 0 : index
    %c0_37 = arith.constant 0 : index
    %19 = vector.load %arg9[%c0_35, %c0_36, %c0_37] : memref<18x18x4xf32, #tpu.memory_space<vmem>>, vector<16x16x4xf32>
    %c0_38 = arith.constant 0 : index
    %c0_39 = arith.constant 0 : index
    %c0_40 = arith.constant 0 : index
    %20 = vector.load %arg11[%c0_38, %c0_39, %c0_40] : memref<16x16x36xf32, #tpu.memory_space<vmem>>, vector<16x16x4xf32>
    tpu.vector_store %arg11[%c0_38, %c0_39, %c0_40], %19 {strides = array<i32>} : memref<16x16x36xf32, #tpu.memory_space<vmem>>, vector<16x16x4xf32>,
    %c0_41 = arith.constant 0 : index
    %c1_42 = arith.constant 1 : index
    %c0_43 = arith.constant 0 : index
    %21 = vector.load %arg9[%c0_41, %c1_42, %c0_43] : memref<18x18x4xf32, #tpu.memory_space<vmem>>, vector<16x16x4xf32>
    %c0_44 = arith.constant 0 : index
    %c0_45 = arith.constant 0 : index
    %c4 = arith.constant 4 : index
    %22 = vector.load %arg11[%c0_44, %c0_45, %c4] : memref<16x16x36xf32, #tpu.memory_space<vmem>>, vector<16x16x4xf32>
    tpu.vector_store %arg11[%c0_44, %c0_45, %c4], %21 {strides = array<i32>} : memref<16x16x36xf32, #tpu.memory_space<vmem>>, vector<16x16x4xf32>,
    %c0_46 = arith.constant 0 : index
    %c2 = arith.constant 2 : index
    %c0_47 = arith.constant 0 : index
    %23 = vector.load %arg9[%c0_46, %c2, %c0_47] : memref<18x18x4xf32, #tpu.memory_space<vmem>>, vector<16x16x4xf32>
    %c0_48 = arith.constant 0 : index
    %c0_49 = arith.constant 0 : index
    %c8 = arith.constant 8 : index
    %24 = vector.load %arg11[%c0_48, %c0_49, %c8] : memref<16x16x36xf32, #tpu.memory_space<vmem>>, vector<16x16x4xf32>
    tpu.vector_store %arg11[%c0_48, %c0_49, %c8], %23 {strides = array<i32>} : memref<16x16x36xf32, #tpu.memory_space<vmem>>, vector<16x16x4xf32>,
    %c1_50 = arith.constant 1 : index
    %c0_51 = arith.constant 0 : index
    %c0_52 = arith.constant 0 : index
    %25 = vector.load %arg9[%c1_50, %c0_51, %c0_52] : memref<18x18x4xf32, #tpu.memory_space<vmem>>, vector<16x16x4xf32>
    %c0_53 = arith.constant 0 : index
    %c0_54 = arith.constant 0 : index
    %c12 = arith.constant 12 : index
    %26 = vector.load %arg11[%c0_53, %c0_54, %c12] : memref<16x16x36xf32, #tpu.memory_space<vmem>>, vector<16x16x4xf32>
    tpu.vector_store %arg11[%c0_53, %c0_54, %c12], %25 {strides = array<i32>} : memref<16x16x36xf32, #tpu.memory_space<vmem>>, vector<16x16x4xf32>,
    %c1_55 = arith.constant 1 : index
    %c1_56 = arith.constant 1 : index
    %c0_57 = arith.constant 0 : index
    %27 = vector.load %arg9[%c1_55, %c1_56, %c0_57] : memref<18x18x4xf32, #tpu.memory_space<vmem>>, vector<16x16x4xf32>
    %c0_58 = arith.constant 0 : index
    %c0_59 = arith.constant 0 : index
    %c16 = arith.constant 16 : index
    %28 = vector.load %arg11[%c0_58, %c0_59, %c16] : memref<16x16x36xf32, #tpu.memory_space<vmem>>, vector<16x16x4xf32>
    tpu.vector_store %arg11[%c0_58, %c0_59, %c16], %27 {strides = array<i32>} : memref<16x16x36xf32, #tpu.memory_space<vmem>>, vector<16x16x4xf32>,
    %c1_60 = arith.constant 1 : index
    %c2_61 = arith.constant 2 : index
    %c0_62 = arith.constant 0 : index
    %29 = vector.load %arg9[%c1_60, %c2_61, %c0_62] : memref<18x18x4xf32, #tpu.memory_space<vmem>>, vector<16x16x4xf32>
    %c0_63 = arith.constant 0 : index
    %c0_64 = arith.constant 0 : index
    %c20 = arith.constant 20 : index
    %30 = vector.load %arg11[%c0_63, %c0_64, %c20] : memref<16x16x36xf32, #tpu.memory_space<vmem>>, vector<16x16x4xf32>
    tpu.vector_store %arg11[%c0_63, %c0_64, %c20], %29 {strides = array<i32>} : memref<16x16x36xf32, #tpu.memory_space<vmem>>, vector<16x16x4xf32>,
    %c2_65 = arith.constant 2 : index
    %c0_66 = arith.constant 0 : index
    %c0_67 = arith.constant 0 : index
    %31 = vector.load %arg9[%c2_65, %c0_66, %c0_67] : memref<18x18x4xf32, #tpu.memory_space<vmem>>, vector<16x16x4xf32>
    %c0_68 = arith.constant 0 : index
    %c0_69 = arith.constant 0 : index
    %c24 = arith.constant 24 : index
    %32 = vector.load %arg11[%c0_68, %c0_69, %c24] : memref<16x16x36xf32, #tpu.memory_space<vmem>>, vector<16x16x4xf32>
    tpu.vector_store %arg11[%c0_68, %c0_69, %c24], %31 {strides = array<i32>} : memref<16x16x36xf32, #tpu.memory_space<vmem>>, vector<16x16x4xf32>,
    %c2_70 = arith.constant 2 : index
    %c1_71 = arith.constant 1 : index
    %c0_72 = arith.constant 0 : index
    %33 = vector.load %arg9[%c2_70, %c1_71, %c0_72] : memref<18x18x4xf32, #tpu.memory_space<vmem>>, vector<16x16x4xf32>
    %c0_73 = arith.constant 0 : index
    %c0_74 = arith.constant 0 : index
    %c28 = arith.constant 28 : index
    %34 = vector.load %arg11[%c0_73, %c0_74, %c28] : memref<16x16x36xf32, #tpu.memory_space<vmem>>, vector<16x16x4xf32>
    tpu.vector_store %arg11[%c0_73, %c0_74, %c28], %33 {strides = array<i32>} : memref<16x16x36xf32, #tpu.memory_space<vmem>>, vector<16x16x4xf32>,
    %c2_75 = arith.constant 2 : index
    %c2_76 = arith.constant 2 : index
    %c0_77 = arith.constant 0 : index
    %35 = vector.load %arg9[%c2_75, %c2_76, %c0_77] : memref<18x18x4xf32, #tpu.memory_space<vmem>>, vector<16x16x4xf32>
    %c0_78 = arith.constant 0 : index
    %c0_79 = arith.constant 0 : index
    %c32 = arith.constant 32 : index
    %36 = vector.load %arg11[%c0_78, %c0_79, %c32] : memref<16x16x36xf32, #tpu.memory_space<vmem>>, vector<16x16x4xf32>
    tpu.vector_store %arg11[%c0_78, %c0_79, %c32], %35 {strides = array<i32>} : memref<16x16x36xf32, #tpu.memory_space<vmem>>, vector<16x16x4xf32>,
    %c0_80 = arith.constant 0 : index
    %c0_81 = arith.constant 0 : index
    %c0_82 = arith.constant 0 : index
    %37 = vector.load %arg11[%c0_80, %c0_81, %c0_82] : memref<16x16x36xf32, #tpu.memory_space<vmem>>, vector<16x16x36xf32>
    %38 = vector.shape_cast %37 : vector<16x16x36xf32> to vector<256x36xf32>
    %c0_83 = arith.constant 0 : index
    %c0_84 = arith.constant 0 : index
    %39 = vector.load %arg2[%c0_83, %c0_84] : memref<36x4xf32, #tpu.memory_space<vmem>>, vector<36x4xf32>
    %cst_85 = arith.constant dense<0.000000e+00> : vector<256x4xf32>
    %40 = tpu.matmul %38, %39, %cst_85 {dimension_numbers = #tpu.dot_dimension_numbers<[1], [0], [0], [1], [0, 0, 1, 1], [], []>} : vector<256x36xf32>, vector<36x4xf32>, vector<256x4xf32> -> vector<256x4xf32>
    %c0_86 = arith.constant 0 : index
    %c0_87 = arith.constant 0 : index
    %41 = vector.load %arg3[%c0_86, %c0_87] : memref<1x4xf32, #tpu.memory_space<vmem>>, vector<1x4xf32>
    %42 = vector.broadcast %41 : vector<1x4xf32> to vector<256x4xf32>
    %43 = arith.addf %40, %42 : vector<256x4xf32>
    %cst_88 = arith.constant 0.000000e+00 : f32
    %44 = vector.broadcast %cst_88 : f32 to vector<256x4xf32>
    %45 = arith.maximumf %43, %44 : vector<256x4xf32>
    %46 = vector.shape_cast %45 : vector<256x4xf32> to vector<16x16x4xf32>
    %c1_89 = arith.constant 1 : index
    %c1_90 = arith.constant 1 : index
    %c0_91 = arith.constant 0 : index
    %47 = vector.load %arg10[%c1_89, %c1_90, %c0_91] : memref<18x18x4xf32, #tpu.memory_space<vmem>>, vector<16x16x4xf32>
    tpu.vector_store %arg10[%c1_89, %c1_90, %c0_91], %46 {strides = array<i32>} : memref<18x18x4xf32, #tpu.memory_space<vmem>>, vector<16x16x4xf32>,
    %c0_92 = arith.constant 0 : index
    %c0_93 = arith.constant 0 : index
    %c0_94 = arith.constant 0 : index
    %48 = vector.load %arg10[%c0_92, %c0_93, %c0_94] : memref<18x18x4xf32, #tpu.memory_space<vmem>>, vector<16x16x4xf32>
    %c0_95 = arith.constant 0 : index
    %c0_96 = arith.constant 0 : index
    %c0_97 = arith.constant 0 : index
    %49 = vector.load %arg11[%c0_95, %c0_96, %c0_97] : memref<16x16x36xf32, #tpu.memory_space<vmem>>, vector<16x16x4xf32>
    tpu.vector_store %arg11[%c0_95, %c0_96, %c0_97], %48 {strides = array<i32>} : memref<16x16x36xf32, #tpu.memory_space<vmem>>, vector<16x16x4xf32>,
    %c0_98 = arith.constant 0 : index
    %c1_99 = arith.constant 1 : index
    %c0_100 = arith.constant 0 : index
    %50 = vector.load %arg10[%c0_98, %c1_99, %c0_100] : memref<18x18x4xf32, #tpu.memory_space<vmem>>, vector<16x16x4xf32>
    %c0_101 = arith.constant 0 : index
    %c0_102 = arith.constant 0 : index
    %c4_103 = arith.constant 4 : index
    %51 = vector.load %arg11[%c0_101, %c0_102, %c4_103] : memref<16x16x36xf32, #tpu.memory_space<vmem>>, vector<16x16x4xf32>
    tpu.vector_store %arg11[%c0_101, %c0_102, %c4_103], %50 {strides = array<i32>} : memref<16x16x36xf32, #tpu.memory_space<vmem>>, vector<16x16x4xf32>,
    %c0_104 = arith.constant 0 : index
    %c2_105 = arith.constant 2 : index
    %c0_106 = arith.constant 0 : index
    %52 = vector.load %arg10[%c0_104, %c2_105, %c0_106] : memref<18x18x4xf32, #tpu.memory_space<vmem>>, vector<16x16x4xf32>
    %c0_107 = arith.constant 0 : index
    %c0_108 = arith.constant 0 : index
    %c8_109 = arith.constant 8 : index
    %53 = vector.load %arg11[%c0_107, %c0_108, %c8_109] : memref<16x16x36xf32, #tpu.memory_space<vmem>>, vector<16x16x4xf32>
    tpu.vector_store %arg11[%c0_107, %c0_108, %c8_109], %52 {strides = array<i32>} : memref<16x16x36xf32, #tpu.memory_space<vmem>>, vector<16x16x4xf32>,
    %c1_110 = arith.constant 1 : index
    %c0_111 = arith.constant 0 : index
    %c0_112 = arith.constant 0 : index
    %54 = vector.load %arg10[%c1_110, %c0_111, %c0_112] : memref<18x18x4xf32, #tpu.memory_space<vmem>>, vector<16x16x4xf32>
    %c0_113 = arith.constant 0 : index
    %c0_114 = arith.constant 0 : index
    %c12_115 = arith.constant 12 : index
    %55 = vector.load %arg11[%c0_113, %c0_114, %c12_115] : memref<16x16x36xf32, #tpu.memory_space<vmem>>, vector<16x16x4xf32>
    tpu.vector_store %arg11[%c0_113, %c0_114, %c12_115], %54 {strides = array<i32>} : memref<16x16x36xf32, #tpu.memory_space<vmem>>, vector<16x16x4xf32>,
    %c1_116 = arith.constant 1 : index
    %c1_117 = arith.constant 1 : index
    %c0_118 = arith.constant 0 : index
    %56 = vector.load %arg10[%c1_116, %c1_117, %c0_118] : memref<18x18x4xf32, #tpu.memory_space<vmem>>, vector<16x16x4xf32>
    %c0_119 = arith.constant 0 : index
    %c0_120 = arith.constant 0 : index
    %c16_121 = arith.constant 16 : index
    %57 = vector.load %arg11[%c0_119, %c0_120, %c16_121] : memref<16x16x36xf32, #tpu.memory_space<vmem>>, vector<16x16x4xf32>
    tpu.vector_store %arg11[%c0_119, %c0_120, %c16_121], %56 {strides = array<i32>} : memref<16x16x36xf32, #tpu.memory_space<vmem>>, vector<16x16x4xf32>,
    %c1_122 = arith.constant 1 : index
    %c2_123 = arith.constant 2 : index
    %c0_124 = arith.constant 0 : index
    %58 = vector.load %arg10[%c1_122, %c2_123, %c0_124] : memref<18x18x4xf32, #tpu.memory_space<vmem>>, vector<16x16x4xf32>
    %c0_125 = arith.constant 0 : index
    %c0_126 = arith.constant 0 : index
    %c20_127 = arith.constant 20 : index
    %59 = vector.load %arg11[%c0_125, %c0_126, %c20_127] : memref<16x16x36xf32, #tpu.memory_space<vmem>>, vector<16x16x4xf32>
    tpu.vector_store %arg11[%c0_125, %c0_126, %c20_127], %58 {strides = array<i32>} : memref<16x16x36xf32, #tpu.memory_space<vmem>>, vector<16x16x4xf32>,
    %c2_128 = arith.constant 2 : index
    %c0_129 = arith.constant 0 : index
    %c0_130 = arith.constant 0 : index
    %60 = vector.load %arg10[%c2_128, %c0_129, %c0_130] : memref<18x18x4xf32, #tpu.memory_space<vmem>>, vector<16x16x4xf32>
    %c0_131 = arith.constant 0 : index
    %c0_132 = arith.constant 0 : index
    %c24_133 = arith.constant 24 : index
    %61 = vector.load %arg11[%c0_131, %c0_132, %c24_133] : memref<16x16x36xf32, #tpu.memory_space<vmem>>, vector<16x16x4xf32>
    tpu.vector_store %arg11[%c0_131, %c0_132, %c24_133], %60 {strides = array<i32>} : memref<16x16x36xf32, #tpu.memory_space<vmem>>, vector<16x16x4xf32>,
    %c2_134 = arith.constant 2 : index
    %c1_135 = arith.constant 1 : index
    %c0_136 = arith.constant 0 : index
    %62 = vector.load %arg10[%c2_134, %c1_135, %c0_136] : memref<18x18x4xf32, #tpu.memory_space<vmem>>, vector<16x16x4xf32>
    %c0_137 = arith.constant 0 : index
    %c0_138 = arith.constant 0 : index
    %c28_139 = arith.constant 28 : index
    %63 = vector.load %arg11[%c0_137, %c0_138, %c28_139] : memref<16x16x36xf32, #tpu.memory_space<vmem>>, vector<16x16x4xf32>
    tpu.vector_store %arg11[%c0_137, %c0_138, %c28_139], %62 {strides = array<i32>} : memref<16x16x36xf32, #tpu.memory_space<vmem>>, vector<16x16x4xf32>,
    %c2_140 = arith.constant 2 : index
    %c2_141 = arith.constant 2 : index
    %c0_142 = arith.constant 0 : index
    %64 = vector.load %arg10[%c2_140, %c2_141, %c0_142] : memref<18x18x4xf32, #tpu.memory_space<vmem>>, vector<16x16x4xf32>
    %c0_143 = arith.constant 0 : index
    %c0_144 = arith.constant 0 : index
    %c32_145 = arith.constant 32 : index
    %65 = vector.load %arg11[%c0_143, %c0_144, %c32_145] : memref<16x16x36xf32, #tpu.memory_space<vmem>>, vector<16x16x4xf32>
    tpu.vector_store %arg11[%c0_143, %c0_144, %c32_145], %64 {strides = array<i32>} : memref<16x16x36xf32, #tpu.memory_space<vmem>>, vector<16x16x4xf32>,
    %c0_146 = arith.constant 0 : index
    %c0_147 = arith.constant 0 : index
    %c0_148 = arith.constant 0 : index
    %66 = vector.load %arg11[%c0_146, %c0_147, %c0_148] : memref<16x16x36xf32, #tpu.memory_space<vmem>>, vector<16x16x36xf32>
    %67 = vector.shape_cast %66 : vector<16x16x36xf32> to vector<256x36xf32>
    %c0_149 = arith.constant 0 : index
    %c0_150 = arith.constant 0 : index
    %68 = vector.load %arg4[%c0_149, %c0_150] : memref<36x4xf32, #tpu.memory_space<vmem>>, vector<36x4xf32>
    %cst_151 = arith.constant dense<0.000000e+00> : vector<256x4xf32>
    %69 = tpu.matmul %67, %68, %cst_151 {dimension_numbers = #tpu.dot_dimension_numbers<[1], [0], [0], [1], [0, 0, 1, 1], [], []>} : vector<256x36xf32>, vector<36x4xf32>, vector<256x4xf32> -> vector<256x4xf32>
    %c0_152 = arith.constant 0 : index
    %c0_153 = arith.constant 0 : index
    %70 = vector.load %arg5[%c0_152, %c0_153] : memref<1x4xf32, #tpu.memory_space<vmem>>, vector<1x4xf32>
    %71 = vector.broadcast %70 : vector<1x4xf32> to vector<256x4xf32>
    %72 = arith.addf %69, %71 : vector<256x4xf32>
    %cst_154 = arith.constant 0.000000e+00 : f32
    %73 = vector.broadcast %cst_154 : f32 to vector<256x4xf32>
    %74 = arith.maximumf %72, %73 : vector<256x4xf32>
    %c0_155 = arith.constant 0 : index
    %c0_156 = arith.constant 0 : index
    %75 = vector.load %arg6[%c0_155, %c0_156] : memref<4x4xf32, #tpu.memory_space<vmem>>, vector<4x4xf32>
    %cst_157 = arith.constant dense<0.000000e+00> : vector<256x4xf32>
    %76 = tpu.matmul %74, %75, %cst_157 {dimension_numbers = #tpu.dot_dimension_numbers<[1], [0], [0], [1], [0, 0, 1, 1], [], []>} : vector<256x4xf32>, vector<4x4xf32>, vector<256x4xf32> -> vector<256x4xf32>
    %c0_158 = arith.constant 0 : index
    %c0_159 = arith.constant 0 : index
    %77 = vector.load %arg7[%c0_158, %c0_159] : memref<1x4xf32, #tpu.memory_space<vmem>>, vector<1x4xf32>
    %78 = vector.broadcast %77 : vector<1x4xf32> to vector<256x4xf32>
    %79 = arith.addf %76, %78 : vector<256x4xf32>
    %80 = vector.shape_cast %79 : vector<256x4xf32> to vector<16x16x4xf32>
    %c0_160 = arith.constant 0 : index
    %c0_161 = arith.constant 0 : index
    %c0_162 = arith.constant 0 : index
    %c0_163 = arith.constant 0 : index
    %81 = vector.load %arg1[%c0_160, %c0_161, %c0_162, %c0_163] : memref<2x16x16x4xf32, #tpu.memory_space<vmem>>, vector<1x16x16x4xf32>
    %82 = vector.shape_cast %81 : vector<1x16x16x4xf32> to vector<16x16x4xf32>
    %83 = arith.addf %80, %82 : vector<16x16x4xf32>
    %cst_164 = arith.constant 0.000000e+00 : f32
    %84 = vector.broadcast %cst_164 : f32 to vector<16x16x4xf32>
    %85 = arith.maximumf %83, %84 : vector<16x16x4xf32>
    %c0_165 = arith.constant 0 : index
    %c0_166 = arith.constant 0 : index
    %c0_167 = arith.constant 0 : index
    %c0_168 = arith.constant 0 : index
    %86 = vector.load %arg8[%c0_165, %c0_166, %c0_167, %c0_168] : memref<2x16x16x4xf32, #tpu.memory_space<vmem>>, vector<1x16x16x4xf32>
    %87 = vector.shape_cast %86 : vector<1x16x16x4xf32> to vector<16x16x4xf32>
    %88 = vector.shape_cast %85 : vector<16x16x4xf32> to vector<1x16x16x4xf32>
    tpu.vector_store %arg8[%c0_165, %c0_166, %c0_167, %c0_168], %88 {strides = array<i32>} : memref<2x16x16x4xf32, #tpu.memory_space<vmem>>, vector<1x16x16x4xf32>,
    %c1_169 = arith.constant 1 : index
    %c0_170 = arith.constant 0 : index
    %c0_171 = arith.constant 0 : index
    %c0_172 = arith.constant 0 : index
    %89 = vector.load %arg1[%c1_169, %c0_170, %c0_171, %c0_172] : memref<2x16x16x4xf32, #tpu.memory_space<vmem>>, vector<1x16x16x4xf32>
    %90 = vector.shape_cast %89 : vector<1x16x16x4xf32> to vector<16x16x4xf32>
    %c1_173 = arith.constant 1 : index
    %c1_174 = arith.constant 1 : index
    %c0_175 = arith.constant 0 : index
    %91 = vector.load %arg9[%c1_173, %c1_174, %c0_175] : memref<18x18x4xf32, #tpu.memory_space<vmem>>, vector<16x16x4xf32>
    tpu.vector_store %arg9[%c1_173, %c1_174, %c0_175], %90 {strides = array<i32>} : memref<18x18x4xf32, #tpu.memory_space<vmem>>, vector<16x16x4xf32>,
    %c0_176 = arith.constant 0 : index
    %c0_177 = arith.constant 0 : index
    %c0_178 = arith.constant 0 : index
    %92 = vector.load %arg9[%c0_176, %c0_177, %c0_178] : memref<18x18x4xf32, #tpu.memory_space<vmem>>, vector<16x16x4xf32>
    %c0_179 = arith.constant 0 : index
    %c0_180 = arith.constant 0 : index
    %c0_181 = arith.constant 0 : index
    %93 = vector.load %arg11[%c0_179, %c0_180, %c0_181] : memref<16x16x36xf32, #tpu.memory_space<vmem>>, vector<16x16x4xf32>
    tpu.vector_store %arg11[%c0_179, %c0_180, %c0_181], %92 {strides = array<i32>} : memref<16x16x36xf32, #tpu.memory_space<vmem>>, vector<16x16x4xf32>,
    %c0_182 = arith.constant 0 : index
    %c1_183 = arith.constant 1 : index
    %c0_184 = arith.constant 0 : index
    %94 = vector.load %arg9[%c0_182, %c1_183, %c0_184] : memref<18x18x4xf32, #tpu.memory_space<vmem>>, vector<16x16x4xf32>
    %c0_185 = arith.constant 0 : index
    %c0_186 = arith.constant 0 : index
    %c4_187 = arith.constant 4 : index
    %95 = vector.load %arg11[%c0_185, %c0_186, %c4_187] : memref<16x16x36xf32, #tpu.memory_space<vmem>>, vector<16x16x4xf32>
    tpu.vector_store %arg11[%c0_185, %c0_186, %c4_187], %94 {strides = array<i32>} : memref<16x16x36xf32, #tpu.memory_space<vmem>>, vector<16x16x4xf32>,
    %c0_188 = arith.constant 0 : index
    %c2_189 = arith.constant 2 : index
    %c0_190 = arith.constant 0 : index
    %96 = vector.load %arg9[%c0_188, %c2_189, %c0_190] : memref<18x18x4xf32, #tpu.memory_space<vmem>>, vector<16x16x4xf32>
    %c0_191 = arith.constant 0 : index
    %c0_192 = arith.constant 0 : index
    %c8_193 = arith.constant 8 : index
    %97 = vector.load %arg11[%c0_191, %c0_192, %c8_193] : memref<16x16x36xf32, #tpu.memory_space<vmem>>, vector<16x16x4xf32>
    tpu.vector_store %arg11[%c0_191, %c0_192, %c8_193], %96 {strides = array<i32>} : memref<16x16x36xf32, #tpu.memory_space<vmem>>, vector<16x16x4xf32>,
    %c1_194 = arith.constant 1 : index
    %c0_195 = arith.constant 0 : index
    %c0_196 = arith.constant 0 : index
    %98 = vector.load %arg9[%c1_194, %c0_195, %c0_196] : memref<18x18x4xf32, #tpu.memory_space<vmem>>, vector<16x16x4xf32>
    %c0_197 = arith.constant 0 : index
    %c0_198 = arith.constant 0 : index
    %c12_199 = arith.constant 12 : index
    %99 = vector.load %arg11[%c0_197, %c0_198, %c12_199] : memref<16x16x36xf32, #tpu.memory_space<vmem>>, vector<16x16x4xf32>
    tpu.vector_store %arg11[%c0_197, %c0_198, %c12_199], %98 {strides = array<i32>} : memref<16x16x36xf32, #tpu.memory_space<vmem>>, vector<16x16x4xf32>,
    %c1_200 = arith.constant 1 : index
    %c1_201 = arith.constant 1 : index
    %c0_202 = arith.constant 0 : index
    %100 = vector.load %arg9[%c1_200, %c1_201, %c0_202] : memref<18x18x4xf32, #tpu.memory_space<vmem>>, vector<16x16x4xf32>
    %c0_203 = arith.constant 0 : index
    %c0_204 = arith.constant 0 : index
    %c16_205 = arith.constant 16 : index
    %101 = vector.load %arg11[%c0_203, %c0_204, %c16_205] : memref<16x16x36xf32, #tpu.memory_space<vmem>>, vector<16x16x4xf32>
    tpu.vector_store %arg11[%c0_203, %c0_204, %c16_205], %100 {strides = array<i32>} : memref<16x16x36xf32, #tpu.memory_space<vmem>>, vector<16x16x4xf32>,
    %c1_206 = arith.constant 1 : index
    %c2_207 = arith.constant 2 : index
    %c0_208 = arith.constant 0 : index
    %102 = vector.load %arg9[%c1_206, %c2_207, %c0_208] : memref<18x18x4xf32, #tpu.memory_space<vmem>>, vector<16x16x4xf32>
    %c0_209 = arith.constant 0 : index
    %c0_210 = arith.constant 0 : index
    %c20_211 = arith.constant 20 : index
    %103 = vector.load %arg11[%c0_209, %c0_210, %c20_211] : memref<16x16x36xf32, #tpu.memory_space<vmem>>, vector<16x16x4xf32>
    tpu.vector_store %arg11[%c0_209, %c0_210, %c20_211], %102 {strides = array<i32>} : memref<16x16x36xf32, #tpu.memory_space<vmem>>, vector<16x16x4xf32>,
    %c2_212 = arith.constant 2 : index
    %c0_213 = arith.constant 0 : index
    %c0_214 = arith.constant 0 : index
    %104 = vector.load %arg9[%c2_212, %c0_213, %c0_214] : memref<18x18x4xf32, #tpu.memory_space<vmem>>, vector<16x16x4xf32>
    %c0_215 = arith.constant 0 : index
    %c0_216 = arith.constant 0 : index
    %c24_217 = arith.constant 24 : index
    %105 = vector.load %arg11[%c0_215, %c0_216, %c24_217] : memref<16x16x36xf32, #tpu.memory_space<vmem>>, vector<16x16x4xf32>
    tpu.vector_store %arg11[%c0_215, %c0_216, %c24_217], %104 {strides = array<i32>} : memref<16x16x36xf32, #tpu.memory_space<vmem>>, vector<16x16x4xf32>,
    %c2_218 = arith.constant 2 : index
    %c1_219 = arith.constant 1 : index
    %c0_220 = arith.constant 0 : index
    %106 = vector.load %arg9[%c2_218, %c1_219, %c0_220] : memref<18x18x4xf32, #tpu.memory_space<vmem>>, vector<16x16x4xf32>
    %c0_221 = arith.constant 0 : index
    %c0_222 = arith.constant 0 : index
    %c28_223 = arith.constant 28 : index
    %107 = vector.load %arg11[%c0_221, %c0_222, %c28_223] : memref<16x16x36xf32, #tpu.memory_space<vmem>>, vector<16x16x4xf32>
    tpu.vector_store %arg11[%c0_221, %c0_222, %c28_223], %106 {strides = array<i32>} : memref<16x16x36xf32, #tpu.memory_space<vmem>>, vector<16x16x4xf32>,
    %c2_224 = arith.constant 2 : index
    %c2_225 = arith.constant 2 : index
    %c0_226 = arith.constant 0 : index
    %108 = vector.load %arg9[%c2_224, %c2_225, %c0_226] : memref<18x18x4xf32, #tpu.memory_space<vmem>>, vector<16x16x4xf32>
    %c0_227 = arith.constant 0 : index
    %c0_228 = arith.constant 0 : index
    %c32_229 = arith.constant 32 : index
    %109 = vector.load %arg11[%c0_227, %c0_228, %c32_229] : memref<16x16x36xf32, #tpu.memory_space<vmem>>, vector<16x16x4xf32>
    tpu.vector_store %arg11[%c0_227, %c0_228, %c32_229], %108 {strides = array<i32>} : memref<16x16x36xf32, #tpu.memory_space<vmem>>, vector<16x16x4xf32>,
    %c0_230 = arith.constant 0 : index
    %c0_231 = arith.constant 0 : index
    %c0_232 = arith.constant 0 : index
    %110 = vector.load %arg11[%c0_230, %c0_231, %c0_232] : memref<16x16x36xf32, #tpu.memory_space<vmem>>, vector<16x16x36xf32>
    %111 = vector.shape_cast %110 : vector<16x16x36xf32> to vector<256x36xf32>
    %c0_233 = arith.constant 0 : index
    %c0_234 = arith.constant 0 : index
    %112 = vector.load %arg2[%c0_233, %c0_234] : memref<36x4xf32, #tpu.memory_space<vmem>>, vector<36x4xf32>
    %cst_235 = arith.constant dense<0.000000e+00> : vector<256x4xf32>
    %113 = tpu.matmul %111, %112, %cst_235 {dimension_numbers = #tpu.dot_dimension_numbers<[1], [0], [0], [1], [0, 0, 1, 1], [], []>} : vector<256x36xf32>, vector<36x4xf32>, vector<256x4xf32> -> vector<256x4xf32>
    %c0_236 = arith.constant 0 : index
    %c0_237 = arith.constant 0 : index
    %114 = vector.load %arg3[%c0_236, %c0_237] : memref<1x4xf32, #tpu.memory_space<vmem>>, vector<1x4xf32>
    %115 = vector.broadcast %114 : vector<1x4xf32> to vector<256x4xf32>
    %116 = arith.addf %113, %115 : vector<256x4xf32>
    %cst_238 = arith.constant 0.000000e+00 : f32
    %117 = vector.broadcast %cst_238 : f32 to vector<256x4xf32>
    %118 = arith.maximumf %116, %117 : vector<256x4xf32>
    %119 = vector.shape_cast %118 : vector<256x4xf32> to vector<16x16x4xf32>
    %c1_239 = arith.constant 1 : index
    %c1_240 = arith.constant 1 : index
    %c0_241 = arith.constant 0 : index
    %120 = vector.load %arg10[%c1_239, %c1_240, %c0_241] : memref<18x18x4xf32, #tpu.memory_space<vmem>>, vector<16x16x4xf32>
    tpu.vector_store %arg10[%c1_239, %c1_240, %c0_241], %119 {strides = array<i32>} : memref<18x18x4xf32, #tpu.memory_space<vmem>>, vector<16x16x4xf32>,
    %c0_242 = arith.constant 0 : index
    %c0_243 = arith.constant 0 : index
    %c0_244 = arith.constant 0 : index
    %121 = vector.load %arg10[%c0_242, %c0_243, %c0_244] : memref<18x18x4xf32, #tpu.memory_space<vmem>>, vector<16x16x4xf32>
    %c0_245 = arith.constant 0 : index
    %c0_246 = arith.constant 0 : index
    %c0_247 = arith.constant 0 : index
    %122 = vector.load %arg11[%c0_245, %c0_246, %c0_247] : memref<16x16x36xf32, #tpu.memory_space<vmem>>, vector<16x16x4xf32>
    tpu.vector_store %arg11[%c0_245, %c0_246, %c0_247], %121 {strides = array<i32>} : memref<16x16x36xf32, #tpu.memory_space<vmem>>, vector<16x16x4xf32>,
    %c0_248 = arith.constant 0 : index
    %c1_249 = arith.constant 1 : index
    %c0_250 = arith.constant 0 : index
    %123 = vector.load %arg10[%c0_248, %c1_249, %c0_250] : memref<18x18x4xf32, #tpu.memory_space<vmem>>, vector<16x16x4xf32>
    %c0_251 = arith.constant 0 : index
    %c0_252 = arith.constant 0 : index
    %c4_253 = arith.constant 4 : index
    %124 = vector.load %arg11[%c0_251, %c0_252, %c4_253] : memref<16x16x36xf32, #tpu.memory_space<vmem>>, vector<16x16x4xf32>
    tpu.vector_store %arg11[%c0_251, %c0_252, %c4_253], %123 {strides = array<i32>} : memref<16x16x36xf32, #tpu.memory_space<vmem>>, vector<16x16x4xf32>,
    %c0_254 = arith.constant 0 : index
    %c2_255 = arith.constant 2 : index
    %c0_256 = arith.constant 0 : index
    %125 = vector.load %arg10[%c0_254, %c2_255, %c0_256] : memref<18x18x4xf32, #tpu.memory_space<vmem>>, vector<16x16x4xf32>
    %c0_257 = arith.constant 0 : index
    %c0_258 = arith.constant 0 : index
    %c8_259 = arith.constant 8 : index
    %126 = vector.load %arg11[%c0_257, %c0_258, %c8_259] : memref<16x16x36xf32, #tpu.memory_space<vmem>>, vector<16x16x4xf32>
    tpu.vector_store %arg11[%c0_257, %c0_258, %c8_259], %125 {strides = array<i32>} : memref<16x16x36xf32, #tpu.memory_space<vmem>>, vector<16x16x4xf32>,
    %c1_260 = arith.constant 1 : index
    %c0_261 = arith.constant 0 : index
    %c0_262 = arith.constant 0 : index
    %127 = vector.load %arg10[%c1_260, %c0_261, %c0_262] : memref<18x18x4xf32, #tpu.memory_space<vmem>>, vector<16x16x4xf32>
    %c0_263 = arith.constant 0 : index
    %c0_264 = arith.constant 0 : index
    %c12_265 = arith.constant 12 : index
    %128 = vector.load %arg11[%c0_263, %c0_264, %c12_265] : memref<16x16x36xf32, #tpu.memory_space<vmem>>, vector<16x16x4xf32>
    tpu.vector_store %arg11[%c0_263, %c0_264, %c12_265], %127 {strides = array<i32>} : memref<16x16x36xf32, #tpu.memory_space<vmem>>, vector<16x16x4xf32>,
    %c1_266 = arith.constant 1 : index
    %c1_267 = arith.constant 1 : index
    %c0_268 = arith.constant 0 : index
    %129 = vector.load %arg10[%c1_266, %c1_267, %c0_268] : memref<18x18x4xf32, #tpu.memory_space<vmem>>, vector<16x16x4xf32>
    %c0_269 = arith.constant 0 : index
    %c0_270 = arith.constant 0 : index
    %c16_271 = arith.constant 16 : index
    %130 = vector.load %arg11[%c0_269, %c0_270, %c16_271] : memref<16x16x36xf32, #tpu.memory_space<vmem>>, vector<16x16x4xf32>
    tpu.vector_store %arg11[%c0_269, %c0_270, %c16_271], %129 {strides = array<i32>} : memref<16x16x36xf32, #tpu.memory_space<vmem>>, vector<16x16x4xf32>,
    %c1_272 = arith.constant 1 : index
    %c2_273 = arith.constant 2 : index
    %c0_274 = arith.constant 0 : index
    %131 = vector.load %arg10[%c1_272, %c2_273, %c0_274] : memref<18x18x4xf32, #tpu.memory_space<vmem>>, vector<16x16x4xf32>
    %c0_275 = arith.constant 0 : index
    %c0_276 = arith.constant 0 : index
    %c20_277 = arith.constant 20 : index
    %132 = vector.load %arg11[%c0_275, %c0_276, %c20_277] : memref<16x16x36xf32, #tpu.memory_space<vmem>>, vector<16x16x4xf32>
    tpu.vector_store %arg11[%c0_275, %c0_276, %c20_277], %131 {strides = array<i32>} : memref<16x16x36xf32, #tpu.memory_space<vmem>>, vector<16x16x4xf32>,
    %c2_278 = arith.constant 2 : index
    %c0_279 = arith.constant 0 : index
    %c0_280 = arith.constant 0 : index
    %133 = vector.load %arg10[%c2_278, %c0_279, %c0_280] : memref<18x18x4xf32, #tpu.memory_space<vmem>>, vector<16x16x4xf32>
    %c0_281 = arith.constant 0 : index
    %c0_282 = arith.constant 0 : index
    %c24_283 = arith.constant 24 : index
    %134 = vector.load %arg11[%c0_281, %c0_282, %c24_283] : memref<16x16x36xf32, #tpu.memory_space<vmem>>, vector<16x16x4xf32>
    tpu.vector_store %arg11[%c0_281, %c0_282, %c24_283], %133 {strides = array<i32>} : memref<16x16x36xf32, #tpu.memory_space<vmem>>, vector<16x16x4xf32>,
    %c2_284 = arith.constant 2 : index
    %c1_285 = arith.constant 1 : index
    %c0_286 = arith.constant 0 : index
    %135 = vector.load %arg10[%c2_284, %c1_285, %c0_286] : memref<18x18x4xf32, #tpu.memory_space<vmem>>, vector<16x16x4xf32>
    %c0_287 = arith.constant 0 : index
    %c0_288 = arith.constant 0 : index
    %c28_289 = arith.constant 28 : index
    %136 = vector.load %arg11[%c0_287, %c0_288, %c28_289] : memref<16x16x36xf32, #tpu.memory_space<vmem>>, vector<16x16x4xf32>
    tpu.vector_store %arg11[%c0_287, %c0_288, %c28_289], %135 {strides = array<i32>} : memref<16x16x36xf32, #tpu.memory_space<vmem>>, vector<16x16x4xf32>,
    %c2_290 = arith.constant 2 : index
    %c2_291 = arith.constant 2 : index
    %c0_292 = arith.constant 0 : index
    %137 = vector.load %arg10[%c2_290, %c2_291, %c0_292] : memref<18x18x4xf32, #tpu.memory_space<vmem>>, vector<16x16x4xf32>
    %c0_293 = arith.constant 0 : index
    %c0_294 = arith.constant 0 : index
    %c32_295 = arith.constant 32 : index
    %138 = vector.load %arg11[%c0_293, %c0_294, %c32_295] : memref<16x16x36xf32, #tpu.memory_space<vmem>>, vector<16x16x4xf32>
    tpu.vector_store %arg11[%c0_293, %c0_294, %c32_295], %137 {strides = array<i32>} : memref<16x16x36xf32, #tpu.memory_space<vmem>>, vector<16x16x4xf32>,
    %c0_296 = arith.constant 0 : index
    %c0_297 = arith.constant 0 : index
    %c0_298 = arith.constant 0 : index
    %139 = vector.load %arg11[%c0_296, %c0_297, %c0_298] : memref<16x16x36xf32, #tpu.memory_space<vmem>>, vector<16x16x36xf32>
    %140 = vector.shape_cast %139 : vector<16x16x36xf32> to vector<256x36xf32>
    %c0_299 = arith.constant 0 : index
    %c0_300 = arith.constant 0 : index
    %141 = vector.load %arg4[%c0_299, %c0_300] : memref<36x4xf32, #tpu.memory_space<vmem>>, vector<36x4xf32>
    %cst_301 = arith.constant dense<0.000000e+00> : vector<256x4xf32>
    %142 = tpu.matmul %140, %141, %cst_301 {dimension_numbers = #tpu.dot_dimension_numbers<[1], [0], [0], [1], [0, 0, 1, 1], [], []>} : vector<256x36xf32>, vector<36x4xf32>, vector<256x4xf32> -> vector<256x4xf32>
    %c0_302 = arith.constant 0 : index
    %c0_303 = arith.constant 0 : index
    %143 = vector.load %arg5[%c0_302, %c0_303] : memref<1x4xf32, #tpu.memory_space<vmem>>, vector<1x4xf32>
    %144 = vector.broadcast %143 : vector<1x4xf32> to vector<256x4xf32>
    %145 = arith.addf %142, %144 : vector<256x4xf32>
    %cst_304 = arith.constant 0.000000e+00 : f32
    %146 = vector.broadcast %cst_304 : f32 to vector<256x4xf32>
    %147 = arith.maximumf %145, %146 : vector<256x4xf32>
    %c0_305 = arith.constant 0 : index
    %c0_306 = arith.constant 0 : index
    %148 = vector.load %arg6[%c0_305, %c0_306] : memref<4x4xf32, #tpu.memory_space<vmem>>, vector<4x4xf32>
    %cst_307 = arith.constant dense<0.000000e+00> : vector<256x4xf32>
    %149 = tpu.matmul %147, %148, %cst_307 {dimension_numbers = #tpu.dot_dimension_numbers<[1], [0], [0], [1], [0, 0, 1, 1], [], []>} : vector<256x4xf32>, vector<4x4xf32>, vector<256x4xf32> -> vector<256x4xf32>
    %c0_308 = arith.constant 0 : index
    %c0_309 = arith.constant 0 : index
    %150 = vector.load %arg7[%c0_308, %c0_309] : memref<1x4xf32, #tpu.memory_space<vmem>>, vector<1x4xf32>
    %151 = vector.broadcast %150 : vector<1x4xf32> to vector<256x4xf32>
    %152 = arith.addf %149, %151 : vector<256x4xf32>
    %153 = vector.shape_cast %152 : vector<256x4xf32> to vector<16x16x4xf32>
    %c1_310 = arith.constant 1 : index
    %c0_311 = arith.constant 0 : index
    %c0_312 = arith.constant 0 : index
    %c0_313 = arith.constant 0 : index
    %154 = vector.load %arg1[%c1_310, %c0_311, %c0_312, %c0_313] : memref<2x16x16x4xf32, #tpu.memory_space<vmem>>, vector<1x16x16x4xf32>
    %155 = vector.shape_cast %154 : vector<1x16x16x4xf32> to vector<16x16x4xf32>
    %156 = arith.addf %153, %155 : vector<16x16x4xf32>
    %cst_314 = arith.constant 0.000000e+00 : f32
    %157 = vector.broadcast %cst_314 : f32 to vector<16x16x4xf32>
    %158 = arith.maximumf %156, %157 : vector<16x16x4xf32>
    %c1_315 = arith.constant 1 : index
    %c0_316 = arith.constant 0 : index
    %c0_317 = arith.constant 0 : index
    %c0_318 = arith.constant 0 : index
    %159 = vector.load %arg8[%c1_315, %c0_316, %c0_317, %c0_318] : memref<2x16x16x4xf32, #tpu.memory_space<vmem>>, vector<1x16x16x4xf32>
    %160 = vector.shape_cast %159 : vector<1x16x16x4xf32> to vector<16x16x4xf32>
    %161 = vector.shape_cast %158 : vector<16x16x4xf32> to vector<1x16x16x4xf32>
    tpu.vector_store %arg8[%c1_315, %c0_316, %c0_317, %c0_318], %161 {strides = array<i32>} : memref<2x16x16x4xf32, #tpu.memory_space<vmem>>, vector<1x16x16x4xf32>,
    return
  }
  func.func @transform_0(%arg0: i32) -> (i32, i32, i32, i32) {
    %c0_i32 = arith.constant 0 : i32
    %c0_i32_0 = arith.constant 0 : i32
    %c0_i32_1 = arith.constant 0 : i32
    %c0_i32_2 = arith.constant 0 : i32
    return %arg0, %c0_i32, %c0_i32_0, %c0_i32_1 : i32, i32, i32, i32
  }
  func.func @transform_1(%arg0: i32) -> (i32, i32) {
    %c0_i32 = arith.constant 0 : i32
    %c0_i32_0 = arith.constant 0 : i32
    %c0_i32_1 = arith.constant 0 : i32
    return %c0_i32, %c0_i32_0 : i32, i32
  }
  func.func @transform_2(%arg0: i32) -> (i32, i32) {
    %c0_i32 = arith.constant 0 : i32
    %c0_i32_0 = arith.constant 0 : i32
    %c0_i32_1 = arith.constant 0 : i32
    return %c0_i32, %c0_i32_0 : i32, i32
  }
  func.func @transform_3(%arg0: i32) -> (i32, i32) {
    %c0_i32 = arith.constant 0 : i32
    %c0_i32_0 = arith.constant 0 : i32
    %c0_i32_1 = arith.constant 0 : i32
    return %c0_i32, %c0_i32_0 : i32, i32
  }
  func.func @transform_4(%arg0: i32) -> (i32, i32) {
    %c0_i32 = arith.constant 0 : i32
    %c0_i32_0 = arith.constant 0 : i32
    %c0_i32_1 = arith.constant 0 : i32
    return %c0_i32, %c0_i32_0 : i32, i32
  }
  func.func @transform_5(%arg0: i32) -> (i32, i32) {
    %c0_i32 = arith.constant 0 : i32
    %c0_i32_0 = arith.constant 0 : i32
    %c0_i32_1 = arith.constant 0 : i32
    return %c0_i32, %c0_i32_0 : i32, i32
  }
  func.func @transform_6(%arg0: i32) -> (i32, i32) {
    %c0_i32 = arith.constant 0 : i32
    %c0_i32_0 = arith.constant 0 : i32
    %c0_i32_1 = arith.constant 0 : i32
    return %c0_i32, %c0_i32_0 : i32, i32
  }
  func.func @transform_7(%arg0: i32) -> (i32, i32, i32, i32) {
    %c0_i32 = arith.constant 0 : i32
    %c0_i32_0 = arith.constant 0 : i32
    %c0_i32_1 = arith.constant 0 : i32
    %c0_i32_2 = arith.constant 0 : i32
    return %arg0, %c0_i32, %c0_i32_0, %c0_i32_1 : i32, i32, i32, i32
  }
}

</mosaic_0001>

<llo_original>
// kernel: tpu_custom_call.1
$region0: #{tpu_custom_call.1}
  #allocation0 [shape = 'u32[]', space=smem, size = 0x4, offset = 0x4, fixed_abs, tag = 'smem constant byte address 0x4 - core index']
  #allocation1 [shape = 'u32[72,128]{1,0:T(1,128)}', space=vmem, size = 0x9000, scoped, tag = 'internal scratch']
  #allocation2 [shape = 'f32[18,18,4]{2,1,0:T(8,128)}', space=vmem, size = 0x36000, scoped, tag = 'scratch operand']
  #allocation3 [shape = 'f32[18,18,4]{2,1,0:T(8,128)}', space=vmem, size = 0x36000, scoped, tag = 'scratch operand']
  #allocation4 [shape = 'f32[16,16,36]{2,1,0:T(8,128)}', space=vmem, size = 0x20000, scoped, tag = 'scratch operand']
  %s0 = inlined_call_operand.vmem [shape: f32[2,16,16,4], index: 0, kind: input, shape index: {}]
  %s1 = inlined_call_operand.vmem [shape: f32[36,4], index: 1, kind: input, shape index: {}]
  %s2 = inlined_call_operand.vmem [shape: f32[1,4], index: 2, kind: input, shape index: {}]
  %s3 = inlined_call_operand.vmem [shape: f32[36,4], index: 3, kind: input, shape index: {}]
  %s4 = inlined_call_operand.vmem [shape: f32[1,4], index: 4, kind: input, shape index: {}]
  %s5 = inlined_call_operand.vmem [shape: f32[4,4], index: 5, kind: input, shape index: {}]
  %s6 = inlined_call_operand.vmem [shape: f32[1,4], index: 6, kind: input, shape index: {}]
  %s7 = inlined_call_operand.vmem [shape: f32[2,16,16,4], index: 7, kind: output, shape index: {}]
  %s8 = sld [smem:[#allocation0]]
  $region38: #{tpu_custom_call.1} parent=0
    _
  %s10 = ssub.s32 1, %s8
  %s11 = scalar_select 0, %s10, %s8
  // Predicated region
  $region2: #{tpu_custom_call.1} parent=0 // pred_check
    _
  $region3: #{tpu_custom_call.1} parent=0 // pred_check_branch
    %13 = sbr.rel (0) target = $region5
  $region4: #{tpu_custom_call.1} parent=0 // pred_region
    _
  $region5: #{tpu_custom_call.1} parent=0 // pred_fallthru
    _
  // Predicated region
  $region6: #{tpu_custom_call.1} parent=0 // pred_check
    _
  $region7: #{tpu_custom_call.1} parent=0 // pred_check_branch
    %15 = sbr.rel (0) target = $region9
  $region8: #{tpu_custom_call.1} parent=0 // pred_region
    _
  $region9: #{tpu_custom_call.1} parent=0 // pred_fallthru
    _
  // Predicated region
  $region10: #{tpu_custom_call.1} parent=0 // pred_check
    _
  $region11: #{tpu_custom_call.1} parent=0 // pred_check_branch
    %17 = sbr.rel (0) target = $region13
  $region12: #{tpu_custom_call.1} parent=0 // pred_region
    _
  $region13: #{tpu_custom_call.1} parent=0 // pred_fallthru
    _
  // Predicated region
  $region14: #{tpu_custom_call.1} parent=0 // pred_check
    _
  $region15: #{tpu_custom_call.1} parent=0 // pred_check_branch
    %19 = sbr.rel (0) target = $region17
  $region16: #{tpu_custom_call.1} parent=0 // pred_region
    _
  $region17: #{tpu_custom_call.1} parent=0 // pred_fallthru
    _
  // Predicated region
  $region18: #{tpu_custom_call.1} parent=0 // pred_check
    _
  $region19: #{tpu_custom_call.1} parent=0 // pred_check_branch
    %21 = sbr.rel (0) target = $region21
  $region20: #{tpu_custom_call.1} parent=0 // pred_region
    _
  $region21: #{tpu_custom_call.1} parent=0 // pred_fallthru
    _
  // Predicated region
  $region22: #{tpu_custom_call.1} parent=0 // pred_check
    _
  $region23: #{tpu_custom_call.1} parent=0 // pred_check_branch
    %23 = sbr.rel (0) target = $region25
  $region24: #{tpu_custom_call.1} parent=0 // pred_region
    _
  $region25: #{tpu_custom_call.1} parent=0 // pred_fallthru
    _
  // Predicated region
  $region26: #{tpu_custom_call.1} parent=0 // pred_check
    _
  $region27: #{tpu_custom_call.1} parent=0 // pred_check_branch
    %25 = sbr.rel (0) target = $region29
  $region28: #{tpu_custom_call.1} parent=0 // pred_region
    _
  $region29: #{tpu_custom_call.1} parent=0 // pred_fallthru
    _
  %vm26 = vcmask 31744
  %27 = vst.msk [vmem:[#allocation2] sm:$0xff] %vm26, 0.0
  %28 = vst.msk [vmem:[#allocation2 + $0x8] sm:$0xff] %vm26, 0.0
  %vm29 = vcmask 25600
  %30 = vst.msk [vmem:[#allocation2 + $0x10] sm:$0x3] %vm29, 0.0
  %s31 = scalar_lea.vmem [#allocation2], 408
  %32 = vst.msk [vmem:[%s31] sm:$0xff] %vm26, 0.0
  %33 = vst.msk [vmem:[%s31 + $0x8] sm:$0xff] %vm26, 0.0
  %34 = vst.msk [vmem:[%s31 + $0x10] sm:$0x3] %vm29, 0.0
  %s35 = scalar_lea.vmem [#allocation2], 24
  %vm36 = vcmask 24576
  %37 = vst.msk [vmem:[%s35] sm:$0x1] %vm36, 0.0
  %38 = vst.msk [vmem:[%s35 + $0x18] sm:$0x1] %vm36, 0.0
  %39 = vst.msk [vmem:[%s35 + $0x30] sm:$0x1] %vm36, 0.0
  %40 = vst.msk [vmem:[%s35 + $0x48] sm:$0x1] %vm36, 0.0
  %41 = vst.msk [vmem:[%s35 + $0x60] sm:$0x1] %vm36, 0.0
  %42 = vst.msk [vmem:[%s35 + $0x78] sm:$0x1] %vm36, 0.0
  %43 = vst.msk [vmem:[%s35 + $0x90] sm:$0x1] %vm36, 0.0
  %44 = vst.msk [vmem:[%s35 + $0xa8] sm:$0x1] %vm36, 0.0
  %45 = vst.msk [vmem:[%s35 + $0xc0] sm:$0x1] %vm36, 0.0
  %46 = vst.msk [vmem:[%s35 + $0xd8] sm:$0x1] %vm36, 0.0
  %47 = vst.msk [vmem:[%s35 + $0xf0] sm:$0x1] %vm36, 0.0
  %48 = vst.msk [vmem:[%s35 + $0x108] sm:$0x1] %vm36, 0.0
  %49 = vst.msk [vmem:[%s35 + $0x120] sm:$0x1] %vm36, 0.0
  %50 = vst.msk [vmem:[%s35 + $0x138] sm:$0x1] %vm36, 0.0
  %51 = vst.msk [vmem:[%s35 + $0x150] sm:$0x1] %vm36, 0.0
  %52 = vst.msk [vmem:[%s35 + $0x168] sm:$0x1] %vm36, 0.0
  %53 = vst.msk [vmem:[%s35 + $0x11] sm:$0x1] %vm36, 0.0
  %54 = vst.msk [vmem:[%s35 + $0x29] sm:$0x1] %vm36, 0.0
  %55 = vst.msk [vmem:[%s35 + $0x41] sm:$0x1] %vm36, 0.0
  %56 = vst.msk [vmem:[%s35 + $0x59] sm:$0x1] %vm36, 0.0
  %57 = vst.msk [vmem:[%s35 + $0x71] sm:$0x1] %vm36, 0.0
  %58 = vst.msk [vmem:[%s35 + $0x89] sm:$0x1] %vm36, 0.0
  %59 = vst.msk [vmem:[%s35 + $0xa1] sm:$0x1] %vm36, 0.0
  %60 = vst.msk [vmem:[%s35 + $0xb9] sm:$0x1] %vm36, 0.0
  %61 = vst.msk [vmem:[%s35 + $0xd1] sm:$0x1] %vm36, 0.0
  %62 = vst.msk [vmem:[%s35 + $0xe9] sm:$0x1] %vm36, 0.0
  %63 = vst.msk [vmem:[%s35 + $0x101] sm:$0x1] %vm36, 0.0
  %64 = vst.msk [vmem:[%s35 + $0x119] sm:$0x1] %vm36, 0.0
  %65 = vst.msk [vmem:[%s35 + $0x131] sm:$0x1] %vm36, 0.0
  %66 = vst.msk [vmem:[%s35 + $0x149] sm:$0x1] %vm36, 0.0
  %67 = vst.msk [vmem:[%s35 + $0x161] sm:$0x1] %vm36, 0.0
  %68 = vst.msk [vmem:[%s35 + $0x179] sm:$0x1] %vm36, 0.0
  %69 = vst.msk [vmem:[#allocation3] sm:$0xff] %vm26, 0.0
  %70 = vst.msk [vmem:[#allocation3 + $0x8] sm:$0xff] %vm26, 0.0
  %71 = vst.msk [vmem:[#allocation3 + $0x10] sm:$0x3] %vm29, 0.0
  %s72 = scalar_lea.vmem [#allocation3], 408
  %73 = vst.msk [vmem:[%s72] sm:$0xff] %vm26, 0.0
  %74 = vst.msk [vmem:[%s72 + $0x8] sm:$0xff] %vm26, 0.0
  %75 = vst.msk [vmem:[%s72 + $0x10] sm:$0x3] %vm29, 0.0
  %s76 = scalar_lea.vmem [#allocation3], 24
  %77 = vst.msk [vmem:[%s76] sm:$0x1] %vm36, 0.0
  %78 = vst.msk [vmem:[%s76 + $0x18] sm:$0x1] %vm36, 0.0
  %79 = vst.msk [vmem:[%s76 + $0x30] sm:$0x1] %vm36, 0.0
  %80 = vst.msk [vmem:[%s76 + $0x48] sm:$0x1] %vm36, 0.0
  %81 = vst.msk [vmem:[%s76 + $0x60] sm:$0x1] %vm36, 0.0
  %82 = vst.msk [vmem:[%s76 + $0x78] sm:$0x1] %vm36, 0.0
  %83 = vst.msk [vmem:[%s76 + $0x90] sm:$0x1] %vm36, 0.0
  %84 = vst.msk [vmem:[%s76 + $0xa8] sm:$0x1] %vm36, 0.0
  %85 = vst.msk [vmem:[%s76 + $0xc0] sm:$0x1] %vm36, 0.0
  %86 = vst.msk [vmem:[%s76 + $0xd8] sm:$0x1] %vm36, 0.0
  %87 = vst.msk [vmem:[%s76 + $0xf0] sm:$0x1] %vm36, 0.0
  %88 = vst.msk [vmem:[%s76 + $0x108] sm:$0x1] %vm36, 0.0
  %89 = vst.msk [vmem:[%s76 + $0x120] sm:$0x1] %vm36, 0.0
  %90 = vst.msk [vmem:[%s76 + $0x138] sm:$0x1] %vm36, 0.0
  %91 = vst.msk [vmem:[%s76 + $0x150] sm:$0x1] %vm36, 0.0
  %92 = vst.msk [vmem:[%s76 + $0x168] sm:$0x1] %vm36, 0.0
  %93 = vst.msk [vmem:[%s76 + $0x11] sm:$0x1] %vm36, 0.0
  %94 = vst.msk [vmem:[%s76 + $0x29] sm:$0x1] %vm36, 0.0
  %95 = vst.msk [vmem:[%s76 + $0x41] sm:$0x1] %vm36, 0.0
  %96 = vst.msk [vmem:[%s76 + $0x59] sm:$0x1] %vm36, 0.0
  %97 = vst.msk [vmem:[%s76 + $0x71] sm:$0x1] %vm36, 0.0
  %98 = vst.msk [vmem:[%s76 + $0x89] sm:$0x1] %vm36, 0.0
  %99 = vst.msk [vmem:[%s76 + $0xa1] sm:$0x1] %vm36, 0.0
  %100 = vst.msk [vmem:[%s76 + $0xb9] sm:$0x1] %vm36, 0.0
  %101 = vst.msk [vmem:[%s76 + $0xd1] sm:$0x1] %vm36, 0.0
  %102 = vst.msk [vmem:[%s76 + $0xe9] sm:$0x1] %vm36, 0.0
  %103 = vst.msk [vmem:[%s76 + $0x101] sm:$0x1] %vm36, 0.0
  %104 = vst.msk [vmem:[%s76 + $0x119] sm:$0x1] %vm36, 0.0
  %105 = vst.msk [vmem:[%s76 + $0x131] sm:$0x1] %vm36, 0.0
  %106 = vst.msk [vmem:[%s76 + $0x149] sm:$0x1] %vm36, 0.0
  %107 = vst.msk [vmem:[%s76 + $0x161] sm:$0x1] %vm36, 0.0
  %108 = vst.msk [vmem:[%s76 + $0x179] sm:$0x1] %vm36, 0.0
  %v109 = vld [vmem:[%s0] sm:$0xff]
  %v110 = vld [vmem:[%s0 + $0x8] sm:$0xff]
  %v111 = vld [vmem:[%s0 + $0x10] sm:$0xff]
  %v112 = vld [vmem:[%s0 + $0x18] sm:$0xff]
  %v113 = vld [vmem:[%s0 + $0x20] sm:$0xff]
  %v114 = vld [vmem:[%s0 + $0x28] sm:$0xff]
  %v115 = vld [vmem:[%s0 + $0x30] sm:$0xff]
  %v116 = vld [vmem:[%s0 + $0x38] sm:$0xff]
  %v117 = vld [vmem:[%s0 + $0x40] sm:$0xff]
  %v118 = vld [vmem:[%s0 + $0x48] sm:$0xff]
  %v119 = vld [vmem:[%s0 + $0x50] sm:$0xff]
  %v120 = vld [vmem:[%s0 + $0x58] sm:$0xff]
  %v121 = vld [vmem:[%s0 + $0x60] sm:$0xff]
  %v122 = vld [vmem:[%s0 + $0x68] sm:$0xff]
  %v123 = vld [vmem:[%s0 + $0x70] sm:$0xff]
  %v124 = vld [vmem:[%s0 + $0x78] sm:$0xff]
  %v125 = vld [vmem:[%s0 + $0x80] sm:$0xff]
  %v126 = vld [vmem:[%s0 + $0x88] sm:$0xff]
  %v127 = vld [vmem:[%s0 + $0x90] sm:$0xff]
  %v128 = vld [vmem:[%s0 + $0x98] sm:$0xff]
  %v129 = vld [vmem:[%s0 + $0xa0] sm:$0xff]
  %v130 = vld [vmem:[%s0 + $0xa8] sm:$0xff]
  %v131 = vld [vmem:[%s0 + $0xb0] sm:$0xff]
  %v132 = vld [vmem:[%s0 + $0xb8] sm:$0xff]
  %v133 = vld [vmem:[%s0 + $0xc0] sm:$0xff]
  %v134 = vld [vmem:[%s0 + $0xc8] sm:$0xff]
  %v135 = vld [vmem:[%s0 + $0xd0] sm:$0xff]
  %v136 = vld [vmem:[%s0 + $0xd8] sm:$0xff]
  %v137 = vld [vmem:[%s0 + $0xe0] sm:$0xff]
  %v138 = vld [vmem:[%s0 + $0xe8] sm:$0xff]
  %v139 = vld [vmem:[%s0 + $0xf0] sm:$0xff]
  %v140 = vld [vmem:[%s0 + $0xf8] sm:$0xff]
  %141 = vst.msk [vmem:[%s35 + $0x1] sm:$0xff] %vm26, %v109
  %142 = vst.msk [vmem:[%s35 + $0x9] sm:$0xff] %vm26, %v110
  %143 = vst.msk [vmem:[%s35 + $0x19] sm:$0xff] %vm26, %v111
  %144 = vst.msk [vmem:[%s35 + $0x21] sm:$0xff] %vm26, %v112
  %145 = vst.msk [vmem:[%s35 + $0x31] sm:$0xff] %vm26, %v113
  %146 = vst.msk [vmem:[%s35 + $0x39] sm:$0xff] %vm26, %v114
  %147 = vst.msk [vmem:[%s35 + $0x49] sm:$0xff] %vm26, %v115
  %148 = vst.msk [vmem:[%s35 + $0x51] sm:$0xff] %vm26, %v116
  %149 = vst.msk [vmem:[%s35 + $0x61] sm:$0xff] %vm26, %v117
  %150 = vst.msk [vmem:[%s35 + $0x69] sm:$0xff] %vm26, %v118
  %151 = vst.msk [vmem:[%s35 + $0x79] sm:$0xff] %vm26, %v119
  %152 = vst.msk [vmem:[%s35 + $0x81] sm:$0xff] %vm26, %v120
  %153 = vst.msk [vmem:[%s35 + $0x91] sm:$0xff] %vm26, %v121
  %154 = vst.msk [vmem:[%s35 + $0x99] sm:$0xff] %vm26, %v122
  %155 = vst.msk [vmem:[%s35 + $0xa9] sm:$0xff] %vm26, %v123
  %156 = vst.msk [vmem:[%s35 + $0xb1] sm:$0xff] %vm26, %v124
  %157 = vst.msk [vmem:[%s35 + $0xc1] sm:$0xff] %vm26, %v125
  %158 = vst.msk [vmem:[%s35 + $0xc9] sm:$0xff] %vm26, %v126
  %159 = vst.msk [vmem:[%s35 + $0xd9] sm:$0xff] %vm26, %v127
  %160 = vst.msk [vmem:[%s35 + $0xe1] sm:$0xff] %vm26, %v128
  %161 = vst.msk [vmem:[%s35 + $0xf1] sm:$0xff] %vm26, %v129
  %162 = vst.msk [vmem:[%s35 + $0xf9] sm:$0xff] %vm26, %v130
  %163 = vst.msk [vmem:[%s35 + $0x109] sm:$0xff] %vm26, %v131
  %164 = vst.msk [vmem:[%s35 + $0x111] sm:$0xff] %vm26, %v132
  %165 = vst.msk [vmem:[%s35 + $0x121] sm:$0xff] %vm26, %v133
  %166 = vst.msk [vmem:[%s35 + $0x129] sm:$0xff] %vm26, %v134
  %167 = vst.msk [vmem:[%s35 + $0x139] sm:$0xff] %vm26, %v135
  %168 = vst.msk [vmem:[%s35 + $0x141] sm:$0xff] %vm26, %v136
  %169 = vst.msk [vmem:[%s35 + $0x151] sm:$0xff] %vm26, %v137
  %170 = vst.msk [vmem:[%s35 + $0x159] sm:$0xff] %vm26, %v138
  %171 = vst.msk [vmem:[%s35 + $0x169] sm:$0xff] %vm26, %v139
  %172 = vst.msk [vmem:[%s35 + $0x171] sm:$0xff] %vm26, %v140
  %v173 = vld [vmem:[#allocation2] sm:$0xff]
  %v174 = vld [vmem:[#allocation2 + $0x8] sm:$0xff]
  %v175 = vld [vmem:[#allocation2 + $0x18] sm:$0xff]
  %v176 = vld [vmem:[#allocation2 + $0x20] sm:$0xff]
  %v177 = vld [vmem:[#allocation2 + $0x30] sm:$0xff]
  %v178 = vld [vmem:[#allocation2 + $0x38] sm:$0xff]
  %v179 = vld [vmem:[#allocation2 + $0x48] sm:$0xff]
  %v180 = vld [vmem:[#allocation2 + $0x50] sm:$0xff]
  %v181 = vld [vmem:[#allocation2 + $0x60] sm:$0xff]
  %v182 = vld [vmem:[#allocation2 + $0x68] sm:$0xff]
  %v183 = vld [vmem:[#allocation2 + $0x78] sm:$0xff]
  %v184 = vld [vmem:[#allocation2 + $0x80] sm:$0xff]
  %v185 = vld [vmem:[#allocation2 + $0x90] sm:$0xff]
  %v186 = vld [vmem:[#allocation2 + $0x98] sm:$0xff]
  %v187 = vld [vmem:[#allocation2 + $0xa8] sm:$0xff]
  %v188 = vld [vmem:[#allocation2 + $0xb0] sm:$0xff]
  %v189 = vld [vmem:[#allocation2 + $0xc0] sm:$0xff]
  %v190 = vld [vmem:[#allocation2 + $0xc8] sm:$0xff]
  %v191 = vld [vmem:[#allocation2 + $0xd8] sm:$0xff]
  %v192 = vld [vmem:[#allocation2 + $0xe0] sm:$0xff]
  %v193 = vld [vmem:[#allocation2 + $0xf0] sm:$0xff]
  %v194 = vld [vmem:[#allocation2 + $0xf8] sm:$0xff]
  %v195 = vld [vmem:[#allocation2 + $0x108] sm:$0xff]
  %v196 = vld [vmem:[#allocation2 + $0x110] sm:$0xff]
  %v197 = vld [vmem:[#allocation2 + $0x120] sm:$0xff]
  %v198 = vld [vmem:[#allocation2 + $0x128] sm:$0xff]
  %v199 = vld [vmem:[#allocation2 + $0x138] sm:$0xff]
  %v200 = vld [vmem:[#allocation2 + $0x140] sm:$0xff]
  %v201 = vld [vmem:[#allocation2 + $0x150] sm:$0xff]
  %v202 = vld [vmem:[#allocation2 + $0x158] sm:$0xff]
  %v203 = vld [vmem:[#allocation2 + $0x168] sm:$0xff]
  %v204 = vld [vmem:[#allocation2 + $0x170] sm:$0xff]
  %205 = vst.msk [vmem:[#allocation4] sm:$0xff] %vm26, %v173
  %206 = vst.msk [vmem:[#allocation4 + $0x8] sm:$0xff] %vm26, %v174
  %207 = vst.msk [vmem:[#allocation4 + $0x10] sm:$0xff] %vm26, %v175
  %208 = vst.msk [vmem:[#allocation4 + $0x18] sm:$0xff] %vm26, %v176
  %209 = vst.msk [vmem:[#allocation4 + $0x20] sm:$0xff] %vm26, %v177
  %210 = vst.msk [vmem:[#allocation4 + $0x28] sm:$0xff] %vm26, %v178
  %211 = vst.msk [vmem:[#allocation4 + $0x30] sm:$0xff] %vm26, %v179
  %212 = vst.msk [vmem:[#allocation4 + $0x38] sm:$0xff] %vm26, %v180
  %213 = vst.msk [vmem:[#allocation4 + $0x40] sm:$0xff] %vm26, %v181
  %214 = vst.msk [vmem:[#allocation4 + $0x48] sm:$0xff] %vm26, %v182
  %215 = vst.msk [vmem:[#allocation4 + $0x50] sm:$0xff] %vm26, %v183
  %216 = vst.msk [vmem:[#allocation4 + $0x58] sm:$0xff] %vm26, %v184
  %217 = vst.msk [vmem:[#allocation4 + $0x60] sm:$0xff] %vm26, %v185
  %218 = vst.msk [vmem:[#allocation4 + $0x68] sm:$0xff] %vm26, %v186
  %219 = vst.msk [vmem:[#allocation4 + $0x70] sm:$0xff] %vm26, %v187
  %220 = vst.msk [vmem:[#allocation4 + $0x78] sm:$0xff] %vm26, %v188
  %221 = vst.msk [vmem:[#allocation4 + $0x80] sm:$0xff] %vm26, %v189
  %222 = vst.msk [vmem:[#allocation4 + $0x88] sm:$0xff] %vm26, %v190
  %223 = vst.msk [vmem:[#allocation4 + $0x90] sm:$0xff] %vm26, %v191
  %224 = vst.msk [vmem:[#allocation4 + $0x98] sm:$0xff] %vm26, %v192
  %225 = vst.msk [vmem:[#allocation4 + $0xa0] sm:$0xff] %vm26, %v193
  %226 = vst.msk [vmem:[#allocation4 + $0xa8] sm:$0xff] %vm26, %v194
  %227 = vst.msk [vmem:[#allocation4 + $0xb0] sm:$0xff] %vm26, %v195
  %228 = vst.msk [vmem:[#allocation4 + $0xb8] sm:$0xff] %vm26, %v196
  %229 = vst.msk [vmem:[#allocation4 + $0xc0] sm:$0xff] %vm26, %v197
  %230 = vst.msk [vmem:[#allocation4 + $0xc8] sm:$0xff] %vm26, %v198
  %231 = vst.msk [vmem:[#allocation4 + $0xd0] sm:$0xff] %vm26, %v199
  %232 = vst.msk [vmem:[#allocation4 + $0xd8] sm:$0xff] %vm26, %v200
  %233 = vst.msk [vmem:[#allocation4 + $0xe0] sm:$0xff] %vm26, %v201
  %234 = vst.msk [vmem:[#allocation4 + $0xe8] sm:$0xff] %vm26, %v202
  %235 = vst.msk [vmem:[#allocation4 + $0xf0] sm:$0xff] %vm26, %v203
  %236 = vst.msk [vmem:[#allocation4 + $0xf8] sm:$0xff] %vm26, %v204
  %v237 = vld [vmem:[#allocation2 + $0x1] sm:$0xff]
  %v238 = vld [vmem:[#allocation2 + $0x9] sm:$0xff]
  %v239 = vld [vmem:[#allocation2 + $0x19] sm:$0xff]
  %v240 = vld [vmem:[#allocation2 + $0x21] sm:$0xff]
  %v241 = vld [vmem:[#allocation2 + $0x31] sm:$0xff]
  %v242 = vld [vmem:[#allocation2 + $0x39] sm:$0xff]
  %v243 = vld [vmem:[#allocation2 + $0x49] sm:$0xff]
  %v244 = vld [vmem:[#allocation2 + $0x51] sm:$0xff]
  %v245 = vld [vmem:[#allocation2 + $0x61] sm:$0xff]
  %v246 = vld [vmem:[#allocation2 + $0x69] sm:$0xff]
  %v247 = vld [vmem:[#allocation2 + $0x79] sm:$0xff]
  %v248 = vld [vmem:[#allocation2 + $0x81] sm:$0xff]
  %v249 = vld [vmem:[#allocation2 + $0x91] sm:$0xff]
  %v250 = vld [vmem:[#allocation2 + $0x99] sm:$0xff]
  %v251 = vld [vmem:[#allocation2 + $0xa9] sm:$0xff]
  %v252 = vld [vmem:[#allocation2 + $0xb1] sm:$0xff]
  %v253 = vld [vmem:[#allocation2 + $0xc1] sm:$0xff]
  %v254 = vld [vmem:[#allocation2 + $0xc9] sm:$0xff]
  %v255 = vld [vmem:[#allocation2 + $0xd9] sm:$0xff]
  %v256 = vld [vmem:[#allocation2 + $0xe1] sm:$0xff]
  %v257 = vld [vmem:[#allocation2 + $0xf1] sm:$0xff]
  %v258 = vld [vmem:[#allocation2 + $0xf9] sm:$0xff]
  %v259 = vld [vmem:[#allocation2 + $0x109] sm:$0xff]
  %v260 = vld [vmem:[#allocation2 + $0x111] sm:$0xff]
  %v261 = vld [vmem:[#allocation2 + $0x121] sm:$0xff]
  %v262 = vld [vmem:[#allocation2 + $0x129] sm:$0xff]
  %v263 = vld [vmem:[#allocation2 + $0x139] sm:$0xff]
  %v264 = vld [vmem:[#allocation2 + $0x141] sm:$0xff]
  %v265 = vld [vmem:[#allocation2 + $0x151] sm:$0xff]
  %v266 = vld [vmem:[#allocation2 + $0x159] sm:$0xff]
  %v267 = vld [vmem:[#allocation2 + $0x169] sm:$0xff]
  %v268 = vld [vmem:[#allocation2 + $0x171] sm:$0xff]
  %301 = vrot.lane.b32.xlu0 %v237, 4
  %v302 = vpop.permute.xlu0 %301
  %303 = vrot.lane.b32.xlu0 %v238, 4
  %v304 = vpop.permute.xlu0 %303
  %305 = vrot.lane.b32.xlu0 %v239, 4
  %v306 = vpop.permute.xlu0 %305
  %307 = vrot.lane.b32.xlu0 %v240, 4
  %v308 = vpop.permute.xlu0 %307
  %309 = vrot.lane.b32.xlu0 %v241, 4
  %v310 = vpop.permute.xlu0 %309
  %311 = vrot.lane.b32.xlu0 %v242, 4
  %v312 = vpop.permute.xlu0 %311
  %313 = vrot.lane.b32.xlu0 %v243, 4
  %v314 = vpop.permute.xlu0 %313
  %315 = vrot.lane.b32.xlu0 %v244, 4
  %v316 = vpop.permute.xlu0 %315
  %317 = vrot.lane.b32.xlu0 %v245, 4
  %v318 = vpop.permute.xlu0 %317
  %319 = vrot.lane.b32.xlu0 %v246, 4
  %v320 = vpop.permute.xlu0 %319
  %321 = vrot.lane.b32.xlu0 %v247, 4
  %v322 = vpop.permute.xlu0 %321
  %323 = vrot.lane.b32.xlu0 %v248, 4
  %v324 = vpop.permute.xlu0 %323
  %325 = vrot.lane.b32.xlu0 %v249, 4
  %v326 = vpop.permute.xlu0 %325
  %327 = vrot.lane.b32.xlu0 %v250, 4
  %v328 = vpop.permute.xlu0 %327
  %329 = vrot.lane.b32.xlu0 %v251, 4
  %v330 = vpop.permute.xlu0 %329
  %331 = vrot.lane.b32.xlu0 %v252, 4
  %v332 = vpop.permute.xlu0 %331
  %333 = vrot.lane.b32.xlu0 %v253, 4
  %v334 = vpop.permute.xlu0 %333
  %335 = vrot.lane.b32.xlu0 %v254, 4
  %v336 = vpop.permute.xlu0 %335
  %337 = vrot.lane.b32.xlu0 %v255, 4
  %v338 = vpop.permute.xlu0 %337
  %339 = vrot.lane.b32.xlu0 %v256, 4
  %v340 = vpop.permute.xlu0 %339
  %341 = vrot.lane.b32.xlu0 %v257, 4
  %v342 = vpop.permute.xlu0 %341
  %343 = vrot.lane.b32.xlu0 %v258, 4
  %v344 = vpop.permute.xlu0 %343
  %345 = vrot.lane.b32.xlu0 %v259, 4
  %v346 = vpop.permute.xlu0 %345
  %347 = vrot.lane.b32.xlu0 %v260, 4
  %v348 = vpop.permute.xlu0 %347
  %349 = vrot.lane.b32.xlu0 %v261, 4
  %v350 = vpop.permute.xlu0 %349
  %351 = vrot.lane.b32.xlu0 %v262, 4
  %v352 = vpop.permute.xlu0 %351
  %353 = vrot.lane.b32.xlu0 %v263, 4
  %v354 = vpop.permute.xlu0 %353
  %355 = vrot.lane.b32.xlu0 %v264, 4
  %v356 = vpop.permute.xlu0 %355
  %357 = vrot.lane.b32.xlu0 %v265, 4
  %v358 = vpop.permute.xlu0 %357
  %359 = vrot.lane.b32.xlu0 %v266, 4
  %v360 = vpop.permute.xlu0 %359
  %361 = vrot.lane.b32.xlu0 %v267, 4
  %v362 = vpop.permute.xlu0 %361
  %363 = vrot.lane.b32.xlu0 %v268, 4
  %v364 = vpop.permute.xlu0 %363
  %vm397 = vcmask 64544
  %398 = vst.msk [vmem:[#allocation4] sm:$0xff] %vm397, %v302
  %399 = vst.msk [vmem:[#allocation4 + $0x8] sm:$0xff] %vm397, %v304
  %400 = vst.msk [vmem:[#allocation4 + $0x10] sm:$0xff] %vm397, %v306
  %401 = vst.msk [vmem:[#allocation4 + $0x18] sm:$0xff] %vm397, %v308
  %402 = vst.msk [vmem:[#allocation4 + $0x20] sm:$0xff] %vm397, %v310
  %403 = vst.msk [vmem:[#allocation4 + $0x28] sm:$0xff] %vm397, %v312
  %404 = vst.msk [vmem:[#allocation4 + $0x30] sm:$0xff] %vm397, %v314
  %405 = vst.msk [vmem:[#allocation4 + $0x38] sm:$0xff] %vm397, %v316
  %406 = vst.msk [vmem:[#allocation4 + $0x40] sm:$0xff] %vm397, %v318
  %407 = vst.msk [vmem:[#allocation4 + $0x48] sm:$0xff] %vm397, %v320
  %408 = vst.msk [vmem:[#allocation4 + $0x50] sm:$0xff] %vm397, %v322
  %409 = vst.msk [vmem:[#allocation4 + $0x58] sm:$0xff] %vm397, %v324
  %410 = vst.msk [vmem:[#allocation4 + $0x60] sm:$0xff] %vm397, %v326
  %411 = vst.msk [vmem:[#allocation4 + $0x68] sm:$0xff] %vm397, %v328
  %412 = vst.msk [vmem:[#allocation4 + $0x70] sm:$0xff] %vm397, %v330
  %413 = vst.msk [vmem:[#allocation4 + $0x78] sm:$0xff] %vm397, %v332
  %414 = vst.msk [vmem:[#allocation4 + $0x80] sm:$0xff] %vm397, %v334
  %415 = vst.msk [vmem:[#allocation4 + $0x88] sm:$0xff] %vm397, %v336
  %416 = vst.msk [vmem:[#allocation4 + $0x90] sm:$0xff] %vm397, %v338
  %417 = vst.msk [vmem:[#allocation4 + $0x98] sm:$0xff] %vm397, %v340
  %418 = vst.msk [vmem:[#allocation4 + $0xa0] sm:$0xff] %vm397, %v342
  %419 = vst.msk [vmem:[#allocation4 + $0xa8] sm:$0xff] %vm397, %v344
  %420 = vst.msk [vmem:[#allocation4 + $0xb0] sm:$0xff] %vm397, %v346
  %421 = vst.msk [vmem:[#allocation4 + $0xb8] sm:$0xff] %vm397, %v348
  %422 = vst.msk [vmem:[#allocation4 + $0xc0] sm:$0xff] %vm397, %v350
  %423 = vst.msk [vmem:[#allocation4 + $0xc8] sm:$0xff] %vm397, %v352
  %424 = vst.msk [vmem:[#allocation4 + $0xd0] sm:$0xff] %vm397, %v354
  %425 = vst.msk [vmem:[#allocation4 + $0xd8] sm:$0xff] %vm397, %v356
  %426 = vst.msk [vmem:[#allocation4 + $0xe0] sm:$0xff] %vm397, %v358
  %427 = vst.msk [vmem:[#allocation4 + $0xe8] sm:$0xff] %vm397, %v360
  %428 = vst.msk [vmem:[#allocation4 + $0xf0] sm:$0xff] %vm397, %v362
  %429 = vst.msk [vmem:[#allocation4 + $0xf8] sm:$0xff] %vm397, %v364
  %v430 = vld [vmem:[#allocation2 + $0x2] sm:$0xff]
  %v431 = vld [vmem:[#allocation2 + $0xa] sm:$0xff]
  %v432 = vld [vmem:[#allocation2 + $0x1a] sm:$0xff]
  %v433 = vld [vmem:[#allocation2 + $0x22] sm:$0xff]
  %v434 = vld [vmem:[#allocation2 + $0x32] sm:$0xff]
  %v435 = vld [vmem:[#allocation2 + $0x3a] sm:$0xff]
  %v436 = vld [vmem:[#allocation2 + $0x4a] sm:$0xff]
  %v437 = vld [vmem:[#allocation2 + $0x52] sm:$0xff]
  %v438 = vld [vmem:[#allocation2 + $0x62] sm:$0xff]
  %v439 = vld [vmem:[#allocation2 + $0x6a] sm:$0xff]
  %v440 = vld [vmem:[#allocation2 + $0x7a] sm:$0xff]
  %v441 = vld [vmem:[#allocation2 + $0x82] sm:$0xff]
  %v442 = vld [vmem:[#allocation2 + $0x92] sm:$0xff]
  %v443 = vld [vmem:[#allocation2 + $0x9a] sm:$0xff]
  %v444 = vld [vmem:[#allocation2 + $0xaa] sm:$0xff]
  %v445 = vld [vmem:[#allocation2 + $0xb2] sm:$0xff]
  %v446 = vld [vmem:[#allocation2 + $0xc2] sm:$0xff]
  %v447 = vld [vmem:[#allocation2 + $0xca] sm:$0xff]
  %v448 = vld [vmem:[#allocation2 + $0xda] sm:$0xff]
  %v449 = vld [vmem:[#allocation2 + $0xe2] sm:$0xff]
  %v450 = vld [vmem:[#allocation2 + $0xf2] sm:$0xff]
  %v451 = vld [vmem:[#allocation2 + $0xfa] sm:$0xff]
  %v452 = vld [vmem:[#allocation2 + $0x10a] sm:$0xff]
  %v453 = vld [vmem:[#allocation2 + $0x112] sm:$0xff]
  %v454 = vld [vmem:[#allocation2 + $0x122] sm:$0xff]
  %v455 = vld [vmem:[#allocation2 + $0x12a] sm:$0xff]
  %v456 = vld [vmem:[#allocation2 + $0x13a] sm:$0xff]
  %v457 = vld [vmem:[#allocation2 + $0x142] sm:$0xff]
  %v458 = vld [vmem:[#allocation2 + $0x152] sm:$0xff]
  %v459 = vld [vmem:[#allocation2 + $0x15a] sm:$0xff]
  %v460 = vld [vmem:[#allocation2 + $0x16a] sm:$0xff]
  %v461 = vld [vmem:[#allocation2 + $0x172] sm:$0xff]
  %494 = vrot.lane.b32.xlu0 %v430, 8
  %v495 = vpop.permute.xlu0 %494
  %496 = vrot.lane.b32.xlu0 %v431, 8
  %v497 = vpop.permute.xlu0 %496
  %498 = vrot.lane.b32.xlu0 %v432, 8
  %v499 = vpop.permute.xlu0 %498
  %500 = vrot.lane.b32.xlu0 %v433, 8
  %v501 = vpop.permute.xlu0 %500
  %502 = vrot.lane.b32.xlu0 %v434, 8
  %v503 = vpop.permute.xlu0 %502
  %504 = vrot.lane.b32.xlu0 %v435, 8
  %v505 = vpop.permute.xlu0 %504
  %506 = vrot.lane.b32.xlu0 %v436, 8
  %v507 = vpop.permute.xlu0 %506
  %508 = vrot.lane.b32.xlu0 %v437, 8
  %v509 = vpop.permute.xlu0 %508
  %510 = vrot.lane.b32.xlu0 %v438, 8
  %v511 = vpop.permute.xlu0 %510
  %512 = vrot.lane.b32.xlu0 %v439, 8
  %v513 = vpop.permute.xlu0 %512
  %514 = vrot.lane.b32.xlu0 %v440, 8
  %v515 = vpop.permute.xlu0 %514
  %516 = vrot.lane.b32.xlu0 %v441, 8
  %v517 = vpop.permute.xlu0 %516
  %518 = vrot.lane.b32.xlu0 %v442, 8
  %v519 = vpop.permute.xlu0 %518
  %520 = vrot.lane.b32.xlu0 %v443, 8
  %v521 = vpop.permute.xlu0 %520
  %522 = vrot.lane.b32.xlu0 %v444, 8
  %v523 = vpop.permute.xlu0 %522
  %524 = vrot.lane.b32.xlu0 %v445, 8
  %v525 = vpop.permute.xlu0 %524
  %526 = vrot.lane.b32.xlu0 %v446, 8
  %v527 = vpop.permute.xlu0 %526
  %528 = vrot.lane.b32.xlu0 %v447, 8
  %v529 = vpop.permute.xlu0 %528
  %530 = vrot.lane.b32.xlu0 %v448, 8
  %v531 = vpop.permute.xlu0 %530
  %532 = vrot.lane.b32.xlu0 %v449, 8
  %v533 = vpop.permute.xlu0 %532
  %534 = vrot.lane.b32.xlu0 %v450, 8
  %v535 = vpop.permute.xlu0 %534
  %536 = vrot.lane.b32.xlu0 %v451, 8
  %v537 = vpop.permute.xlu0 %536
  %538 = vrot.lane.b32.xlu0 %v452, 8
  %v539 = vpop.permute.xlu0 %538
  %540 = vrot.lane.b32.xlu0 %v453, 8
  %v541 = vpop.permute.xlu0 %540
  %542 = vrot.lane.b32.xlu0 %v454, 8
  %v543 = vpop.permute.xlu0 %542
  %544 = vrot.lane.b32.xlu0 %v455, 8
  %v545 = vpop.permute.xlu0 %544
  %546 = vrot.lane.b32.xlu0 %v456, 8
  %v547 = vpop.permute.xlu0 %546
  %548 = vrot.lane.b32.xlu0 %v457, 8
  %v549 = vpop.permute.xlu0 %548
  %550 = vrot.lane.b32.xlu0 %v458, 8
  %v551 = vpop.permute.xlu0 %550
  %552 = vrot.lane.b32.xlu0 %v459, 8
  %v553 = vpop.permute.xlu0 %552
  %554 = vrot.lane.b32.xlu0 %v460, 8
  %v555 = vpop.permute.xlu0 %554
  %556 = vrot.lane.b32.xlu0 %v461, 8
  %v557 = vpop.permute.xlu0 %556
  %vm590 = vcmask 97344
  %591 = vst.msk [vmem:[#allocation4] sm:$0xff] %vm590, %v495
  %592 = vst.msk [vmem:[#allocation4 + $0x8] sm:$0xff] %vm590, %v497
  %593 = vst.msk [vmem:[#allocation4 + $0x10] sm:$0xff] %vm590, %v499
  %594 = vst.msk [vmem:[#allocation4 + $0x18] sm:$0xff] %vm590, %v501
  %595 = vst.msk [vmem:[#allocation4 + $0x20] sm:$0xff] %vm590, %v503
  %596 = vst.msk [vmem:[#allocation4 + $0x28] sm:$0xff] %vm590, %v505
  %597 = vst.msk [vmem:[#allocation4 + $0x30] sm:$0xff] %vm590, %v507
  %598 = vst.msk [vmem:[#allocation4 + $0x38] sm:$0xff] %vm590, %v509
  %599 = vst.msk [vmem:[#allocation4 + $0x40] sm:$0xff] %vm590, %v511
  %600 = vst.msk [vmem:[#allocation4 + $0x48] sm:$0xff] %vm590, %v513
  %601 = vst.msk [vmem:[#allocation4 + $0x50] sm:$0xff] %vm590, %v515
  %602 = vst.msk [vmem:[#allocation4 + $0x58] sm:$0xff] %vm590, %v517
  %603 = vst.msk [vmem:[#allocation4 + $0x60] sm:$0xff] %vm590, %v519
  %604 = vst.msk [vmem:[#allocation4 + $0x68] sm:$0xff] %vm590, %v521
  %605 = vst.msk [vmem:[#allocation4 + $0x70] sm:$0xff] %vm590, %v523
  %606 = vst.msk [vmem:[#allocation4 + $0x78] sm:$0xff] %vm590, %v525
  %607 = vst.msk [vmem:[#allocation4 + $0x80] sm:$0xff] %vm590, %v527
  %608 = vst.msk [vmem:[#allocation4 + $0x88] sm:$0xff] %vm590, %v529
  %609 = vst.msk [vmem:[#allocation4 + $0x90] sm:$0xff] %vm590, %v531
  %610 = vst.msk [vmem:[#allocation4 + $0x98] sm:$0xff] %vm590, %v533
  %611 = vst.msk [vmem:[#allocation4 + $0xa0] sm:$0xff] %vm590, %v535
  %612 = vst.msk [vmem:[#allocation4 + $0xa8] sm:$0xff] %vm590, %v537
  %613 = vst.msk [vmem:[#allocation4 + $0xb0] sm:$0xff] %vm590, %v539
  %614 = vst.msk [vmem:[#allocation4 + $0xb8] sm:$0xff] %vm590, %v541
  %615 = vst.msk [vmem:[#allocation4 + $0xc0] sm:$0xff] %vm590, %v543
  %616 = vst.msk [vmem:[#allocation4 + $0xc8] sm:$0xff] %vm590, %v545
  %617 = vst.msk [vmem:[#allocation4 + $0xd0] sm:$0xff] %vm590, %v547
  %618 = vst.msk [vmem:[#allocation4 + $0xd8] sm:$0xff] %vm590, %v549
  %619 = vst.msk [vmem:[#allocation4 + $0xe0] sm:$0xff] %vm590, %v551
  %620 = vst.msk [vmem:[#allocation4 + $0xe8] sm:$0xff] %vm590, %v553
  %621 = vst.msk [vmem:[#allocation4 + $0xf0] sm:$0xff] %vm590, %v555
  %622 = vst.msk [vmem:[#allocation4 + $0xf8] sm:$0xff] %vm590, %v557
  %v623 = vld [vmem:[%s35] sm:$0xff]
  %v624 = vld [vmem:[%s35 + $0x8] sm:$0xff]
  %v625 = vld [vmem:[%s35 + $0x18] sm:$0xff]
  %v626 = vld [vmem:[%s35 + $0x20] sm:$0xff]
  %v627 = vld [vmem:[%s35 + $0x30] sm:$0xff]
  %v628 = vld [vmem:[%s35 + $0x38] sm:$0xff]
  %v629 = vld [vmem:[%s35 + $0x48] sm:$0xff]
  %v630 = vld [vmem:[%s35 + $0x50] sm:$0xff]
  %v631 = vld [vmem:[%s35 + $0x60] sm:$0xff]
  %v632 = vld [vmem:[%s35 + $0x68] sm:$0xff]
  %v633 = vld [vmem:[%s35 + $0x78] sm:$0xff]
  %v634 = vld [vmem:[%s35 + $0x80] sm:$0xff]
  %v635 = vld [vmem:[%s35 + $0x90] sm:$0xff]
  %v636 = vld [vmem:[%s35 + $0x98] sm:$0xff]
  %v637 = vld [vmem:[%s35 + $0xa8] sm:$0xff]
  %v638 = vld [vmem:[%s35 + $0xb0] sm:$0xff]
  %v639 = vld [vmem:[%s35 + $0xc0] sm:$0xff]
  %v640 = vld [vmem:[%s35 + $0xc8] sm:$0xff]
  %v641 = vld [vmem:[%s35 + $0xd8] sm:$0xff]
  %v642 = vld [vmem:[%s35 + $0xe0] sm:$0xff]
  %v643 = vld [vmem:[%s35 + $0xf0] sm:$0xff]
  %v644 = vld [vmem:[%s35 + $0xf8] sm:$0xff]
  %v645 = vld [vmem:[%s35 + $0x108] sm:$0xff]
  %v646 = vld [vmem:[%s35 + $0x110] sm:$0xff]
  %v647 = vld [vmem:[%s35 + $0x120] sm:$0xff]
  %v648 = vld [vmem:[%s35 + $0x128] sm:$0xff]
  %v649 = vld [vmem:[%s35 + $0x138] sm:$0xff]
  %v650 = vld [vmem:[%s35 + $0x140] sm:$0xff]
  %v651 = vld [vmem:[%s35 + $0x150] sm:$0xff]
  %v652 = vld [vmem:[%s35 + $0x158] sm:$0xff]
  %v653 = vld [vmem:[%s35 + $0x168] sm:$0xff]
  %v654 = vld [vmem:[%s35 + $0x170] sm:$0xff]
  %687 = vrot.lane.b32.xlu0 %v623, 12
  %v688 = vpop.permute.xlu0 %687
  %689 = vrot.lane.b32.xlu0 %v624, 12
  %v690 = vpop.permute.xlu0 %689
  %691 = vrot.lane.b32.xlu0 %v625, 12
  %v692 = vpop.permute.xlu0 %691
  %693 = vrot.lane.b32.xlu0 %v626, 12
  %v694 = vpop.permute.xlu0 %693
  %695 = vrot.lane.b32.xlu0 %v627, 12
  %v696 = vpop.permute.xlu0 %695
  %697 = vrot.lane.b32.xlu0 %v628, 12
  %v698 = vpop.permute.xlu0 %697
  %699 = vrot.lane.b32.xlu0 %v629, 12
  %v700 = vpop.permute.xlu0 %699
  %701 = vrot.lane.b32.xlu0 %v630, 12
  %v702 = vpop.permute.xlu0 %701
  %703 = vrot.lane.b32.xlu0 %v631, 12
  %v704 = vpop.permute.xlu0 %703
  %705 = vrot.lane.b32.xlu0 %v632, 12
  %v706 = vpop.permute.xlu0 %705
  %707 = vrot.lane.b32.xlu0 %v633, 12
  %v708 = vpop.permute.xlu0 %707
  %709 = vrot.lane.b32.xlu0 %v634, 12
  %v710 = vpop.permute.xlu0 %709
  %711 = vrot.lane.b32.xlu0 %v635, 12
  %v712 = vpop.permute.xlu0 %711
  %713 = vrot.lane.b32.xlu0 %v636, 12
  %v714 = vpop.permute.xlu0 %713
  %715 = vrot.lane.b32.xlu0 %v637, 12
  %v716 = vpop.permute.xlu0 %715
  %717 = vrot.lane.b32.xlu0 %v638, 12
  %v718 = vpop.permute.xlu0 %717
  %719 = vrot.lane.b32.xlu0 %v639, 12
  %v720 = vpop.permute.xlu0 %719
  %721 = vrot.lane.b32.xlu0 %v640, 12
  %v722 = vpop.permute.xlu0 %721
  %723 = vrot.lane.b32.xlu0 %v641, 12
  %v724 = vpop.permute.xlu0 %723
  %725 = vrot.lane.b32.xlu0 %v642, 12
  %v726 = vpop.permute.xlu0 %725
  %727 = vrot.lane.b32.xlu0 %v643, 12
  %v728 = vpop.permute.xlu0 %727
  %729 = vrot.lane.b32.xlu0 %v644, 12
  %v730 = vpop.permute.xlu0 %729
  %731 = vrot.lane.b32.xlu0 %v645, 12
  %v732 = vpop.permute.xlu0 %731
  %733 = vrot.lane.b32.xlu0 %v646, 12
  %v734 = vpop.permute.xlu0 %733
  %735 = vrot.lane.b32.xlu0 %v647, 12
  %v736 = vpop.permute.xlu0 %735
  %737 = vrot.lane.b32.xlu0 %v648, 12
  %v738 = vpop.permute.xlu0 %737
  %739 = vrot.lane.b32.xlu0 %v649, 12
  %v740 = vpop.permute.xlu0 %739
  %741 = vrot.lane.b32.xlu0 %v650, 12
  %v742 = vpop.permute.xlu0 %741
  %743 = vrot.lane.b32.xlu0 %v651, 12
  %v744 = vpop.permute.xlu0 %743
  %745 = vrot.lane.b32.xlu0 %v652, 12
  %v746 = vpop.permute.xlu0 %745
  %747 = vrot.lane.b32.xlu0 %v653, 12
  %v748 = vpop.permute.xlu0 %747
  %749 = vrot.lane.b32.xlu0 %v654, 12
  %v750 = vpop.permute.xlu0 %749
  %vm783 = vcmask 130144
  %784 = vst.msk [vmem:[#allocation4] sm:$0xff] %vm783, %v688
  %785 = vst.msk [vmem:[#allocation4 + $0x8] sm:$0xff] %vm783, %v690
  %786 = vst.msk [vmem:[#allocation4 + $0x10] sm:$0xff] %vm783, %v692
  %787 = vst.msk [vmem:[#allocation4 + $0x18] sm:$0xff] %vm783, %v694
  %788 = vst.msk [vmem:[#allocation4 + $0x20] sm:$0xff] %vm783, %v696
  %789 = vst.msk [vmem:[#allocation4 + $0x28] sm:$0xff] %vm783, %v698
  %790 = vst.msk [vmem:[#allocation4 + $0x30] sm:$0xff] %vm783, %v700
  %791 = vst.msk [vmem:[#allocation4 + $0x38] sm:$0xff] %vm783, %v702
  %792 = vst.msk [vmem:[#allocation4 + $0x40] sm:$0xff] %vm783, %v704
  %793 = vst.msk [vmem:[#allocation4 + $0x48] sm:$0xff] %vm783, %v706
  %794 = vst.msk [vmem:[#allocation4 + $0x50] sm:$0xff] %vm783, %v708
  %795 = vst.msk [vmem:[#allocation4 + $0x58] sm:$0xff] %vm783, %v710
  %796 = vst.msk [vmem:[#allocation4 + $0x60] sm:$0xff] %vm783, %v712
  %797 = vst.msk [vmem:[#allocation4 + $0x68] sm:$0xff] %vm783, %v714
  %798 = vst.msk [vmem:[#allocation4 + $0x70] sm:$0xff] %vm783, %v716
  %799 = vst.msk [vmem:[#allocation4 + $0x78] sm:$0xff] %vm783, %v718
  %800 = vst.msk [vmem:[#allocation4 + $0x80] sm:$0xff] %vm783, %v720
  %801 = vst.msk [vmem:[#allocation4 + $0x88] sm:$0xff] %vm783, %v722
  %802 = vst.msk [vmem:[#allocation4 + $0x90] sm:$0xff] %vm783, %v724
  %803 = vst.msk [vmem:[#allocation4 + $0x98] sm:$0xff] %vm783, %v726
  %804 = vst.msk [vmem:[#allocation4 + $0xa0] sm:$0xff] %vm783, %v728
  %805 = vst.msk [vmem:[#allocation4 + $0xa8] sm:$0xff] %vm783, %v730
  %806 = vst.msk [vmem:[#allocation4 + $0xb0] sm:$0xff] %vm783, %v732
  %807 = vst.msk [vmem:[#allocation4 + $0xb8] sm:$0xff] %vm783, %v734
  %808 = vst.msk [vmem:[#allocation4 + $0xc0] sm:$0xff] %vm783, %v736
  %809 = vst.msk [vmem:[#allocation4 + $0xc8] sm:$0xff] %vm783, %v738
  %810 = vst.msk [vmem:[#allocation4 + $0xd0] sm:$0xff] %vm783, %v740
  %811 = vst.msk [vmem:[#allocation4 + $0xd8] sm:$0xff] %vm783, %v742
  %812 = vst.msk [vmem:[#allocation4 + $0xe0] sm:$0xff] %vm783, %v744
  %813 = vst.msk [vmem:[#allocation4 + $0xe8] sm:$0xff] %vm783, %v746
  %814 = vst.msk [vmem:[#allocation4 + $0xf0] sm:$0xff] %vm783, %v748
  %815 = vst.msk [vmem:[#allocation4 + $0xf8] sm:$0xff] %vm783, %v750
  %v816 = vld [vmem:[%s35 + $0x1] sm:$0xff]
  %v817 = vld [vmem:[%s35 + $0x9] sm:$0xff]
  %v818 = vld [vmem:[%s35 + $0x19] sm:$0xff]
  %v819 = vld [vmem:[%s35 + $0x21] sm:$0xff]
  %v820 = vld [vmem:[%s35 + $0x31] sm:$0xff]
  %v821 = vld [vmem:[%s35 + $0x39] sm:$0xff]
  %v822 = vld [vmem:[%s35 + $0x49] sm:$0xff]
  %v823 = vld [vmem:[%s35 + $0x51] sm:$0xff]
  %v824 = vld [vmem:[%s35 + $0x61] sm:$0xff]
  %v825 = vld [vmem:[%s35 + $0x69] sm:$0xff]
  %v826 = vld [vmem:[%s35 + $0x79] sm:$0xff]
  %v827 = vld [vmem:[%s35 + $0x81] sm:$0xff]
  %v828 = vld [vmem:[%s35 + $0x91] sm:$0xff]
  %v829 = vld [vmem:[%s35 + $0x99] sm:$0xff]
  %v830 = vld [vmem:[%s35 + $0xa9] sm:$0xff]
  %v831 = vld [vmem:[%s35 + $0xb1] sm:$0xff]
  %v832 = vld [vmem:[%s35 + $0xc1] sm:$0xff]
  %v833 = vld [vmem:[%s35 + $0xc9] sm:$0xff]
  %v834 = vld [vmem:[%s35 + $0xd9] sm:$0xff]
  %v835 = vld [vmem:[%s35 + $0xe1] sm:$0xff]
  %v836 = vld [vmem:[%s35 + $0xf1] sm:$0xff]
  %v837 = vld [vmem:[%s35 + $0xf9] sm:$0xff]
  %v838 = vld [vmem:[%s35 + $0x109] sm:$0xff]
  %v839 = vld [vmem:[%s35 + $0x111] sm:$0xff]
  %v840 = vld [vmem:[%s35 + $0x121] sm:$0xff]
  %v841 = vld [vmem:[%s35 + $0x129] sm:$0xff]
  %v842 = vld [vmem:[%s35 + $0x139] sm:$0xff]
  %v843 = vld [vmem:[%s35 + $0x141] sm:$0xff]
  %v844 = vld [vmem:[%s35 + $0x151] sm:$0xff]
  %v845 = vld [vmem:[%s35 + $0x159] sm:$0xff]
  %v846 = vld [vmem:[%s35 + $0x169] sm:$0xff]
  %v847 = vld [vmem:[%s35 + $0x171] sm:$0xff]
  %880 = vrot.lane.b32.xlu0 %v816, 16
  %v881 = vpop.permute.xlu0 %880
  %882 = vrot.lane.b32.xlu0 %v817, 16
  %v883 = vpop.permute.xlu0 %882
  %884 = vrot.lane.b32.xlu0 %v818, 16
  %v885 = vpop.permute.xlu0 %884
  %886 = vrot.lane.b32.xlu0 %v819, 16
  %v887 = vpop.permute.xlu0 %886
  %888 = vrot.lane.b32.xlu0 %v820, 16
  %v889 = vpop.permute.xlu0 %888
  %890 = vrot.lane.b32.xlu0 %v821, 16
  %v891 = vpop.permute.xlu0 %890
  %892 = vrot.lane.b32.xlu0 %v822, 16
  %v893 = vpop.permute.xlu0 %892
  %894 = vrot.lane.b32.xlu0 %v823, 16
  %v895 = vpop.permute.xlu0 %894
  %896 = vrot.lane.b32.xlu0 %v824, 16
  %v897 = vpop.permute.xlu0 %896
  %898 = vrot.lane.b32.xlu0 %v825, 16
  %v899 = vpop.permute.xlu0 %898
  %900 = vrot.lane.b32.xlu0 %v826, 16
  %v901 = vpop.permute.xlu0 %900
  %902 = vrot.lane.b32.xlu0 %v827, 16
  %v903 = vpop.permute.xlu0 %902
  %904 = vrot.lane.b32.xlu0 %v828, 16
  %v905 = vpop.permute.xlu0 %904
  %906 = vrot.lane.b32.xlu0 %v829, 16
  %v907 = vpop.permute.xlu0 %906
  %908 = vrot.lane.b32.xlu0 %v830, 16
  %v909 = vpop.permute.xlu0 %908
  %910 = vrot.lane.b32.xlu0 %v831, 16
  %v911 = vpop.permute.xlu0 %910
  %912 = vrot.lane.b32.xlu0 %v832, 16
  %v913 = vpop.permute.xlu0 %912
  %914 = vrot.lane.b32.xlu0 %v833, 16
  %v915 = vpop.permute.xlu0 %914
  %916 = vrot.lane.b32.xlu0 %v834, 16
  %v917 = vpop.permute.xlu0 %916
  %918 = vrot.lane.b32.xlu0 %v835, 16
  %v919 = vpop.permute.xlu0 %918
  %920 = vrot.lane.b32.xlu0 %v836, 16
  %v921 = vpop.permute.xlu0 %920
  %922 = vrot.lane.b32.xlu0 %v837, 16
  %v923 = vpop.permute.xlu0 %922
  %924 = vrot.lane.b32.xlu0 %v838, 16
  %v925 = vpop.permute.xlu0 %924
  %926 = vrot.lane.b32.xlu0 %v839, 16
  %v927 = vpop.permute.xlu0 %926
  %928 = vrot.lane.b32.xlu0 %v840, 16
  %v929 = vpop.permute.xlu0 %928
  %930 = vrot.lane.b32.xlu0 %v841, 16
  %v931 = vpop.permute.xlu0 %930
  %932 = vrot.lane.b32.xlu0 %v842, 16
  %v933 = vpop.permute.xlu0 %932
  %934 = vrot.lane.b32.xlu0 %v843, 16
  %v935 = vpop.permute.xlu0 %934
  %936 = vrot.lane.b32.xlu0 %v844, 16
  %v937 = vpop.permute.xlu0 %936
  %938 = vrot.lane.b32.xlu0 %v845, 16
  %v939 = vpop.permute.xlu0 %938
  %940 = vrot.lane.b32.xlu0 %v846, 16
  %v941 = vpop.permute.xlu0 %940
  %942 = vrot.lane.b32.xlu0 %v847, 16
  %v943 = vpop.permute.xlu0 %942
  %vm976 = vcmask 162944
  %977 = vst.msk [vmem:[#allocation4] sm:$0xff] %vm976, %v881
  %978 = vst.msk [vmem:[#allocation4 + $0x8] sm:$0xff] %vm976, %v883
  %979 = vst.msk [vmem:[#allocation4 + $0x10] sm:$0xff] %vm976, %v885
  %980 = vst.msk [vmem:[#allocation4 + $0x18] sm:$0xff] %vm976, %v887
  %981 = vst.msk [vmem:[#allocation4 + $0x20] sm:$0xff] %vm976, %v889
  %982 = vst.msk [vmem:[#allocation4 + $0x28] sm:$0xff] %vm976, %v891
  %983 = vst.msk [vmem:[#allocation4 + $0x30] sm:$0xff] %vm976, %v893
  %984 = vst.msk [vmem:[#allocation4 + $0x38] sm:$0xff] %vm976, %v895
  %985 = vst.msk [vmem:[#allocation4 + $0x40] sm:$0xff] %vm976, %v897
  %986 = vst.msk [vmem:[#allocation4 + $0x48] sm:$0xff] %vm976, %v899
  %987 = vst.msk [vmem:[#allocation4 + $0x50] sm:$0xff] %vm976, %v901
  %988 = vst.msk [vmem:[#allocation4 + $0x58] sm:$0xff] %vm976, %v903
  %989 = vst.msk [vmem:[#allocation4 + $0x60] sm:$0xff] %vm976, %v905
  %990 = vst.msk [vmem:[#allocation4 + $0x68] sm:$0xff] %vm976, %v907
  %991 = vst.msk [vmem:[#allocation4 + $0x70] sm:$0xff] %vm976, %v909
  %992 = vst.msk [vmem:[#allocation4 + $0x78] sm:$0xff] %vm976, %v911
  %993 = vst.msk [vmem:[#allocation4 + $0x80] sm:$0xff] %vm976, %v913
  %994 = vst.msk [vmem:[#allocation4 + $0x88] sm:$0xff] %vm976, %v915
  %995 = vst.msk [vmem:[#allocation4 + $0x90] sm:$0xff] %vm976, %v917
  %996 = vst.msk [vmem:[#allocation4 + $0x98] sm:$0xff] %vm976, %v919
  %997 = vst.msk [vmem:[#allocation4 + $0xa0] sm:$0xff] %vm976, %v921
  %998 = vst.msk [vmem:[#allocation4 + $0xa8] sm:$0xff] %vm976, %v923
  %999 = vst.msk [vmem:[#allocation4 + $0xb0] sm:$0xff] %vm976, %v925
  %1000 = vst.msk [vmem:[#allocation4 + $0xb8] sm:$0xff] %vm976, %v927
  %1001 = vst.msk [vmem:[#allocation4 + $0xc0] sm:$0xff] %vm976, %v929
  %1002 = vst.msk [vmem:[#allocation4 + $0xc8] sm:$0xff] %vm976, %v931
  %1003 = vst.msk [vmem:[#allocation4 + $0xd0] sm:$0xff] %vm976, %v933
  %1004 = vst.msk [vmem:[#allocation4 + $0xd8] sm:$0xff] %vm976, %v935
  %1005 = vst.msk [vmem:[#allocation4 + $0xe0] sm:$0xff] %vm976, %v937
  %1006 = vst.msk [vmem:[#allocation4 + $0xe8] sm:$0xff] %vm976, %v939
  %1007 = vst.msk [vmem:[#allocation4 + $0xf0] sm:$0xff] %vm976, %v941
  %1008 = vst.msk [vmem:[#allocation4 + $0xf8] sm:$0xff] %vm976, %v943
  %v1009 = vld [vmem:[%s35 + $0x2] sm:$0xff]
  %v1010 = vld [vmem:[%s35 + $0xa] sm:$0xff]
  %v1011 = vld [vmem:[%s35 + $0x1a] sm:$0xff]
  %v1012 = vld [vmem:[%s35 + $0x22] sm:$0xff]
  %v1013 = vld [vmem:[%s35 + $0x32] sm:$0xff]
  %v1014 = vld [vmem:[%s35 + $0x3a] sm:$0xff]
  %v1015 = vld [vmem:[%s35 + $0x4a] sm:$0xff]
  %v1016 = vld [vmem:[%s35 + $0x52] sm:$0xff]
  %v1017 = vld [vmem:[%s35 + $0x62] sm:$0xff]
  %v1018 = vld [vmem:[%s35 + $0x6a] sm:$0xff]
  %v1019 = vld [vmem:[%s35 + $0x7a] sm:$0xff]
  %v1020 = vld [vmem:[%s35 + $0x82] sm:$0xff]
  %v1021 = vld [vmem:[%s35 + $0x92] sm:$0xff]
  %v1022 = vld [vmem:[%s35 + $0x9a] sm:$0xff]
  %v1023 = vld [vmem:[%s35 + $0xaa] sm:$0xff]
  %v1024 = vld [vmem:[%s35 + $0xb2] sm:$0xff]
  %v1025 = vld [vmem:[%s35 + $0xc2] sm:$0xff]
  %v1026 = vld [vmem:[%s35 + $0xca] sm:$0xff]
  %v1027 = vld [vmem:[%s35 + $0xda] sm:$0xff]
  %v1028 = vld [vmem:[%s35 + $0xe2] sm:$0xff]
  %v1029 = vld [vmem:[%s35 + $0xf2] sm:$0xff]
  %v1030 = vld [vmem:[%s35 + $0xfa] sm:$0xff]
  %v1031 = vld [vmem:[%s35 + $0x10a] sm:$0xff]
  %v1032 = vld [vmem:[%s35 + $0x112] sm:$0xff]
  %v1033 = vld [vmem:[%s35 + $0x122] sm:$0xff]
  %v1034 = vld [vmem:[%s35 + $0x12a] sm:$0xff]
  %v1035 = vld [vmem:[%s35 + $0x13a] sm:$0xff]
  %v1036 = vld [vmem:[%s35 + $0x142] sm:$0xff]
  %v1037 = vld [vmem:[%s35 + $0x152] sm:$0xff]
  %v1038 = vld [vmem:[%s35 + $0x15a] sm:$0xff]
  %v1039 = vld [vmem:[%s35 + $0x16a] sm:$0xff]
  %v1040 = vld [vmem:[%s35 + $0x172] sm:$0xff]
  %1073 = vrot.lane.b32.xlu0 %v1009, 20
  %v1074 = vpop.permute.xlu0 %1073
  %1075 = vrot.lane.b32.xlu0 %v1010, 20
  %v1076 = vpop.permute.xlu0 %1075
  %1077 = vrot.lane.b32.xlu0 %v1011, 20
  %v1078 = vpop.permute.xlu0 %1077
  %1079 = vrot.lane.b32.xlu0 %v1012, 20
  %v1080 = vpop.permute.xlu0 %1079
  %1081 = vrot.lane.b32.xlu0 %v1013, 20
  %v1082 = vpop.permute.xlu0 %1081
  %1083 = vrot.lane.b32.xlu0 %v1014, 20
  %v1084 = vpop.permute.xlu0 %1083
  %1085 = vrot.lane.b32.xlu0 %v1015, 20
  %v1086 = vpop.permute.xlu0 %1085
  %1087 = vrot.lane.b32.xlu0 %v1016, 20
  %v1088 = vpop.permute.xlu0 %1087
  %1089 = vrot.lane.b32.xlu0 %v1017, 20
  %v1090 = vpop.permute.xlu0 %1089
  %1091 = vrot.lane.b32.xlu0 %v1018, 20
  %v1092 = vpop.permute.xlu0 %1091
  %1093 = vrot.lane.b32.xlu0 %v1019, 20
  %v1094 = vpop.permute.xlu0 %1093
  %1095 = vrot.lane.b32.xlu0 %v1020, 20
  %v1096 = vpop.permute.xlu0 %1095
  %1097 = vrot.lane.b32.xlu0 %v1021, 20
  %v1098 = vpop.permute.xlu0 %1097
  %1099 = vrot.lane.b32.xlu0 %v1022, 20
  %v1100 = vpop.permute.xlu0 %1099
  %1101 = vrot.lane.b32.xlu0 %v1023, 20
  %v1102 = vpop.permute.xlu0 %1101
  %1103 = vrot.lane.b32.xlu0 %v1024, 20
  %v1104 = vpop.permute.xlu0 %1103
  %1105 = vrot.lane.b32.xlu0 %v1025, 20
  %v1106 = vpop.permute.xlu0 %1105
  %1107 = vrot.lane.b32.xlu0 %v1026, 20
  %v1108 = vpop.permute.xlu0 %1107
  %1109 = vrot.lane.b32.xlu0 %v1027, 20
  %v1110 = vpop.permute.xlu0 %1109
  %1111 = vrot.lane.b32.xlu0 %v1028, 20
  %v1112 = vpop.permute.xlu0 %1111
  %1113 = vrot.lane.b32.xlu0 %v1029, 20
  %v1114 = vpop.permute.xlu0 %1113
  %1115 = vrot.lane.b32.xlu0 %v1030, 20
  %v1116 = vpop.permute.xlu0 %1115
  %1117 = vrot.lane.b32.xlu0 %v1031, 20
  %v1118 = vpop.permute.xlu0 %1117
  %1119 = vrot.lane.b32.xlu0 %v1032, 20
  %v1120 = vpop.permute.xlu0 %1119
  %1121 = vrot.lane.b32.xlu0 %v1033, 20
  %v1122 = vpop.permute.xlu0 %1121
  %1123 = vrot.lane.b32.xlu0 %v1034, 20
  %v1124 = vpop.permute.xlu0 %1123
  %1125 = vrot.lane.b32.xlu0 %v1035, 20
  %v1126 = vpop.permute.xlu0 %1125
  %1127 = vrot.lane.b32.xlu0 %v1036, 20
  %v1128 = vpop.permute.xlu0 %1127
  %1129 = vrot.lane.b32.xlu0 %v1037, 20
  %v1130 = vpop.permute.xlu0 %1129
  %1131 = vrot.lane.b32.xlu0 %v1038, 20
  %v1132 = vpop.permute.xlu0 %1131
  %1133 = vrot.lane.b32.xlu0 %v1039, 20
  %v1134 = vpop.permute.xlu0 %1133
  %1135 = vrot.lane.b32.xlu0 %v1040, 20
  %v1136 = vpop.permute.xlu0 %1135
  %vm1169 = vcmask 195744
  %1170 = vst.msk [vmem:[#allocation4] sm:$0xff] %vm1169, %v1074
  %1171 = vst.msk [vmem:[#allocation4 + $0x8] sm:$0xff] %vm1169, %v1076
  %1172 = vst.msk [vmem:[#allocation4 + $0x10] sm:$0xff] %vm1169, %v1078
  %1173 = vst.msk [vmem:[#allocation4 + $0x18] sm:$0xff] %vm1169, %v1080
  %1174 = vst.msk [vmem:[#allocation4 + $0x20] sm:$0xff] %vm1169, %v1082
  %1175 = vst.msk [vmem:[#allocation4 + $0x28] sm:$0xff] %vm1169, %v1084
  %1176 = vst.msk [vmem:[#allocation4 + $0x30] sm:$0xff] %vm1169, %v1086
  %1177 = vst.msk [vmem:[#allocation4 + $0x38] sm:$0xff] %vm1169, %v1088
  %1178 = vst.msk [vmem:[#allocation4 + $0x40] sm:$0xff] %vm1169, %v1090
  %1179 = vst.msk [vmem:[#allocation4 + $0x48] sm:$0xff] %vm1169, %v1092
  %1180 = vst.msk [vmem:[#allocation4 + $0x50] sm:$0xff] %vm1169, %v1094
  %1181 = vst.msk [vmem:[#allocation4 + $0x58] sm:$0xff] %vm1169, %v1096
  %1182 = vst.msk [vmem:[#allocation4 + $0x60] sm:$0xff] %vm1169, %v1098
  %1183 = vst.msk [vmem:[#allocation4 + $0x68] sm:$0xff] %vm1169, %v1100
  %1184 = vst.msk [vmem:[#allocation4 + $0x70] sm:$0xff] %vm1169, %v1102
  %1185 = vst.msk [vmem:[#allocation4 + $0x78] sm:$0xff] %vm1169, %v1104
  %1186 = vst.msk [vmem:[#allocation4 + $0x80] sm:$0xff] %vm1169, %v1106
  %1187 = vst.msk [vmem:[#allocation4 + $0x88] sm:$0xff] %vm1169, %v1108
  %1188 = vst.msk [vmem:[#allocation4 + $0x90] sm:$0xff] %vm1169, %v1110
  %1189 = vst.msk [vmem:[#allocation4 + $0x98] sm:$0xff] %vm1169, %v1112
  %1190 = vst.msk [vmem:[#allocation4 + $0xa0] sm:$0xff] %vm1169, %v1114
  %1191 = vst.msk [vmem:[#allocation4 + $0xa8] sm:$0xff] %vm1169, %v1116
  %1192 = vst.msk [vmem:[#allocation4 + $0xb0] sm:$0xff] %vm1169, %v1118
  %1193 = vst.msk [vmem:[#allocation4 + $0xb8] sm:$0xff] %vm1169, %v1120
  %1194 = vst.msk [vmem:[#allocation4 + $0xc0] sm:$0xff] %vm1169, %v1122
  %1195 = vst.msk [vmem:[#allocation4 + $0xc8] sm:$0xff] %vm1169, %v1124
  %1196 = vst.msk [vmem:[#allocation4 + $0xd0] sm:$0xff] %vm1169, %v1126
  %1197 = vst.msk [vmem:[#allocation4 + $0xd8] sm:$0xff] %vm1169, %v1128
  %1198 = vst.msk [vmem:[#allocation4 + $0xe0] sm:$0xff] %vm1169, %v1130
  %1199 = vst.msk [vmem:[#allocation4 + $0xe8] sm:$0xff] %vm1169, %v1132
  %1200 = vst.msk [vmem:[#allocation4 + $0xf0] sm:$0xff] %vm1169, %v1134
  %1201 = vst.msk [vmem:[#allocation4 + $0xf8] sm:$0xff] %vm1169, %v1136
  %s1202 = scalar_lea.vmem [#allocation2], 48
  %v1203 = vld [vmem:[%s1202] sm:$0xff]
  %v1204 = vld [vmem:[%s1202 + $0x8] sm:$0xff]
  %v1205 = vld [vmem:[%s1202 + $0x18] sm:$0xff]
  %v1206 = vld [vmem:[%s1202 + $0x20] sm:$0xff]
  %v1207 = vld [vmem:[%s1202 + $0x30] sm:$0xff]
  %v1208 = vld [vmem:[%s1202 + $0x38] sm:$0xff]
  %v1209 = vld [vmem:[%s1202 + $0x48] sm:$0xff]
  %v1210 = vld [vmem:[%s1202 + $0x50] sm:$0xff]
  %v1211 = vld [vmem:[%s1202 + $0x60] sm:$0xff]
  %v1212 = vld [vmem:[%s1202 + $0x68] sm:$0xff]
  %v1213 = vld [vmem:[%s1202 + $0x78] sm:$0xff]
  %v1214 = vld [vmem:[%s1202 + $0x80] sm:$0xff]
  %v1215 = vld [vmem:[%s1202 + $0x90] sm:$0xff]
  %v1216 = vld [vmem:[%s1202 + $0x98] sm:$0xff]
  %v1217 = vld [vmem:[%s1202 + $0xa8] sm:$0xff]
  %v1218 = vld [vmem:[%s1202 + $0xb0] sm:$0xff]
  %v1219 = vld [vmem:[%s1202 + $0xc0] sm:$0xff]
  %v1220 = vld [vmem:[%s1202 + $0xc8] sm:$0xff]
  %v1221 = vld [vmem:[%s1202 + $0xd8] sm:$0xff]
  %v1222 = vld [vmem:[%s1202 + $0xe0] sm:$0xff]
  %v1223 = vld [vmem:[%s1202 + $0xf0] sm:$0xff]
  %v1224 = vld [vmem:[%s1202 + $0xf8] sm:$0xff]
  %v1225 = vld [vmem:[%s1202 + $0x108] sm:$0xff]
  %v1226 = vld [vmem:[%s1202 + $0x110] sm:$0xff]
  %v1227 = vld [vmem:[%s1202 + $0x120] sm:$0xff]
  %v1228 = vld [vmem:[%s1202 + $0x128] sm:$0xff]
  %v1229 = vld [vmem:[%s1202 + $0x138] sm:$0xff]
  %v1230 = vld [vmem:[%s1202 + $0x140] sm:$0xff]
  %v1231 = vld [vmem:[%s1202 + $0x150] sm:$0xff]
  %v1232 = vld [vmem:[%s1202 + $0x158] sm:$0xff]
  %v1233 = vld [vmem:[%s1202 + $0x168] sm:$0xff]
  %v1234 = vld [vmem:[%s1202 + $0x170] sm:$0xff]
  %1267 = vrot.lane.b32.xlu0 %v1203, 24
  %v1268 = vpop.permute.xlu0 %1267
  %1269 = vrot.lane.b32.xlu0 %v1204, 24
  %v1270 = vpop.permute.xlu0 %1269
  %1271 = vrot.lane.b32.xlu0 %v1205, 24
  %v1272 = vpop.permute.xlu0 %1271
  %1273 = vrot.lane.b32.xlu0 %v1206, 24
  %v1274 = vpop.permute.xlu0 %1273
  %1275 = vrot.lane.b32.xlu0 %v1207, 24
  %v1276 = vpop.permute.xlu0 %1275
  %1277 = vrot.lane.b32.xlu0 %v1208, 24
  %v1278 = vpop.permute.xlu0 %1277
  %1279 = vrot.lane.b32.xlu0 %v1209, 24
  %v1280 = vpop.permute.xlu0 %1279
  %1281 = vrot.lane.b32.xlu0 %v1210, 24
  %v1282 = vpop.permute.xlu0 %1281
  %1283 = vrot.lane.b32.xlu0 %v1211, 24
  %v1284 = vpop.permute.xlu0 %1283
  %1285 = vrot.lane.b32.xlu0 %v1212, 24
  %v1286 = vpop.permute.xlu0 %1285
  %1287 = vrot.lane.b32.xlu0 %v1213, 24
  %v1288 = vpop.permute.xlu0 %1287
  %1289 = vrot.lane.b32.xlu0 %v1214, 24
  %v1290 = vpop.permute.xlu0 %1289
  %1291 = vrot.lane.b32.xlu0 %v1215, 24
  %v1292 = vpop.permute.xlu0 %1291
  %1293 = vrot.lane.b32.xlu0 %v1216, 24
  %v1294 = vpop.permute.xlu0 %1293
  %1295 = vrot.lane.b32.xlu0 %v1217, 24
  %v1296 = vpop.permute.xlu0 %1295
  %1297 = vrot.lane.b32.xlu0 %v1218, 24
  %v1298 = vpop.permute.xlu0 %1297
  %1299 = vrot.lane.b32.xlu0 %v1219, 24
  %v1300 = vpop.permute.xlu0 %1299
  %1301 = vrot.lane.b32.xlu0 %v1220, 24
  %v1302 = vpop.permute.xlu0 %1301
  %1303 = vrot.lane.b32.xlu0 %v1221, 24
  %v1304 = vpop.permute.xlu0 %1303
  %1305 = vrot.lane.b32.xlu0 %v1222, 24
  %v1306 = vpop.permute.xlu0 %1305
  %1307 = vrot.lane.b32.xlu0 %v1223, 24
  %v1308 = vpop.permute.xlu0 %1307
  %1309 = vrot.lane.b32.xlu0 %v1224, 24
  %v1310 = vpop.permute.xlu0 %1309
  %1311 = vrot.lane.b32.xlu0 %v1225, 24
  %v1312 = vpop.permute.xlu0 %1311
  %1313 = vrot.lane.b32.xlu0 %v1226, 24
  %v1314 = vpop.permute.xlu0 %1313
  %1315 = vrot.lane.b32.xlu0 %v1227, 24
  %v1316 = vpop.permute.xlu0 %1315
  %1317 = vrot.lane.b32.xlu0 %v1228, 24
  %v1318 = vpop.permute.xlu0 %1317
  %1319 = vrot.lane.b32.xlu0 %v1229, 24
  %v1320 = vpop.permute.xlu0 %1319
  %1321 = vrot.lane.b32.xlu0 %v1230, 24
  %v1322 = vpop.permute.xlu0 %1321
  %1323 = vrot.lane.b32.xlu0 %v1231, 24
  %v1324 = vpop.permute.xlu0 %1323
  %1325 = vrot.lane.b32.xlu0 %v1232, 24
  %v1326 = vpop.permute.xlu0 %1325
  %1327 = vrot.lane.b32.xlu0 %v1233, 24
  %v1328 = vpop.permute.xlu0 %1327
  %1329 = vrot.lane.b32.xlu0 %v1234, 24
  %v1330 = vpop.permute.xlu0 %1329
  %vm1363 = vcmask 228544
  %1364 = vst.msk [vmem:[#allocation4] sm:$0xff] %vm1363, %v1268
  %1365 = vst.msk [vmem:[#allocation4 + $0x8] sm:$0xff] %vm1363, %v1270
  %1366 = vst.msk [vmem:[#allocation4 + $0x10] sm:$0xff] %vm1363, %v1272
  %1367 = vst.msk [vmem:[#allocation4 + $0x18] sm:$0xff] %vm1363, %v1274
  %1368 = vst.msk [vmem:[#allocation4 + $0x20] sm:$0xff] %vm1363, %v1276
  %1369 = vst.msk [vmem:[#allocation4 + $0x28] sm:$0xff] %vm1363, %v1278
  %1370 = vst.msk [vmem:[#allocation4 + $0x30] sm:$0xff] %vm1363, %v1280
  %1371 = vst.msk [vmem:[#allocation4 + $0x38] sm:$0xff] %vm1363, %v1282
  %1372 = vst.msk [vmem:[#allocation4 + $0x40] sm:$0xff] %vm1363, %v1284
  %1373 = vst.msk [vmem:[#allocation4 + $0x48] sm:$0xff] %vm1363, %v1286
  %1374 = vst.msk [vmem:[#allocation4 + $0x50] sm:$0xff] %vm1363, %v1288
  %1375 = vst.msk [vmem:[#allocation4 + $0x58] sm:$0xff] %vm1363, %v1290
  %1376 = vst.msk [vmem:[#allocation4 + $0x60] sm:$0xff] %vm1363, %v1292
  %1377 = vst.msk [vmem:[#allocation4 + $0x68] sm:$0xff] %vm1363, %v1294
  %1378 = vst.msk [vmem:[#allocation4 + $0x70] sm:$0xff] %vm1363, %v1296
  %1379 = vst.msk [vmem:[#allocation4 + $0x78] sm:$0xff] %vm1363, %v1298
  %1380 = vst.msk [vmem:[#allocation4 + $0x80] sm:$0xff] %vm1363, %v1300
  %1381 = vst.msk [vmem:[#allocation4 + $0x88] sm:$0xff] %vm1363, %v1302
  %1382 = vst.msk [vmem:[#allocation4 + $0x90] sm:$0xff] %vm1363, %v1304
  %1383 = vst.msk [vmem:[#allocation4 + $0x98] sm:$0xff] %vm1363, %v1306
  %1384 = vst.msk [vmem:[#allocation4 + $0xa0] sm:$0xff] %vm1363, %v1308
  %1385 = vst.msk [vmem:[#allocation4 + $0xa8] sm:$0xff] %vm1363, %v1310
  %1386 = vst.msk [vmem:[#allocation4 + $0xb0] sm:$0xff] %vm1363, %v1312
  %1387 = vst.msk [vmem:[#allocation4 + $0xb8] sm:$0xff] %vm1363, %v1314
  %1388 = vst.msk [vmem:[#allocation4 + $0xc0] sm:$0xff] %vm1363, %v1316
  %1389 = vst.msk [vmem:[#allocation4 + $0xc8] sm:$0xff] %vm1363, %v1318
  %1390 = vst.msk [vmem:[#allocation4 + $0xd0] sm:$0xff] %vm1363, %v1320
  %1391 = vst.msk [vmem:[#allocation4 + $0xd8] sm:$0xff] %vm1363, %v1322
  %1392 = vst.msk [vmem:[#allocation4 + $0xe0] sm:$0xff] %vm1363, %v1324
  %1393 = vst.msk [vmem:[#allocation4 + $0xe8] sm:$0xff] %vm1363, %v1326
  %1394 = vst.msk [vmem:[#allocation4 + $0xf0] sm:$0xff] %vm1363, %v1328
  %1395 = vst.msk [vmem:[#allocation4 + $0xf8] sm:$0xff] %vm1363, %v1330
  %v1396 = vld [vmem:[%s1202 + $0x1] sm:$0xff]
  %v1397 = vld [vmem:[%s1202 + $0x9] sm:$0xff]
  %v1398 = vld [vmem:[%s1202 + $0x19] sm:$0xff]
  %v1399 = vld [vmem:[%s1202 + $0x21] sm:$0xff]
  %v1400 = vld [vmem:[%s1202 + $0x31] sm:$0xff]
  %v1401 = vld [vmem:[%s1202 + $0x39] sm:$0xff]
  %v1402 = vld [vmem:[%s1202 + $0x49] sm:$0xff]
  %v1403 = vld [vmem:[%s1202 + $0x51] sm:$0xff]
  %v1404 = vld [vmem:[%s1202 + $0x61] sm:$0xff]
  %v1405 = vld [vmem:[%s1202 + $0x69] sm:$0xff]
  %v1406 = vld [vmem:[%s1202 + $0x79] sm:$0xff]
  %v1407 = vld [vmem:[%s1202 + $0x81] sm:$0xff]
  %v1408 = vld [vmem:[%s1202 + $0x91] sm:$0xff]
  %v1409 = vld [vmem:[%s1202 + $0x99] sm:$0xff]
  %v1410 = vld [vmem:[%s1202 + $0xa9] sm:$0xff]
  %v1411 = vld [vmem:[%s1202 + $0xb1] sm:$0xff]
  %v1412 = vld [vmem:[%s1202 + $0xc1] sm:$0xff]
  %v1413 = vld [vmem:[%s1202 + $0xc9] sm:$0xff]
  %v1414 = vld [vmem:[%s1202 + $0xd9] sm:$0xff]
  %v1415 = vld [vmem:[%s1202 + $0xe1] sm:$0xff]
  %v1416 = vld [vmem:[%s1202 + $0xf1] sm:$0xff]
  %v1417 = vld [vmem:[%s1202 + $0xf9] sm:$0xff]
  %v1418 = vld [vmem:[%s1202 + $0x109] sm:$0xff]
  %v1419 = vld [vmem:[%s1202 + $0x111] sm:$0xff]
  %v1420 = vld [vmem:[%s1202 + $0x121] sm:$0xff]
  %v1421 = vld [vmem:[%s1202 + $0x129] sm:$0xff]
  %v1422 = vld [vmem:[%s1202 + $0x139] sm:$0xff]
  %v1423 = vld [vmem:[%s1202 + $0x141] sm:$0xff]
  %v1424 = vld [vmem:[%s1202 + $0x151] sm:$0xff]
  %v1425 = vld [vmem:[%s1202 + $0x159] sm:$0xff]
  %v1426 = vld [vmem:[%s1202 + $0x169] sm:$0xff]
  %v1427 = vld [vmem:[%s1202 + $0x171] sm:$0xff]
  %1460 = vrot.lane.b32.xlu0 %v1396, 28
  %v1461 = vpop.permute.xlu0 %1460
  %1462 = vrot.lane.b32.xlu0 %v1397, 28
  %v1463 = vpop.permute.xlu0 %1462
  %1464 = vrot.lane.b32.xlu0 %v1398, 28
  %v1465 = vpop.permute.xlu0 %1464
  %1466 = vrot.lane.b32.xlu0 %v1399, 28
  %v1467 = vpop.permute.xlu0 %1466
  %1468 = vrot.lane.b32.xlu0 %v1400, 28
  %v1469 = vpop.permute.xlu0 %1468
  %1470 = vrot.lane.b32.xlu0 %v1401, 28
  %v1471 = vpop.permute.xlu0 %1470
  %1472 = vrot.lane.b32.xlu0 %v1402, 28
  %v1473 = vpop.permute.xlu0 %1472
  %1474 = vrot.lane.b32.xlu0 %v1403, 28
  %v1475 = vpop.permute.xlu0 %1474
  %1476 = vrot.lane.b32.xlu0 %v1404, 28
  %v1477 = vpop.permute.xlu0 %1476
  %1478 = vrot.lane.b32.xlu0 %v1405, 28
  %v1479 = vpop.permute.xlu0 %1478
  %1480 = vrot.lane.b32.xlu0 %v1406, 28
  %v1481 = vpop.permute.xlu0 %1480
  %1482 = vrot.lane.b32.xlu0 %v1407, 28
  %v1483 = vpop.permute.xlu0 %1482
  %1484 = vrot.lane.b32.xlu0 %v1408, 28
  %v1485 = vpop.permute.xlu0 %1484
  %1486 = vrot.lane.b32.xlu0 %v1409, 28
  %v1487 = vpop.permute.xlu0 %1486
  %1488 = vrot.lane.b32.xlu0 %v1410, 28
  %v1489 = vpop.permute.xlu0 %1488
  %1490 = vrot.lane.b32.xlu0 %v1411, 28
  %v1491 = vpop.permute.xlu0 %1490
  %1492 = vrot.lane.b32.xlu0 %v1412, 28
  %v1493 = vpop.permute.xlu0 %1492
  %1494 = vrot.lane.b32.xlu0 %v1413, 28
  %v1495 = vpop.permute.xlu0 %1494
  %1496 = vrot.lane.b32.xlu0 %v1414, 28
  %v1497 = vpop.permute.xlu0 %1496
  %1498 = vrot.lane.b32.xlu0 %v1415, 28
  %v1499 = vpop.permute.xlu0 %1498
  %1500 = vrot.lane.b32.xlu0 %v1416, 28
  %v1501 = vpop.permute.xlu0 %1500
  %1502 = vrot.lane.b32.xlu0 %v1417, 28
  %v1503 = vpop.permute.xlu0 %1502
  %1504 = vrot.lane.b32.xlu0 %v1418, 28
  %v1505 = vpop.permute.xlu0 %1504
  %1506 = vrot.lane.b32.xlu0 %v1419, 28
  %v1507 = vpop.permute.xlu0 %1506
  %1508 = vrot.lane.b32.xlu0 %v1420, 28
  %v1509 = vpop.permute.xlu0 %1508
  %1510 = vrot.lane.b32.xlu0 %v1421, 28
  %v1511 = vpop.permute.xlu0 %1510
  %1512 = vrot.lane.b32.xlu0 %v1422, 28
  %v1513 = vpop.permute.xlu0 %1512
  %1514 = vrot.lane.b32.xlu0 %v1423, 28
  %v1515 = vpop.permute.xlu0 %1514
  %1516 = vrot.lane.b32.xlu0 %v1424, 28
  %v1517 = vpop.permute.xlu0 %1516
  %1518 = vrot.lane.b32.xlu0 %v1425, 28
  %v1519 = vpop.permute.xlu0 %1518
  %1520 = vrot.lane.b32.xlu0 %v1426, 28
  %v1521 = vpop.permute.xlu0 %1520
  %1522 = vrot.lane.b32.xlu0 %v1427, 28
  %v1523 = vpop.permute.xlu0 %1522
  %vm1556 = vcmask 261344
  %1557 = vst.msk [vmem:[#allocation4] sm:$0xff] %vm1556, %v1461
  %1558 = vst.msk [vmem:[#allocation4 + $0x8] sm:$0xff] %vm1556, %v1463
  %1559 = vst.msk [vmem:[#allocation4 + $0x10] sm:$0xff] %vm1556, %v1465
  %1560 = vst.msk [vmem:[#allocation4 + $0x18] sm:$0xff] %vm1556, %v1467
  %1561 = vst.msk [vmem:[#allocation4 + $0x20] sm:$0xff] %vm1556, %v1469
  %1562 = vst.msk [vmem:[#allocation4 + $0x28] sm:$0xff] %vm1556, %v1471
  %1563 = vst.msk [vmem:[#allocation4 + $0x30] sm:$0xff] %vm1556, %v1473
  %1564 = vst.msk [vmem:[#allocation4 + $0x38] sm:$0xff] %vm1556, %v1475
  %1565 = vst.msk [vmem:[#allocation4 + $0x40] sm:$0xff] %vm1556, %v1477
  %1566 = vst.msk [vmem:[#allocation4 + $0x48] sm:$0xff] %vm1556, %v1479
  %1567 = vst.msk [vmem:[#allocation4 + $0x50] sm:$0xff] %vm1556, %v1481
  %1568 = vst.msk [vmem:[#allocation4 + $0x58] sm:$0xff] %vm1556, %v1483
  %1569 = vst.msk [vmem:[#allocation4 + $0x60] sm:$0xff] %vm1556, %v1485
  %1570 = vst.msk [vmem:[#allocation4 + $0x68] sm:$0xff] %vm1556, %v1487
  %1571 = vst.msk [vmem:[#allocation4 + $0x70] sm:$0xff] %vm1556, %v1489
  %1572 = vst.msk [vmem:[#allocation4 + $0x78] sm:$0xff] %vm1556, %v1491
  %1573 = vst.msk [vmem:[#allocation4 + $0x80] sm:$0xff] %vm1556, %v1493
  %1574 = vst.msk [vmem:[#allocation4 + $0x88] sm:$0xff] %vm1556, %v1495
  %1575 = vst.msk [vmem:[#allocation4 + $0x90] sm:$0xff] %vm1556, %v1497
  %1576 = vst.msk [vmem:[#allocation4 + $0x98] sm:$0xff] %vm1556, %v1499
  %1577 = vst.msk [vmem:[#allocation4 + $0xa0] sm:$0xff] %vm1556, %v1501
  %1578 = vst.msk [vmem:[#allocation4 + $0xa8] sm:$0xff] %vm1556, %v1503
  %1579 = vst.msk [vmem:[#allocation4 + $0xb0] sm:$0xff] %vm1556, %v1505
  %1580 = vst.msk [vmem:[#allocation4 + $0xb8] sm:$0xff] %vm1556, %v1507
  %1581 = vst.msk [vmem:[#allocation4 + $0xc0] sm:$0xff] %vm1556, %v1509
  %1582 = vst.msk [vmem:[#allocation4 + $0xc8] sm:$0xff] %vm1556, %v1511
  %1583 = vst.msk [vmem:[#allocation4 + $0xd0] sm:$0xff] %vm1556, %v1513
  %1584 = vst.msk [vmem:[#allocation4 + $0xd8] sm:$0xff] %vm1556, %v1515
  %1585 = vst.msk [vmem:[#allocation4 + $0xe0] sm:$0xff] %vm1556, %v1517
  %1586 = vst.msk [vmem:[#allocation4 + $0xe8] sm:$0xff] %vm1556, %v1519
  %1587 = vst.msk [vmem:[#allocation4 + $0xf0] sm:$0xff] %vm1556, %v1521
  %1588 = vst.msk [vmem:[#allocation4 + $0xf8] sm:$0xff] %vm1556, %v1523
  %v1589 = vld [vmem:[%s1202 + $0x2] sm:$0xff]
  %v1590 = vld [vmem:[%s1202 + $0xa] sm:$0xff]
  %v1591 = vld [vmem:[%s1202 + $0x1a] sm:$0xff]
  %v1592 = vld [vmem:[%s1202 + $0x22] sm:$0xff]
  %v1593 = vld [vmem:[%s1202 + $0x32] sm:$0xff]
  %v1594 = vld [vmem:[%s1202 + $0x3a] sm:$0xff]
  %v1595 = vld [vmem:[%s1202 + $0x4a] sm:$0xff]
  %v1596 = vld [vmem:[%s1202 + $0x52] sm:$0xff]
  %v1597 = vld [vmem:[%s1202 + $0x62] sm:$0xff]
  %v1598 = vld [vmem:[%s1202 + $0x6a] sm:$0xff]
  %v1599 = vld [vmem:[%s1202 + $0x7a] sm:$0xff]
  %v1600 = vld [vmem:[%s1202 + $0x82] sm:$0xff]
  %v1601 = vld [vmem:[%s1202 + $0x92] sm:$0xff]
  %v1602 = vld [vmem:[%s1202 + $0x9a] sm:$0xff]
  %v1603 = vld [vmem:[%s1202 + $0xaa] sm:$0xff]
  %v1604 = vld [vmem:[%s1202 + $0xb2] sm:$0xff]
  %v1605 = vld [vmem:[%s1202 + $0xc2] sm:$0xff]
  %v1606 = vld [vmem:[%s1202 + $0xca] sm:$0xff]
  %v1607 = vld [vmem:[%s1202 + $0xda] sm:$0xff]
  %v1608 = vld [vmem:[%s1202 + $0xe2] sm:$0xff]
  %v1609 = vld [vmem:[%s1202 + $0xf2] sm:$0xff]
  %v1610 = vld [vmem:[%s1202 + $0xfa] sm:$0xff]
  %v1611 = vld [vmem:[%s1202 + $0x10a] sm:$0xff]
  %v1612 = vld [vmem:[%s1202 + $0x112] sm:$0xff]
  %v1613 = vld [vmem:[%s1202 + $0x122] sm:$0xff]
  %v1614 = vld [vmem:[%s1202 + $0x12a] sm:$0xff]
  %v1615 = vld [vmem:[%s1202 + $0x13a] sm:$0xff]
  %v1616 = vld [vmem:[%s1202 + $0x142] sm:$0xff]
  %v1617 = vld [vmem:[%s1202 + $0x152] sm:$0xff]
  %v1618 = vld [vmem:[%s1202 + $0x15a] sm:$0xff]
  %v1619 = vld [vmem:[%s1202 + $0x16a] sm:$0xff]
  %v1620 = vld [vmem:[%s1202 + $0x172] sm:$0xff]
  %1653 = vrot.lane.b32.xlu0 %v1589, 32
  %v1654 = vpop.permute.xlu0 %1653
  %1655 = vrot.lane.b32.xlu0 %v1590, 32
  %v1656 = vpop.permute.xlu0 %1655
  %1657 = vrot.lane.b32.xlu0 %v1591, 32
  %v1658 = vpop.permute.xlu0 %1657
  %1659 = vrot.lane.b32.xlu0 %v1592, 32
  %v1660 = vpop.permute.xlu0 %1659
  %1661 = vrot.lane.b32.xlu0 %v1593, 32
  %v1662 = vpop.permute.xlu0 %1661
  %1663 = vrot.lane.b32.xlu0 %v1594, 32
  %v1664 = vpop.permute.xlu0 %1663
  %1665 = vrot.lane.b32.xlu0 %v1595, 32
  %v1666 = vpop.permute.xlu0 %1665
  %1667 = vrot.lane.b32.xlu0 %v1596, 32
  %v1668 = vpop.permute.xlu0 %1667
  %1669 = vrot.lane.b32.xlu0 %v1597, 32
  %v1670 = vpop.permute.xlu0 %1669
  %1671 = vrot.lane.b32.xlu0 %v1598, 32
  %v1672 = vpop.permute.xlu0 %1671
  %1673 = vrot.lane.b32.xlu0 %v1599, 32
  %v1674 = vpop.permute.xlu0 %1673
  %1675 = vrot.lane.b32.xlu0 %v1600, 32
  %v1676 = vpop.permute.xlu0 %1675
  %1677 = vrot.lane.b32.xlu0 %v1601, 32
  %v1678 = vpop.permute.xlu0 %1677
  %1679 = vrot.lane.b32.xlu0 %v1602, 32
  %v1680 = vpop.permute.xlu0 %1679
  %1681 = vrot.lane.b32.xlu0 %v1603, 32
  %v1682 = vpop.permute.xlu0 %1681
  %1683 = vrot.lane.b32.xlu0 %v1604, 32
  %v1684 = vpop.permute.xlu0 %1683
  %1685 = vrot.lane.b32.xlu0 %v1605, 32
  %v1686 = vpop.permute.xlu0 %1685
  %1687 = vrot.lane.b32.xlu0 %v1606, 32
  %v1688 = vpop.permute.xlu0 %1687
  %1689 = vrot.lane.b32.xlu0 %v1607, 32
  %v1690 = vpop.permute.xlu0 %1689
  %1691 = vrot.lane.b32.xlu0 %v1608, 32
  %v1692 = vpop.permute.xlu0 %1691
  %1693 = vrot.lane.b32.xlu0 %v1609, 32
  %v1694 = vpop.permute.xlu0 %1693
  %1695 = vrot.lane.b32.xlu0 %v1610, 32
  %v1696 = vpop.permute.xlu0 %1695
  %1697 = vrot.lane.b32.xlu0 %v1611, 32
  %v1698 = vpop.permute.xlu0 %1697
  %1699 = vrot.lane.b32.xlu0 %v1612, 32
  %v1700 = vpop.permute.xlu0 %1699
  %1701 = vrot.lane.b32.xlu0 %v1613, 32
  %v1702 = vpop.permute.xlu0 %1701
  %1703 = vrot.lane.b32.xlu0 %v1614, 32
  %v1704 = vpop.permute.xlu0 %1703
  %1705 = vrot.lane.b32.xlu0 %v1615, 32
  %v1706 = vpop.permute.xlu0 %1705
  %1707 = vrot.lane.b32.xlu0 %v1616, 32
  %v1708 = vpop.permute.xlu0 %1707
  %1709 = vrot.lane.b32.xlu0 %v1617, 32
  %v1710 = vpop.permute.xlu0 %1709
  %1711 = vrot.lane.b32.xlu0 %v1618, 32
  %v1712 = vpop.permute.xlu0 %1711
  %1713 = vrot.lane.b32.xlu0 %v1619, 32
  %v1714 = vpop.permute.xlu0 %1713
  %1715 = vrot.lane.b32.xlu0 %v1620, 32
  %v1716 = vpop.permute.xlu0 %1715
  %vm1749 = vcmask 294144
  %1750 = vst.msk [vmem:[#allocation4] sm:$0xff] %vm1749, %v1654
  %1751 = vst.msk [vmem:[#allocation4 + $0x8] sm:$0xff] %vm1749, %v1656
  %1752 = vst.msk [vmem:[#allocation4 + $0x10] sm:$0xff] %vm1749, %v1658
  %1753 = vst.msk [vmem:[#allocation4 + $0x18] sm:$0xff] %vm1749, %v1660
  %1754 = vst.msk [vmem:[#allocation4 + $0x20] sm:$0xff] %vm1749, %v1662
  %1755 = vst.msk [vmem:[#allocation4 + $0x28] sm:$0xff] %vm1749, %v1664
  %1756 = vst.msk [vmem:[#allocation4 + $0x30] sm:$0xff] %vm1749, %v1666
  %1757 = vst.msk [vmem:[#allocation4 + $0x38] sm:$0xff] %vm1749, %v1668
  %1758 = vst.msk [vmem:[#allocation4 + $0x40] sm:$0xff] %vm1749, %v1670
  %1759 = vst.msk [vmem:[#allocation4 + $0x48] sm:$0xff] %vm1749, %v1672
  %1760 = vst.msk [vmem:[#allocation4 + $0x50] sm:$0xff] %vm1749, %v1674
  %1761 = vst.msk [vmem:[#allocation4 + $0x58] sm:$0xff] %vm1749, %v1676
  %1762 = vst.msk [vmem:[#allocation4 + $0x60] sm:$0xff] %vm1749, %v1678
  %1763 = vst.msk [vmem:[#allocation4 + $0x68] sm:$0xff] %vm1749, %v1680
  %1764 = vst.msk [vmem:[#allocation4 + $0x70] sm:$0xff] %vm1749, %v1682
  %1765 = vst.msk [vmem:[#allocation4 + $0x78] sm:$0xff] %vm1749, %v1684
  %1766 = vst.msk [vmem:[#allocation4 + $0x80] sm:$0xff] %vm1749, %v1686
  %1767 = vst.msk [vmem:[#allocation4 + $0x88] sm:$0xff] %vm1749, %v1688
  %1768 = vst.msk [vmem:[#allocation4 + $0x90] sm:$0xff] %vm1749, %v1690
  %1769 = vst.msk [vmem:[#allocation4 + $0x98] sm:$0xff] %vm1749, %v1692
  %1770 = vst.msk [vmem:[#allocation4 + $0xa0] sm:$0xff] %vm1749, %v1694
  %1771 = vst.msk [vmem:[#allocation4 + $0xa8] sm:$0xff] %vm1749, %v1696
  %1772 = vst.msk [vmem:[#allocation4 + $0xb0] sm:$0xff] %vm1749, %v1698
  %1773 = vst.msk [vmem:[#allocation4 + $0xb8] sm:$0xff] %vm1749, %v1700
  %1774 = vst.msk [vmem:[#allocation4 + $0xc0] sm:$0xff] %vm1749, %v1702
  %1775 = vst.msk [vmem:[#allocation4 + $0xc8] sm:$0xff] %vm1749, %v1704
  %1776 = vst.msk [vmem:[#allocation4 + $0xd0] sm:$0xff] %vm1749, %v1706
  %1777 = vst.msk [vmem:[#allocation4 + $0xd8] sm:$0xff] %vm1749, %v1708
  %1778 = vst.msk [vmem:[#allocation4 + $0xe0] sm:$0xff] %vm1749, %v1710
  %1779 = vst.msk [vmem:[#allocation4 + $0xe8] sm:$0xff] %vm1749, %v1712
  %1780 = vst.msk [vmem:[#allocation4 + $0xf0] sm:$0xff] %vm1749, %v1714
  %1781 = vst.msk [vmem:[#allocation4 + $0xf8] sm:$0xff] %vm1749, %v1716
  %v1782 = vld [vmem:[#allocation4] sm:$0xff]
  %v1783 = vld [vmem:[#allocation4 + $0x8] sm:$0xff]
  %v1784 = vld [vmem:[#allocation4 + $0x10] sm:$0xff]
  %v1785 = vld [vmem:[#allocation4 + $0x18] sm:$0xff]
  %v1786 = vld [vmem:[#allocation4 + $0x20] sm:$0xff]
  %v1787 = vld [vmem:[#allocation4 + $0x28] sm:$0xff]
  %v1788 = vld [vmem:[#allocation4 + $0x30] sm:$0xff]
  %v1789 = vld [vmem:[#allocation4 + $0x38] sm:$0xff]
  %v1790 = vld [vmem:[#allocation4 + $0x40] sm:$0xff]
  %v1791 = vld [vmem:[#allocation4 + $0x48] sm:$0xff]
  %v1792 = vld [vmem:[#allocation4 + $0x50] sm:$0xff]
  %v1793 = vld [vmem:[#allocation4 + $0x58] sm:$0xff]
  %v1794 = vld [vmem:[#allocation4 + $0x60] sm:$0xff]
  %v1795 = vld [vmem:[#allocation4 + $0x68] sm:$0xff]
  %v1796 = vld [vmem:[#allocation4 + $0x70] sm:$0xff]
  %v1797 = vld [vmem:[#allocation4 + $0x78] sm:$0xff]
  %v1798 = vld [vmem:[#allocation4 + $0x80] sm:$0xff]
  %v1799 = vld [vmem:[#allocation4 + $0x88] sm:$0xff]
  %v1800 = vld [vmem:[#allocation4 + $0x90] sm:$0xff]
  %v1801 = vld [vmem:[#allocation4 + $0x98] sm:$0xff]
  %v1802 = vld [vmem:[#allocation4 + $0xa0] sm:$0xff]
  %v1803 = vld [vmem:[#allocation4 + $0xa8] sm:$0xff]
  %v1804 = vld [vmem:[#allocation4 + $0xb0] sm:$0xff]
  %v1805 = vld [vmem:[#allocation4 + $0xb8] sm:$0xff]
  %v1806 = vld [vmem:[#allocation4 + $0xc0] sm:$0xff]
  %v1807 = vld [vmem:[#allocation4 + $0xc8] sm:$0xff]
  %v1808 = vld [vmem:[#allocation4 + $0xd0] sm:$0xff]
  %v1809 = vld [vmem:[#allocation4 + $0xd8] sm:$0xff]
  %v1810 = vld [vmem:[#allocation4 + $0xe0] sm:$0xff]
  %v1811 = vld [vmem:[#allocation4 + $0xe8] sm:$0xff]
  %v1812 = vld [vmem:[#allocation4 + $0xf0] sm:$0xff]
  %v1813 = vld [vmem:[#allocation4 + $0xf8] sm:$0xff]
  %v1814 = vld [vmem:[%s1] sm:$0xff]
  %v1815 = vld [vmem:[%s1 + $0x8] sm:$0xff]
  %v1816 = vld [vmem:[%s1 + $0x10] sm:$0xff]
  %v1817 = vld [vmem:[%s1 + $0x18] sm:$0xff]
  %v1818 = vld [vmem:[%s1 + $0x20] sm:$0xf]
  %v1819 = vld [vmem:[%s2] sm:$0x1]
  %v1821 = vperm.slane %v1819, 0
  %vm1823 = vcmask 293888
  %v1825 = vsel %vm1823, %v1782, 0
  %v1828 = vsel %vm1823, %v1783, 0
  %v1831 = vsel %vm1823, %v1784, 0
  %v1834 = vsel %vm1823, %v1785, 0
  %v1837 = vsel %vm1823, %v1786, 0
  %v1840 = vsel %vm1823, %v1787, 0
  %v1843 = vsel %vm1823, %v1788, 0
  %v1846 = vsel %vm1823, %v1789, 0
  %v1849 = vsel %vm1823, %v1790, 0
  %v1852 = vsel %vm1823, %v1791, 0
  %v1855 = vsel %vm1823, %v1792, 0
  %v1858 = vsel %vm1823, %v1793, 0
  %v1861 = vsel %vm1823, %v1794, 0
  %v1864 = vsel %vm1823, %v1795, 0
  %v1867 = vsel %vm1823, %v1796, 0
  %v1870 = vsel %vm1823, %v1797, 0
  %v1873 = vsel %vm1823, %v1798, 0
  %v1876 = vsel %vm1823, %v1799, 0
  %v1879 = vsel %vm1823, %v1800, 0
  %v1882 = vsel %vm1823, %v1801, 0
  %v1885 = vsel %vm1823, %v1802, 0
  %v1888 = vsel %vm1823, %v1803, 0
  %v1891 = vsel %vm1823, %v1804, 0
  %v1894 = vsel %vm1823, %v1805, 0
  %v1897 = vsel %vm1823, %v1806, 0
  %v1900 = vsel %vm1823, %v1807, 0
  %v1903 = vsel %vm1823, %v1808, 0
  %v1906 = vsel %vm1823, %v1809, 0
  %v1909 = vsel %vm1823, %v1810, 0
  %v1912 = vsel %vm1823, %v1811, 0
  %v1915 = vsel %vm1823, %v1812, 0
  %v1918 = vsel %vm1823, %v1813, 0
  %vm1920 = vcmask 1043456
  %v1922 = vsel %vm1920, %v1818, 0
  %1924 = vmatpush.msra.mxu0 0.0
  %1925 = vmatpush.msra.mxu0 0.0
  %1926 = vmatpush.msra.mxu0 0.0
  %1927 = vmatpush.msra.mxu0 0.0
  %1928 = vmatpush.msra.mxu0 0.0
  %1929 = vmatpush.msra.mxu0 0.0
  %1930 = vmatpush.msra.mxu0 0.0
  %1931 = vmatpush.msra.mxu0 0.0
  %1932 = vmatpush.msra.mxu0 0.0
  %1933 = vmatpush.msra.mxu0 0.0
  %1934 = vmatpush.msra.mxu0 0.0
  %1935 = vmatpush.msra.mxu0 %v1922
  %1936 = vmatpush.msra.mxu0 %v1817
  %1937 = vmatpush.msra.mxu0 %v1816
  %1938 = vmatpush.msra.mxu0 %v1815
  %1939 = vmatpush.msra.mxu0 %v1814
  %1940 = vmatmul.f32.gmra.mxu0 %v1825
  %v1941 = vpop.f32.mrf.mxu0
  %v1942 = vadd.f32 %v1821, %v1941
  %1943 = vmatmul.f32.gmra.mxu0 %v1828
  %v1944 = vpop.f32.mrf.mxu0
  %v1945 = vadd.f32 %v1821, %v1944
  %1946 = vmatmul.f32.gmra.mxu0 %v1831
  %v1947 = vpop.f32.mrf.mxu0
  %v1948 = vadd.f32 %v1821, %v1947
  %1949 = vmatmul.f32.gmra.mxu0 %v1834
  %v1950 = vpop.f32.mrf.mxu0
  %v1951 = vadd.f32 %v1821, %v1950
  %1952 = vmatmul.f32.gmra.mxu0 %v1837
  %v1953 = vpop.f32.mrf.mxu0
  %v1954 = vadd.f32 %v1821, %v1953
  %1955 = vmatmul.f32.gmra.mxu0 %v1840
  %v1956 = vpop.f32.mrf.mxu0
  %v1957 = vadd.f32 %v1821, %v1956
  %1958 = vmatmul.f32.gmra.mxu0 %v1843
  %v1959 = vpop.f32.mrf.mxu0
  %v1960 = vadd.f32 %v1821, %v1959
  %1961 = vmatmul.f32.gmra.mxu0 %v1846
  %v1962 = vpop.f32.mrf.mxu0
  %v1963 = vadd.f32 %v1821, %v1962
  %1964 = vmatmul.f32.gmra.mxu0 %v1849
  %v1965 = vpop.f32.mrf.mxu0
  %v1966 = vadd.f32 %v1821, %v1965
  %1967 = vmatmul.f32.gmra.mxu0 %v1852
  %v1968 = vpop.f32.mrf.mxu0
  %v1969 = vadd.f32 %v1821, %v1968
  %1970 = vmatmul.f32.gmra.mxu0 %v1855
  %v1971 = vpop.f32.mrf.mxu0
  %v1972 = vadd.f32 %v1821, %v1971
  %1973 = vmatmul.f32.gmra.mxu0 %v1858
  %v1974 = vpop.f32.mrf.mxu0
  %v1975 = vadd.f32 %v1821, %v1974
  %1976 = vmatmul.f32.gmra.mxu0 %v1861
  %v1977 = vpop.f32.mrf.mxu0
  %v1978 = vadd.f32 %v1821, %v1977
  %1979 = vmatmul.f32.gmra.mxu0 %v1864
  %v1980 = vpop.f32.mrf.mxu0
  %v1981 = vadd.f32 %v1821, %v1980
  %1982 = vmatmul.f32.gmra.mxu0 %v1867
  %v1983 = vpop.f32.mrf.mxu0
  %v1984 = vadd.f32 %v1821, %v1983
  %1985 = vmatmul.f32.gmra.mxu0 %v1870
  %v1986 = vpop.f32.mrf.mxu0
  %v1987 = vadd.f32 %v1821, %v1986
  %1988 = vmatmul.f32.gmra.mxu0 %v1873
  %v1989 = vpop.f32.mrf.mxu0
  %v1990 = vadd.f32 %v1821, %v1989
  %1991 = vmatmul.f32.gmra.mxu0 %v1876
  %v1992 = vpop.f32.mrf.mxu0
  %v1993 = vadd.f32 %v1821, %v1992
  %1994 = vmatmul.f32.gmra.mxu0 %v1879
  %v1995 = vpop.f32.mrf.mxu0
  %v1996 = vadd.f32 %v1821, %v1995
  %1997 = vmatmul.f32.gmra.mxu0 %v1882
  %v1998 = vpop.f32.mrf.mxu0
  %v1999 = vadd.f32 %v1821, %v1998
  %2000 = vmatmul.f32.gmra.mxu0 %v1885
  %v2001 = vpop.f32.mrf.mxu0
  %v2002 = vadd.f32 %v1821, %v2001
  %2003 = vmatmul.f32.gmra.mxu0 %v1888
  %v2004 = vpop.f32.mrf.mxu0
  %v2005 = vadd.f32 %v1821, %v2004
  %2006 = vmatmul.f32.gmra.mxu0 %v1891
  %v2007 = vpop.f32.mrf.mxu0
  %v2008 = vadd.f32 %v1821, %v2007
  %2009 = vmatmul.f32.gmra.mxu0 %v1894
  %v2010 = vpop.f32.mrf.mxu0
  %v2011 = vadd.f32 %v1821, %v2010
  %2012 = vmatmul.f32.gmra.mxu0 %v1897
  %v2013 = vpop.f32.mrf.mxu0
  %v2014 = vadd.f32 %v1821, %v2013
  %2015 = vmatmul.f32.gmra.mxu0 %v1900
  %v2016 = vpop.f32.mrf.mxu0
  %v2017 = vadd.f32 %v1821, %v2016
  %2018 = vmatmul.f32.gmra.mxu0 %v1903
  %v2019 = vpop.f32.mrf.mxu0
  %v2020 = vadd.f32 %v1821, %v2019
  %2021 = vmatmul.f32.gmra.mxu0 %v1906
  %v2022 = vpop.f32.mrf.mxu0
  %v2023 = vadd.f32 %v1821, %v2022
  %2024 = vmatmul.f32.gmra.mxu0 %v1909
  %v2025 = vpop.f32.mrf.mxu0
  %v2026 = vadd.f32 %v1821, %v2025
  %2027 = vmatmul.f32.gmra.mxu0 %v1912
  %v2028 = vpop.f32.mrf.mxu0
  %v2029 = vadd.f32 %v1821, %v2028
  %2030 = vmatmul.f32.gmra.mxu0 %v1915
  %v2031 = vpop.f32.mrf.mxu0
  %v2032 = vadd.f32 %v1821, %v2031
  %2033 = vmatmul.f32.gmra.mxu0 %v1918
  %v2034 = vpop.f32.mrf.mxu0
  %v2035 = vadd.f32 %v1821, %v2034
  %2036 = vdwg.mxu0
  %v2037 = vmax.f32 %v1942, 0.0
  %v2038 = vmax.f32 %v1945, 0.0
  %v2039 = vmax.f32 %v1948, 0.0
  %v2040 = vmax.f32 %v1951, 0.0
  %v2041 = vmax.f32 %v1954, 0.0
  %v2042 = vmax.f32 %v1957, 0.0
  %v2043 = vmax.f32 %v1960, 0.0
  %v2044 = vmax.f32 %v1963, 0.0
  %v2045 = vmax.f32 %v1966, 0.0
  %v2046 = vmax.f32 %v1969, 0.0
  %v2047 = vmax.f32 %v1972, 0.0
  %v2048 = vmax.f32 %v1975, 0.0
  %v2049 = vmax.f32 %v1978, 0.0
  %v2050 = vmax.f32 %v1981, 0.0
  %v2051 = vmax.f32 %v1984, 0.0
  %v2052 = vmax.f32 %v1987, 0.0
  %v2053 = vmax.f32 %v1990, 0.0
  %v2054 = vmax.f32 %v1993, 0.0
  %v2055 = vmax.f32 %v1996, 0.0
  %v2056 = vmax.f32 %v1999, 0.0
  %v2057 = vmax.f32 %v2002, 0.0
  %v2058 = vmax.f32 %v2005, 0.0
  %v2059 = vmax.f32 %v2008, 0.0
  %v2060 = vmax.f32 %v2011, 0.0
  %v2061 = vmax.f32 %v2014, 0.0
  %v2062 = vmax.f32 %v2017, 0.0
  %v2063 = vmax.f32 %v2020, 0.0
  %v2064 = vmax.f32 %v2023, 0.0
  %v2065 = vmax.f32 %v2026, 0.0
  %v2066 = vmax.f32 %v2029, 0.0
  %v2067 = vmax.f32 %v2032, 0.0
  %v2068 = vmax.f32 %v2035, 0.0
  %2069 = vst.msk [vmem:[%s76 + $0x1] sm:$0xff] %vm26, %v2037
  %2070 = vst.msk [vmem:[%s76 + $0x9] sm:$0xff] %vm26, %v2038
  %2071 = vst.msk [vmem:[%s76 + $0x19] sm:$0xff] %vm26, %v2039
  %2072 = vst.msk [vmem:[%s76 + $0x21] sm:$0xff] %vm26, %v2040
  %2073 = vst.msk [vmem:[%s76 + $0x31] sm:$0xff] %vm26, %v2041
  %2074 = vst.msk [vmem:[%s76 + $0x39] sm:$0xff] %vm26, %v2042
  %2075 = vst.msk [vmem:[%s76 + $0x49] sm:$0xff] %vm26, %v2043
  %2076 = vst.msk [vmem:[%s76 + $0x51] sm:$0xff] %vm26, %v2044
  %2077 = vst.msk [vmem:[%s76 + $0x61] sm:$0xff] %vm26, %v2045
  %2078 = vst.msk [vmem:[%s76 + $0x69] sm:$0xff] %vm26, %v2046
  %2079 = vst.msk [vmem:[%s76 + $0x79] sm:$0xff] %vm26, %v2047
  %2080 = vst.msk [vmem:[%s76 + $0x81] sm:$0xff] %vm26, %v2048
  %2081 = vst.msk [vmem:[%s76 + $0x91] sm:$0xff] %vm26, %v2049
  %2082 = vst.msk [vmem:[%s76 + $0x99] sm:$0xff] %vm26, %v2050
  %2083 = vst.msk [vmem:[%s76 + $0xa9] sm:$0xff] %vm26, %v2051
  %2084 = vst.msk [vmem:[%s76 + $0xb1] sm:$0xff] %vm26, %v2052
  %2085 = vst.msk [vmem:[%s76 + $0xc1] sm:$0xff] %vm26, %v2053
  %2086 = vst.msk [vmem:[%s76 + $0xc9] sm:$0xff] %vm26, %v2054
  %2087 = vst.msk [vmem:[%s76 + $0xd9] sm:$0xff] %vm26, %v2055
  %2088 = vst.msk [vmem:[%s76 + $0xe1] sm:$0xff] %vm26, %v2056
  %2089 = vst.msk [vmem:[%s76 + $0xf1] sm:$0xff] %vm26, %v2057
  %2090 = vst.msk [vmem:[%s76 + $0xf9] sm:$0xff] %vm26, %v2058
  %2091 = vst.msk [vmem:[%s76 + $0x109] sm:$0xff] %vm26, %v2059
  %2092 = vst.msk [vmem:[%s76 + $0x111] sm:$0xff] %vm26, %v2060
  %2093 = vst.msk [vmem:[%s76 + $0x121] sm:$0xff] %vm26, %v2061
  %2094 = vst.msk [vmem:[%s76 + $0x129] sm:$0xff] %vm26, %v2062
  %2095 = vst.msk [vmem:[%s76 + $0x139] sm:$0xff] %vm26, %v2063
  %2096 = vst.msk [vmem:[%s76 + $0x141] sm:$0xff] %vm26, %v2064
  %2097 = vst.msk [vmem:[%s76 + $0x151] sm:$0xff] %vm26, %v2065
  %2098 = vst.msk [vmem:[%s76 + $0x159] sm:$0xff] %vm26, %v2066
  %2099 = vst.msk [vmem:[%s76 + $0x169] sm:$0xff] %vm26, %v2067
  %2100 = vst.msk [vmem:[%s76 + $0x171] sm:$0xff] %vm26, %v2068
  %v2101 = vld [vmem:[#allocation3] sm:$0xff]
  %v2102 = vld [vmem:[#allocation3 + $0x8] sm:$0xff]
  %v2103 = vld [vmem:[#allocation3 + $0x18] sm:$0xff]
  %v2104 = vld [vmem:[#allocation3 + $0x20] sm:$0xff]
  %v2105 = vld [vmem:[#allocation3 + $0x30] sm:$0xff]
  %v2106 = vld [vmem:[#allocation3 + $0x38] sm:$0xff]
  %v2107 = vld [vmem:[#allocation3 + $0x48] sm:$0xff]
  %v2108 = vld [vmem:[#allocation3 + $0x50] sm:$0xff]
  %v2109 = vld [vmem:[#allocation3 + $0x60] sm:$0xff]
  %v2110 = vld [vmem:[#allocation3 + $0x68] sm:$0xff]
  %v2111 = vld [vmem:[#allocation3 + $0x78] sm:$0xff]
  %v2112 = vld [vmem:[#allocation3 + $0x80] sm:$0xff]
  %v2113 = vld [vmem:[#allocation3 + $0x90] sm:$0xff]
  %v2114 = vld [vmem:[#allocation3 + $0x98] sm:$0xff]
  %v2115 = vld [vmem:[#allocation3 + $0xa8] sm:$0xff]
  %v2116 = vld [vmem:[#allocation3 + $0xb0] sm:$0xff]
  %v2117 = vld [vmem:[#allocation3 + $0xc0] sm:$0xff]
  %v2118 = vld [vmem:[#allocation3 + $0xc8] sm:$0xff]
  %v2119 = vld [vmem:[#allocation3 + $0xd8] sm:$0xff]
  %v2120 = vld [vmem:[#allocation3 + $0xe0] sm:$0xff]
  %v2121 = vld [vmem:[#allocation3 + $0xf0] sm:$0xff]
  %v2122 = vld [vmem:[#allocation3 + $0xf8] sm:$0xff]
  %v2123 = vld [vmem:[#allocation3 + $0x108] sm:$0xff]
  %v2124 = vld [vmem:[#allocation3 + $0x110] sm:$0xff]
  %v2125 = vld [vmem:[#allocation3 + $0x120] sm:$0xff]
  %v2126 = vld [vmem:[#allocation3 + $0x128] sm:$0xff]
  %v2127 = vld [vmem:[#allocation3 + $0x138] sm:$0xff]
  %v2128 = vld [vmem:[#allocation3 + $0x140] sm:$0xff]
  %v2129 = vld [vmem:[#allocation3 + $0x150] sm:$0xff]
  %v2130 = vld [vmem:[#allocation3 + $0x158] sm:$0xff]
  %v2131 = vld [vmem:[#allocation3 + $0x168] sm:$0xff]
  %v2132 = vld [vmem:[#allocation3 + $0x170] sm:$0xff]
  %2133 = vst.msk [vmem:[#allocation4] sm:$0xff] %vm26, %v2101
  %2134 = vst.msk [vmem:[#allocation4 + $0x8] sm:$0xff] %vm26, %v2102
  %2135 = vst.msk [vmem:[#allocation4 + $0x10] sm:$0xff] %vm26, %v2103
  %2136 = vst.msk [vmem:[#allocation4 + $0x18] sm:$0xff] %vm26, %v2104
  %2137 = vst.msk [vmem:[#allocation4 + $0x20] sm:$0xff] %vm26, %v2105
  %2138 = vst.msk [vmem:[#allocation4 + $0x28] sm:$0xff] %vm26, %v2106
  %2139 = vst.msk [vmem:[#allocation4 + $0x30] sm:$0xff] %vm26, %v2107
  %2140 = vst.msk [vmem:[#allocation4 + $0x38] sm:$0xff] %vm26, %v2108
  %2141 = vst.msk [vmem:[#allocation4 + $0x40] sm:$0xff] %vm26, %v2109
  %2142 = vst.msk [vmem:[#allocation4 + $0x48] sm:$0xff] %vm26, %v2110
  %2143 = vst.msk [vmem:[#allocation4 + $0x50] sm:$0xff] %vm26, %v2111
  %2144 = vst.msk [vmem:[#allocation4 + $0x58] sm:$0xff] %vm26, %v2112
  %2145 = vst.msk [vmem:[#allocation4 + $0x60] sm:$0xff] %vm26, %v2113
  %2146 = vst.msk [vmem:[#allocation4 + $0x68] sm:$0xff] %vm26, %v2114
  %2147 = vst.msk [vmem:[#allocation4 + $0x70] sm:$0xff] %vm26, %v2115
  %2148 = vst.msk [vmem:[#allocation4 + $0x78] sm:$0xff] %vm26, %v2116
  %2149 = vst.msk [vmem:[#allocation4 + $0x80] sm:$0xff] %vm26, %v2117
  %2150 = vst.msk [vmem:[#allocation4 + $0x88] sm:$0xff] %vm26, %v2118
  %2151 = vst.msk [vmem:[#allocation4 + $0x90] sm:$0xff] %vm26, %v2119
  %2152 = vst.msk [vmem:[#allocation4 + $0x98] sm:$0xff] %vm26, %v2120
  %2153 = vst.msk [vmem:[#allocation4 + $0xa0] sm:$0xff] %vm26, %v2121
  %2154 = vst.msk [vmem:[#allocation4 + $0xa8] sm:$0xff] %vm26, %v2122
  %2155 = vst.msk [vmem:[#allocation4 + $0xb0] sm:$0xff] %vm26, %v2123
  %2156 = vst.msk [vmem:[#allocation4 + $0xb8] sm:$0xff] %vm26, %v2124
  %2157 = vst.msk [vmem:[#allocation4 + $0xc0] sm:$0xff] %vm26, %v2125
  %2158 = vst.msk [vmem:[#allocation4 + $0xc8] sm:$0xff] %vm26, %v2126
  %2159 = vst.msk [vmem:[#allocation4 + $0xd0] sm:$0xff] %vm26, %v2127
  %2160 = vst.msk [vmem:[#allocation4 + $0xd8] sm:$0xff] %vm26, %v2128
  %2161 = vst.msk [vmem:[#allocation4 + $0xe0] sm:$0xff] %vm26, %v2129
  %2162 = vst.msk [vmem:[#allocation4 + $0xe8] sm:$0xff] %vm26, %v2130
  %2163 = vst.msk [vmem:[#allocation4 + $0xf0] sm:$0xff] %vm26, %v2131
  %2164 = vst.msk [vmem:[#allocation4 + $0xf8] sm:$0xff] %vm26, %v2132
  %v2165 = vld [vmem:[#allocation3 + $0x1] sm:$0xff]
  %v2166 = vld [vmem:[#allocation3 + $0x9] sm:$0xff]
  %v2167 = vld [vmem:[#allocation3 + $0x19] sm:$0xff]
  %v2168 = vld [vmem:[#allocation3 + $0x21] sm:$0xff]
  %v2169 = vld [vmem:[#allocation3 + $0x31] sm:$0xff]
  %v2170 = vld [vmem:[#allocation3 + $0x39] sm:$0xff]
  %v2171 = vld [vmem:[#allocation3 + $0x49] sm:$0xff]
  %v2172 = vld [vmem:[#allocation3 + $0x51] sm:$0xff]
  %v2173 = vld [vmem:[#allocation3 + $0x61] sm:$0xff]
  %v2174 = vld [vmem:[#allocation3 + $0x69] sm:$0xff]
  %v2175 = vld [vmem:[#allocation3 + $0x79] sm:$0xff]
  %v2176 = vld [vmem:[#allocation3 + $0x81] sm:$0xff]
  %v2177 = vld [vmem:[#allocation3 + $0x91] sm:$0xff]
  %v2178 = vld [vmem:[#allocation3 + $0x99] sm:$0xff]
  %v2179 = vld [vmem:[#allocation3 + $0xa9] sm:$0xff]
  %v2180 = vld [vmem:[#allocation3 + $0xb1] sm:$0xff]
  %v2181 = vld [vmem:[#allocation3 + $0xc1] sm:$0xff]
  %v2182 = vld [vmem:[#allocation3 + $0xc9] sm:$0xff]
  %v2183 = vld [vmem:[#allocation3 + $0xd9] sm:$0xff]
  %v2184 = vld [vmem:[#allocation3 + $0xe1] sm:$0xff]
  %v2185 = vld [vmem:[#allocation3 + $0xf1] sm:$0xff]
  %v2186 = vld [vmem:[#allocation3 + $0xf9] sm:$0xff]
  %v2187 = vld [vmem:[#allocation3 + $0x109] sm:$0xff]
  %v2188 = vld [vmem:[#allocation3 + $0x111] sm:$0xff]
  %v2189 = vld [vmem:[#allocation3 + $0x121] sm:$0xff]
  %v2190 = vld [vmem:[#allocation3 + $0x129] sm:$0xff]
  %v2191 = vld [vmem:[#allocation3 + $0x139] sm:$0xff]
  %v2192 = vld [vmem:[#allocation3 + $0x141] sm:$0xff]
  %v2193 = vld [vmem:[#allocation3 + $0x151] sm:$0xff]
  %v2194 = vld [vmem:[#allocation3 + $0x159] sm:$0xff]
  %v2195 = vld [vmem:[#allocation3 + $0x169] sm:$0xff]
  %v2196 = vld [vmem:[#allocation3 + $0x171] sm:$0xff]
  %2229 = vrot.lane.b32.xlu0 %v2165, 4
  %v2230 = vpop.permute.xlu0 %2229
  %2231 = vrot.lane.b32.xlu0 %v2166, 4
  %v2232 = vpop.permute.xlu0 %2231
  %2233 = vrot.lane.b32.xlu0 %v2167, 4
  %v2234 = vpop.permute.xlu0 %2233
  %2235 = vrot.lane.b32.xlu0 %v2168, 4
  %v2236 = vpop.permute.xlu0 %2235
  %2237 = vrot.lane.b32.xlu0 %v2169, 4
  %v2238 = vpop.permute.xlu0 %2237
  %2239 = vrot.lane.b32.xlu0 %v2170, 4
  %v2240 = vpop.permute.xlu0 %2239
  %2241 = vrot.lane.b32.xlu0 %v2171, 4
  %v2242 = vpop.permute.xlu0 %2241
  %2243 = vrot.lane.b32.xlu0 %v2172, 4
  %v2244 = vpop.permute.xlu0 %2243
  %2245 = vrot.lane.b32.xlu0 %v2173, 4
  %v2246 = vpop.permute.xlu0 %2245
  %2247 = vrot.lane.b32.xlu0 %v2174, 4
  %v2248 = vpop.permute.xlu0 %2247
  %2249 = vrot.lane.b32.xlu0 %v2175, 4
  %v2250 = vpop.permute.xlu0 %2249
  %2251 = vrot.lane.b32.xlu0 %v2176, 4
  %v2252 = vpop.permute.xlu0 %2251
  %2253 = vrot.lane.b32.xlu0 %v2177, 4
  %v2254 = vpop.permute.xlu0 %2253
  %2255 = vrot.lane.b32.xlu0 %v2178, 4
  %v2256 = vpop.permute.xlu0 %2255
  %2257 = vrot.lane.b32.xlu0 %v2179, 4
  %v2258 = vpop.permute.xlu0 %2257
  %2259 = vrot.lane.b32.xlu0 %v2180, 4
  %v2260 = vpop.permute.xlu0 %2259
  %2261 = vrot.lane.b32.xlu0 %v2181, 4
  %v2262 = vpop.permute.xlu0 %2261
  %2263 = vrot.lane.b32.xlu0 %v2182, 4
  %v2264 = vpop.permute.xlu0 %2263
  %2265 = vrot.lane.b32.xlu0 %v2183, 4
  %v2266 = vpop.permute.xlu0 %2265
  %2267 = vrot.lane.b32.xlu0 %v2184, 4
  %v2268 = vpop.permute.xlu0 %2267
  %2269 = vrot.lane.b32.xlu0 %v2185, 4
  %v2270 = vpop.permute.xlu0 %2269
  %2271 = vrot.lane.b32.xlu0 %v2186, 4
  %v2272 = vpop.permute.xlu0 %2271
  %2273 = vrot.lane.b32.xlu0 %v2187, 4
  %v2274 = vpop.permute.xlu0 %2273
  %2275 = vrot.lane.b32.xlu0 %v2188, 4
  %v2276 = vpop.permute.xlu0 %2275
  %2277 = vrot.lane.b32.xlu0 %v2189, 4
  %v2278 = vpop.permute.xlu0 %2277
  %2279 = vrot.lane.b32.xlu0 %v2190, 4
  %v2280 = vpop.permute.xlu0 %2279
  %2281 = vrot.lane.b32.xlu0 %v2191, 4
  %v2282 = vpop.permute.xlu0 %2281
  %2283 = vrot.lane.b32.xlu0 %v2192, 4
  %v2284 = vpop.permute.xlu0 %2283
  %2285 = vrot.lane.b32.xlu0 %v2193, 4
  %v2286 = vpop.permute.xlu0 %2285
  %2287 = vrot.lane.b32.xlu0 %v2194, 4
  %v2288 = vpop.permute.xlu0 %2287
  %2289 = vrot.lane.b32.xlu0 %v2195, 4
  %v2290 = vpop.permute.xlu0 %2289
  %2291 = vrot.lane.b32.xlu0 %v2196, 4
  %v2292 = vpop.permute.xlu0 %2291
  %2325 = vst.msk [vmem:[#allocation4] sm:$0xff] %vm397, %v2230
  %2326 = vst.msk [vmem:[#allocation4 + $0x8] sm:$0xff] %vm397, %v2232
  %2327 = vst.msk [vmem:[#allocation4 + $0x10] sm:$0xff] %vm397, %v2234
  %2328 = vst.msk [vmem:[#allocation4 + $0x18] sm:$0xff] %vm397, %v2236
  %2329 = vst.msk [vmem:[#allocation4 + $0x20] sm:$0xff] %vm397, %v2238
  %2330 = vst.msk [vmem:[#allocation4 + $0x28] sm:$0xff] %vm397, %v2240
  %2331 = vst.msk [vmem:[#allocation4 + $0x30] sm:$0xff] %vm397, %v2242
  %2332 = vst.msk [vmem:[#allocation4 + $0x38] sm:$0xff] %vm397, %v2244
  %2333 = vst.msk [vmem:[#allocation4 + $0x40] sm:$0xff] %vm397, %v2246
  %2334 = vst.msk [vmem:[#allocation4 + $0x48] sm:$0xff] %vm397, %v2248
  %2335 = vst.msk [vmem:[#allocation4 + $0x50] sm:$0xff] %vm397, %v2250
  %2336 = vst.msk [vmem:[#allocation4 + $0x58] sm:$0xff] %vm397, %v2252
  %2337 = vst.msk [vmem:[#allocation4 + $0x60] sm:$0xff] %vm397, %v2254
  %2338 = vst.msk [vmem:[#allocation4 + $0x68] sm:$0xff] %vm397, %v2256
  %2339 = vst.msk [vmem:[#allocation4 + $0x70] sm:$0xff] %vm397, %v2258
  %2340 = vst.msk [vmem:[#allocation4 + $0x78] sm:$0xff] %vm397, %v2260
  %2341 = vst.msk [vmem:[#allocation4 + $0x80] sm:$0xff] %vm397, %v2262
  %2342 = vst.msk [vmem:[#allocation4 + $0x88] sm:$0xff] %vm397, %v2264
  %2343 = vst.msk [vmem:[#allocation4 + $0x90] sm:$0xff] %vm397, %v2266
  %2344 = vst.msk [vmem:[#allocation4 + $0x98] sm:$0xff] %vm397, %v2268
  %2345 = vst.msk [vmem:[#allocation4 + $0xa0] sm:$0xff] %vm397, %v2270
  %2346 = vst.msk [vmem:[#allocation4 + $0xa8] sm:$0xff] %vm397, %v2272
  %2347 = vst.msk [vmem:[#allocation4 + $0xb0] sm:$0xff] %vm397, %v2274
  %2348 = vst.msk [vmem:[#allocation4 + $0xb8] sm:$0xff] %vm397, %v2276
  %2349 = vst.msk [vmem:[#allocation4 + $0xc0] sm:$0xff] %vm397, %v2278
  %2350 = vst.msk [vmem:[#allocation4 + $0xc8] sm:$0xff] %vm397, %v2280
  %2351 = vst.msk [vmem:[#allocation4 + $0xd0] sm:$0xff] %vm397, %v2282
  %2352 = vst.msk [vmem:[#allocation4 + $0xd8] sm:$0xff] %vm397, %v2284
  %2353 = vst.msk [vmem:[#allocation4 + $0xe0] sm:$0xff] %vm397, %v2286
  %2354 = vst.msk [vmem:[#allocation4 + $0xe8] sm:$0xff] %vm397, %v2288
  %2355 = vst.msk [vmem:[#allocation4 + $0xf0] sm:$0xff] %vm397, %v2290
  %2356 = vst.msk [vmem:[#allocation4 + $0xf8] sm:$0xff] %vm397, %v2292
  %v2357 = vld [vmem:[#allocation3 + $0x2] sm:$0xff]
  %v2358 = vld [vmem:[#allocation3 + $0xa] sm:$0xff]
  %v2359 = vld [vmem:[#allocation3 + $0x1a] sm:$0xff]
  %v2360 = vld [vmem:[#allocation3 + $0x22] sm:$0xff]
  %v2361 = vld [vmem:[#allocation3 + $0x32] sm:$0xff]
  %v2362 = vld [vmem:[#allocation3 + $0x3a] sm:$0xff]
  %v2363 = vld [vmem:[#allocation3 + $0x4a] sm:$0xff]
  %v2364 = vld [vmem:[#allocation3 + $0x52] sm:$0xff]
  %v2365 = vld [vmem:[#allocation3 + $0x62] sm:$0xff]
  %v2366 = vld [vmem:[#allocation3 + $0x6a] sm:$0xff]
  %v2367 = vld [vmem:[#allocation3 + $0x7a] sm:$0xff]
  %v2368 = vld [vmem:[#allocation3 + $0x82] sm:$0xff]
  %v2369 = vld [vmem:[#allocation3 + $0x92] sm:$0xff]
  %v2370 = vld [vmem:[#allocation3 + $0x9a] sm:$0xff]
  %v2371 = vld [vmem:[#allocation3 + $0xaa] sm:$0xff]
  %v2372 = vld [vmem:[#allocation3 + $0xb2] sm:$0xff]
  %v2373 = vld [vmem:[#allocation3 + $0xc2] sm:$0xff]
  %v2374 = vld [vmem:[#allocation3 + $0xca] sm:$0xff]
  %v2375 = vld [vmem:[#allocation3 + $0xda] sm:$0xff]
  %v2376 = vld [vmem:[#allocation3 + $0xe2] sm:$0xff]
  %v2377 = vld [vmem:[#allocation3 + $0xf2] sm:$0xff]
  %v2378 = vld [vmem:[#allocation3 + $0xfa] sm:$0xff]
  %v2379 = vld [vmem:[#allocation3 + $0x10a] sm:$0xff]
  %v2380 = vld [vmem:[#allocation3 + $0x112] sm:$0xff]
  %v2381 = vld [vmem:[#allocation3 + $0x122] sm:$0xff]
  %v2382 = vld [vmem:[#allocation3 + $0x12a] sm:$0xff]
  %v2383 = vld [vmem:[#allocation3 + $0x13a] sm:$0xff]
  %v2384 = vld [vmem:[#allocation3 + $0x142] sm:$0xff]
  %v2385 = vld [vmem:[#allocation3 + $0x152] sm:$0xff]
  %v2386 = vld [vmem:[#allocation3 + $0x15a] sm:$0xff]
  %v2387 = vld [vmem:[#allocation3 + $0x16a] sm:$0xff]
  %v2388 = vld [vmem:[#allocation3 + $0x172] sm:$0xff]
  %2421 = vrot.lane.b32.xlu0 %v2357, 8
  %v2422 = vpop.permute.xlu0 %2421
  %2423 = vrot.lane.b32.xlu0 %v2358, 8
  %v2424 = vpop.permute.xlu0 %2423
  %2425 = vrot.lane.b32.xlu0 %v2359, 8
  %v2426 = vpop.permute.xlu0 %2425
  %2427 = vrot.lane.b32.xlu0 %v2360, 8
  %v2428 = vpop.permute.xlu0 %2427
  %2429 = vrot.lane.b32.xlu0 %v2361, 8
  %v2430 = vpop.permute.xlu0 %2429
  %2431 = vrot.lane.b32.xlu0 %v2362, 8
  %v2432 = vpop.permute.xlu0 %2431
  %2433 = vrot.lane.b32.xlu0 %v2363, 8
  %v2434 = vpop.permute.xlu0 %2433
  %2435 = vrot.lane.b32.xlu0 %v2364, 8
  %v2436 = vpop.permute.xlu0 %2435
  %2437 = vrot.lane.b32.xlu0 %v2365, 8
  %v2438 = vpop.permute.xlu0 %2437
  %2439 = vrot.lane.b32.xlu0 %v2366, 8
  %v2440 = vpop.permute.xlu0 %2439
  %2441 = vrot.lane.b32.xlu0 %v2367, 8
  %v2442 = vpop.permute.xlu0 %2441
  %2443 = vrot.lane.b32.xlu0 %v2368, 8
  %v2444 = vpop.permute.xlu0 %2443
  %2445 = vrot.lane.b32.xlu0 %v2369, 8
  %v2446 = vpop.permute.xlu0 %2445
  %2447 = vrot.lane.b32.xlu0 %v2370, 8
  %v2448 = vpop.permute.xlu0 %2447
  %2449 = vrot.lane.b32.xlu0 %v2371, 8
  %v2450 = vpop.permute.xlu0 %2449
  %2451 = vrot.lane.b32.xlu0 %v2372, 8
  %v2452 = vpop.permute.xlu0 %2451
  %2453 = vrot.lane.b32.xlu0 %v2373, 8
  %v2454 = vpop.permute.xlu0 %2453
  %2455 = vrot.lane.b32.xlu0 %v2374, 8
  %v2456 = vpop.permute.xlu0 %2455
  %2457 = vrot.lane.b32.xlu0 %v2375, 8
  %v2458 = vpop.permute.xlu0 %2457
  %2459 = vrot.lane.b32.xlu0 %v2376, 8
  %v2460 = vpop.permute.xlu0 %2459
  %2461 = vrot.lane.b32.xlu0 %v2377, 8
  %v2462 = vpop.permute.xlu0 %2461
  %2463 = vrot.lane.b32.xlu0 %v2378, 8
  %v2464 = vpop.permute.xlu0 %2463
  %2465 = vrot.lane.b32.xlu0 %v2379, 8
  %v2466 = vpop.permute.xlu0 %2465
  %2467 = vrot.lane.b32.xlu0 %v2380, 8
  %v2468 = vpop.permute.xlu0 %2467
  %2469 = vrot.lane.b32.xlu0 %v2381, 8
  %v2470 = vpop.permute.xlu0 %2469
  %2471 = vrot.lane.b32.xlu0 %v2382, 8
  %v2472 = vpop.permute.xlu0 %2471
  %2473 = vrot.lane.b32.xlu0 %v2383, 8
  %v2474 = vpop.permute.xlu0 %2473
  %2475 = vrot.lane.b32.xlu0 %v2384, 8
  %v2476 = vpop.permute.xlu0 %2475
  %2477 = vrot.lane.b32.xlu0 %v2385, 8
  %v2478 = vpop.permute.xlu0 %2477
  %2479 = vrot.lane.b32.xlu0 %v2386, 8
  %v2480 = vpop.permute.xlu0 %2479
  %2481 = vrot.lane.b32.xlu0 %v2387, 8
  %v2482 = vpop.permute.xlu0 %2481
  %2483 = vrot.lane.b32.xlu0 %v2388, 8
  %v2484 = vpop.permute.xlu0 %2483
  %2517 = vst.msk [vmem:[#allocation4] sm:$0xff] %vm590, %v2422
  %2518 = vst.msk [vmem:[#allocation4 + $0x8] sm:$0xff] %vm590, %v2424
  %2519 = vst.msk [vmem:[#allocation4 + $0x10] sm:$0xff] %vm590, %v2426
  %2520 = vst.msk [vmem:[#allocation4 + $0x18] sm:$0xff] %vm590, %v2428
  %2521 = vst.msk [vmem:[#allocation4 + $0x20] sm:$0xff] %vm590, %v2430
  %2522 = vst.msk [vmem:[#allocation4 + $0x28] sm:$0xff] %vm590, %v2432
  %2523 = vst.msk [vmem:[#allocation4 + $0x30] sm:$0xff] %vm590, %v2434
  %2524 = vst.msk [vmem:[#allocation4 + $0x38] sm:$0xff] %vm590, %v2436
  %2525 = vst.msk [vmem:[#allocation4 + $0x40] sm:$0xff] %vm590, %v2438
  %2526 = vst.msk [vmem:[#allocation4 + $0x48] sm:$0xff] %vm590, %v2440
  %2527 = vst.msk [vmem:[#allocation4 + $0x50] sm:$0xff] %vm590, %v2442
  %2528 = vst.msk [vmem:[#allocation4 + $0x58] sm:$0xff] %vm590, %v2444
  %2529 = vst.msk [vmem:[#allocation4 + $0x60] sm:$0xff] %vm590, %v2446
  %2530 = vst.msk [vmem:[#allocation4 + $0x68] sm:$0xff] %vm590, %v2448
  %2531 = vst.msk [vmem:[#allocation4 + $0x70] sm:$0xff] %vm590, %v2450
  %2532 = vst.msk [vmem:[#allocation4 + $0x78] sm:$0xff] %vm590, %v2452
  %2533 = vst.msk [vmem:[#allocation4 + $0x80] sm:$0xff] %vm590, %v2454
  %2534 = vst.msk [vmem:[#allocation4 + $0x88] sm:$0xff] %vm590, %v2456
  %2535 = vst.msk [vmem:[#allocation4 + $0x90] sm:$0xff] %vm590, %v2458
  %2536 = vst.msk [vmem:[#allocation4 + $0x98] sm:$0xff] %vm590, %v2460
  %2537 = vst.msk [vmem:[#allocation4 + $0xa0] sm:$0xff] %vm590, %v2462
  %2538 = vst.msk [vmem:[#allocation4 + $0xa8] sm:$0xff] %vm590, %v2464
  %2539 = vst.msk [vmem:[#allocation4 + $0xb0] sm:$0xff] %vm590, %v2466
  %2540 = vst.msk [vmem:[#allocation4 + $0xb8] sm:$0xff] %vm590, %v2468
  %2541 = vst.msk [vmem:[#allocation4 + $0xc0] sm:$0xff] %vm590, %v2470
  %2542 = vst.msk [vmem:[#allocation4 + $0xc8] sm:$0xff] %vm590, %v2472
  %2543 = vst.msk [vmem:[#allocation4 + $0xd0] sm:$0xff] %vm590, %v2474
  %2544 = vst.msk [vmem:[#allocation4 + $0xd8] sm:$0xff] %vm590, %v2476
  %2545 = vst.msk [vmem:[#allocation4 + $0xe0] sm:$0xff] %vm590, %v2478
  %2546 = vst.msk [vmem:[#allocation4 + $0xe8] sm:$0xff] %vm590, %v2480
  %2547 = vst.msk [vmem:[#allocation4 + $0xf0] sm:$0xff] %vm590, %v2482
  %2548 = vst.msk [vmem:[#allocation4 + $0xf8] sm:$0xff] %vm590, %v2484
  %v2549 = vld [vmem:[%s76] sm:$0xff]
  %v2550 = vld [vmem:[%s76 + $0x8] sm:$0xff]
  %v2551 = vld [vmem:[%s76 + $0x18] sm:$0xff]
  %v2552 = vld [vmem:[%s76 + $0x20] sm:$0xff]
  %v2553 = vld [vmem:[%s76 + $0x30] sm:$0xff]
  %v2554 = vld [vmem:[%s76 + $0x38] sm:$0xff]
  %v2555 = vld [vmem:[%s76 + $0x48] sm:$0xff]
  %v2556 = vld [vmem:[%s76 + $0x50] sm:$0xff]
  %v2557 = vld [vmem:[%s76 + $0x60] sm:$0xff]
  %v2558 = vld [vmem:[%s76 + $0x68] sm:$0xff]
  %v2559 = vld [vmem:[%s76 + $0x78] sm:$0xff]
  %v2560 = vld [vmem:[%s76 + $0x80] sm:$0xff]
  %v2561 = vld [vmem:[%s76 + $0x90] sm:$0xff]
  %v2562 = vld [vmem:[%s76 + $0x98] sm:$0xff]
  %v2563 = vld [vmem:[%s76 + $0xa8] sm:$0xff]
  %v2564 = vld [vmem:[%s76 + $0xb0] sm:$0xff]
  %v2565 = vld [vmem:[%s76 + $0xc0] sm:$0xff]
  %v2566 = vld [vmem:[%s76 + $0xc8] sm:$0xff]
  %v2567 = vld [vmem:[%s76 + $0xd8] sm:$0xff]
  %v2568 = vld [vmem:[%s76 + $0xe0] sm:$0xff]
  %v2569 = vld [vmem:[%s76 + $0xf0] sm:$0xff]
  %v2570 = vld [vmem:[%s76 + $0xf8] sm:$0xff]
  %v2571 = vld [vmem:[%s76 + $0x108] sm:$0xff]
  %v2572 = vld [vmem:[%s76 + $0x110] sm:$0xff]
  %v2573 = vld [vmem:[%s76 + $0x120] sm:$0xff]
  %v2574 = vld [vmem:[%s76 + $0x128] sm:$0xff]
  %v2575 = vld [vmem:[%s76 + $0x138] sm:$0xff]
  %v2576 = vld [vmem:[%s76 + $0x140] sm:$0xff]
  %v2577 = vld [vmem:[%s76 + $0x150] sm:$0xff]
  %v2578 = vld [vmem:[%s76 + $0x158] sm:$0xff]
  %v2579 = vld [vmem:[%s76 + $0x168] sm:$0xff]
  %v2580 = vld [vmem:[%s76 + $0x170] sm:$0xff]
  %2613 = vrot.lane.b32.xlu0 %v2549, 12
  %v2614 = vpop.permute.xlu0 %2613
  %2615 = vrot.lane.b32.xlu0 %v2550, 12
  %v2616 = vpop.permute.xlu0 %2615
  %2617 = vrot.lane.b32.xlu0 %v2551, 12
  %v2618 = vpop.permute.xlu0 %2617
  %2619 = vrot.lane.b32.xlu0 %v2552, 12
  %v2620 = vpop.permute.xlu0 %2619
  %2621 = vrot.lane.b32.xlu0 %v2553, 12
  %v2622 = vpop.permute.xlu0 %2621
  %2623 = vrot.lane.b32.xlu0 %v2554, 12
  %v2624 = vpop.permute.xlu0 %2623
  %2625 = vrot.lane.b32.xlu0 %v2555, 12
  %v2626 = vpop.permute.xlu0 %2625
  %2627 = vrot.lane.b32.xlu0 %v2556, 12
  %v2628 = vpop.permute.xlu0 %2627
  %2629 = vrot.lane.b32.xlu0 %v2557, 12
  %v2630 = vpop.permute.xlu0 %2629
  %2631 = vrot.lane.b32.xlu0 %v2558, 12
  %v2632 = vpop.permute.xlu0 %2631
  %2633 = vrot.lane.b32.xlu0 %v2559, 12
  %v2634 = vpop.permute.xlu0 %2633
  %2635 = vrot.lane.b32.xlu0 %v2560, 12
  %v2636 = vpop.permute.xlu0 %2635
  %2637 = vrot.lane.b32.xlu0 %v2561, 12
  %v2638 = vpop.permute.xlu0 %2637
  %2639 = vrot.lane.b32.xlu0 %v2562, 12
  %v2640 = vpop.permute.xlu0 %2639
  %2641 = vrot.lane.b32.xlu0 %v2563, 12
  %v2642 = vpop.permute.xlu0 %2641
  %2643 = vrot.lane.b32.xlu0 %v2564, 12
  %v2644 = vpop.permute.xlu0 %2643
  %2645 = vrot.lane.b32.xlu0 %v2565, 12
  %v2646 = vpop.permute.xlu0 %2645
  %2647 = vrot.lane.b32.xlu0 %v2566, 12
  %v2648 = vpop.permute.xlu0 %2647
  %2649 = vrot.lane.b32.xlu0 %v2567, 12
  %v2650 = vpop.permute.xlu0 %2649
  %2651 = vrot.lane.b32.xlu0 %v2568, 12
  %v2652 = vpop.permute.xlu0 %2651
  %2653 = vrot.lane.b32.xlu0 %v2569, 12
  %v2654 = vpop.permute.xlu0 %2653
  %2655 = vrot.lane.b32.xlu0 %v2570, 12
  %v2656 = vpop.permute.xlu0 %2655
  %2657 = vrot.lane.b32.xlu0 %v2571, 12
  %v2658 = vpop.permute.xlu0 %2657
  %2659 = vrot.lane.b32.xlu0 %v2572, 12
  %v2660 = vpop.permute.xlu0 %2659
  %2661 = vrot.lane.b32.xlu0 %v2573, 12
  %v2662 = vpop.permute.xlu0 %2661
  %2663 = vrot.lane.b32.xlu0 %v2574, 12
  %v2664 = vpop.permute.xlu0 %2663
  %2665 = vrot.lane.b32.xlu0 %v2575, 12
  %v2666 = vpop.permute.xlu0 %2665
  %2667 = vrot.lane.b32.xlu0 %v2576, 12
  %v2668 = vpop.permute.xlu0 %2667
  %2669 = vrot.lane.b32.xlu0 %v2577, 12
  %v2670 = vpop.permute.xlu0 %2669
  %2671 = vrot.lane.b32.xlu0 %v2578, 12
  %v2672 = vpop.permute.xlu0 %2671
  %2673 = vrot.lane.b32.xlu0 %v2579, 12
  %v2674 = vpop.permute.xlu0 %2673
  %2675 = vrot.lane.b32.xlu0 %v2580, 12
  %v2676 = vpop.permute.xlu0 %2675
  %2709 = vst.msk [vmem:[#allocation4] sm:$0xff] %vm783, %v2614
  %2710 = vst.msk [vmem:[#allocation4 + $0x8] sm:$0xff] %vm783, %v2616
  %2711 = vst.msk [vmem:[#allocation4 + $0x10] sm:$0xff] %vm783, %v2618
  %2712 = vst.msk [vmem:[#allocation4 + $0x18] sm:$0xff] %vm783, %v2620
  %2713 = vst.msk [vmem:[#allocation4 + $0x20] sm:$0xff] %vm783, %v2622
  %2714 = vst.msk [vmem:[#allocation4 + $0x28] sm:$0xff] %vm783, %v2624
  %2715 = vst.msk [vmem:[#allocation4 + $0x30] sm:$0xff] %vm783, %v2626
  %2716 = vst.msk [vmem:[#allocation4 + $0x38] sm:$0xff] %vm783, %v2628
  %2717 = vst.msk [vmem:[#allocation4 + $0x40] sm:$0xff] %vm783, %v2630
  %2718 = vst.msk [vmem:[#allocation4 + $0x48] sm:$0xff] %vm783, %v2632
  %2719 = vst.msk [vmem:[#allocation4 + $0x50] sm:$0xff] %vm783, %v2634
  %2720 = vst.msk [vmem:[#allocation4 + $0x58] sm:$0xff] %vm783, %v2636
  %2721 = vst.msk [vmem:[#allocation4 + $0x60] sm:$0xff] %vm783, %v2638
  %2722 = vst.msk [vmem:[#allocation4 + $0x68] sm:$0xff] %vm783, %v2640
  %2723 = vst.msk [vmem:[#allocation4 + $0x70] sm:$0xff] %vm783, %v2642
  %2724 = vst.msk [vmem:[#allocation4 + $0x78] sm:$0xff] %vm783, %v2644
  %2725 = vst.msk [vmem:[#allocation4 + $0x80] sm:$0xff] %vm783, %v2646
  %2726 = vst.msk [vmem:[#allocation4 + $0x88] sm:$0xff] %vm783, %v2648
  %2727 = vst.msk [vmem:[#allocation4 + $0x90] sm:$0xff] %vm783, %v2650
  %2728 = vst.msk [vmem:[#allocation4 + $0x98] sm:$0xff] %vm783, %v2652
  %2729 = vst.msk [vmem:[#allocation4 + $0xa0] sm:$0xff] %vm783, %v2654
  %2730 = vst.msk [vmem:[#allocation4 + $0xa8] sm:$0xff] %vm783, %v2656
  %2731 = vst.msk [vmem:[#allocation4 + $0xb0] sm:$0xff] %vm783, %v2658
  %2732 = vst.msk [vmem:[#allocation4 + $0xb8] sm:$0xff] %vm783, %v2660
  %2733 = vst.msk [vmem:[#allocation4 + $0xc0] sm:$0xff] %vm783, %v2662
  %2734 = vst.msk [vmem:[#allocation4 + $0xc8] sm:$0xff] %vm783, %v2664
  %2735 = vst.msk [vmem:[#allocation4 + $0xd0] sm:$0xff] %vm783, %v2666
  %2736 = vst.msk [vmem:[#allocation4 + $0xd8] sm:$0xff] %vm783, %v2668
  %2737 = vst.msk [vmem:[#allocation4 + $0xe0] sm:$0xff] %vm783, %v2670
  %2738 = vst.msk [vmem:[#allocation4 + $0xe8] sm:$0xff] %vm783, %v2672
  %2739 = vst.msk [vmem:[#allocation4 + $0xf0] sm:$0xff] %vm783, %v2674
  %2740 = vst.msk [vmem:[#allocation4 + $0xf8] sm:$0xff] %vm783, %v2676
  %v2741 = vld [vmem:[%s76 + $0x1] sm:$0xff]
  %v2742 = vld [vmem:[%s76 + $0x9] sm:$0xff]
  %v2743 = vld [vmem:[%s76 + $0x19] sm:$0xff]
  %v2744 = vld [vmem:[%s76 + $0x21] sm:$0xff]
  %v2745 = vld [vmem:[%s76 + $0x31] sm:$0xff]
  %v2746 = vld [vmem:[%s76 + $0x39] sm:$0xff]
  %v2747 = vld [vmem:[%s76 + $0x49] sm:$0xff]
  %v2748 = vld [vmem:[%s76 + $0x51] sm:$0xff]
  %v2749 = vld [vmem:[%s76 + $0x61] sm:$0xff]
  %v2750 = vld [vmem:[%s76 + $0x69] sm:$0xff]
  %v2751 = vld [vmem:[%s76 + $0x79] sm:$0xff]
  %v2752 = vld [vmem:[%s76 + $0x81] sm:$0xff]
  %v2753 = vld [vmem:[%s76 + $0x91] sm:$0xff]
  %v2754 = vld [vmem:[%s76 + $0x99] sm:$0xff]
  %v2755 = vld [vmem:[%s76 + $0xa9] sm:$0xff]
  %v2756 = vld [vmem:[%s76 + $0xb1] sm:$0xff]
  %v2757 = vld [vmem:[%s76 + $0xc1] sm:$0xff]
  %v2758 = vld [vmem:[%s76 + $0xc9] sm:$0xff]
  %v2759 = vld [vmem:[%s76 + $0xd9] sm:$0xff]
  %v2760 = vld [vmem:[%s76 + $0xe1] sm:$0xff]
  %v2761 = vld [vmem:[%s76 + $0xf1] sm:$0xff]
  %v2762 = vld [vmem:[%s76 + $0xf9] sm:$0xff]
  %v2763 = vld [vmem:[%s76 + $0x109] sm:$0xff]
  %v2764 = vld [vmem:[%s76 + $0x111] sm:$0xff]
  %v2765 = vld [vmem:[%s76 + $0x121] sm:$0xff]
  %v2766 = vld [vmem:[%s76 + $0x129] sm:$0xff]
  %v2767 = vld [vmem:[%s76 + $0x139] sm:$0xff]
  %v2768 = vld [vmem:[%s76 + $0x141] sm:$0xff]
  %v2769 = vld [vmem:[%s76 + $0x151] sm:$0xff]
  %v2770 = vld [vmem:[%s76 + $0x159] sm:$0xff]
  %v2771 = vld [vmem:[%s76 + $0x169] sm:$0xff]
  %v2772 = vld [vmem:[%s76 + $0x171] sm:$0xff]
  %2805 = vrot.lane.b32.xlu0 %v2741, 16
  %v2806 = vpop.permute.xlu0 %2805
  %2807 = vrot.lane.b32.xlu0 %v2742, 16
  %v2808 = vpop.permute.xlu0 %2807
  %2809 = vrot.lane.b32.xlu0 %v2743, 16
  %v2810 = vpop.permute.xlu0 %2809
  %2811 = vrot.lane.b32.xlu0 %v2744, 16
  %v2812 = vpop.permute.xlu0 %2811
  %2813 = vrot.lane.b32.xlu0 %v2745, 16
  %v2814 = vpop.permute.xlu0 %2813
  %2815 = vrot.lane.b32.xlu0 %v2746, 16
  %v2816 = vpop.permute.xlu0 %2815
  %2817 = vrot.lane.b32.xlu0 %v2747, 16
  %v2818 = vpop.permute.xlu0 %2817
  %2819 = vrot.lane.b32.xlu0 %v2748, 16
  %v2820 = vpop.permute.xlu0 %2819
  %2821 = vrot.lane.b32.xlu0 %v2749, 16
  %v2822 = vpop.permute.xlu0 %2821
  %2823 = vrot.lane.b32.xlu0 %v2750, 16
  %v2824 = vpop.permute.xlu0 %2823
  %2825 = vrot.lane.b32.xlu0 %v2751, 16
  %v2826 = vpop.permute.xlu0 %2825
  %2827 = vrot.lane.b32.xlu0 %v2752, 16
  %v2828 = vpop.permute.xlu0 %2827
  %2829 = vrot.lane.b32.xlu0 %v2753, 16
  %v2830 = vpop.permute.xlu0 %2829
  %2831 = vrot.lane.b32.xlu0 %v2754, 16
  %v2832 = vpop.permute.xlu0 %2831
  %2833 = vrot.lane.b32.xlu0 %v2755, 16
  %v2834 = vpop.permute.xlu0 %2833
  %2835 = vrot.lane.b32.xlu0 %v2756, 16
  %v2836 = vpop.permute.xlu0 %2835
  %2837 = vrot.lane.b32.xlu0 %v2757, 16
  %v2838 = vpop.permute.xlu0 %2837
  %2839 = vrot.lane.b32.xlu0 %v2758, 16
  %v2840 = vpop.permute.xlu0 %2839
  %2841 = vrot.lane.b32.xlu0 %v2759, 16
  %v2842 = vpop.permute.xlu0 %2841
  %2843 = vrot.lane.b32.xlu0 %v2760, 16
  %v2844 = vpop.permute.xlu0 %2843
  %2845 = vrot.lane.b32.xlu0 %v2761, 16
  %v2846 = vpop.permute.xlu0 %2845
  %2847 = vrot.lane.b32.xlu0 %v2762, 16
  %v2848 = vpop.permute.xlu0 %2847
  %2849 = vrot.lane.b32.xlu0 %v2763, 16
  %v2850 = vpop.permute.xlu0 %2849
  %2851 = vrot.lane.b32.xlu0 %v2764, 16
  %v2852 = vpop.permute.xlu0 %2851
  %2853 = vrot.lane.b32.xlu0 %v2765, 16
  %v2854 = vpop.permute.xlu0 %2853
  %2855 = vrot.lane.b32.xlu0 %v2766, 16
  %v2856 = vpop.permute.xlu0 %2855
  %2857 = vrot.lane.b32.xlu0 %v2767, 16
  %v2858 = vpop.permute.xlu0 %2857
  %2859 = vrot.lane.b32.xlu0 %v2768, 16
  %v2860 = vpop.permute.xlu0 %2859
  %2861 = vrot.lane.b32.xlu0 %v2769, 16
  %v2862 = vpop.permute.xlu0 %2861
  %2863 = vrot.lane.b32.xlu0 %v2770, 16
  %v2864 = vpop.permute.xlu0 %2863
  %2865 = vrot.lane.b32.xlu0 %v2771, 16
  %v2866 = vpop.permute.xlu0 %2865
  %2867 = vrot.lane.b32.xlu0 %v2772, 16
  %v2868 = vpop.permute.xlu0 %2867
  %2901 = vst.msk [vmem:[#allocation4] sm:$0xff] %vm976, %v2806
  %2902 = vst.msk [vmem:[#allocation4 + $0x8] sm:$0xff] %vm976, %v2808
  %2903 = vst.msk [vmem:[#allocation4 + $0x10] sm:$0xff] %vm976, %v2810
  %2904 = vst.msk [vmem:[#allocation4 + $0x18] sm:$0xff] %vm976, %v2812
  %2905 = vst.msk [vmem:[#allocation4 + $0x20] sm:$0xff] %vm976, %v2814
  %2906 = vst.msk [vmem:[#allocation4 + $0x28] sm:$0xff] %vm976, %v2816
  %2907 = vst.msk [vmem:[#allocation4 + $0x30] sm:$0xff] %vm976, %v2818
  %2908 = vst.msk [vmem:[#allocation4 + $0x38] sm:$0xff] %vm976, %v2820
  %2909 = vst.msk [vmem:[#allocation4 + $0x40] sm:$0xff] %vm976, %v2822
  %2910 = vst.msk [vmem:[#allocation4 + $0x48] sm:$0xff] %vm976, %v2824
  %2911 = vst.msk [vmem:[#allocation4 + $0x50] sm:$0xff] %vm976, %v2826
  %2912 = vst.msk [vmem:[#allocation4 + $0x58] sm:$0xff] %vm976, %v2828
  %2913 = vst.msk [vmem:[#allocation4 + $0x60] sm:$0xff] %vm976, %v2830
  %2914 = vst.msk [vmem:[#allocation4 + $0x68] sm:$0xff] %vm976, %v2832
  %2915 = vst.msk [vmem:[#allocation4 + $0x70] sm:$0xff] %vm976, %v2834
  %2916 = vst.msk [vmem:[#allocation4 + $0x78] sm:$0xff] %vm976, %v2836
  %2917 = vst.msk [vmem:[#allocation4 + $0x80] sm:$0xff] %vm976, %v2838
  %2918 = vst.msk [vmem:[#allocation4 + $0x88] sm:$0xff] %vm976, %v2840
  %2919 = vst.msk [vmem:[#allocation4 + $0x90] sm:$0xff] %vm976, %v2842
  %2920 = vst.msk [vmem:[#allocation4 + $0x98] sm:$0xff] %vm976, %v2844
  %2921 = vst.msk [vmem:[#allocation4 + $0xa0] sm:$0xff] %vm976, %v2846
  %2922 = vst.msk [vmem:[#allocation4 + $0xa8] sm:$0xff] %vm976, %v2848
  %2923 = vst.msk [vmem:[#allocation4 + $0xb0] sm:$0xff] %vm976, %v2850
  %2924 = vst.msk [vmem:[#allocation4 + $0xb8] sm:$0xff] %vm976, %v2852
  %2925 = vst.msk [vmem:[#allocation4 + $0xc0] sm:$0xff] %vm976, %v2854
  %2926 = vst.msk [vmem:[#allocation4 + $0xc8] sm:$0xff] %vm976, %v2856
  %2927 = vst.msk [vmem:[#allocation4 + $0xd0] sm:$0xff] %vm976, %v2858
  %2928 = vst.msk [vmem:[#allocation4 + $0xd8] sm:$0xff] %vm976, %v2860
  %2929 = vst.msk [vmem:[#allocation4 + $0xe0] sm:$0xff] %vm976, %v2862
  %2930 = vst.msk [vmem:[#allocation4 + $0xe8] sm:$0xff] %vm976, %v2864
  %2931 = vst.msk [vmem:[#allocation4 + $0xf0] sm:$0xff] %vm976, %v2866
  %2932 = vst.msk [vmem:[#allocation4 + $0xf8] sm:$0xff] %vm976, %v2868
  %v2933 = vld [vmem:[%s76 + $0x2] sm:$0xff]
  %v2934 = vld [vmem:[%s76 + $0xa] sm:$0xff]
  %v2935 = vld [vmem:[%s76 + $0x1a] sm:$0xff]
  %v2936 = vld [vmem:[%s76 + $0x22] sm:$0xff]
  %v2937 = vld [vmem:[%s76 + $0x32] sm:$0xff]
  %v2938 = vld [vmem:[%s76 + $0x3a] sm:$0xff]
  %v2939 = vld [vmem:[%s76 + $0x4a] sm:$0xff]
  %v2940 = vld [vmem:[%s76 + $0x52] sm:$0xff]
  %v2941 = vld [vmem:[%s76 + $0x62] sm:$0xff]
  %v2942 = vld [vmem:[%s76 + $0x6a] sm:$0xff]
  %v2943 = vld [vmem:[%s76 + $0x7a] sm:$0xff]
  %v2944 = vld [vmem:[%s76 + $0x82] sm:$0xff]
  %v2945 = vld [vmem:[%s76 + $0x92] sm:$0xff]
  %v2946 = vld [vmem:[%s76 + $0x9a] sm:$0xff]
  %v2947 = vld [vmem:[%s76 + $0xaa] sm:$0xff]
  %v2948 = vld [vmem:[%s76 + $0xb2] sm:$0xff]
  %v2949 = vld [vmem:[%s76 + $0xc2] sm:$0xff]
  %v2950 = vld [vmem:[%s76 + $0xca] sm:$0xff]
  %v2951 = vld [vmem:[%s76 + $0xda] sm:$0xff]
  %v2952 = vld [vmem:[%s76 + $0xe2] sm:$0xff]
  %v2953 = vld [vmem:[%s76 + $0xf2] sm:$0xff]
  %v2954 = vld [vmem:[%s76 + $0xfa] sm:$0xff]
  %v2955 = vld [vmem:[%s76 + $0x10a] sm:$0xff]
  %v2956 = vld [vmem:[%s76 + $0x112] sm:$0xff]
  %v2957 = vld [vmem:[%s76 + $0x122] sm:$0xff]
  %v2958 = vld [vmem:[%s76 + $0x12a] sm:$0xff]
  %v2959 = vld [vmem:[%s76 + $0x13a] sm:$0xff]
  %v2960 = vld [vmem:[%s76 + $0x142] sm:$0xff]
  %v2961 = vld [vmem:[%s76 + $0x152] sm:$0xff]
  %v2962 = vld [vmem:[%s76 + $0x15a] sm:$0xff]
  %v2963 = vld [vmem:[%s76 + $0x16a] sm:$0xff]
  %v2964 = vld [vmem:[%s76 + $0x172] sm:$0xff]
  %2997 = vrot.lane.b32.xlu0 %v2933, 20
  %v2998 = vpop.permute.xlu0 %2997
  %2999 = vrot.lane.b32.xlu0 %v2934, 20
  %v3000 = vpop.permute.xlu0 %2999
  %3001 = vrot.lane.b32.xlu0 %v2935, 20
  %v3002 = vpop.permute.xlu0 %3001
  %3003 = vrot.lane.b32.xlu0 %v2936, 20
  %v3004 = vpop.permute.xlu0 %3003
  %3005 = vrot.lane.b32.xlu0 %v2937, 20
  %v3006 = vpop.permute.xlu0 %3005
  %3007 = vrot.lane.b32.xlu0 %v2938, 20
  %v3008 = vpop.permute.xlu0 %3007
  %3009 = vrot.lane.b32.xlu0 %v2939, 20
  %v3010 = vpop.permute.xlu0 %3009
  %3011 = vrot.lane.b32.xlu0 %v2940, 20
  %v3012 = vpop.permute.xlu0 %3011
  %3013 = vrot.lane.b32.xlu0 %v2941, 20
  %v3014 = vpop.permute.xlu0 %3013
  %3015 = vrot.lane.b32.xlu0 %v2942, 20
  %v3016 = vpop.permute.xlu0 %3015
  %3017 = vrot.lane.b32.xlu0 %v2943, 20
  %v3018 = vpop.permute.xlu0 %3017
  %3019 = vrot.lane.b32.xlu0 %v2944, 20
  %v3020 = vpop.permute.xlu0 %3019
  %3021 = vrot.lane.b32.xlu0 %v2945, 20
  %v3022 = vpop.permute.xlu0 %3021
  %3023 = vrot.lane.b32.xlu0 %v2946, 20
  %v3024 = vpop.permute.xlu0 %3023
  %3025 = vrot.lane.b32.xlu0 %v2947, 20
  %v3026 = vpop.permute.xlu0 %3025
  %3027 = vrot.lane.b32.xlu0 %v2948, 20
  %v3028 = vpop.permute.xlu0 %3027
  %3029 = vrot.lane.b32.xlu0 %v2949, 20
  %v3030 = vpop.permute.xlu0 %3029
  %3031 = vrot.lane.b32.xlu0 %v2950, 20
  %v3032 = vpop.permute.xlu0 %3031
  %3033 = vrot.lane.b32.xlu0 %v2951, 20
  %v3034 = vpop.permute.xlu0 %3033
  %3035 = vrot.lane.b32.xlu0 %v2952, 20
  %v3036 = vpop.permute.xlu0 %3035
  %3037 = vrot.lane.b32.xlu0 %v2953, 20
  %v3038 = vpop.permute.xlu0 %3037
  %3039 = vrot.lane.b32.xlu0 %v2954, 20
  %v3040 = vpop.permute.xlu0 %3039
  %3041 = vrot.lane.b32.xlu0 %v2955, 20
  %v3042 = vpop.permute.xlu0 %3041
  %3043 = vrot.lane.b32.xlu0 %v2956, 20
  %v3044 = vpop.permute.xlu0 %3043
  %3045 = vrot.lane.b32.xlu0 %v2957, 20
  %v3046 = vpop.permute.xlu0 %3045
  %3047 = vrot.lane.b32.xlu0 %v2958, 20
  %v3048 = vpop.permute.xlu0 %3047
  %3049 = vrot.lane.b32.xlu0 %v2959, 20
  %v3050 = vpop.permute.xlu0 %3049
  %3051 = vrot.lane.b32.xlu0 %v2960, 20
  %v3052 = vpop.permute.xlu0 %3051
  %3053 = vrot.lane.b32.xlu0 %v2961, 20
  %v3054 = vpop.permute.xlu0 %3053
  %3055 = vrot.lane.b32.xlu0 %v2962, 20
  %v3056 = vpop.permute.xlu0 %3055
  %3057 = vrot.lane.b32.xlu0 %v2963, 20
  %v3058 = vpop.permute.xlu0 %3057
  %3059 = vrot.lane.b32.xlu0 %v2964, 20
  %v3060 = vpop.permute.xlu0 %3059
  %3093 = vst.msk [vmem:[#allocation4] sm:$0xff] %vm1169, %v2998
  %3094 = vst.msk [vmem:[#allocation4 + $0x8] sm:$0xff] %vm1169, %v3000
  %3095 = vst.msk [vmem:[#allocation4 + $0x10] sm:$0xff] %vm1169, %v3002
  %3096 = vst.msk [vmem:[#allocation4 + $0x18] sm:$0xff] %vm1169, %v3004
  %3097 = vst.msk [vmem:[#allocation4 + $0x20] sm:$0xff] %vm1169, %v3006
  %3098 = vst.msk [vmem:[#allocation4 + $0x28] sm:$0xff] %vm1169, %v3008
  %3099 = vst.msk [vmem:[#allocation4 + $0x30] sm:$0xff] %vm1169, %v3010
  %3100 = vst.msk [vmem:[#allocation4 + $0x38] sm:$0xff] %vm1169, %v3012
  %3101 = vst.msk [vmem:[#allocation4 + $0x40] sm:$0xff] %vm1169, %v3014
  %3102 = vst.msk [vmem:[#allocation4 + $0x48] sm:$0xff] %vm1169, %v3016
  %3103 = vst.msk [vmem:[#allocation4 + $0x50] sm:$0xff] %vm1169, %v3018
  %3104 = vst.msk [vmem:[#allocation4 + $0x58] sm:$0xff] %vm1169, %v3020
  %3105 = vst.msk [vmem:[#allocation4 + $0x60] sm:$0xff] %vm1169, %v3022
  %3106 = vst.msk [vmem:[#allocation4 + $0x68] sm:$0xff] %vm1169, %v3024
  %3107 = vst.msk [vmem:[#allocation4 + $0x70] sm:$0xff] %vm1169, %v3026
  %3108 = vst.msk [vmem:[#allocation4 + $0x78] sm:$0xff] %vm1169, %v3028
  %3109 = vst.msk [vmem:[#allocation4 + $0x80] sm:$0xff] %vm1169, %v3030
  %3110 = vst.msk [vmem:[#allocation4 + $0x88] sm:$0xff] %vm1169, %v3032
  %3111 = vst.msk [vmem:[#allocation4 + $0x90] sm:$0xff] %vm1169, %v3034
  %3112 = vst.msk [vmem:[#allocation4 + $0x98] sm:$0xff] %vm1169, %v3036
  %3113 = vst.msk [vmem:[#allocation4 + $0xa0] sm:$0xff] %vm1169, %v3038
  %3114 = vst.msk [vmem:[#allocation4 + $0xa8] sm:$0xff] %vm1169, %v3040
  %3115 = vst.msk [vmem:[#allocation4 + $0xb0] sm:$0xff] %vm1169, %v3042
  %3116 = vst.msk [vmem:[#allocation4 + $0xb8] sm:$0xff] %vm1169, %v3044
  %3117 = vst.msk [vmem:[#allocation4 + $0xc0] sm:$0xff] %vm1169, %v3046
  %3118 = vst.msk [vmem:[#allocation4 + $0xc8] sm:$0xff] %vm1169, %v3048
  %3119 = vst.msk [vmem:[#allocation4 + $0xd0] sm:$0xff] %vm1169, %v3050
  %3120 = vst.msk [vmem:[#allocation4 + $0xd8] sm:$0xff] %vm1169, %v3052
  %3121 = vst.msk [vmem:[#allocation4 + $0xe0] sm:$0xff] %vm1169, %v3054
  %3122 = vst.msk [vmem:[#allocation4 + $0xe8] sm:$0xff] %vm1169, %v3056
  %3123 = vst.msk [vmem:[#allocation4 + $0xf0] sm:$0xff] %vm1169, %v3058
  %3124 = vst.msk [vmem:[#allocation4 + $0xf8] sm:$0xff] %vm1169, %v3060
  %s3125 = scalar_lea.vmem [#allocation3], 48
  %v3126 = vld [vmem:[%s3125] sm:$0xff]
  %v3127 = vld [vmem:[%s3125 + $0x8] sm:$0xff]
  %v3128 = vld [vmem:[%s3125 + $0x18] sm:$0xff]
  %v3129 = vld [vmem:[%s3125 + $0x20] sm:$0xff]
  %v3130 = vld [vmem:[%s3125 + $0x30] sm:$0xff]
  %v3131 = vld [vmem:[%s3125 + $0x38] sm:$0xff]
  %v3132 = vld [vmem:[%s3125 + $0x48] sm:$0xff]
  %v3133 = vld [vmem:[%s3125 + $0x50] sm:$0xff]
  %v3134 = vld [vmem:[%s3125 + $0x60] sm:$0xff]
  %v3135 = vld [vmem:[%s3125 + $0x68] sm:$0xff]
  %v3136 = vld [vmem:[%s3125 + $0x78] sm:$0xff]
  %v3137 = vld [vmem:[%s3125 + $0x80] sm:$0xff]
  %v3138 = vld [vmem:[%s3125 + $0x90] sm:$0xff]
  %v3139 = vld [vmem:[%s3125 + $0x98] sm:$0xff]
  %v3140 = vld [vmem:[%s3125 + $0xa8] sm:$0xff]
  %v3141 = vld [vmem:[%s3125 + $0xb0] sm:$0xff]
  %v3142 = vld [vmem:[%s3125 + $0xc0] sm:$0xff]
  %v3143 = vld [vmem:[%s3125 + $0xc8] sm:$0xff]
  %v3144 = vld [vmem:[%s3125 + $0xd8] sm:$0xff]
  %v3145 = vld [vmem:[%s3125 + $0xe0] sm:$0xff]
  %v3146 = vld [vmem:[%s3125 + $0xf0] sm:$0xff]
  %v3147 = vld [vmem:[%s3125 + $0xf8] sm:$0xff]
  %v3148 = vld [vmem:[%s3125 + $0x108] sm:$0xff]
  %v3149 = vld [vmem:[%s3125 + $0x110] sm:$0xff]
  %v3150 = vld [vmem:[%s3125 + $0x120] sm:$0xff]
  %v3151 = vld [vmem:[%s3125 + $0x128] sm:$0xff]
  %v3152 = vld [vmem:[%s3125 + $0x138] sm:$0xff]
  %v3153 = vld [vmem:[%s3125 + $0x140] sm:$0xff]
  %v3154 = vld [vmem:[%s3125 + $0x150] sm:$0xff]
  %v3155 = vld [vmem:[%s3125 + $0x158] sm:$0xff]
  %v3156 = vld [vmem:[%s3125 + $0x168] sm:$0xff]
  %v3157 = vld [vmem:[%s3125 + $0x170] sm:$0xff]
  %3190 = vrot.lane.b32.xlu0 %v3126, 24
  %v3191 = vpop.permute.xlu0 %3190
  %3192 = vrot.lane.b32.xlu0 %v3127, 24
  %v3193 = vpop.permute.xlu0 %3192
  %3194 = vrot.lane.b32.xlu0 %v3128, 24
  %v3195 = vpop.permute.xlu0 %3194
  %3196 = vrot.lane.b32.xlu0 %v3129, 24
  %v3197 = vpop.permute.xlu0 %3196
  %3198 = vrot.lane.b32.xlu0 %v3130, 24
  %v3199 = vpop.permute.xlu0 %3198
  %3200 = vrot.lane.b32.xlu0 %v3131, 24
  %v3201 = vpop.permute.xlu0 %3200
  %3202 = vrot.lane.b32.xlu0 %v3132, 24
  %v3203 = vpop.permute.xlu0 %3202
  %3204 = vrot.lane.b32.xlu0 %v3133, 24
  %v3205 = vpop.permute.xlu0 %3204
  %3206 = vrot.lane.b32.xlu0 %v3134, 24
  %v3207 = vpop.permute.xlu0 %3206
  %3208 = vrot.lane.b32.xlu0 %v3135, 24
  %v3209 = vpop.permute.xlu0 %3208
  %3210 = vrot.lane.b32.xlu0 %v3136, 24
  %v3211 = vpop.permute.xlu0 %3210
  %3212 = vrot.lane.b32.xlu0 %v3137, 24
  %v3213 = vpop.permute.xlu0 %3212
  %3214 = vrot.lane.b32.xlu0 %v3138, 24
  %v3215 = vpop.permute.xlu0 %3214
  %3216 = vrot.lane.b32.xlu0 %v3139, 24
  %v3217 = vpop.permute.xlu0 %3216
  %3218 = vrot.lane.b32.xlu0 %v3140, 24
  %v3219 = vpop.permute.xlu0 %3218
  %3220 = vrot.lane.b32.xlu0 %v3141, 24
  %v3221 = vpop.permute.xlu0 %3220
  %3222 = vrot.lane.b32.xlu0 %v3142, 24
  %v3223 = vpop.permute.xlu0 %3222
  %3224 = vrot.lane.b32.xlu0 %v3143, 24
  %v3225 = vpop.permute.xlu0 %3224
  %3226 = vrot.lane.b32.xlu0 %v3144, 24
  %v3227 = vpop.permute.xlu0 %3226
  %3228 = vrot.lane.b32.xlu0 %v3145, 24
  %v3229 = vpop.permute.xlu0 %3228
  %3230 = vrot.lane.b32.xlu0 %v3146, 24
  %v3231 = vpop.permute.xlu0 %3230
  %3232 = vrot.lane.b32.xlu0 %v3147, 24
  %v3233 = vpop.permute.xlu0 %3232
  %3234 = vrot.lane.b32.xlu0 %v3148, 24
  %v3235 = vpop.permute.xlu0 %3234
  %3236 = vrot.lane.b32.xlu0 %v3149, 24
  %v3237 = vpop.permute.xlu0 %3236
  %3238 = vrot.lane.b32.xlu0 %v3150, 24
  %v3239 = vpop.permute.xlu0 %3238
  %3240 = vrot.lane.b32.xlu0 %v3151, 24
  %v3241 = vpop.permute.xlu0 %3240
  %3242 = vrot.lane.b32.xlu0 %v3152, 24
  %v3243 = vpop.permute.xlu0 %3242
  %3244 = vrot.lane.b32.xlu0 %v3153, 24
  %v3245 = vpop.permute.xlu0 %3244
  %3246 = vrot.lane.b32.xlu0 %v3154, 24
  %v3247 = vpop.permute.xlu0 %3246
  %3248 = vrot.lane.b32.xlu0 %v3155, 24
  %v3249 = vpop.permute.xlu0 %3248
  %3250 = vrot.lane.b32.xlu0 %v3156, 24
  %v3251 = vpop.permute.xlu0 %3250
  %3252 = vrot.lane.b32.xlu0 %v3157, 24
  %v3253 = vpop.permute.xlu0 %3252
  %3286 = vst.msk [vmem:[#allocation4] sm:$0xff] %vm1363, %v3191
  %3287 = vst.msk [vmem:[#allocation4 + $0x8] sm:$0xff] %vm1363, %v3193
  %3288 = vst.msk [vmem:[#allocation4 + $0x10] sm:$0xff] %vm1363, %v3195
  %3289 = vst.msk [vmem:[#allocation4 + $0x18] sm:$0xff] %vm1363, %v3197
  %3290 = vst.msk [vmem:[#allocation4 + $0x20] sm:$0xff] %vm1363, %v3199
  %3291 = vst.msk [vmem:[#allocation4 + $0x28] sm:$0xff] %vm1363, %v3201
  %3292 = vst.msk [vmem:[#allocation4 + $0x30] sm:$0xff] %vm1363, %v3203
  %3293 = vst.msk [vmem:[#allocation4 + $0x38] sm:$0xff] %vm1363, %v3205
  %3294 = vst.msk [vmem:[#allocation4 + $0x40] sm:$0xff] %vm1363, %v3207
  %3295 = vst.msk [vmem:[#allocation4 + $0x48] sm:$0xff] %vm1363, %v3209
  %3296 = vst.msk [vmem:[#allocation4 + $0x50] sm:$0xff] %vm1363, %v3211
  %3297 = vst.msk [vmem:[#allocation4 + $0x58] sm:$0xff] %vm1363, %v3213
  %3298 = vst.msk [vmem:[#allocation4 + $0x60] sm:$0xff] %vm1363, %v3215
  %3299 = vst.msk [vmem:[#allocation4 + $0x68] sm:$0xff] %vm1363, %v3217
  %3300 = vst.msk [vmem:[#allocation4 + $0x70] sm:$0xff] %vm1363, %v3219
  %3301 = vst.msk [vmem:[#allocation4 + $0x78] sm:$0xff] %vm1363, %v3221
  %3302 = vst.msk [vmem:[#allocation4 + $0x80] sm:$0xff] %vm1363, %v3223
  %3303 = vst.msk [vmem:[#allocation4 + $0x88] sm:$0xff] %vm1363, %v3225
  %3304 = vst.msk [vmem:[#allocation4 + $0x90] sm:$0xff] %vm1363, %v3227
  %3305 = vst.msk [vmem:[#allocation4 + $0x98] sm:$0xff] %vm1363, %v3229
  %3306 = vst.msk [vmem:[#allocation4 + $0xa0] sm:$0xff] %vm1363, %v3231
  %3307 = vst.msk [vmem:[#allocation4 + $0xa8] sm:$0xff] %vm1363, %v3233
  %3308 = vst.msk [vmem:[#allocation4 + $0xb0] sm:$0xff] %vm1363, %v3235
  %3309 = vst.msk [vmem:[#allocation4 + $0xb8] sm:$0xff] %vm1363, %v3237
  %3310 = vst.msk [vmem:[#allocation4 + $0xc0] sm:$0xff] %vm1363, %v3239
  %3311 = vst.msk [vmem:[#allocation4 + $0xc8] sm:$0xff] %vm1363, %v3241
  %3312 = vst.msk [vmem:[#allocation4 + $0xd0] sm:$0xff] %vm1363, %v3243
  %3313 = vst.msk [vmem:[#allocation4 + $0xd8] sm:$0xff] %vm1363, %v3245
  %3314 = vst.msk [vmem:[#allocation4 + $0xe0] sm:$0xff] %vm1363, %v3247
  %3315 = vst.msk [vmem:[#allocation4 + $0xe8] sm:$0xff] %vm1363, %v3249
  %3316 = vst.msk [vmem:[#allocation4 + $0xf0] sm:$0xff] %vm1363, %v3251
  %3317 = vst.msk [vmem:[#allocation4 + $0xf8] sm:$0xff] %vm1363, %v3253
  %v3318 = vld [vmem:[%s3125 + $0x1] sm:$0xff]
  %v3319 = vld [vmem:[%s3125 + $0x9] sm:$0xff]
  %v3320 = vld [vmem:[%s3125 + $0x19] sm:$0xff]
  %v3321 = vld [vmem:[%s3125 + $0x21] sm:$0xff]
  %v3322 = vld [vmem:[%s3125 + $0x31] sm:$0xff]
  %v3323 = vld [vmem:[%s3125 + $0x39] sm:$0xff]
  %v3324 = vld [vmem:[%s3125 + $0x49] sm:$0xff]
  %v3325 = vld [vmem:[%s3125 + $0x51] sm:$0xff]
  %v3326 = vld [vmem:[%s3125 + $0x61] sm:$0xff]
  %v3327 = vld [vmem:[%s3125 + $0x69] sm:$0xff]
  %v3328 = vld [vmem:[%s3125 + $0x79] sm:$0xff]
  %v3329 = vld [vmem:[%s3125 + $0x81] sm:$0xff]
  %v3330 = vld [vmem:[%s3125 + $0x91] sm:$0xff]
  %v3331 = vld [vmem:[%s3125 + $0x99] sm:$0xff]
  %v3332 = vld [vmem:[%s3125 + $0xa9] sm:$0xff]
  %v3333 = vld [vmem:[%s3125 + $0xb1] sm:$0xff]
  %v3334 = vld [vmem:[%s3125 + $0xc1] sm:$0xff]
  %v3335 = vld [vmem:[%s3125 + $0xc9] sm:$0xff]
  %v3336 = vld [vmem:[%s3125 + $0xd9] sm:$0xff]
  %v3337 = vld [vmem:[%s3125 + $0xe1] sm:$0xff]
  %v3338 = vld [vmem:[%s3125 + $0xf1] sm:$0xff]
  %v3339 = vld [vmem:[%s3125 + $0xf9] sm:$0xff]
  %v3340 = vld [vmem:[%s3125 + $0x109] sm:$0xff]
  %v3341 = vld [vmem:[%s3125 + $0x111] sm:$0xff]
  %v3342 = vld [vmem:[%s3125 + $0x121] sm:$0xff]
  %v3343 = vld [vmem:[%s3125 + $0x129] sm:$0xff]
  %v3344 = vld [vmem:[%s3125 + $0x139] sm:$0xff]
  %v3345 = vld [vmem:[%s3125 + $0x141] sm:$0xff]
  %v3346 = vld [vmem:[%s3125 + $0x151] sm:$0xff]
  %v3347 = vld [vmem:[%s3125 + $0x159] sm:$0xff]
  %v3348 = vld [vmem:[%s3125 + $0x169] sm:$0xff]
  %v3349 = vld [vmem:[%s3125 + $0x171] sm:$0xff]
  %3382 = vrot.lane.b32.xlu0 %v3318, 28
  %v3383 = vpop.permute.xlu0 %3382
  %3384 = vrot.lane.b32.xlu0 %v3319, 28
  %v3385 = vpop.permute.xlu0 %3384
  %3386 = vrot.lane.b32.xlu0 %v3320, 28
  %v3387 = vpop.permute.xlu0 %3386
  %3388 = vrot.lane.b32.xlu0 %v3321, 28
  %v3389 = vpop.permute.xlu0 %3388
  %3390 = vrot.lane.b32.xlu0 %v3322, 28
  %v3391 = vpop.permute.xlu0 %3390
  %3392 = vrot.lane.b32.xlu0 %v3323, 28
  %v3393 = vpop.permute.xlu0 %3392
  %3394 = vrot.lane.b32.xlu0 %v3324, 28
  %v3395 = vpop.permute.xlu0 %3394
  %3396 = vrot.lane.b32.xlu0 %v3325, 28
  %v3397 = vpop.permute.xlu0 %3396
  %3398 = vrot.lane.b32.xlu0 %v3326, 28
  %v3399 = vpop.permute.xlu0 %3398
  %3400 = vrot.lane.b32.xlu0 %v3327, 28
  %v3401 = vpop.permute.xlu0 %3400
  %3402 = vrot.lane.b32.xlu0 %v3328, 28
  %v3403 = vpop.permute.xlu0 %3402
  %3404 = vrot.lane.b32.xlu0 %v3329, 28
  %v3405 = vpop.permute.xlu0 %3404
  %3406 = vrot.lane.b32.xlu0 %v3330, 28
  %v3407 = vpop.permute.xlu0 %3406
  %3408 = vrot.lane.b32.xlu0 %v3331, 28
  %v3409 = vpop.permute.xlu0 %3408
  %3410 = vrot.lane.b32.xlu0 %v3332, 28
  %v3411 = vpop.permute.xlu0 %3410
  %3412 = vrot.lane.b32.xlu0 %v3333, 28
  %v3413 = vpop.permute.xlu0 %3412
  %3414 = vrot.lane.b32.xlu0 %v3334, 28
  %v3415 = vpop.permute.xlu0 %3414
  %3416 = vrot.lane.b32.xlu0 %v3335, 28
  %v3417 = vpop.permute.xlu0 %3416
  %3418 = vrot.lane.b32.xlu0 %v3336, 28
  %v3419 = vpop.permute.xlu0 %3418
  %3420 = vrot.lane.b32.xlu0 %v3337, 28
  %v3421 = vpop.permute.xlu0 %3420
  %3422 = vrot.lane.b32.xlu0 %v3338, 28
  %v3423 = vpop.permute.xlu0 %3422
  %3424 = vrot.lane.b32.xlu0 %v3339, 28
  %v3425 = vpop.permute.xlu0 %3424
  %3426 = vrot.lane.b32.xlu0 %v3340, 28
  %v3427 = vpop.permute.xlu0 %3426
  %3428 = vrot.lane.b32.xlu0 %v3341, 28
  %v3429 = vpop.permute.xlu0 %3428
  %3430 = vrot.lane.b32.xlu0 %v3342, 28
  %v3431 = vpop.permute.xlu0 %3430
  %3432 = vrot.lane.b32.xlu0 %v3343, 28
  %v3433 = vpop.permute.xlu0 %3432
  %3434 = vrot.lane.b32.xlu0 %v3344, 28
  %v3435 = vpop.permute.xlu0 %3434
  %3436 = vrot.lane.b32.xlu0 %v3345, 28
  %v3437 = vpop.permute.xlu0 %3436
  %3438 = vrot.lane.b32.xlu0 %v3346, 28
  %v3439 = vpop.permute.xlu0 %3438
  %3440 = vrot.lane.b32.xlu0 %v3347, 28
  %v3441 = vpop.permute.xlu0 %3440
  %3442 = vrot.lane.b32.xlu0 %v3348, 28
  %v3443 = vpop.permute.xlu0 %3442
  %3444 = vrot.lane.b32.xlu0 %v3349, 28
  %v3445 = vpop.permute.xlu0 %3444
  %3478 = vst.msk [vmem:[#allocation4] sm:$0xff] %vm1556, %v3383
  %3479 = vst.msk [vmem:[#allocation4 + $0x8] sm:$0xff] %vm1556, %v3385
  %3480 = vst.msk [vmem:[#allocation4 + $0x10] sm:$0xff] %vm1556, %v3387
  %3481 = vst.msk [vmem:[#allocation4 + $0x18] sm:$0xff] %vm1556, %v3389
  %3482 = vst.msk [vmem:[#allocation4 + $0x20] sm:$0xff] %vm1556, %v3391
  %3483 = vst.msk [vmem:[#allocation4 + $0x28] sm:$0xff] %vm1556, %v3393
  %3484 = vst.msk [vmem:[#allocation4 + $0x30] sm:$0xff] %vm1556, %v3395
  %3485 = vst.msk [vmem:[#allocation4 + $0x38] sm:$0xff] %vm1556, %v3397
  %3486 = vst.msk [vmem:[#allocation4 + $0x40] sm:$0xff] %vm1556, %v3399
  %3487 = vst.msk [vmem:[#allocation4 + $0x48] sm:$0xff] %vm1556, %v3401
  %3488 = vst.msk [vmem:[#allocation4 + $0x50] sm:$0xff] %vm1556, %v3403
  %3489 = vst.msk [vmem:[#allocation4 + $0x58] sm:$0xff] %vm1556, %v3405
  %3490 = vst.msk [vmem:[#allocation4 + $0x60] sm:$0xff] %vm1556, %v3407
  %3491 = vst.msk [vmem:[#allocation4 + $0x68] sm:$0xff] %vm1556, %v3409
  %3492 = vst.msk [vmem:[#allocation4 + $0x70] sm:$0xff] %vm1556, %v3411
  %3493 = vst.msk [vmem:[#allocation4 + $0x78] sm:$0xff] %vm1556, %v3413
  %3494 = vst.msk [vmem:[#allocation4 + $0x80] sm:$0xff] %vm1556, %v3415
  %3495 = vst.msk [vmem:[#allocation4 + $0x88] sm:$0xff] %vm1556, %v3417
  %3496 = vst.msk [vmem:[#allocation4 + $0x90] sm:$0xff] %vm1556, %v3419
  %3497 = vst.msk [vmem:[#allocation4 + $0x98] sm:$0xff] %vm1556, %v3421
  %3498 = vst.msk [vmem:[#allocation4 + $0xa0] sm:$0xff] %vm1556, %v3423
  %3499 = vst.msk [vmem:[#allocation4 + $0xa8] sm:$0xff] %vm1556, %v3425
  %3500 = vst.msk [vmem:[#allocation4 + $0xb0] sm:$0xff] %vm1556, %v3427
  %3501 = vst.msk [vmem:[#allocation4 + $0xb8] sm:$0xff] %vm1556, %v3429
  %3502 = vst.msk [vmem:[#allocation4 + $0xc0] sm:$0xff] %vm1556, %v3431
  %3503 = vst.msk [vmem:[#allocation4 + $0xc8] sm:$0xff] %vm1556, %v3433
  %3504 = vst.msk [vmem:[#allocation4 + $0xd0] sm:$0xff] %vm1556, %v3435
  %3505 = vst.msk [vmem:[#allocation4 + $0xd8] sm:$0xff] %vm1556, %v3437
  %3506 = vst.msk [vmem:[#allocation4 + $0xe0] sm:$0xff] %vm1556, %v3439
  %3507 = vst.msk [vmem:[#allocation4 + $0xe8] sm:$0xff] %vm1556, %v3441
  %3508 = vst.msk [vmem:[#allocation4 + $0xf0] sm:$0xff] %vm1556, %v3443
  %3509 = vst.msk [vmem:[#allocation4 + $0xf8] sm:$0xff] %vm1556, %v3445
  %v3510 = vld [vmem:[%s3125 + $0x2] sm:$0xff]
  %v3511 = vld [vmem:[%s3125 + $0xa] sm:$0xff]
  %v3512 = vld [vmem:[%s3125 + $0x1a] sm:$0xff]
  %v3513 = vld [vmem:[%s3125 + $0x22] sm:$0xff]
  %v3514 = vld [vmem:[%s3125 + $0x32] sm:$0xff]
  %v3515 = vld [vmem:[%s3125 + $0x3a] sm:$0xff]
  %v3516 = vld [vmem:[%s3125 + $0x4a] sm:$0xff]
  %v3517 = vld [vmem:[%s3125 + $0x52] sm:$0xff]
  %v3518 = vld [vmem:[%s3125 + $0x62] sm:$0xff]
  %v3519 = vld [vmem:[%s3125 + $0x6a] sm:$0xff]
  %v3520 = vld [vmem:[%s3125 + $0x7a] sm:$0xff]
  %v3521 = vld [vmem:[%s3125 + $0x82] sm:$0xff]
  %v3522 = vld [vmem:[%s3125 + $0x92] sm:$0xff]
  %v3523 = vld [vmem:[%s3125 + $0x9a] sm:$0xff]
  %v3524 = vld [vmem:[%s3125 + $0xaa] sm:$0xff]
  %v3525 = vld [vmem:[%s3125 + $0xb2] sm:$0xff]
  %v3526 = vld [vmem:[%s3125 + $0xc2] sm:$0xff]
  %v3527 = vld [vmem:[%s3125 + $0xca] sm:$0xff]
  %v3528 = vld [vmem:[%s3125 + $0xda] sm:$0xff]
  %v3529 = vld [vmem:[%s3125 + $0xe2] sm:$0xff]
  %v3530 = vld [vmem:[%s3125 + $0xf2] sm:$0xff]
  %v3531 = vld [vmem:[%s3125 + $0xfa] sm:$0xff]
  %v3532 = vld [vmem:[%s3125 + $0x10a] sm:$0xff]
  %v3533 = vld [vmem:[%s3125 + $0x112] sm:$0xff]
  %v3534 = vld [vmem:[%s3125 + $0x122] sm:$0xff]
  %v3535 = vld [vmem:[%s3125 + $0x12a] sm:$0xff]
  %v3536 = vld [vmem:[%s3125 + $0x13a] sm:$0xff]
  %v3537 = vld [vmem:[%s3125 + $0x142] sm:$0xff]
  %v3538 = vld [vmem:[%s3125 + $0x152] sm:$0xff]
  %v3539 = vld [vmem:[%s3125 + $0x15a] sm:$0xff]
  %v3540 = vld [vmem:[%s3125 + $0x16a] sm:$0xff]
  %v3541 = vld [vmem:[%s3125 + $0x172] sm:$0xff]
  %3574 = vrot.lane.b32.xlu0 %v3510, 32
  %v3575 = vpop.permute.xlu0 %3574
  %3576 = vrot.lane.b32.xlu0 %v3511, 32
  %v3577 = vpop.permute.xlu0 %3576
  %3578 = vrot.lane.b32.xlu0 %v3512, 32
  %v3579 = vpop.permute.xlu0 %3578
  %3580 = vrot.lane.b32.xlu0 %v3513, 32
  %v3581 = vpop.permute.xlu0 %3580
  %3582 = vrot.lane.b32.xlu0 %v3514, 32
  %v3583 = vpop.permute.xlu0 %3582
  %3584 = vrot.lane.b32.xlu0 %v3515, 32
  %v3585 = vpop.permute.xlu0 %3584
  %3586 = vrot.lane.b32.xlu0 %v3516, 32
  %v3587 = vpop.permute.xlu0 %3586
  %3588 = vrot.lane.b32.xlu0 %v3517, 32
  %v3589 = vpop.permute.xlu0 %3588
  %3590 = vrot.lane.b32.xlu0 %v3518, 32
  %v3591 = vpop.permute.xlu0 %3590
  %3592 = vrot.lane.b32.xlu0 %v3519, 32
  %v3593 = vpop.permute.xlu0 %3592
  %3594 = vrot.lane.b32.xlu0 %v3520, 32
  %v3595 = vpop.permute.xlu0 %3594
  %3596 = vrot.lane.b32.xlu0 %v3521, 32
  %v3597 = vpop.permute.xlu0 %3596
  %3598 = vrot.lane.b32.xlu0 %v3522, 32
  %v3599 = vpop.permute.xlu0 %3598
  %3600 = vrot.lane.b32.xlu0 %v3523, 32
  %v3601 = vpop.permute.xlu0 %3600
  %3602 = vrot.lane.b32.xlu0 %v3524, 32
  %v3603 = vpop.permute.xlu0 %3602
  %3604 = vrot.lane.b32.xlu0 %v3525, 32
  %v3605 = vpop.permute.xlu0 %3604
  %3606 = vrot.lane.b32.xlu0 %v3526, 32
  %v3607 = vpop.permute.xlu0 %3606
  %3608 = vrot.lane.b32.xlu0 %v3527, 32
  %v3609 = vpop.permute.xlu0 %3608
  %3610 = vrot.lane.b32.xlu0 %v3528, 32
  %v3611 = vpop.permute.xlu0 %3610
  %3612 = vrot.lane.b32.xlu0 %v3529, 32
  %v3613 = vpop.permute.xlu0 %3612
  %3614 = vrot.lane.b32.xlu0 %v3530, 32
  %v3615 = vpop.permute.xlu0 %3614
  %3616 = vrot.lane.b32.xlu0 %v3531, 32
  %v3617 = vpop.permute.xlu0 %3616
  %3618 = vrot.lane.b32.xlu0 %v3532, 32
  %v3619 = vpop.permute.xlu0 %3618
  %3620 = vrot.lane.b32.xlu0 %v3533, 32
  %v3621 = vpop.permute.xlu0 %3620
  %3622 = vrot.lane.b32.xlu0 %v3534, 32
  %v3623 = vpop.permute.xlu0 %3622
  %3624 = vrot.lane.b32.xlu0 %v3535, 32
  %v3625 = vpop.permute.xlu0 %3624
  %3626 = vrot.lane.b32.xlu0 %v3536, 32
  %v3627 = vpop.permute.xlu0 %3626
  %3628 = vrot.lane.b32.xlu0 %v3537, 32
  %v3629 = vpop.permute.xlu0 %3628
  %3630 = vrot.lane.b32.xlu0 %v3538, 32
  %v3631 = vpop.permute.xlu0 %3630
  %3632 = vrot.lane.b32.xlu0 %v3539, 32
  %v3633 = vpop.permute.xlu0 %3632
  %3634 = vrot.lane.b32.xlu0 %v3540, 32
  %v3635 = vpop.permute.xlu0 %3634
  %3636 = vrot.lane.b32.xlu0 %v3541, 32
  %v3637 = vpop.permute.xlu0 %3636
  %3670 = vst.msk [vmem:[#allocation4] sm:$0xff] %vm1749, %v3575
  %3671 = vst.msk [vmem:[#allocation4 + $0x8] sm:$0xff] %vm1749, %v3577
  %3672 = vst.msk [vmem:[#allocation4 + $0x10] sm:$0xff] %vm1749, %v3579
  %3673 = vst.msk [vmem:[#allocation4 + $0x18] sm:$0xff] %vm1749, %v3581
  %3674 = vst.msk [vmem:[#allocation4 + $0x20] sm:$0xff] %vm1749, %v3583
  %3675 = vst.msk [vmem:[#allocation4 + $0x28] sm:$0xff] %vm1749, %v3585
  %3676 = vst.msk [vmem:[#allocation4 + $0x30] sm:$0xff] %vm1749, %v3587
  %3677 = vst.msk [vmem:[#allocation4 + $0x38] sm:$0xff] %vm1749, %v3589
  %3678 = vst.msk [vmem:[#allocation4 + $0x40] sm:$0xff] %vm1749, %v3591
  %3679 = vst.msk [vmem:[#allocation4 + $0x48] sm:$0xff] %vm1749, %v3593
  %3680 = vst.msk [vmem:[#allocation4 + $0x50] sm:$0xff] %vm1749, %v3595
  %3681 = vst.msk [vmem:[#allocation4 + $0x58] sm:$0xff] %vm1749, %v3597
  %3682 = vst.msk [vmem:[#allocation4 + $0x60] sm:$0xff] %vm1749, %v3599
  %3683 = vst.msk [vmem:[#allocation4 + $0x68] sm:$0xff] %vm1749, %v3601
  %3684 = vst.msk [vmem:[#allocation4 + $0x70] sm:$0xff] %vm1749, %v3603
  %3685 = vst.msk [vmem:[#allocation4 + $0x78] sm:$0xff] %vm1749, %v3605
  %3686 = vst.msk [vmem:[#allocation4 + $0x80] sm:$0xff] %vm1749, %v3607
  %3687 = vst.msk [vmem:[#allocation4 + $0x88] sm:$0xff] %vm1749, %v3609
  %3688 = vst.msk [vmem:[#allocation4 + $0x90] sm:$0xff] %vm1749, %v3611
  %3689 = vst.msk [vmem:[#allocation4 + $0x98] sm:$0xff] %vm1749, %v3613
  %3690 = vst.msk [vmem:[#allocation4 + $0xa0] sm:$0xff] %vm1749, %v3615
  %3691 = vst.msk [vmem:[#allocation4 + $0xa8] sm:$0xff] %vm1749, %v3617
  %3692 = vst.msk [vmem:[#allocation4 + $0xb0] sm:$0xff] %vm1749, %v3619
  %3693 = vst.msk [vmem:[#allocation4 + $0xb8] sm:$0xff] %vm1749, %v3621
  %3694 = vst.msk [vmem:[#allocation4 + $0xc0] sm:$0xff] %vm1749, %v3623
  %3695 = vst.msk [vmem:[#allocation4 + $0xc8] sm:$0xff] %vm1749, %v3625
  %3696 = vst.msk [vmem:[#allocation4 + $0xd0] sm:$0xff] %vm1749, %v3627
  %3697 = vst.msk [vmem:[#allocation4 + $0xd8] sm:$0xff] %vm1749, %v3629
  %3698 = vst.msk [vmem:[#allocation4 + $0xe0] sm:$0xff] %vm1749, %v3631
  %3699 = vst.msk [vmem:[#allocation4 + $0xe8] sm:$0xff] %vm1749, %v3633
  %3700 = vst.msk [vmem:[#allocation4 + $0xf0] sm:$0xff] %vm1749, %v3635
  %3701 = vst.msk [vmem:[#allocation4 + $0xf8] sm:$0xff] %vm1749, %v3637
  %v3702 = vld [vmem:[#allocation4] sm:$0xff]
  %v3703 = vld [vmem:[#allocation4 + $0x8] sm:$0xff]
  %v3704 = vld [vmem:[#allocation4 + $0x10] sm:$0xff]
  %v3705 = vld [vmem:[#allocation4 + $0x18] sm:$0xff]
  %v3706 = vld [vmem:[#allocation4 + $0x20] sm:$0xff]
  %v3707 = vld [vmem:[#allocation4 + $0x28] sm:$0xff]
  %v3708 = vld [vmem:[#allocation4 + $0x30] sm:$0xff]
  %v3709 = vld [vmem:[#allocation4 + $0x38] sm:$0xff]
  %v3710 = vld [vmem:[#allocation4 + $0x40] sm:$0xff]
  %v3711 = vld [vmem:[#allocation4 + $0x48] sm:$0xff]
  %v3712 = vld [vmem:[#allocation4 + $0x50] sm:$0xff]
  %v3713 = vld [vmem:[#allocation4 + $0x58] sm:$0xff]
  %v3714 = vld [vmem:[#allocation4 + $0x60] sm:$0xff]
  %v3715 = vld [vmem:[#allocation4 + $0x68] sm:$0xff]
  %v3716 = vld [vmem:[#allocation4 + $0x70] sm:$0xff]
  %v3717 = vld [vmem:[#allocation4 + $0x78] sm:$0xff]
  %v3718 = vld [vmem:[#allocation4 + $0x80] sm:$0xff]
  %v3719 = vld [vmem:[#allocation4 + $0x88] sm:$0xff]
  %v3720 = vld [vmem:[#allocation4 + $0x90] sm:$0xff]
  %v3721 = vld [vmem:[#allocation4 + $0x98] sm:$0xff]
  %v3722 = vld [vmem:[#allocation4 + $0xa0] sm:$0xff]
  %v3723 = vld [vmem:[#allocation4 + $0xa8] sm:$0xff]
  %v3724 = vld [vmem:[#allocation4 + $0xb0] sm:$0xff]
  %v3725 = vld [vmem:[#allocation4 + $0xb8] sm:$0xff]
  %v3726 = vld [vmem:[#allocation4 + $0xc0] sm:$0xff]
  %v3727 = vld [vmem:[#allocation4 + $0xc8] sm:$0xff]
  %v3728 = vld [vmem:[#allocation4 + $0xd0] sm:$0xff]
  %v3729 = vld [vmem:[#allocation4 + $0xd8] sm:$0xff]
  %v3730 = vld [vmem:[#allocation4 + $0xe0] sm:$0xff]
  %v3731 = vld [vmem:[#allocation4 + $0xe8] sm:$0xff]
  %v3732 = vld [vmem:[#allocation4 + $0xf0] sm:$0xff]
  %v3733 = vld [vmem:[#allocation4 + $0xf8] sm:$0xff]
  %v3734 = vld [vmem:[%s3] sm:$0xff]
  %v3735 = vld [vmem:[%s3 + $0x8] sm:$0xff]
  %v3736 = vld [vmem:[%s3 + $0x10] sm:$0xff]
  %v3737 = vld [vmem:[%s3 + $0x18] sm:$0xff]
  %v3738 = vld [vmem:[%s3 + $0x20] sm:$0xf]
  %v3739 = vld [vmem:[%s4] sm:$0x1]
  %v3741 = vperm.slane %v3739, 0
  %v3744 = vsel %vm1823, %v3702, 0
  %v3747 = vsel %vm1823, %v3703, 0
  %v3750 = vsel %vm1823, %v3704, 0
  %v3753 = vsel %vm1823, %v3705, 0
  %v3756 = vsel %vm1823, %v3706, 0
  %v3759 = vsel %vm1823, %v3707, 0
  %v3762 = vsel %vm1823, %v3708, 0
  %v3765 = vsel %vm1823, %v3709, 0
  %v3768 = vsel %vm1823, %v3710, 0
  %v3771 = vsel %vm1823, %v3711, 0
  %v3774 = vsel %vm1823, %v3712, 0
  %v3777 = vsel %vm1823, %v3713, 0
  %v3780 = vsel %vm1823, %v3714, 0
  %v3783 = vsel %vm1823, %v3715, 0
  %v3786 = vsel %vm1823, %v3716, 0
  %v3789 = vsel %vm1823, %v3717, 0
  %v3792 = vsel %vm1823, %v3718, 0
  %v3795 = vsel %vm1823, %v3719, 0
  %v3798 = vsel %vm1823, %v3720, 0
  %v3801 = vsel %vm1823, %v3721, 0
  %v3804 = vsel %vm1823, %v3722, 0
  %v3807 = vsel %vm1823, %v3723, 0
  %v3810 = vsel %vm1823, %v3724, 0
  %v3813 = vsel %vm1823, %v3725, 0
  %v3816 = vsel %vm1823, %v3726, 0
  %v3819 = vsel %vm1823, %v3727, 0
  %v3822 = vsel %vm1823, %v3728, 0
  %v3825 = vsel %vm1823, %v3729, 0
  %v3828 = vsel %vm1823, %v3730, 0
  %v3831 = vsel %vm1823, %v3731, 0
  %v3834 = vsel %vm1823, %v3732, 0
  %v3837 = vsel %vm1823, %v3733, 0
  %v3840 = vsel %vm1920, %v3738, 0
  %3842 = vmatpush.msra.mxu0 0.0
  %3843 = vmatpush.msra.mxu0 0.0
  %3844 = vmatpush.msra.mxu0 0.0
  %3845 = vmatpush.msra.mxu0 0.0
  %3846 = vmatpush.msra.mxu0 0.0
  %3847 = vmatpush.msra.mxu0 0.0
  %3848 = vmatpush.msra.mxu0 0.0
  %3849 = vmatpush.msra.mxu0 0.0
  %3850 = vmatpush.msra.mxu0 0.0
  %3851 = vmatpush.msra.mxu0 0.0
  %3852 = vmatpush.msra.mxu0 0.0
  %3853 = vmatpush.msra.mxu0 %v3840
  %3854 = vmatpush.msra.mxu0 %v3737
  %3855 = vmatpush.msra.mxu0 %v3736
  %3856 = vmatpush.msra.mxu0 %v3735
  %3857 = vmatpush.msra.mxu0 %v3734
  %3858 = vmatmul.f32.gmra.mxu0 %v3744
  %v3859 = vpop.f32.mrf.mxu0
  %v3860 = vadd.f32 %v3741, %v3859
  %3861 = vmatmul.f32.gmra.mxu0 %v3747
  %v3862 = vpop.f32.mrf.mxu0
  %v3863 = vadd.f32 %v3741, %v3862
  %3864 = vmatmul.f32.gmra.mxu0 %v3750
  %v3865 = vpop.f32.mrf.mxu0
  %v3866 = vadd.f32 %v3741, %v3865
  %3867 = vmatmul.f32.gmra.mxu0 %v3753
  %v3868 = vpop.f32.mrf.mxu0
  %v3869 = vadd.f32 %v3741, %v3868
  %3870 = vmatmul.f32.gmra.mxu0 %v3756
  %v3871 = vpop.f32.mrf.mxu0
  %v3872 = vadd.f32 %v3741, %v3871
  %3873 = vmatmul.f32.gmra.mxu0 %v3759
  %v3874 = vpop.f32.mrf.mxu0
  %v3875 = vadd.f32 %v3741, %v3874
  %3876 = vmatmul.f32.gmra.mxu0 %v3762
  %v3877 = vpop.f32.mrf.mxu0
  %v3878 = vadd.f32 %v3741, %v3877
  %3879 = vmatmul.f32.gmra.mxu0 %v3765
  %v3880 = vpop.f32.mrf.mxu0
  %v3881 = vadd.f32 %v3741, %v3880
  %3882 = vmatmul.f32.gmra.mxu0 %v3768
  %v3883 = vpop.f32.mrf.mxu0
  %v3884 = vadd.f32 %v3741, %v3883
  %3885 = vmatmul.f32.gmra.mxu0 %v3771
  %v3886 = vpop.f32.mrf.mxu0
  %v3887 = vadd.f32 %v3741, %v3886
  %3888 = vmatmul.f32.gmra.mxu0 %v3774
  %v3889 = vpop.f32.mrf.mxu0
  %v3890 = vadd.f32 %v3741, %v3889
  %3891 = vmatmul.f32.gmra.mxu0 %v3777
  %v3892 = vpop.f32.mrf.mxu0
  %v3893 = vadd.f32 %v3741, %v3892
  %3894 = vmatmul.f32.gmra.mxu0 %v3780
  %v3895 = vpop.f32.mrf.mxu0
  %v3896 = vadd.f32 %v3741, %v3895
  %3897 = vmatmul.f32.gmra.mxu0 %v3783
  %v3898 = vpop.f32.mrf.mxu0
  %v3899 = vadd.f32 %v3741, %v3898
  %3900 = vmatmul.f32.gmra.mxu0 %v3786
  %v3901 = vpop.f32.mrf.mxu0
  %v3902 = vadd.f32 %v3741, %v3901
  %3903 = vmatmul.f32.gmra.mxu0 %v3789
  %v3904 = vpop.f32.mrf.mxu0
  %v3905 = vadd.f32 %v3741, %v3904
  %3906 = vmatmul.f32.gmra.mxu0 %v3792
  %v3907 = vpop.f32.mrf.mxu0
  %v3908 = vadd.f32 %v3741, %v3907
  %3909 = vmatmul.f32.gmra.mxu0 %v3795
  %v3910 = vpop.f32.mrf.mxu0
  %v3911 = vadd.f32 %v3741, %v3910
  %3912 = vmatmul.f32.gmra.mxu0 %v3798
  %v3913 = vpop.f32.mrf.mxu0
  %v3914 = vadd.f32 %v3741, %v3913
  %3915 = vmatmul.f32.gmra.mxu0 %v3801
  %v3916 = vpop.f32.mrf.mxu0
  %v3917 = vadd.f32 %v3741, %v3916
  %3918 = vmatmul.f32.gmra.mxu0 %v3804
  %v3919 = vpop.f32.mrf.mxu0
  %v3920 = vadd.f32 %v3741, %v3919
  %3921 = vmatmul.f32.gmra.mxu0 %v3807
  %v3922 = vpop.f32.mrf.mxu0
  %v3923 = vadd.f32 %v3741, %v3922
  %3924 = vmatmul.f32.gmra.mxu0 %v3810
  %v3925 = vpop.f32.mrf.mxu0
  %v3926 = vadd.f32 %v3741, %v3925
  %3927 = vmatmul.f32.gmra.mxu0 %v3813
  %v3928 = vpop.f32.mrf.mxu0
  %v3929 = vadd.f32 %v3741, %v3928
  %3930 = vmatmul.f32.gmra.mxu0 %v3816
  %v3931 = vpop.f32.mrf.mxu0
  %v3932 = vadd.f32 %v3741, %v3931
  %3933 = vmatmul.f32.gmra.mxu0 %v3819
  %v3934 = vpop.f32.mrf.mxu0
  %v3935 = vadd.f32 %v3741, %v3934
  %3936 = vmatmul.f32.gmra.mxu0 %v3822
  %v3937 = vpop.f32.mrf.mxu0
  %v3938 = vadd.f32 %v3741, %v3937
  %3939 = vmatmul.f32.gmra.mxu0 %v3825
  %v3940 = vpop.f32.mrf.mxu0
  %v3941 = vadd.f32 %v3741, %v3940
  %3942 = vmatmul.f32.gmra.mxu0 %v3828
  %v3943 = vpop.f32.mrf.mxu0
  %v3944 = vadd.f32 %v3741, %v3943
  %3945 = vmatmul.f32.gmra.mxu0 %v3831
  %v3946 = vpop.f32.mrf.mxu0
  %v3947 = vadd.f32 %v3741, %v3946
  %3948 = vmatmul.f32.gmra.mxu0 %v3834
  %v3949 = vpop.f32.mrf.mxu0
  %v3950 = vadd.f32 %v3741, %v3949
  %3951 = vmatmul.f32.gmra.mxu0 %v3837
  %v3952 = vpop.f32.mrf.mxu0
  %v3953 = vadd.f32 %v3741, %v3952
  %3954 = vdwg.mxu0
  %v3955 = vmax.f32 %v3860, 0.0
  %v3956 = vmax.f32 %v3863, 0.0
  %v3957 = vmax.f32 %v3866, 0.0
  %v3958 = vmax.f32 %v3869, 0.0
  %v3959 = vmax.f32 %v3872, 0.0
  %v3960 = vmax.f32 %v3875, 0.0
  %v3961 = vmax.f32 %v3878, 0.0
  %v3962 = vmax.f32 %v3881, 0.0
  %v3963 = vmax.f32 %v3884, 0.0
  %v3964 = vmax.f32 %v3887, 0.0
  %v3965 = vmax.f32 %v3890, 0.0
  %v3966 = vmax.f32 %v3893, 0.0
  %v3967 = vmax.f32 %v3896, 0.0
  %v3968 = vmax.f32 %v3899, 0.0
  %v3969 = vmax.f32 %v3902, 0.0
  %v3970 = vmax.f32 %v3905, 0.0
  %v3971 = vmax.f32 %v3908, 0.0
  %v3972 = vmax.f32 %v3911, 0.0
  %v3973 = vmax.f32 %v3914, 0.0
  %v3974 = vmax.f32 %v3917, 0.0
  %v3975 = vmax.f32 %v3920, 0.0
  %v3976 = vmax.f32 %v3923, 0.0
  %v3977 = vmax.f32 %v3926, 0.0
  %v3978 = vmax.f32 %v3929, 0.0
  %v3979 = vmax.f32 %v3932, 0.0
  %v3980 = vmax.f32 %v3935, 0.0
  %v3981 = vmax.f32 %v3938, 0.0
  %v3982 = vmax.f32 %v3941, 0.0
  %v3983 = vmax.f32 %v3944, 0.0
  %v3984 = vmax.f32 %v3947, 0.0
  %v3985 = vmax.f32 %v3950, 0.0
  %v3986 = vmax.f32 %v3953, 0.0
  %v3987 = vld [vmem:[%s5] sm:$0xf]
  %v3988 = vld [vmem:[%s6] sm:$0x1]
  %v3990 = vperm.slane %v3988, 0
  %v3993 = vsel %vm26, %v3955, 0
  %v3996 = vsel %vm26, %v3956, 0
  %v3999 = vsel %vm26, %v3957, 0
  %v4002 = vsel %vm26, %v3958, 0
  %v4005 = vsel %vm26, %v3959, 0
  %v4008 = vsel %vm26, %v3960, 0
  %v4011 = vsel %vm26, %v3961, 0
  %v4014 = vsel %vm26, %v3962, 0
  %v4017 = vsel %vm26, %v3963, 0
  %v4020 = vsel %vm26, %v3964, 0
  %v4023 = vsel %vm26, %v3965, 0
  %v4026 = vsel %vm26, %v3966, 0
  %v4029 = vsel %vm26, %v3967, 0
  %v4032 = vsel %vm26, %v3968, 0
  %v4035 = vsel %vm26, %v3969, 0
  %v4038 = vsel %vm26, %v3970, 0
  %v4041 = vsel %vm26, %v3971, 0
  %v4044 = vsel %vm26, %v3972, 0
  %v4047 = vsel %vm26, %v3973, 0
  %v4050 = vsel %vm26, %v3974, 0
  %v4053 = vsel %vm26, %v3975, 0
  %v4056 = vsel %vm26, %v3976, 0
  %v4059 = vsel %vm26, %v3977, 0
  %v4062 = vsel %vm26, %v3978, 0
  %v4065 = vsel %vm26, %v3979, 0
  %v4068 = vsel %vm26, %v3980, 0
  %v4071 = vsel %vm26, %v3981, 0
  %v4074 = vsel %vm26, %v3982, 0
  %v4077 = vsel %vm26, %v3983, 0
  %v4080 = vsel %vm26, %v3984, 0
  %v4083 = vsel %vm26, %v3985, 0
  %v4086 = vsel %vm26, %v3986, 0
  %v4089 = vsel %vm1920, %v3987, 0
  %4091 = vmatpush.msra.mxu0 0.0
  %4092 = vmatpush.msra.mxu0 0.0
  %4093 = vmatpush.msra.mxu0 0.0
  %4094 = vmatpush.msra.mxu0 0.0
  %4095 = vmatpush.msra.mxu0 0.0
  %4096 = vmatpush.msra.mxu0 0.0
  %4097 = vmatpush.msra.mxu0 0.0
  %4098 = vmatpush.msra.mxu0 0.0
  %4099 = vmatpush.msra.mxu0 0.0
  %4100 = vmatpush.msra.mxu0 0.0
  %4101 = vmatpush.msra.mxu0 0.0
  %4102 = vmatpush.msra.mxu0 0.0
  %4103 = vmatpush.msra.mxu0 0.0
  %4104 = vmatpush.msra.mxu0 0.0
  %4105 = vmatpush.msra.mxu0 0.0
  %4106 = vmatpush.msra.mxu0 %v4089
  %4107 = vmatmul.f32.gmra.mxu0 %v3993
  %v4108 = vpop.f32.mrf.mxu0
  %v4109 = vadd.f32 %v3990, %v4108
  %4110 = vmatmul.f32.gmra.mxu0 %v3996
  %v4111 = vpop.f32.mrf.mxu0
  %v4112 = vadd.f32 %v3990, %v4111
  %4113 = vmatmul.f32.gmra.mxu0 %v3999
  %v4114 = vpop.f32.mrf.mxu0
  %v4115 = vadd.f32 %v3990, %v4114
  %4116 = vmatmul.f32.gmra.mxu0 %v4002
  %v4117 = vpop.f32.mrf.mxu0
  %v4118 = vadd.f32 %v3990, %v4117
  %4119 = vmatmul.f32.gmra.mxu0 %v4005
  %v4120 = vpop.f32.mrf.mxu0
  %v4121 = vadd.f32 %v3990, %v4120
  %4122 = vmatmul.f32.gmra.mxu0 %v4008
  %v4123 = vpop.f32.mrf.mxu0
  %v4124 = vadd.f32 %v3990, %v4123
  %4125 = vmatmul.f32.gmra.mxu0 %v4011
  %v4126 = vpop.f32.mrf.mxu0
  %v4127 = vadd.f32 %v3990, %v4126
  %4128 = vmatmul.f32.gmra.mxu0 %v4014
  %v4129 = vpop.f32.mrf.mxu0
  %v4130 = vadd.f32 %v3990, %v4129
  %4131 = vmatmul.f32.gmra.mxu0 %v4017
  %v4132 = vpop.f32.mrf.mxu0
  %v4133 = vadd.f32 %v3990, %v4132
  %4134 = vmatmul.f32.gmra.mxu0 %v4020
  %v4135 = vpop.f32.mrf.mxu0
  %v4136 = vadd.f32 %v3990, %v4135
  %4137 = vmatmul.f32.gmra.mxu0 %v4023
  %v4138 = vpop.f32.mrf.mxu0
  %v4139 = vadd.f32 %v3990, %v4138
  %4140 = vmatmul.f32.gmra.mxu0 %v4026
  %v4141 = vpop.f32.mrf.mxu0
  %v4142 = vadd.f32 %v3990, %v4141
  %4143 = vmatmul.f32.gmra.mxu0 %v4029
  %v4144 = vpop.f32.mrf.mxu0
  %v4145 = vadd.f32 %v3990, %v4144
  %4146 = vmatmul.f32.gmra.mxu0 %v4032
  %v4147 = vpop.f32.mrf.mxu0
  %v4148 = vadd.f32 %v3990, %v4147
  %4149 = vmatmul.f32.gmra.mxu0 %v4035
  %v4150 = vpop.f32.mrf.mxu0
  %v4151 = vadd.f32 %v3990, %v4150
  %4152 = vmatmul.f32.gmra.mxu0 %v4038
  %v4153 = vpop.f32.mrf.mxu0
  %v4154 = vadd.f32 %v3990, %v4153
  %4155 = vmatmul.f32.gmra.mxu0 %v4041
  %v4156 = vpop.f32.mrf.mxu0
  %v4157 = vadd.f32 %v3990, %v4156
  %4158 = vmatmul.f32.gmra.mxu0 %v4044
  %v4159 = vpop.f32.mrf.mxu0
  %v4160 = vadd.f32 %v3990, %v4159
  %4161 = vmatmul.f32.gmra.mxu0 %v4047
  %v4162 = vpop.f32.mrf.mxu0
  %v4163 = vadd.f32 %v3990, %v4162
  %4164 = vmatmul.f32.gmra.mxu0 %v4050
  %v4165 = vpop.f32.mrf.mxu0
  %v4166 = vadd.f32 %v3990, %v4165
  %4167 = vmatmul.f32.gmra.mxu0 %v4053
  %v4168 = vpop.f32.mrf.mxu0
  %v4169 = vadd.f32 %v3990, %v4168
  %4170 = vmatmul.f32.gmra.mxu0 %v4056
  %v4171 = vpop.f32.mrf.mxu0
  %v4172 = vadd.f32 %v3990, %v4171
  %4173 = vmatmul.f32.gmra.mxu0 %v4059
  %v4174 = vpop.f32.mrf.mxu0
  %v4175 = vadd.f32 %v3990, %v4174
  %4176 = vmatmul.f32.gmra.mxu0 %v4062
  %v4177 = vpop.f32.mrf.mxu0
  %v4178 = vadd.f32 %v3990, %v4177
  %4179 = vmatmul.f32.gmra.mxu0 %v4065
  %v4180 = vpop.f32.mrf.mxu0
  %v4181 = vadd.f32 %v3990, %v4180
  %4182 = vmatmul.f32.gmra.mxu0 %v4068
  %v4183 = vpop.f32.mrf.mxu0
  %v4184 = vadd.f32 %v3990, %v4183
  %4185 = vmatmul.f32.gmra.mxu0 %v4071
  %v4186 = vpop.f32.mrf.mxu0
  %v4187 = vadd.f32 %v3990, %v4186
  %4188 = vmatmul.f32.gmra.mxu0 %v4074
  %v4189 = vpop.f32.mrf.mxu0
  %v4190 = vadd.f32 %v3990, %v4189
  %4191 = vmatmul.f32.gmra.mxu0 %v4077
  %v4192 = vpop.f32.mrf.mxu0
  %v4193 = vadd.f32 %v3990, %v4192
  %4194 = vmatmul.f32.gmra.mxu0 %v4080
  %v4195 = vpop.f32.mrf.mxu0
  %v4196 = vadd.f32 %v3990, %v4195
  %4197 = vmatmul.f32.gmra.mxu0 %v4083
  %v4198 = vpop.f32.mrf.mxu0
  %v4199 = vadd.f32 %v3990, %v4198
  %4200 = vmatmul.f32.gmra.mxu0 %v4086
  %v4201 = vpop.f32.mrf.mxu0
  %v4202 = vadd.f32 %v3990, %v4201
  %4203 = vdwg.mxu0
  %v4204 = vld [vmem:[%s0] sm:$0xff]
  %v4205 = vld [vmem:[%s0 + $0x8] sm:$0xff]
  %v4206 = vld [vmem:[%s0 + $0x10] sm:$0xff]
  %v4207 = vld [vmem:[%s0 + $0x18] sm:$0xff]
  %v4208 = vld [vmem:[%s0 + $0x20] sm:$0xff]
  %v4209 = vld [vmem:[%s0 + $0x28] sm:$0xff]
  %v4210 = vld [vmem:[%s0 + $0x30] sm:$0xff]
  %v4211 = vld [vmem:[%s0 + $0x38] sm:$0xff]
  %v4212 = vld [vmem:[%s0 + $0x40] sm:$0xff]
  %v4213 = vld [vmem:[%s0 + $0x48] sm:$0xff]
  %v4214 = vld [vmem:[%s0 + $0x50] sm:$0xff]
  %v4215 = vld [vmem:[%s0 + $0x58] sm:$0xff]
  %v4216 = vld [vmem:[%s0 + $0x60] sm:$0xff]
  %v4217 = vld [vmem:[%s0 + $0x68] sm:$0xff]
  %v4218 = vld [vmem:[%s0 + $0x70] sm:$0xff]
  %v4219 = vld [vmem:[%s0 + $0x78] sm:$0xff]
  %v4220 = vld [vmem:[%s0 + $0x80] sm:$0xff]
  %v4221 = vld [vmem:[%s0 + $0x88] sm:$0xff]
  %v4222 = vld [vmem:[%s0 + $0x90] sm:$0xff]
  %v4223 = vld [vmem:[%s0 + $0x98] sm:$0xff]
  %v4224 = vld [vmem:[%s0 + $0xa0] sm:$0xff]
  %v4225 = vld [vmem:[%s0 + $0xa8] sm:$0xff]
  %v4226 = vld [vmem:[%s0 + $0xb0] sm:$0xff]
  %v4227 = vld [vmem:[%s0 + $0xb8] sm:$0xff]
  %v4228 = vld [vmem:[%s0 + $0xc0] sm:$0xff]
  %v4229 = vld [vmem:[%s0 + $0xc8] sm:$0xff]
  %v4230 = vld [vmem:[%s0 + $0xd0] sm:$0xff]
  %v4231 = vld [vmem:[%s0 + $0xd8] sm:$0xff]
  %v4232 = vld [vmem:[%s0 + $0xe0] sm:$0xff]
  %v4233 = vld [vmem:[%s0 + $0xe8] sm:$0xff]
  %v4234 = vld [vmem:[%s0 + $0xf0] sm:$0xff]
  %v4235 = vld [vmem:[%s0 + $0xf8] sm:$0xff]
  %v4236 = vadd.f32 %v4109, %v4204
  %v4237 = vadd.f32 %v4112, %v4205
  %v4238 = vadd.f32 %v4115, %v4206
  %v4239 = vadd.f32 %v4118, %v4207
  %v4240 = vadd.f32 %v4121, %v4208
  %v4241 = vadd.f32 %v4124, %v4209
  %v4242 = vadd.f32 %v4127, %v4210
  %v4243 = vadd.f32 %v4130, %v4211
  %v4244 = vadd.f32 %v4133, %v4212
  %v4245 = vadd.f32 %v4136, %v4213
  %v4246 = vadd.f32 %v4139, %v4214
  %v4247 = vadd.f32 %v4142, %v4215
  %v4248 = vadd.f32 %v4145, %v4216
  %v4249 = vadd.f32 %v4148, %v4217
  %v4250 = vadd.f32 %v4151, %v4218
  %v4251 = vadd.f32 %v4154, %v4219
  %v4252 = vadd.f32 %v4157, %v4220
  %v4253 = vadd.f32 %v4160, %v4221
  %v4254 = vadd.f32 %v4163, %v4222
  %v4255 = vadd.f32 %v4166, %v4223
  %v4256 = vadd.f32 %v4169, %v4224
  %v4257 = vadd.f32 %v4172, %v4225
  %v4258 = vadd.f32 %v4175, %v4226
  %v4259 = vadd.f32 %v4178, %v4227
  %v4260 = vadd.f32 %v4181, %v4228
  %v4261 = vadd.f32 %v4184, %v4229
  %v4262 = vadd.f32 %v4187, %v4230
  %v4263 = vadd.f32 %v4190, %v4231
  %v4264 = vadd.f32 %v4193, %v4232
  %v4265 = vadd.f32 %v4196, %v4233
  %v4266 = vadd.f32 %v4199, %v4234
  %v4267 = vadd.f32 %v4202, %v4235
  %v4268 = vmax.f32 %v4236, 0.0
  %v4269 = vmax.f32 %v4237, 0.0
  %v4270 = vmax.f32 %v4238, 0.0
  %v4271 = vmax.f32 %v4239, 0.0
  %v4272 = vmax.f32 %v4240, 0.0
  %v4273 = vmax.f32 %v4241, 0.0
  %v4274 = vmax.f32 %v4242, 0.0
  %v4275 = vmax.f32 %v4243, 0.0
  %v4276 = vmax.f32 %v4244, 0.0
  %v4277 = vmax.f32 %v4245, 0.0
  %v4278 = vmax.f32 %v4246, 0.0
  %v4279 = vmax.f32 %v4247, 0.0
  %v4280 = vmax.f32 %v4248, 0.0
  %v4281 = vmax.f32 %v4249, 0.0
  %v4282 = vmax.f32 %v4250, 0.0
  %v4283 = vmax.f32 %v4251, 0.0
  %v4284 = vmax.f32 %v4252, 0.0
  %v4285 = vmax.f32 %v4253, 0.0
  %v4286 = vmax.f32 %v4254, 0.0
  %v4287 = vmax.f32 %v4255, 0.0
  %v4288 = vmax.f32 %v4256, 0.0
  %v4289 = vmax.f32 %v4257, 0.0
  %v4290 = vmax.f32 %v4258, 0.0
  %v4291 = vmax.f32 %v4259, 0.0
  %v4292 = vmax.f32 %v4260, 0.0
  %v4293 = vmax.f32 %v4261, 0.0
  %v4294 = vmax.f32 %v4262, 0.0
  %v4295 = vmax.f32 %v4263, 0.0
  %v4296 = vmax.f32 %v4264, 0.0
  %v4297 = vmax.f32 %v4265, 0.0
  %v4298 = vmax.f32 %v4266, 0.0
  %v4299 = vmax.f32 %v4267, 0.0
  %4300 = vst.msk [vmem:[%s7] sm:$0xff] %vm26, %v4268
  %4301 = vst.msk [vmem:[%s7 + $0x8] sm:$0xff] %vm26, %v4269
  %4302 = vst.msk [vmem:[%s7 + $0x10] sm:$0xff] %vm26, %v4270
  %4303 = vst.msk [vmem:[%s7 + $0x18] sm:$0xff] %vm26, %v4271
  %4304 = vst.msk [vmem:[%s7 + $0x20] sm:$0xff] %vm26, %v4272
  %4305 = vst.msk [vmem:[%s7 + $0x28] sm:$0xff] %vm26, %v4273
  %4306 = vst.msk [vmem:[%s7 + $0x30] sm:$0xff] %vm26, %v4274
  %4307 = vst.msk [vmem:[%s7 + $0x38] sm:$0xff] %vm26, %v4275
  %4308 = vst.msk [vmem:[%s7 + $0x40] sm:$0xff] %vm26, %v4276
  %4309 = vst.msk [vmem:[%s7 + $0x48] sm:$0xff] %vm26, %v4277
  %4310 = vst.msk [vmem:[%s7 + $0x50] sm:$0xff] %vm26, %v4278
  %4311 = vst.msk [vmem:[%s7 + $0x58] sm:$0xff] %vm26, %v4279
  %4312 = vst.msk [vmem:[%s7 + $0x60] sm:$0xff] %vm26, %v4280
  %4313 = vst.msk [vmem:[%s7 + $0x68] sm:$0xff] %vm26, %v4281
  %4314 = vst.msk [vmem:[%s7 + $0x70] sm:$0xff] %vm26, %v4282
  %4315 = vst.msk [vmem:[%s7 + $0x78] sm:$0xff] %vm26, %v4283
  %4316 = vst.msk [vmem:[%s7 + $0x80] sm:$0xff] %vm26, %v4284
  %4317 = vst.msk [vmem:[%s7 + $0x88] sm:$0xff] %vm26, %v4285
  %4318 = vst.msk [vmem:[%s7 + $0x90] sm:$0xff] %vm26, %v4286
  %4319 = vst.msk [vmem:[%s7 + $0x98] sm:$0xff] %vm26, %v4287
  %4320 = vst.msk [vmem:[%s7 + $0xa0] sm:$0xff] %vm26, %v4288
  %4321 = vst.msk [vmem:[%s7 + $0xa8] sm:$0xff] %vm26, %v4289
  %4322 = vst.msk [vmem:[%s7 + $0xb0] sm:$0xff] %vm26, %v4290
  %4323 = vst.msk [vmem:[%s7 + $0xb8] sm:$0xff] %vm26, %v4291
  %4324 = vst.msk [vmem:[%s7 + $0xc0] sm:$0xff] %vm26, %v4292
  %4325 = vst.msk [vmem:[%s7 + $0xc8] sm:$0xff] %vm26, %v4293
  %4326 = vst.msk [vmem:[%s7 + $0xd0] sm:$0xff] %vm26, %v4294
  %4327 = vst.msk [vmem:[%s7 + $0xd8] sm:$0xff] %vm26, %v4295
  %4328 = vst.msk [vmem:[%s7 + $0xe0] sm:$0xff] %vm26, %v4296
  %4329 = vst.msk [vmem:[%s7 + $0xe8] sm:$0xff] %vm26, %v4297
  %4330 = vst.msk [vmem:[%s7 + $0xf0] sm:$0xff] %vm26, %v4298
  %4331 = vst.msk [vmem:[%s7 + $0xf8] sm:$0xff] %vm26, %v4299
  %s4332 = scalar_lea.vmem %s0, 256
  %v4333 = vld [vmem:[%s4332] sm:$0xff]
  %v4334 = vld [vmem:[%s4332 + $0x8] sm:$0xff]
  %v4335 = vld [vmem:[%s4332 + $0x10] sm:$0xff]
  %v4336 = vld [vmem:[%s4332 + $0x18] sm:$0xff]
  %v4337 = vld [vmem:[%s4332 + $0x20] sm:$0xff]
  %v4338 = vld [vmem:[%s4332 + $0x28] sm:$0xff]
  %v4339 = vld [vmem:[%s4332 + $0x30] sm:$0xff]
  %v4340 = vld [vmem:[%s4332 + $0x38] sm:$0xff]
  %v4341 = vld [vmem:[%s4332 + $0x40] sm:$0xff]
  %v4342 = vld [vmem:[%s4332 + $0x48] sm:$0xff]
  %v4343 = vld [vmem:[%s4332 + $0x50] sm:$0xff]
  %v4344 = vld [vmem:[%s4332 + $0x58] sm:$0xff]
  %v4345 = vld [vmem:[%s4332 + $0x60] sm:$0xff]
  %v4346 = vld [vmem:[%s4332 + $0x68] sm:$0xff]
  %v4347 = vld [vmem:[%s4332 + $0x70] sm:$0xff]
  %v4348 = vld [vmem:[%s4332 + $0x78] sm:$0xff]
  %v4349 = vld [vmem:[%s4332 + $0x80] sm:$0xff]
  %v4350 = vld [vmem:[%s4332 + $0x88] sm:$0xff]
  %v4351 = vld [vmem:[%s4332 + $0x90] sm:$0xff]
  %v4352 = vld [vmem:[%s4332 + $0x98] sm:$0xff]
  %v4353 = vld [vmem:[%s4332 + $0xa0] sm:$0xff]
  %v4354 = vld [vmem:[%s4332 + $0xa8] sm:$0xff]
  %v4355 = vld [vmem:[%s4332 + $0xb0] sm:$0xff]
  %v4356 = vld [vmem:[%s4332 + $0xb8] sm:$0xff]
  %v4357 = vld [vmem:[%s4332 + $0xc0] sm:$0xff]
  %v4358 = vld [vmem:[%s4332 + $0xc8] sm:$0xff]
  %v4359 = vld [vmem:[%s4332 + $0xd0] sm:$0xff]
  %v4360 = vld [vmem:[%s4332 + $0xd8] sm:$0xff]
  %v4361 = vld [vmem:[%s4332 + $0xe0] sm:$0xff]
  %v4362 = vld [vmem:[%s4332 + $0xe8] sm:$0xff]
  %v4363 = vld [vmem:[%s4332 + $0xf0] sm:$0xff]
  %v4364 = vld [vmem:[%s4332 + $0xf8] sm:$0xff]
  %4365 = vst.msk [vmem:[%s35 + $0x1] sm:$0xff] %vm26, %v4333
  %4366 = vst.msk [vmem:[%s35 + $0x9] sm:$0xff] %vm26, %v4334
  %4367 = vst.msk [vmem:[%s35 + $0x19] sm:$0xff] %vm26, %v4335
  %4368 = vst.msk [vmem:[%s35 + $0x21] sm:$0xff] %vm26, %v4336
  %4369 = vst.msk [vmem:[%s35 + $0x31] sm:$0xff] %vm26, %v4337
  %4370 = vst.msk [vmem:[%s35 + $0x39] sm:$0xff] %vm26, %v4338
  %4371 = vst.msk [vmem:[%s35 + $0x49] sm:$0xff] %vm26, %v4339
  %4372 = vst.msk [vmem:[%s35 + $0x51] sm:$0xff] %vm26, %v4340
  %4373 = vst.msk [vmem:[%s35 + $0x61] sm:$0xff] %vm26, %v4341
  %4374 = vst.msk [vmem:[%s35 + $0x69] sm:$0xff] %vm26, %v4342
  %4375 = vst.msk [vmem:[%s35 + $0x79] sm:$0xff] %vm26, %v4343
  %4376 = vst.msk [vmem:[%s35 + $0x81] sm:$0xff] %vm26, %v4344
  %4377 = vst.msk [vmem:[%s35 + $0x91] sm:$0xff] %vm26, %v4345
  %4378 = vst.msk [vmem:[%s35 + $0x99] sm:$0xff] %vm26, %v4346
  %4379 = vst.msk [vmem:[%s35 + $0xa9] sm:$0xff] %vm26, %v4347
  %4380 = vst.msk [vmem:[%s35 + $0xb1] sm:$0xff] %vm26, %v4348
  %4381 = vst.msk [vmem:[%s35 + $0xc1] sm:$0xff] %vm26, %v4349
  %4382 = vst.msk [vmem:[%s35 + $0xc9] sm:$0xff] %vm26, %v4350
  %4383 = vst.msk [vmem:[%s35 + $0xd9] sm:$0xff] %vm26, %v4351
  %4384 = vst.msk [vmem:[%s35 + $0xe1] sm:$0xff] %vm26, %v4352
  %4385 = vst.msk [vmem:[%s35 + $0xf1] sm:$0xff] %vm26, %v4353
  %4386 = vst.msk [vmem:[%s35 + $0xf9] sm:$0xff] %vm26, %v4354
  %4387 = vst.msk [vmem:[%s35 + $0x109] sm:$0xff] %vm26, %v4355
  %4388 = vst.msk [vmem:[%s35 + $0x111] sm:$0xff] %vm26, %v4356
  %4389 = vst.msk [vmem:[%s35 + $0x121] sm:$0xff] %vm26, %v4357
  %4390 = vst.msk [vmem:[%s35 + $0x129] sm:$0xff] %vm26, %v4358
  %4391 = vst.msk [vmem:[%s35 + $0x139] sm:$0xff] %vm26, %v4359
  %4392 = vst.msk [vmem:[%s35 + $0x141] sm:$0xff] %vm26, %v4360
  %4393 = vst.msk [vmem:[%s35 + $0x151] sm:$0xff] %vm26, %v4361
  %4394 = vst.msk [vmem:[%s35 + $0x159] sm:$0xff] %vm26, %v4362
  %4395 = vst.msk [vmem:[%s35 + $0x169] sm:$0xff] %vm26, %v4363
  %4396 = vst.msk [vmem:[%s35 + $0x171] sm:$0xff] %vm26, %v4364
  %v4397 = vld [vmem:[#allocation2] sm:$0xff]
  %v4398 = vld [vmem:[#allocation2 + $0x8] sm:$0xff]
  %v4399 = vld [vmem:[#allocation2 + $0x18] sm:$0xff]
  %v4400 = vld [vmem:[#allocation2 + $0x20] sm:$0xff]
  %v4401 = vld [vmem:[#allocation2 + $0x30] sm:$0xff]
  %v4402 = vld [vmem:[#allocation2 + $0x38] sm:$0xff]
  %v4403 = vld [vmem:[#allocation2 + $0x48] sm:$0xff]
  %v4404 = vld [vmem:[#allocation2 + $0x50] sm:$0xff]
  %v4405 = vld [vmem:[#allocation2 + $0x60] sm:$0xff]
  %v4406 = vld [vmem:[#allocation2 + $0x68] sm:$0xff]
  %v4407 = vld [vmem:[#allocation2 + $0x78] sm:$0xff]
  %v4408 = vld [vmem:[#allocation2 + $0x80] sm:$0xff]
  %v4409 = vld [vmem:[#allocation2 + $0x90] sm:$0xff]
  %v4410 = vld [vmem:[#allocation2 + $0x98] sm:$0xff]
  %v4411 = vld [vmem:[#allocation2 + $0xa8] sm:$0xff]
  %v4412 = vld [vmem:[#allocation2 + $0xb0] sm:$0xff]
  %v4413 = vld [vmem:[#allocation2 + $0xc0] sm:$0xff]
  %v4414 = vld [vmem:[#allocation2 + $0xc8] sm:$0xff]
  %v4415 = vld [vmem:[#allocation2 + $0xd8] sm:$0xff]
  %v4416 = vld [vmem:[#allocation2 + $0xe0] sm:$0xff]
  %v4417 = vld [vmem:[#allocation2 + $0xf0] sm:$0xff]
  %v4418 = vld [vmem:[#allocation2 + $0xf8] sm:$0xff]
  %v4419 = vld [vmem:[#allocation2 + $0x108] sm:$0xff]
  %v4420 = vld [vmem:[#allocation2 + $0x110] sm:$0xff]
  %v4421 = vld [vmem:[#allocation2 + $0x120] sm:$0xff]
  %v4422 = vld [vmem:[#allocation2 + $0x128] sm:$0xff]
  %v4423 = vld [vmem:[#allocation2 + $0x138] sm:$0xff]
  %v4424 = vld [vmem:[#allocation2 + $0x140] sm:$0xff]
  %v4425 = vld [vmem:[#allocation2 + $0x150] sm:$0xff]
  %v4426 = vld [vmem:[#allocation2 + $0x158] sm:$0xff]
  %v4427 = vld [vmem:[#allocation2 + $0x168] sm:$0xff]
  %v4428 = vld [vmem:[#allocation2 + $0x170] sm:$0xff]
  %4429 = vst.msk [vmem:[#allocation4] sm:$0xff] %vm26, %v4397
  %4430 = vst.msk [vmem:[#allocation4 + $0x8] sm:$0xff] %vm26, %v4398
  %4431 = vst.msk [vmem:[#allocation4 + $0x10] sm:$0xff] %vm26, %v4399
  %4432 = vst.msk [vmem:[#allocation4 + $0x18] sm:$0xff] %vm26, %v4400
  %4433 = vst.msk [vmem:[#allocation4 + $0x20] sm:$0xff] %vm26, %v4401
  %4434 = vst.msk [vmem:[#allocation4 + $0x28] sm:$0xff] %vm26, %v4402
  %4435 = vst.msk [vmem:[#allocation4 + $0x30] sm:$0xff] %vm26, %v4403
  %4436 = vst.msk [vmem:[#allocation4 + $0x38] sm:$0xff] %vm26, %v4404
  %4437 = vst.msk [vmem:[#allocation4 + $0x40] sm:$0xff] %vm26, %v4405
  %4438 = vst.msk [vmem:[#allocation4 + $0x48] sm:$0xff] %vm26, %v4406
  %4439 = vst.msk [vmem:[#allocation4 + $0x50] sm:$0xff] %vm26, %v4407
  %4440 = vst.msk [vmem:[#allocation4 + $0x58] sm:$0xff] %vm26, %v4408
  %4441 = vst.msk [vmem:[#allocation4 + $0x60] sm:$0xff] %vm26, %v4409
  %4442 = vst.msk [vmem:[#allocation4 + $0x68] sm:$0xff] %vm26, %v4410
  %4443 = vst.msk [vmem:[#allocation4 + $0x70] sm:$0xff] %vm26, %v4411
  %4444 = vst.msk [vmem:[#allocation4 + $0x78] sm:$0xff] %vm26, %v4412
  %4445 = vst.msk [vmem:[#allocation4 + $0x80] sm:$0xff] %vm26, %v4413
  %4446 = vst.msk [vmem:[#allocation4 + $0x88] sm:$0xff] %vm26, %v4414
  %4447 = vst.msk [vmem:[#allocation4 + $0x90] sm:$0xff] %vm26, %v4415
  %4448 = vst.msk [vmem:[#allocation4 + $0x98] sm:$0xff] %vm26, %v4416
  %4449 = vst.msk [vmem:[#allocation4 + $0xa0] sm:$0xff] %vm26, %v4417
  %4450 = vst.msk [vmem:[#allocation4 + $0xa8] sm:$0xff] %vm26, %v4418
  %4451 = vst.msk [vmem:[#allocation4 + $0xb0] sm:$0xff] %vm26, %v4419
  %4452 = vst.msk [vmem:[#allocation4 + $0xb8] sm:$0xff] %vm26, %v4420
  %4453 = vst.msk [vmem:[#allocation4 + $0xc0] sm:$0xff] %vm26, %v4421
  %4454 = vst.msk [vmem:[#allocation4 + $0xc8] sm:$0xff] %vm26, %v4422
  %4455 = vst.msk [vmem:[#allocation4 + $0xd0] sm:$0xff] %vm26, %v4423
  %4456 = vst.msk [vmem:[#allocation4 + $0xd8] sm:$0xff] %vm26, %v4424
  %4457 = vst.msk [vmem:[#allocation4 + $0xe0] sm:$0xff] %vm26, %v4425
  %4458 = vst.msk [vmem:[#allocation4 + $0xe8] sm:$0xff] %vm26, %v4426
  %4459 = vst.msk [vmem:[#allocation4 + $0xf0] sm:$0xff] %vm26, %v4427
  %4460 = vst.msk [vmem:[#allocation4 + $0xf8] sm:$0xff] %vm26, %v4428
  %v4461 = vld [vmem:[#allocation2 + $0x1] sm:$0xff]
  %v4462 = vld [vmem:[#allocation2 + $0x9] sm:$0xff]
  %v4463 = vld [vmem:[#allocation2 + $0x19] sm:$0xff]
  %v4464 = vld [vmem:[#allocation2 + $0x21] sm:$0xff]
  %v4465 = vld [vmem:[#allocation2 + $0x31] sm:$0xff]
  %v4466 = vld [vmem:[#allocation2 + $0x39] sm:$0xff]
  %v4467 = vld [vmem:[#allocation2 + $0x49] sm:$0xff]
  %v4468 = vld [vmem:[#allocation2 + $0x51] sm:$0xff]
  %v4469 = vld [vmem:[#allocation2 + $0x61] sm:$0xff]
  %v4470 = vld [vmem:[#allocation2 + $0x69] sm:$0xff]
  %v4471 = vld [vmem:[#allocation2 + $0x79] sm:$0xff]
  %v4472 = vld [vmem:[#allocation2 + $0x81] sm:$0xff]
  %v4473 = vld [vmem:[#allocation2 + $0x91] sm:$0xff]
  %v4474 = vld [vmem:[#allocation2 + $0x99] sm:$0xff]
  %v4475 = vld [vmem:[#allocation2 + $0xa9] sm:$0xff]
  %v4476 = vld [vmem:[#allocation2 + $0xb1] sm:$0xff]
  %v4477 = vld [vmem:[#allocation2 + $0xc1] sm:$0xff]
  %v4478 = vld [vmem:[#allocation2 + $0xc9] sm:$0xff]
  %v4479 = vld [vmem:[#allocation2 + $0xd9] sm:$0xff]
  %v4480 = vld [vmem:[#allocation2 + $0xe1] sm:$0xff]
  %v4481 = vld [vmem:[#allocation2 + $0xf1] sm:$0xff]
  %v4482 = vld [vmem:[#allocation2 + $0xf9] sm:$0xff]
  %v4483 = vld [vmem:[#allocation2 + $0x109] sm:$0xff]
  %v4484 = vld [vmem:[#allocation2 + $0x111] sm:$0xff]
  %v4485 = vld [vmem:[#allocation2 + $0x121] sm:$0xff]
  %v4486 = vld [vmem:[#allocation2 + $0x129] sm:$0xff]
  %v4487 = vld [vmem:[#allocation2 + $0x139] sm:$0xff]
  %v4488 = vld [vmem:[#allocation2 + $0x141] sm:$0xff]
  %v4489 = vld [vmem:[#allocation2 + $0x151] sm:$0xff]
  %v4490 = vld [vmem:[#allocation2 + $0x159] sm:$0xff]
  %v4491 = vld [vmem:[#allocation2 + $0x169] sm:$0xff]
  %v4492 = vld [vmem:[#allocation2 + $0x171] sm:$0xff]
  %4525 = vrot.lane.b32.xlu0 %v4461, 4
  %v4526 = vpop.permute.xlu0 %4525
  %4527 = vrot.lane.b32.xlu0 %v4462, 4
  %v4528 = vpop.permute.xlu0 %4527
  %4529 = vrot.lane.b32.xlu0 %v4463, 4
  %v4530 = vpop.permute.xlu0 %4529
  %4531 = vrot.lane.b32.xlu0 %v4464, 4
  %v4532 = vpop.permute.xlu0 %4531
  %4533 = vrot.lane.b32.xlu0 %v4465, 4
  %v4534 = vpop.permute.xlu0 %4533
  %4535 = vrot.lane.b32.xlu0 %v4466, 4
  %v4536 = vpop.permute.xlu0 %4535
  %4537 = vrot.lane.b32.xlu0 %v4467, 4
  %v4538 = vpop.permute.xlu0 %4537
  %4539 = vrot.lane.b32.xlu0 %v4468, 4
  %v4540 = vpop.permute.xlu0 %4539
  %4541 = vrot.lane.b32.xlu0 %v4469, 4
  %v4542 = vpop.permute.xlu0 %4541
  %4543 = vrot.lane.b32.xlu0 %v4470, 4
  %v4544 = vpop.permute.xlu0 %4543
  %4545 = vrot.lane.b32.xlu0 %v4471, 4
  %v4546 = vpop.permute.xlu0 %4545
  %4547 = vrot.lane.b32.xlu0 %v4472, 4
  %v4548 = vpop.permute.xlu0 %4547
  %4549 = vrot.lane.b32.xlu0 %v4473, 4
  %v4550 = vpop.permute.xlu0 %4549
  %4551 = vrot.lane.b32.xlu0 %v4474, 4
  %v4552 = vpop.permute.xlu0 %4551
  %4553 = vrot.lane.b32.xlu0 %v4475, 4
  %v4554 = vpop.permute.xlu0 %4553
  %4555 = vrot.lane.b32.xlu0 %v4476, 4
  %v4556 = vpop.permute.xlu0 %4555
  %4557 = vrot.lane.b32.xlu0 %v4477, 4
  %v4558 = vpop.permute.xlu0 %4557
  %4559 = vrot.lane.b32.xlu0 %v4478, 4
  %v4560 = vpop.permute.xlu0 %4559
  %4561 = vrot.lane.b32.xlu0 %v4479, 4
  %v4562 = vpop.permute.xlu0 %4561
  %4563 = vrot.lane.b32.xlu0 %v4480, 4
  %v4564 = vpop.permute.xlu0 %4563
  %4565 = vrot.lane.b32.xlu0 %v4481, 4
  %v4566 = vpop.permute.xlu0 %4565
  %4567 = vrot.lane.b32.xlu0 %v4482, 4
  %v4568 = vpop.permute.xlu0 %4567
  %4569 = vrot.lane.b32.xlu0 %v4483, 4
  %v4570 = vpop.permute.xlu0 %4569
  %4571 = vrot.lane.b32.xlu0 %v4484, 4
  %v4572 = vpop.permute.xlu0 %4571
  %4573 = vrot.lane.b32.xlu0 %v4485, 4
  %v4574 = vpop.permute.xlu0 %4573
  %4575 = vrot.lane.b32.xlu0 %v4486, 4
  %v4576 = vpop.permute.xlu0 %4575
  %4577 = vrot.lane.b32.xlu0 %v4487, 4
  %v4578 = vpop.permute.xlu0 %4577
  %4579 = vrot.lane.b32.xlu0 %v4488, 4
  %v4580 = vpop.permute.xlu0 %4579
  %4581 = vrot.lane.b32.xlu0 %v4489, 4
  %v4582 = vpop.permute.xlu0 %4581
  %4583 = vrot.lane.b32.xlu0 %v4490, 4
  %v4584 = vpop.permute.xlu0 %4583
  %4585 = vrot.lane.b32.xlu0 %v4491, 4
  %v4586 = vpop.permute.xlu0 %4585
  %4587 = vrot.lane.b32.xlu0 %v4492, 4
  %v4588 = vpop.permute.xlu0 %4587
  %4621 = vst.msk [vmem:[#allocation4] sm:$0xff] %vm397, %v4526
  %4622 = vst.msk [vmem:[#allocation4 + $0x8] sm:$0xff] %vm397, %v4528
  %4623 = vst.msk [vmem:[#allocation4 + $0x10] sm:$0xff] %vm397, %v4530
  %4624 = vst.msk [vmem:[#allocation4 + $0x18] sm:$0xff] %vm397, %v4532
  %4625 = vst.msk [vmem:[#allocation4 + $0x20] sm:$0xff] %vm397, %v4534
  %4626 = vst.msk [vmem:[#allocation4 + $0x28] sm:$0xff] %vm397, %v4536
  %4627 = vst.msk [vmem:[#allocation4 + $0x30] sm:$0xff] %vm397, %v4538
  %4628 = vst.msk [vmem:[#allocation4 + $0x38] sm:$0xff] %vm397, %v4540
  %4629 = vst.msk [vmem:[#allocation4 + $0x40] sm:$0xff] %vm397, %v4542
  %4630 = vst.msk [vmem:[#allocation4 + $0x48] sm:$0xff] %vm397, %v4544
  %4631 = vst.msk [vmem:[#allocation4 + $0x50] sm:$0xff] %vm397, %v4546
  %4632 = vst.msk [vmem:[#allocation4 + $0x58] sm:$0xff] %vm397, %v4548
  %4633 = vst.msk [vmem:[#allocation4 + $0x60] sm:$0xff] %vm397, %v4550
  %4634 = vst.msk [vmem:[#allocation4 + $0x68] sm:$0xff] %vm397, %v4552
  %4635 = vst.msk [vmem:[#allocation4 + $0x70] sm:$0xff] %vm397, %v4554
  %4636 = vst.msk [vmem:[#allocation4 + $0x78] sm:$0xff] %vm397, %v4556
  %4637 = vst.msk [vmem:[#allocation4 + $0x80] sm:$0xff] %vm397, %v4558
  %4638 = vst.msk [vmem:[#allocation4 + $0x88] sm:$0xff] %vm397, %v4560
  %4639 = vst.msk [vmem:[#allocation4 + $0x90] sm:$0xff] %vm397, %v4562
  %4640 = vst.msk [vmem:[#allocation4 + $0x98] sm:$0xff] %vm397, %v4564
  %4641 = vst.msk [vmem:[#allocation4 + $0xa0] sm:$0xff] %vm397, %v4566
  %4642 = vst.msk [vmem:[#allocation4 + $0xa8] sm:$0xff] %vm397, %v4568
  %4643 = vst.msk [vmem:[#allocation4 + $0xb0] sm:$0xff] %vm397, %v4570
  %4644 = vst.msk [vmem:[#allocation4 + $0xb8] sm:$0xff] %vm397, %v4572
  %4645 = vst.msk [vmem:[#allocation4 + $0xc0] sm:$0xff] %vm397, %v4574
  %4646 = vst.msk [vmem:[#allocation4 + $0xc8] sm:$0xff] %vm397, %v4576
  %4647 = vst.msk [vmem:[#allocation4 + $0xd0] sm:$0xff] %vm397, %v4578
  %4648 = vst.msk [vmem:[#allocation4 + $0xd8] sm:$0xff] %vm397, %v4580
  %4649 = vst.msk [vmem:[#allocation4 + $0xe0] sm:$0xff] %vm397, %v4582
  %4650 = vst.msk [vmem:[#allocation4 + $0xe8] sm:$0xff] %vm397, %v4584
  %4651 = vst.msk [vmem:[#allocation4 + $0xf0] sm:$0xff] %vm397, %v4586
  %4652 = vst.msk [vmem:[#allocation4 + $0xf8] sm:$0xff] %vm397, %v4588
  %v4653 = vld [vmem:[#allocation2 + $0x2] sm:$0xff]
  %v4654 = vld [vmem:[#allocation2 + $0xa] sm:$0xff]
  %v4655 = vld [vmem:[#allocation2 + $0x1a] sm:$0xff]
  %v4656 = vld [vmem:[#allocation2 + $0x22] sm:$0xff]
  %v4657 = vld [vmem:[#allocation2 + $0x32] sm:$0xff]
  %v4658 = vld [vmem:[#allocation2 + $0x3a] sm:$0xff]
  %v4659 = vld [vmem:[#allocation2 + $0x4a] sm:$0xff]
  %v4660 = vld [vmem:[#allocation2 + $0x52] sm:$0xff]
  %v4661 = vld [vmem:[#allocation2 + $0x62] sm:$0xff]
  %v4662 = vld [vmem:[#allocation2 + $0x6a] sm:$0xff]
  %v4663 = vld [vmem:[#allocation2 + $0x7a] sm:$0xff]
  %v4664 = vld [vmem:[#allocation2 + $0x82] sm:$0xff]
  %v4665 = vld [vmem:[#allocation2 + $0x92] sm:$0xff]
  %v4666 = vld [vmem:[#allocation2 + $0x9a] sm:$0xff]
  %v4667 = vld [vmem:[#allocation2 + $0xaa] sm:$0xff]
  %v4668 = vld [vmem:[#allocation2 + $0xb2] sm:$0xff]
  %v4669 = vld [vmem:[#allocation2 + $0xc2] sm:$0xff]
  %v4670 = vld [vmem:[#allocation2 + $0xca] sm:$0xff]
  %v4671 = vld [vmem:[#allocation2 + $0xda] sm:$0xff]
  %v4672 = vld [vmem:[#allocation2 + $0xe2] sm:$0xff]
  %v4673 = vld [vmem:[#allocation2 + $0xf2] sm:$0xff]
  %v4674 = vld [vmem:[#allocation2 + $0xfa] sm:$0xff]
  %v4675 = vld [vmem:[#allocation2 + $0x10a] sm:$0xff]
  %v4676 = vld [vmem:[#allocation2 + $0x112] sm:$0xff]
  %v4677 = vld [vmem:[#allocation2 + $0x122] sm:$0xff]
  %v4678 = vld [vmem:[#allocation2 + $0x12a] sm:$0xff]
  %v4679 = vld [vmem:[#allocation2 + $0x13a] sm:$0xff]
  %v4680 = vld [vmem:[#allocation2 + $0x142] sm:$0xff]
  %v4681 = vld [vmem:[#allocation2 + $0x152] sm:$0xff]
  %v4682 = vld [vmem:[#allocation2 + $0x15a] sm:$0xff]
  %v4683 = vld [vmem:[#allocation2 + $0x16a] sm:$0xff]
  %v4684 = vld [vmem:[#allocation2 + $0x172] sm:$0xff]
  %4717 = vrot.lane.b32.xlu0 %v4653, 8
  %v4718 = vpop.permute.xlu0 %4717
  %4719 = vrot.lane.b32.xlu0 %v4654, 8
  %v4720 = vpop.permute.xlu0 %4719
  %4721 = vrot.lane.b32.xlu0 %v4655, 8
  %v4722 = vpop.permute.xlu0 %4721
  %4723 = vrot.lane.b32.xlu0 %v4656, 8
  %v4724 = vpop.permute.xlu0 %4723
  %4725 = vrot.lane.b32.xlu0 %v4657, 8
  %v4726 = vpop.permute.xlu0 %4725
  %4727 = vrot.lane.b32.xlu0 %v4658, 8
  %v4728 = vpop.permute.xlu0 %4727
  %4729 = vrot.lane.b32.xlu0 %v4659, 8
  %v4730 = vpop.permute.xlu0 %4729
  %4731 = vrot.lane.b32.xlu0 %v4660, 8
  %v4732 = vpop.permute.xlu0 %4731
  %4733 = vrot.lane.b32.xlu0 %v4661, 8
  %v4734 = vpop.permute.xlu0 %4733
  %4735 = vrot.lane.b32.xlu0 %v4662, 8
  %v4736 = vpop.permute.xlu0 %4735
  %4737 = vrot.lane.b32.xlu0 %v4663, 8
  %v4738 = vpop.permute.xlu0 %4737
  %4739 = vrot.lane.b32.xlu0 %v4664, 8
  %v4740 = vpop.permute.xlu0 %4739
  %4741 = vrot.lane.b32.xlu0 %v4665, 8
  %v4742 = vpop.permute.xlu0 %4741
  %4743 = vrot.lane.b32.xlu0 %v4666, 8
  %v4744 = vpop.permute.xlu0 %4743
  %4745 = vrot.lane.b32.xlu0 %v4667, 8
  %v4746 = vpop.permute.xlu0 %4745
  %4747 = vrot.lane.b32.xlu0 %v4668, 8
  %v4748 = vpop.permute.xlu0 %4747
  %4749 = vrot.lane.b32.xlu0 %v4669, 8
  %v4750 = vpop.permute.xlu0 %4749
  %4751 = vrot.lane.b32.xlu0 %v4670, 8
  %v4752 = vpop.permute.xlu0 %4751
  %4753 = vrot.lane.b32.xlu0 %v4671, 8
  %v4754 = vpop.permute.xlu0 %4753
  %4755 = vrot.lane.b32.xlu0 %v4672, 8
  %v4756 = vpop.permute.xlu0 %4755
  %4757 = vrot.lane.b32.xlu0 %v4673, 8
  %v4758 = vpop.permute.xlu0 %4757
  %4759 = vrot.lane.b32.xlu0 %v4674, 8
  %v4760 = vpop.permute.xlu0 %4759
  %4761 = vrot.lane.b32.xlu0 %v4675, 8
  %v4762 = vpop.permute.xlu0 %4761
  %4763 = vrot.lane.b32.xlu0 %v4676, 8
  %v4764 = vpop.permute.xlu0 %4763
  %4765 = vrot.lane.b32.xlu0 %v4677, 8
  %v4766 = vpop.permute.xlu0 %4765
  %4767 = vrot.lane.b32.xlu0 %v4678, 8
  %v4768 = vpop.permute.xlu0 %4767
  %4769 = vrot.lane.b32.xlu0 %v4679, 8
  %v4770 = vpop.permute.xlu0 %4769
  %4771 = vrot.lane.b32.xlu0 %v4680, 8
  %v4772 = vpop.permute.xlu0 %4771
  %4773 = vrot.lane.b32.xlu0 %v4681, 8
  %v4774 = vpop.permute.xlu0 %4773
  %4775 = vrot.lane.b32.xlu0 %v4682, 8
  %v4776 = vpop.permute.xlu0 %4775
  %4777 = vrot.lane.b32.xlu0 %v4683, 8
  %v4778 = vpop.permute.xlu0 %4777
  %4779 = vrot.lane.b32.xlu0 %v4684, 8
  %v4780 = vpop.permute.xlu0 %4779
  %4813 = vst.msk [vmem:[#allocation4] sm:$0xff] %vm590, %v4718
  %4814 = vst.msk [vmem:[#allocation4 + $0x8] sm:$0xff] %vm590, %v4720
  %4815 = vst.msk [vmem:[#allocation4 + $0x10] sm:$0xff] %vm590, %v4722
  %4816 = vst.msk [vmem:[#allocation4 + $0x18] sm:$0xff] %vm590, %v4724
  %4817 = vst.msk [vmem:[#allocation4 + $0x20] sm:$0xff] %vm590, %v4726
  %4818 = vst.msk [vmem:[#allocation4 + $0x28] sm:$0xff] %vm590, %v4728
  %4819 = vst.msk [vmem:[#allocation4 + $0x30] sm:$0xff] %vm590, %v4730
  %4820 = vst.msk [vmem:[#allocation4 + $0x38] sm:$0xff] %vm590, %v4732
  %4821 = vst.msk [vmem:[#allocation4 + $0x40] sm:$0xff] %vm590, %v4734
  %4822 = vst.msk [vmem:[#allocation4 + $0x48] sm:$0xff] %vm590, %v4736
  %4823 = vst.msk [vmem:[#allocation4 + $0x50] sm:$0xff] %vm590, %v4738
  %4824 = vst.msk [vmem:[#allocation4 + $0x58] sm:$0xff] %vm590, %v4740
  %4825 = vst.msk [vmem:[#allocation4 + $0x60] sm:$0xff] %vm590, %v4742
  %4826 = vst.msk [vmem:[#allocation4 + $0x68] sm:$0xff] %vm590, %v4744
  %4827 = vst.msk [vmem:[#allocation4 + $0x70] sm:$0xff] %vm590, %v4746
  %4828 = vst.msk [vmem:[#allocation4 + $0x78] sm:$0xff] %vm590, %v4748
  %4829 = vst.msk [vmem:[#allocation4 + $0x80] sm:$0xff] %vm590, %v4750
  %4830 = vst.msk [vmem:[#allocation4 + $0x88] sm:$0xff] %vm590, %v4752
  %4831 = vst.msk [vmem:[#allocation4 + $0x90] sm:$0xff] %vm590, %v4754
  %4832 = vst.msk [vmem:[#allocation4 + $0x98] sm:$0xff] %vm590, %v4756
  %4833 = vst.msk [vmem:[#allocation4 + $0xa0] sm:$0xff] %vm590, %v4758
  %4834 = vst.msk [vmem:[#allocation4 + $0xa8] sm:$0xff] %vm590, %v4760
  %4835 = vst.msk [vmem:[#allocation4 + $0xb0] sm:$0xff] %vm590, %v4762
  %4836 = vst.msk [vmem:[#allocation4 + $0xb8] sm:$0xff] %vm590, %v4764
  %4837 = vst.msk [vmem:[#allocation4 + $0xc0] sm:$0xff] %vm590, %v4766
  %4838 = vst.msk [vmem:[#allocation4 + $0xc8] sm:$0xff] %vm590, %v4768
  %4839 = vst.msk [vmem:[#allocation4 + $0xd0] sm:$0xff] %vm590, %v4770
  %4840 = vst.msk [vmem:[#allocation4 + $0xd8] sm:$0xff] %vm590, %v4772
  %4841 = vst.msk [vmem:[#allocation4 + $0xe0] sm:$0xff] %vm590, %v4774
  %4842 = vst.msk [vmem:[#allocation4 + $0xe8] sm:$0xff] %vm590, %v4776
  %4843 = vst.msk [vmem:[#allocation4 + $0xf0] sm:$0xff] %vm590, %v4778
  %4844 = vst.msk [vmem:[#allocation4 + $0xf8] sm:$0xff] %vm590, %v4780
  %v4845 = vld [vmem:[%s35] sm:$0xff]
  %v4846 = vld [vmem:[%s35 + $0x8] sm:$0xff]
  %v4847 = vld [vmem:[%s35 + $0x18] sm:$0xff]
  %v4848 = vld [vmem:[%s35 + $0x20] sm:$0xff]
  %v4849 = vld [vmem:[%s35 + $0x30] sm:$0xff]
  %v4850 = vld [vmem:[%s35 + $0x38] sm:$0xff]
  %v4851 = vld [vmem:[%s35 + $0x48] sm:$0xff]
  %v4852 = vld [vmem:[%s35 + $0x50] sm:$0xff]
  %v4853 = vld [vmem:[%s35 + $0x60] sm:$0xff]
  %v4854 = vld [vmem:[%s35 + $0x68] sm:$0xff]
  %v4855 = vld [vmem:[%s35 + $0x78] sm:$0xff]
  %v4856 = vld [vmem:[%s35 + $0x80] sm:$0xff]
  %v4857 = vld [vmem:[%s35 + $0x90] sm:$0xff]
  %v4858 = vld [vmem:[%s35 + $0x98] sm:$0xff]
  %v4859 = vld [vmem:[%s35 + $0xa8] sm:$0xff]
  %v4860 = vld [vmem:[%s35 + $0xb0] sm:$0xff]
  %v4861 = vld [vmem:[%s35 + $0xc0] sm:$0xff]
  %v4862 = vld [vmem:[%s35 + $0xc8] sm:$0xff]
  %v4863 = vld [vmem:[%s35 + $0xd8] sm:$0xff]
  %v4864 = vld [vmem:[%s35 + $0xe0] sm:$0xff]
  %v4865 = vld [vmem:[%s35 + $0xf0] sm:$0xff]
  %v4866 = vld [vmem:[%s35 + $0xf8] sm:$0xff]
  %v4867 = vld [vmem:[%s35 + $0x108] sm:$0xff]
  %v4868 = vld [vmem:[%s35 + $0x110] sm:$0xff]
  %v4869 = vld [vmem:[%s35 + $0x120] sm:$0xff]
  %v4870 = vld [vmem:[%s35 + $0x128] sm:$0xff]
  %v4871 = vld [vmem:[%s35 + $0x138] sm:$0xff]
  %v4872 = vld [vmem:[%s35 + $0x140] sm:$0xff]
  %v4873 = vld [vmem:[%s35 + $0x150] sm:$0xff]
  %v4874 = vld [vmem:[%s35 + $0x158] sm:$0xff]
  %v4875 = vld [vmem:[%s35 + $0x168] sm:$0xff]
  %v4876 = vld [vmem:[%s35 + $0x170] sm:$0xff]
  %4909 = vrot.lane.b32.xlu0 %v4845, 12
  %v4910 = vpop.permute.xlu0 %4909
  %4911 = vrot.lane.b32.xlu0 %v4846, 12
  %v4912 = vpop.permute.xlu0 %4911
  %4913 = vrot.lane.b32.xlu0 %v4847, 12
  %v4914 = vpop.permute.xlu0 %4913
  %4915 = vrot.lane.b32.xlu0 %v4848, 12
  %v4916 = vpop.permute.xlu0 %4915
  %4917 = vrot.lane.b32.xlu0 %v4849, 12
  %v4918 = vpop.permute.xlu0 %4917
  %4919 = vrot.lane.b32.xlu0 %v4850, 12
  %v4920 = vpop.permute.xlu0 %4919
  %4921 = vrot.lane.b32.xlu0 %v4851, 12
  %v4922 = vpop.permute.xlu0 %4921
  %4923 = vrot.lane.b32.xlu0 %v4852, 12
  %v4924 = vpop.permute.xlu0 %4923
  %4925 = vrot.lane.b32.xlu0 %v4853, 12
  %v4926 = vpop.permute.xlu0 %4925
  %4927 = vrot.lane.b32.xlu0 %v4854, 12
  %v4928 = vpop.permute.xlu0 %4927
  %4929 = vrot.lane.b32.xlu0 %v4855, 12
  %v4930 = vpop.permute.xlu0 %4929
  %4931 = vrot.lane.b32.xlu0 %v4856, 12
  %v4932 = vpop.permute.xlu0 %4931
  %4933 = vrot.lane.b32.xlu0 %v4857, 12
  %v4934 = vpop.permute.xlu0 %4933
  %4935 = vrot.lane.b32.xlu0 %v4858, 12
  %v4936 = vpop.permute.xlu0 %4935
  %4937 = vrot.lane.b32.xlu0 %v4859, 12
  %v4938 = vpop.permute.xlu0 %4937
  %4939 = vrot.lane.b32.xlu0 %v4860, 12
  %v4940 = vpop.permute.xlu0 %4939
  %4941 = vrot.lane.b32.xlu0 %v4861, 12
  %v4942 = vpop.permute.xlu0 %4941
  %4943 = vrot.lane.b32.xlu0 %v4862, 12
  %v4944 = vpop.permute.xlu0 %4943
  %4945 = vrot.lane.b32.xlu0 %v4863, 12
  %v4946 = vpop.permute.xlu0 %4945
  %4947 = vrot.lane.b32.xlu0 %v4864, 12
  %v4948 = vpop.permute.xlu0 %4947
  %4949 = vrot.lane.b32.xlu0 %v4865, 12
  %v4950 = vpop.permute.xlu0 %4949
  %4951 = vrot.lane.b32.xlu0 %v4866, 12
  %v4952 = vpop.permute.xlu0 %4951
  %4953 = vrot.lane.b32.xlu0 %v4867, 12
  %v4954 = vpop.permute.xlu0 %4953
  %4955 = vrot.lane.b32.xlu0 %v4868, 12
  %v4956 = vpop.permute.xlu0 %4955
  %4957 = vrot.lane.b32.xlu0 %v4869, 12
  %v4958 = vpop.permute.xlu0 %4957
  %4959 = vrot.lane.b32.xlu0 %v4870, 12
  %v4960 = vpop.permute.xlu0 %4959
  %4961 = vrot.lane.b32.xlu0 %v4871, 12
  %v4962 = vpop.permute.xlu0 %4961
  %4963 = vrot.lane.b32.xlu0 %v4872, 12
  %v4964 = vpop.permute.xlu0 %4963
  %4965 = vrot.lane.b32.xlu0 %v4873, 12
  %v4966 = vpop.permute.xlu0 %4965
  %4967 = vrot.lane.b32.xlu0 %v4874, 12
  %v4968 = vpop.permute.xlu0 %4967
  %4969 = vrot.lane.b32.xlu0 %v4875, 12
  %v4970 = vpop.permute.xlu0 %4969
  %4971 = vrot.lane.b32.xlu0 %v4876, 12
  %v4972 = vpop.permute.xlu0 %4971
  %5005 = vst.msk [vmem:[#allocation4] sm:$0xff] %vm783, %v4910
  %5006 = vst.msk [vmem:[#allocation4 + $0x8] sm:$0xff] %vm783, %v4912
  %5007 = vst.msk [vmem:[#allocation4 + $0x10] sm:$0xff] %vm783, %v4914
  %5008 = vst.msk [vmem:[#allocation4 + $0x18] sm:$0xff] %vm783, %v4916
  %5009 = vst.msk [vmem:[#allocation4 + $0x20] sm:$0xff] %vm783, %v4918
  %5010 = vst.msk [vmem:[#allocation4 + $0x28] sm:$0xff] %vm783, %v4920
  %5011 = vst.msk [vmem:[#allocation4 + $0x30] sm:$0xff] %vm783, %v4922
  %5012 = vst.msk [vmem:[#allocation4 + $0x38] sm:$0xff] %vm783, %v4924
  %5013 = vst.msk [vmem:[#allocation4 + $0x40] sm:$0xff] %vm783, %v4926
  %5014 = vst.msk [vmem:[#allocation4 + $0x48] sm:$0xff] %vm783, %v4928
  %5015 = vst.msk [vmem:[#allocation4 + $0x50] sm:$0xff] %vm783, %v4930
  %5016 = vst.msk [vmem:[#allocation4 + $0x58] sm:$0xff] %vm783, %v4932
  %5017 = vst.msk [vmem:[#allocation4 + $0x60] sm:$0xff] %vm783, %v4934
  %5018 = vst.msk [vmem:[#allocation4 + $0x68] sm:$0xff] %vm783, %v4936
  %5019 = vst.msk [vmem:[#allocation4 + $0x70] sm:$0xff] %vm783, %v4938
  %5020 = vst.msk [vmem:[#allocation4 + $0x78] sm:$0xff] %vm783, %v4940
  %5021 = vst.msk [vmem:[#allocation4 + $0x80] sm:$0xff] %vm783, %v4942
  %5022 = vst.msk [vmem:[#allocation4 + $0x88] sm:$0xff] %vm783, %v4944
  %5023 = vst.msk [vmem:[#allocation4 + $0x90] sm:$0xff] %vm783, %v4946
  %5024 = vst.msk [vmem:[#allocation4 + $0x98] sm:$0xff] %vm783, %v4948
  %5025 = vst.msk [vmem:[#allocation4 + $0xa0] sm:$0xff] %vm783, %v4950
  %5026 = vst.msk [vmem:[#allocation4 + $0xa8] sm:$0xff] %vm783, %v4952
  %5027 = vst.msk [vmem:[#allocation4 + $0xb0] sm:$0xff] %vm783, %v4954
  %5028 = vst.msk [vmem:[#allocation4 + $0xb8] sm:$0xff] %vm783, %v4956
  %5029 = vst.msk [vmem:[#allocation4 + $0xc0] sm:$0xff] %vm783, %v4958
  %5030 = vst.msk [vmem:[#allocation4 + $0xc8] sm:$0xff] %vm783, %v4960
  %5031 = vst.msk [vmem:[#allocation4 + $0xd0] sm:$0xff] %vm783, %v4962
  %5032 = vst.msk [vmem:[#allocation4 + $0xd8] sm:$0xff] %vm783, %v4964
  %5033 = vst.msk [vmem:[#allocation4 + $0xe0] sm:$0xff] %vm783, %v4966
  %5034 = vst.msk [vmem:[#allocation4 + $0xe8] sm:$0xff] %vm783, %v4968
  %5035 = vst.msk [vmem:[#allocation4 + $0xf0] sm:$0xff] %vm783, %v4970
  %5036 = vst.msk [vmem:[#allocation4 + $0xf8] sm:$0xff] %vm783, %v4972
  %v5037 = vld [vmem:[%s35 + $0x1] sm:$0xff]
  %v5038 = vld [vmem:[%s35 + $0x9] sm:$0xff]
  %v5039 = vld [vmem:[%s35 + $0x19] sm:$0xff]
  %v5040 = vld [vmem:[%s35 + $0x21] sm:$0xff]
  %v5041 = vld [vmem:[%s35 + $0x31] sm:$0xff]
  %v5042 = vld [vmem:[%s35 + $0x39] sm:$0xff]
  %v5043 = vld [vmem:[%s35 + $0x49] sm:$0xff]
  %v5044 = vld [vmem:[%s35 + $0x51] sm:$0xff]
  %v5045 = vld [vmem:[%s35 + $0x61] sm:$0xff]
  %v5046 = vld [vmem:[%s35 + $0x69] sm:$0xff]
  %v5047 = vld [vmem:[%s35 + $0x79] sm:$0xff]
  %v5048 = vld [vmem:[%s35 + $0x81] sm:$0xff]
  %v5049 = vld [vmem:[%s35 + $0x91] sm:$0xff]
  %v5050 = vld [vmem:[%s35 + $0x99] sm:$0xff]
  %v5051 = vld [vmem:[%s35 + $0xa9] sm:$0xff]
  %v5052 = vld [vmem:[%s35 + $0xb1] sm:$0xff]
  %v5053 = vld [vmem:[%s35 + $0xc1] sm:$0xff]
  %v5054 = vld [vmem:[%s35 + $0xc9] sm:$0xff]
  %v5055 = vld [vmem:[%s35 + $0xd9] sm:$0xff]
  %v5056 = vld [vmem:[%s35 + $0xe1] sm:$0xff]
  %v5057 = vld [vmem:[%s35 + $0xf1] sm:$0xff]
  %v5058 = vld [vmem:[%s35 + $0xf9] sm:$0xff]
  %v5059 = vld [vmem:[%s35 + $0x109] sm:$0xff]
  %v5060 = vld [vmem:[%s35 + $0x111] sm:$0xff]
  %v5061 = vld [vmem:[%s35 + $0x121] sm:$0xff]
  %v5062 = vld [vmem:[%s35 + $0x129] sm:$0xff]
  %v5063 = vld [vmem:[%s35 + $0x139] sm:$0xff]
  %v5064 = vld [vmem:[%s35 + $0x141] sm:$0xff]
  %v5065 = vld [vmem:[%s35 + $0x151] sm:$0xff]
  %v5066 = vld [vmem:[%s35 + $0x159] sm:$0xff]
  %v5067 = vld [vmem:[%s35 + $0x169] sm:$0xff]
  %v5068 = vld [vmem:[%s35 + $0x171] sm:$0xff]
  %5101 = vrot.lane.b32.xlu0 %v5037, 16
  %v5102 = vpop.permute.xlu0 %5101
  %5103 = vrot.lane.b32.xlu0 %v5038, 16
  %v5104 = vpop.permute.xlu0 %5103
  %5105 = vrot.lane.b32.xlu0 %v5039, 16
  %v5106 = vpop.permute.xlu0 %5105
  %5107 = vrot.lane.b32.xlu0 %v5040, 16
  %v5108 = vpop.permute.xlu0 %5107
  %5109 = vrot.lane.b32.xlu0 %v5041, 16
  %v5110 = vpop.permute.xlu0 %5109
  %5111 = vrot.lane.b32.xlu0 %v5042, 16
  %v5112 = vpop.permute.xlu0 %5111
  %5113 = vrot.lane.b32.xlu0 %v5043, 16
  %v5114 = vpop.permute.xlu0 %5113
  %5115 = vrot.lane.b32.xlu0 %v5044, 16
  %v5116 = vpop.permute.xlu0 %5115
  %5117 = vrot.lane.b32.xlu0 %v5045, 16
  %v5118 = vpop.permute.xlu0 %5117
  %5119 = vrot.lane.b32.xlu0 %v5046, 16
  %v5120 = vpop.permute.xlu0 %5119
  %5121 = vrot.lane.b32.xlu0 %v5047, 16
  %v5122 = vpop.permute.xlu0 %5121
  %5123 = vrot.lane.b32.xlu0 %v5048, 16
  %v5124 = vpop.permute.xlu0 %5123
  %5125 = vrot.lane.b32.xlu0 %v5049, 16
  %v5126 = vpop.permute.xlu0 %5125
  %5127 = vrot.lane.b32.xlu0 %v5050, 16
  %v5128 = vpop.permute.xlu0 %5127
  %5129 = vrot.lane.b32.xlu0 %v5051, 16
  %v5130 = vpop.permute.xlu0 %5129
  %5131 = vrot.lane.b32.xlu0 %v5052, 16
  %v5132 = vpop.permute.xlu0 %5131
  %5133 = vrot.lane.b32.xlu0 %v5053, 16
  %v5134 = vpop.permute.xlu0 %5133
  %5135 = vrot.lane.b32.xlu0 %v5054, 16
  %v5136 = vpop.permute.xlu0 %5135
  %5137 = vrot.lane.b32.xlu0 %v5055, 16
  %v5138 = vpop.permute.xlu0 %5137
  %5139 = vrot.lane.b32.xlu0 %v5056, 16
  %v5140 = vpop.permute.xlu0 %5139
  %5141 = vrot.lane.b32.xlu0 %v5057, 16
  %v5142 = vpop.permute.xlu0 %5141
  %5143 = vrot.lane.b32.xlu0 %v5058, 16
  %v5144 = vpop.permute.xlu0 %5143
  %5145 = vrot.lane.b32.xlu0 %v5059, 16
  %v5146 = vpop.permute.xlu0 %5145
  %5147 = vrot.lane.b32.xlu0 %v5060, 16
  %v5148 = vpop.permute.xlu0 %5147
  %5149 = vrot.lane.b32.xlu0 %v5061, 16
  %v5150 = vpop.permute.xlu0 %5149
  %5151 = vrot.lane.b32.xlu0 %v5062, 16
  %v5152 = vpop.permute.xlu0 %5151
  %5153 = vrot.lane.b32.xlu0 %v5063, 16
  %v5154 = vpop.permute.xlu0 %5153
  %5155 = vrot.lane.b32.xlu0 %v5064, 16
  %v5156 = vpop.permute.xlu0 %5155
  %5157 = vrot.lane.b32.xlu0 %v5065, 16
  %v5158 = vpop.permute.xlu0 %5157
  %5159 = vrot.lane.b32.xlu0 %v5066, 16
  %v5160 = vpop.permute.xlu0 %5159
  %5161 = vrot.lane.b32.xlu0 %v5067, 16
  %v5162 = vpop.permute.xlu0 %5161
  %5163 = vrot.lane.b32.xlu0 %v5068, 16
  %v5164 = vpop.permute.xlu0 %5163
  %5197 = vst.msk [vmem:[#allocation4] sm:$0xff] %vm976, %v5102
  %5198 = vst.msk [vmem:[#allocation4 + $0x8] sm:$0xff] %vm976, %v5104
  %5199 = vst.msk [vmem:[#allocation4 + $0x10] sm:$0xff] %vm976, %v5106
  %5200 = vst.msk [vmem:[#allocation4 + $0x18] sm:$0xff] %vm976, %v5108
  %5201 = vst.msk [vmem:[#allocation4 + $0x20] sm:$0xff] %vm976, %v5110
  %5202 = vst.msk [vmem:[#allocation4 + $0x28] sm:$0xff] %vm976, %v5112
  %5203 = vst.msk [vmem:[#allocation4 + $0x30] sm:$0xff] %vm976, %v5114
  %5204 = vst.msk [vmem:[#allocation4 + $0x38] sm:$0xff] %vm976, %v5116
  %5205 = vst.msk [vmem:[#allocation4 + $0x40] sm:$0xff] %vm976, %v5118
  %5206 = vst.msk [vmem:[#allocation4 + $0x48] sm:$0xff] %vm976, %v5120
  %5207 = vst.msk [vmem:[#allocation4 + $0x50] sm:$0xff] %vm976, %v5122
  %5208 = vst.msk [vmem:[#allocation4 + $0x58] sm:$0xff] %vm976, %v5124
  %5209 = vst.msk [vmem:[#allocation4 + $0x60] sm:$0xff] %vm976, %v5126
  %5210 = vst.msk [vmem:[#allocation4 + $0x68] sm:$0xff] %vm976, %v5128
  %5211 = vst.msk [vmem:[#allocation4 + $0x70] sm:$0xff] %vm976, %v5130
  %5212 = vst.msk [vmem:[#allocation4 + $0x78] sm:$0xff] %vm976, %v5132
  %5213 = vst.msk [vmem:[#allocation4 + $0x80] sm:$0xff] %vm976, %v5134
  %5214 = vst.msk [vmem:[#allocation4 + $0x88] sm:$0xff] %vm976, %v5136
  %5215 = vst.msk [vmem:[#allocation4 + $0x90] sm:$0xff] %vm976, %v5138
  %5216 = vst.msk [vmem:[#allocation4 + $0x98] sm:$0xff] %vm976, %v5140
  %5217 = vst.msk [vmem:[#allocation4 + $0xa0] sm:$0xff] %vm976, %v5142
  %5218 = vst.msk [vmem:[#allocation4 + $0xa8] sm:$0xff] %vm976, %v5144
  %5219 = vst.msk [vmem:[#allocation4 + $0xb0] sm:$0xff] %vm976, %v5146
  %5220 = vst.msk [vmem:[#allocation4 + $0xb8] sm:$0xff] %vm976, %v5148
  %5221 = vst.msk [vmem:[#allocation4 + $0xc0] sm:$0xff] %vm976, %v5150
  %5222 = vst.msk [vmem:[#allocation4 + $0xc8] sm:$0xff] %vm976, %v5152
  %5223 = vst.msk [vmem:[#allocation4 + $0xd0] sm:$0xff] %vm976, %v5154
  %5224 = vst.msk [vmem:[#allocation4 + $0xd8] sm:$0xff] %vm976, %v5156
  %5225 = vst.msk [vmem:[#allocation4 + $0xe0] sm:$0xff] %vm976, %v5158
  %5226 = vst.msk [vmem:[#allocation4 + $0xe8] sm:$0xff] %vm976, %v5160
  %5227 = vst.msk [vmem:[#allocation4 + $0xf0] sm:$0xff] %vm976, %v5162
  %5228 = vst.msk [vmem:[#allocation4 + $0xf8] sm:$0xff] %vm976, %v5164
  %v5229 = vld [vmem:[%s35 + $0x2] sm:$0xff]
  %v5230 = vld [vmem:[%s35 + $0xa] sm:$0xff]
  %v5231 = vld [vmem:[%s35 + $0x1a] sm:$0xff]
  %v5232 = vld [vmem:[%s35 + $0x22] sm:$0xff]
  %v5233 = vld [vmem:[%s35 + $0x32] sm:$0xff]
  %v5234 = vld [vmem:[%s35 + $0x3a] sm:$0xff]
  %v5235 = vld [vmem:[%s35 + $0x4a] sm:$0xff]
  %v5236 = vld [vmem:[%s35 + $0x52] sm:$0xff]
  %v5237 = vld [vmem:[%s35 + $0x62] sm:$0xff]
  %v5238 = vld [vmem:[%s35 + $0x6a] sm:$0xff]
  %v5239 = vld [vmem:[%s35 + $0x7a] sm:$0xff]
  %v5240 = vld [vmem:[%s35 + $0x82] sm:$0xff]
  %v5241 = vld [vmem:[%s35 + $0x92] sm:$0xff]
  %v5242 = vld [vmem:[%s35 + $0x9a] sm:$0xff]
  %v5243 = vld [vmem:[%s35 + $0xaa] sm:$0xff]
  %v5244 = vld [vmem:[%s35 + $0xb2] sm:$0xff]
  %v5245 = vld [vmem:[%s35 + $0xc2] sm:$0xff]
  %v5246 = vld [vmem:[%s35 + $0xca] sm:$0xff]
  %v5247 = vld [vmem:[%s35 + $0xda] sm:$0xff]
  %v5248 = vld [vmem:[%s35 + $0xe2] sm:$0xff]
  %v5249 = vld [vmem:[%s35 + $0xf2] sm:$0xff]
  %v5250 = vld [vmem:[%s35 + $0xfa] sm:$0xff]
  %v5251 = vld [vmem:[%s35 + $0x10a] sm:$0xff]
  %v5252 = vld [vmem:[%s35 + $0x112] sm:$0xff]
  %v5253 = vld [vmem:[%s35 + $0x122] sm:$0xff]
  %v5254 = vld [vmem:[%s35 + $0x12a] sm:$0xff]
  %v5255 = vld [vmem:[%s35 + $0x13a] sm:$0xff]
  %v5256 = vld [vmem:[%s35 + $0x142] sm:$0xff]
  %v5257 = vld [vmem:[%s35 + $0x152] sm:$0xff]
  %v5258 = vld [vmem:[%s35 + $0x15a] sm:$0xff]
  %v5259 = vld [vmem:[%s35 + $0x16a] sm:$0xff]
  %v5260 = vld [vmem:[%s35 + $0x172] sm:$0xff]
  %5293 = vrot.lane.b32.xlu0 %v5229, 20
  %v5294 = vpop.permute.xlu0 %5293
  %5295 = vrot.lane.b32.xlu0 %v5230, 20
  %v5296 = vpop.permute.xlu0 %5295
  %5297 = vrot.lane.b32.xlu0 %v5231, 20
  %v5298 = vpop.permute.xlu0 %5297
  %5299 = vrot.lane.b32.xlu0 %v5232, 20
  %v5300 = vpop.permute.xlu0 %5299
  %5301 = vrot.lane.b32.xlu0 %v5233, 20
  %v5302 = vpop.permute.xlu0 %5301
  %5303 = vrot.lane.b32.xlu0 %v5234, 20
  %v5304 = vpop.permute.xlu0 %5303
  %5305 = vrot.lane.b32.xlu0 %v5235, 20
  %v5306 = vpop.permute.xlu0 %5305
  %5307 = vrot.lane.b32.xlu0 %v5236, 20
  %v5308 = vpop.permute.xlu0 %5307
  %5309 = vrot.lane.b32.xlu0 %v5237, 20
  %v5310 = vpop.permute.xlu0 %5309
  %5311 = vrot.lane.b32.xlu0 %v5238, 20
  %v5312 = vpop.permute.xlu0 %5311
  %5313 = vrot.lane.b32.xlu0 %v5239, 20
  %v5314 = vpop.permute.xlu0 %5313
  %5315 = vrot.lane.b32.xlu0 %v5240, 20
  %v5316 = vpop.permute.xlu0 %5315
  %5317 = vrot.lane.b32.xlu0 %v5241, 20
  %v5318 = vpop.permute.xlu0 %5317
  %5319 = vrot.lane.b32.xlu0 %v5242, 20
  %v5320 = vpop.permute.xlu0 %5319
  %5321 = vrot.lane.b32.xlu0 %v5243, 20
  %v5322 = vpop.permute.xlu0 %5321
  %5323 = vrot.lane.b32.xlu0 %v5244, 20
  %v5324 = vpop.permute.xlu0 %5323
  %5325 = vrot.lane.b32.xlu0 %v5245, 20
  %v5326 = vpop.permute.xlu0 %5325
  %5327 = vrot.lane.b32.xlu0 %v5246, 20
  %v5328 = vpop.permute.xlu0 %5327
  %5329 = vrot.lane.b32.xlu0 %v5247, 20
  %v5330 = vpop.permute.xlu0 %5329
  %5331 = vrot.lane.b32.xlu0 %v5248, 20
  %v5332 = vpop.permute.xlu0 %5331
  %5333 = vrot.lane.b32.xlu0 %v5249, 20
  %v5334 = vpop.permute.xlu0 %5333
  %5335 = vrot.lane.b32.xlu0 %v5250, 20
  %v5336 = vpop.permute.xlu0 %5335
  %5337 = vrot.lane.b32.xlu0 %v5251, 20
  %v5338 = vpop.permute.xlu0 %5337
  %5339 = vrot.lane.b32.xlu0 %v5252, 20
  %v5340 = vpop.permute.xlu0 %5339
  %5341 = vrot.lane.b32.xlu0 %v5253, 20
  %v5342 = vpop.permute.xlu0 %5341
  %5343 = vrot.lane.b32.xlu0 %v5254, 20
  %v5344 = vpop.permute.xlu0 %5343
  %5345 = vrot.lane.b32.xlu0 %v5255, 20
  %v5346 = vpop.permute.xlu0 %5345
  %5347 = vrot.lane.b32.xlu0 %v5256, 20
  %v5348 = vpop.permute.xlu0 %5347
  %5349 = vrot.lane.b32.xlu0 %v5257, 20
  %v5350 = vpop.permute.xlu0 %5349
  %5351 = vrot.lane.b32.xlu0 %v5258, 20
  %v5352 = vpop.permute.xlu0 %5351
  %5353 = vrot.lane.b32.xlu0 %v5259, 20
  %v5354 = vpop.permute.xlu0 %5353
  %5355 = vrot.lane.b32.xlu0 %v5260, 20
  %v5356 = vpop.permute.xlu0 %5355
  %5389 = vst.msk [vmem:[#allocation4] sm:$0xff] %vm1169, %v5294
  %5390 = vst.msk [vmem:[#allocation4 + $0x8] sm:$0xff] %vm1169, %v5296
  %5391 = vst.msk [vmem:[#allocation4 + $0x10] sm:$0xff] %vm1169, %v5298
  %5392 = vst.msk [vmem:[#allocation4 + $0x18] sm:$0xff] %vm1169, %v5300
  %5393 = vst.msk [vmem:[#allocation4 + $0x20] sm:$0xff] %vm1169, %v5302
  %5394 = vst.msk [vmem:[#allocation4 + $0x28] sm:$0xff] %vm1169, %v5304
  %5395 = vst.msk [vmem:[#allocation4 + $0x30] sm:$0xff] %vm1169, %v5306
  %5396 = vst.msk [vmem:[#allocation4 + $0x38] sm:$0xff] %vm1169, %v5308
  %5397 = vst.msk [vmem:[#allocation4 + $0x40] sm:$0xff] %vm1169, %v5310
  %5398 = vst.msk [vmem:[#allocation4 + $0x48] sm:$0xff] %vm1169, %v5312
  %5399 = vst.msk [vmem:[#allocation4 + $0x50] sm:$0xff] %vm1169, %v5314
  %5400 = vst.msk [vmem:[#allocation4 + $0x58] sm:$0xff] %vm1169, %v5316
  %5401 = vst.msk [vmem:[#allocation4 + $0x60] sm:$0xff] %vm1169, %v5318
  %5402 = vst.msk [vmem:[#allocation4 + $0x68] sm:$0xff] %vm1169, %v5320
  %5403 = vst.msk [vmem:[#allocation4 + $0x70] sm:$0xff] %vm1169, %v5322
  %5404 = vst.msk [vmem:[#allocation4 + $0x78] sm:$0xff] %vm1169, %v5324
  %5405 = vst.msk [vmem:[#allocation4 + $0x80] sm:$0xff] %vm1169, %v5326
  %5406 = vst.msk [vmem:[#allocation4 + $0x88] sm:$0xff] %vm1169, %v5328
  %5407 = vst.msk [vmem:[#allocation4 + $0x90] sm:$0xff] %vm1169, %v5330
  %5408 = vst.msk [vmem:[#allocation4 + $0x98] sm:$0xff] %vm1169, %v5332
  %5409 = vst.msk [vmem:[#allocation4 + $0xa0] sm:$0xff] %vm1169, %v5334
  %5410 = vst.msk [vmem:[#allocation4 + $0xa8] sm:$0xff] %vm1169, %v5336
  %5411 = vst.msk [vmem:[#allocation4 + $0xb0] sm:$0xff] %vm1169, %v5338
  %5412 = vst.msk [vmem:[#allocation4 + $0xb8] sm:$0xff] %vm1169, %v5340
  %5413 = vst.msk [vmem:[#allocation4 + $0xc0] sm:$0xff] %vm1169, %v5342
  %5414 = vst.msk [vmem:[#allocation4 + $0xc8] sm:$0xff] %vm1169, %v5344
  %5415 = vst.msk [vmem:[#allocation4 + $0xd0] sm:$0xff] %vm1169, %v5346
  %5416 = vst.msk [vmem:[#allocation4 + $0xd8] sm:$0xff] %vm1169, %v5348
  %5417 = vst.msk [vmem:[#allocation4 + $0xe0] sm:$0xff] %vm1169, %v5350
  %5418 = vst.msk [vmem:[#allocation4 + $0xe8] sm:$0xff] %vm1169, %v5352
  %5419 = vst.msk [vmem:[#allocation4 + $0xf0] sm:$0xff] %vm1169, %v5354
  %5420 = vst.msk [vmem:[#allocation4 + $0xf8] sm:$0xff] %vm1169, %v5356
  %v5421 = vld [vmem:[%s1202] sm:$0xff]
  %v5422 = vld [vmem:[%s1202 + $0x8] sm:$0xff]
  %v5423 = vld [vmem:[%s1202 + $0x18] sm:$0xff]
  %v5424 = vld [vmem:[%s1202 + $0x20] sm:$0xff]
  %v5425 = vld [vmem:[%s1202 + $0x30] sm:$0xff]
  %v5426 = vld [vmem:[%s1202 + $0x38] sm:$0xff]
  %v5427 = vld [vmem:[%s1202 + $0x48] sm:$0xff]
  %v5428 = vld [vmem:[%s1202 + $0x50] sm:$0xff]
  %v5429 = vld [vmem:[%s1202 + $0x60] sm:$0xff]
  %v5430 = vld [vmem:[%s1202 + $0x68] sm:$0xff]
  %v5431 = vld [vmem:[%s1202 + $0x78] sm:$0xff]
  %v5432 = vld [vmem:[%s1202 + $0x80] sm:$0xff]
  %v5433 = vld [vmem:[%s1202 + $0x90] sm:$0xff]
  %v5434 = vld [vmem:[%s1202 + $0x98] sm:$0xff]
  %v5435 = vld [vmem:[%s1202 + $0xa8] sm:$0xff]
  %v5436 = vld [vmem:[%s1202 + $0xb0] sm:$0xff]
  %v5437 = vld [vmem:[%s1202 + $0xc0] sm:$0xff]
  %v5438 = vld [vmem:[%s1202 + $0xc8] sm:$0xff]
  %v5439 = vld [vmem:[%s1202 + $0xd8] sm:$0xff]
  %v5440 = vld [vmem:[%s1202 + $0xe0] sm:$0xff]
  %v5441 = vld [vmem:[%s1202 + $0xf0] sm:$0xff]
  %v5442 = vld [vmem:[%s1202 + $0xf8] sm:$0xff]
  %v5443 = vld [vmem:[%s1202 + $0x108] sm:$0xff]
  %v5444 = vld [vmem:[%s1202 + $0x110] sm:$0xff]
  %v5445 = vld [vmem:[%s1202 + $0x120] sm:$0xff]
  %v5446 = vld [vmem:[%s1202 + $0x128] sm:$0xff]
  %v5447 = vld [vmem:[%s1202 + $0x138] sm:$0xff]
  %v5448 = vld [vmem:[%s1202 + $0x140] sm:$0xff]
  %v5449 = vld [vmem:[%s1202 + $0x150] sm:$0xff]
  %v5450 = vld [vmem:[%s1202 + $0x158] sm:$0xff]
  %v5451 = vld [vmem:[%s1202 + $0x168] sm:$0xff]
  %v5452 = vld [vmem:[%s1202 + $0x170] sm:$0xff]
  %5485 = vrot.lane.b32.xlu0 %v5421, 24
  %v5486 = vpop.permute.xlu0 %5485
  %5487 = vrot.lane.b32.xlu0 %v5422, 24
  %v5488 = vpop.permute.xlu0 %5487
  %5489 = vrot.lane.b32.xlu0 %v5423, 24
  %v5490 = vpop.permute.xlu0 %5489
  %5491 = vrot.lane.b32.xlu0 %v5424, 24
  %v5492 = vpop.permute.xlu0 %5491
  %5493 = vrot.lane.b32.xlu0 %v5425, 24
  %v5494 = vpop.permute.xlu0 %5493
  %5495 = vrot.lane.b32.xlu0 %v5426, 24
  %v5496 = vpop.permute.xlu0 %5495
  %5497 = vrot.lane.b32.xlu0 %v5427, 24
  %v5498 = vpop.permute.xlu0 %5497
  %5499 = vrot.lane.b32.xlu0 %v5428, 24
  %v5500 = vpop.permute.xlu0 %5499
  %5501 = vrot.lane.b32.xlu0 %v5429, 24
  %v5502 = vpop.permute.xlu0 %5501
  %5503 = vrot.lane.b32.xlu0 %v5430, 24
  %v5504 = vpop.permute.xlu0 %5503
  %5505 = vrot.lane.b32.xlu0 %v5431, 24
  %v5506 = vpop.permute.xlu0 %5505
  %5507 = vrot.lane.b32.xlu0 %v5432, 24
  %v5508 = vpop.permute.xlu0 %5507
  %5509 = vrot.lane.b32.xlu0 %v5433, 24
  %v5510 = vpop.permute.xlu0 %5509
  %5511 = vrot.lane.b32.xlu0 %v5434, 24
  %v5512 = vpop.permute.xlu0 %5511
  %5513 = vrot.lane.b32.xlu0 %v5435, 24
  %v5514 = vpop.permute.xlu0 %5513
  %5515 = vrot.lane.b32.xlu0 %v5436, 24
  %v5516 = vpop.permute.xlu0 %5515
  %5517 = vrot.lane.b32.xlu0 %v5437, 24
  %v5518 = vpop.permute.xlu0 %5517
  %5519 = vrot.lane.b32.xlu0 %v5438, 24
  %v5520 = vpop.permute.xlu0 %5519
  %5521 = vrot.lane.b32.xlu0 %v5439, 24
  %v5522 = vpop.permute.xlu0 %5521
  %5523 = vrot.lane.b32.xlu0 %v5440, 24
  %v5524 = vpop.permute.xlu0 %5523
  %5525 = vrot.lane.b32.xlu0 %v5441, 24
  %v5526 = vpop.permute.xlu0 %5525
  %5527 = vrot.lane.b32.xlu0 %v5442, 24
  %v5528 = vpop.permute.xlu0 %5527
  %5529 = vrot.lane.b32.xlu0 %v5443, 24
  %v5530 = vpop.permute.xlu0 %5529
  %5531 = vrot.lane.b32.xlu0 %v5444, 24
  %v5532 = vpop.permute.xlu0 %5531
  %5533 = vrot.lane.b32.xlu0 %v5445, 24
  %v5534 = vpop.permute.xlu0 %5533
  %5535 = vrot.lane.b32.xlu0 %v5446, 24
  %v5536 = vpop.permute.xlu0 %5535
  %5537 = vrot.lane.b32.xlu0 %v5447, 24
  %v5538 = vpop.permute.xlu0 %5537
  %5539 = vrot.lane.b32.xlu0 %v5448, 24
  %v5540 = vpop.permute.xlu0 %5539
  %5541 = vrot.lane.b32.xlu0 %v5449, 24
  %v5542 = vpop.permute.xlu0 %5541
  %5543 = vrot.lane.b32.xlu0 %v5450, 24
  %v5544 = vpop.permute.xlu0 %5543
  %5545 = vrot.lane.b32.xlu0 %v5451, 24
  %v5546 = vpop.permute.xlu0 %5545
  %5547 = vrot.lane.b32.xlu0 %v5452, 24
  %v5548 = vpop.permute.xlu0 %5547
  %5581 = vst.msk [vmem:[#allocation4] sm:$0xff] %vm1363, %v5486
  %5582 = vst.msk [vmem:[#allocation4 + $0x8] sm:$0xff] %vm1363, %v5488
  %5583 = vst.msk [vmem:[#allocation4 + $0x10] sm:$0xff] %vm1363, %v5490
  %5584 = vst.msk [vmem:[#allocation4 + $0x18] sm:$0xff] %vm1363, %v5492
  %5585 = vst.msk [vmem:[#allocation4 + $0x20] sm:$0xff] %vm1363, %v5494
  %5586 = vst.msk [vmem:[#allocation4 + $0x28] sm:$0xff] %vm1363, %v5496
  %5587 = vst.msk [vmem:[#allocation4 + $0x30] sm:$0xff] %vm1363, %v5498
  %5588 = vst.msk [vmem:[#allocation4 + $0x38] sm:$0xff] %vm1363, %v5500
  %5589 = vst.msk [vmem:[#allocation4 + $0x40] sm:$0xff] %vm1363, %v5502
  %5590 = vst.msk [vmem:[#allocation4 + $0x48] sm:$0xff] %vm1363, %v5504
  %5591 = vst.msk [vmem:[#allocation4 + $0x50] sm:$0xff] %vm1363, %v5506
  %5592 = vst.msk [vmem:[#allocation4 + $0x58] sm:$0xff] %vm1363, %v5508
  %5593 = vst.msk [vmem:[#allocation4 + $0x60] sm:$0xff] %vm1363, %v5510
  %5594 = vst.msk [vmem:[#allocation4 + $0x68] sm:$0xff] %vm1363, %v5512
  %5595 = vst.msk [vmem:[#allocation4 + $0x70] sm:$0xff] %vm1363, %v5514
  %5596 = vst.msk [vmem:[#allocation4 + $0x78] sm:$0xff] %vm1363, %v5516
  %5597 = vst.msk [vmem:[#allocation4 + $0x80] sm:$0xff] %vm1363, %v5518
  %5598 = vst.msk [vmem:[#allocation4 + $0x88] sm:$0xff] %vm1363, %v5520
  %5599 = vst.msk [vmem:[#allocation4 + $0x90] sm:$0xff] %vm1363, %v5522
  %5600 = vst.msk [vmem:[#allocation4 + $0x98] sm:$0xff] %vm1363, %v5524
  %5601 = vst.msk [vmem:[#allocation4 + $0xa0] sm:$0xff] %vm1363, %v5526
  %5602 = vst.msk [vmem:[#allocation4 + $0xa8] sm:$0xff] %vm1363, %v5528
  %5603 = vst.msk [vmem:[#allocation4 + $0xb0] sm:$0xff] %vm1363, %v5530
  %5604 = vst.msk [vmem:[#allocation4 + $0xb8] sm:$0xff] %vm1363, %v5532
  %5605 = vst.msk [vmem:[#allocation4 + $0xc0] sm:$0xff] %vm1363, %v5534
  %5606 = vst.msk [vmem:[#allocation4 + $0xc8] sm:$0xff] %vm1363, %v5536
  %5607 = vst.msk [vmem:[#allocation4 + $0xd0] sm:$0xff] %vm1363, %v5538
  %5608 = vst.msk [vmem:[#allocation4 + $0xd8] sm:$0xff] %vm1363, %v5540
  %5609 = vst.msk [vmem:[#allocation4 + $0xe0] sm:$0xff] %vm1363, %v5542
  %5610 = vst.msk [vmem:[#allocation4 + $0xe8] sm:$0xff] %vm1363, %v5544
  %5611 = vst.msk [vmem:[#allocation4 + $0xf0] sm:$0xff] %vm1363, %v5546
  %5612 = vst.msk [vmem:[#allocation4 + $0xf8] sm:$0xff] %vm1363, %v5548
  %v5613 = vld [vmem:[%s1202 + $0x1] sm:$0xff]
  %v5614 = vld [vmem:[%s1202 + $0x9] sm:$0xff]
  %v5615 = vld [vmem:[%s1202 + $0x19] sm:$0xff]
  %v5616 = vld [vmem:[%s1202 + $0x21] sm:$0xff]
  %v5617 = vld [vmem:[%s1202 + $0x31] sm:$0xff]
  %v5618 = vld [vmem:[%s1202 + $0x39] sm:$0xff]
  %v5619 = vld [vmem:[%s1202 + $0x49] sm:$0xff]
  %v5620 = vld [vmem:[%s1202 + $0x51] sm:$0xff]
  %v5621 = vld [vmem:[%s1202 + $0x61] sm:$0xff]
  %v5622 = vld [vmem:[%s1202 + $0x69] sm:$0xff]
  %v5623 = vld [vmem:[%s1202 + $0x79] sm:$0xff]
  %v5624 = vld [vmem:[%s1202 + $0x81] sm:$0xff]
  %v5625 = vld [vmem:[%s1202 + $0x91] sm:$0xff]
  %v5626 = vld [vmem:[%s1202 + $0x99] sm:$0xff]
  %v5627 = vld [vmem:[%s1202 + $0xa9] sm:$0xff]
  %v5628 = vld [vmem:[%s1202 + $0xb1] sm:$0xff]
  %v5629 = vld [vmem:[%s1202 + $0xc1] sm:$0xff]
  %v5630 = vld [vmem:[%s1202 + $0xc9] sm:$0xff]
  %v5631 = vld [vmem:[%s1202 + $0xd9] sm:$0xff]
  %v5632 = vld [vmem:[%s1202 + $0xe1] sm:$0xff]
  %v5633 = vld [vmem:[%s1202 + $0xf1] sm:$0xff]
  %v5634 = vld [vmem:[%s1202 + $0xf9] sm:$0xff]
  %v5635 = vld [vmem:[%s1202 + $0x109] sm:$0xff]
  %v5636 = vld [vmem:[%s1202 + $0x111] sm:$0xff]
  %v5637 = vld [vmem:[%s1202 + $0x121] sm:$0xff]
  %v5638 = vld [vmem:[%s1202 + $0x129] sm:$0xff]
  %v5639 = vld [vmem:[%s1202 + $0x139] sm:$0xff]
  %v5640 = vld [vmem:[%s1202 + $0x141] sm:$0xff]
  %v5641 = vld [vmem:[%s1202 + $0x151] sm:$0xff]
  %v5642 = vld [vmem:[%s1202 + $0x159] sm:$0xff]
  %v5643 = vld [vmem:[%s1202 + $0x169] sm:$0xff]
  %v5644 = vld [vmem:[%s1202 + $0x171] sm:$0xff]
  %5677 = vrot.lane.b32.xlu0 %v5613, 28
  %v5678 = vpop.permute.xlu0 %5677
  %5679 = vrot.lane.b32.xlu0 %v5614, 28
  %v5680 = vpop.permute.xlu0 %5679
  %5681 = vrot.lane.b32.xlu0 %v5615, 28
  %v5682 = vpop.permute.xlu0 %5681
  %5683 = vrot.lane.b32.xlu0 %v5616, 28
  %v5684 = vpop.permute.xlu0 %5683
  %5685 = vrot.lane.b32.xlu0 %v5617, 28
  %v5686 = vpop.permute.xlu0 %5685
  %5687 = vrot.lane.b32.xlu0 %v5618, 28
  %v5688 = vpop.permute.xlu0 %5687
  %5689 = vrot.lane.b32.xlu0 %v5619, 28
  %v5690 = vpop.permute.xlu0 %5689
  %5691 = vrot.lane.b32.xlu0 %v5620, 28
  %v5692 = vpop.permute.xlu0 %5691
  %5693 = vrot.lane.b32.xlu0 %v5621, 28
  %v5694 = vpop.permute.xlu0 %5693
  %5695 = vrot.lane.b32.xlu0 %v5622, 28
  %v5696 = vpop.permute.xlu0 %5695
  %5697 = vrot.lane.b32.xlu0 %v5623, 28
  %v5698 = vpop.permute.xlu0 %5697
  %5699 = vrot.lane.b32.xlu0 %v5624, 28
  %v5700 = vpop.permute.xlu0 %5699
  %5701 = vrot.lane.b32.xlu0 %v5625, 28
  %v5702 = vpop.permute.xlu0 %5701
  %5703 = vrot.lane.b32.xlu0 %v5626, 28
  %v5704 = vpop.permute.xlu0 %5703
  %5705 = vrot.lane.b32.xlu0 %v5627, 28
  %v5706 = vpop.permute.xlu0 %5705
  %5707 = vrot.lane.b32.xlu0 %v5628, 28
  %v5708 = vpop.permute.xlu0 %5707
  %5709 = vrot.lane.b32.xlu0 %v5629, 28
  %v5710 = vpop.permute.xlu0 %5709
  %5711 = vrot.lane.b32.xlu0 %v5630, 28
  %v5712 = vpop.permute.xlu0 %5711
  %5713 = vrot.lane.b32.xlu0 %v5631, 28
  %v5714 = vpop.permute.xlu0 %5713
  %5715 = vrot.lane.b32.xlu0 %v5632, 28
  %v5716 = vpop.permute.xlu0 %5715
  %5717 = vrot.lane.b32.xlu0 %v5633, 28
  %v5718 = vpop.permute.xlu0 %5717
  %5719 = vrot.lane.b32.xlu0 %v5634, 28
  %v5720 = vpop.permute.xlu0 %5719
  %5721 = vrot.lane.b32.xlu0 %v5635, 28
  %v5722 = vpop.permute.xlu0 %5721
  %5723 = vrot.lane.b32.xlu0 %v5636, 28
  %v5724 = vpop.permute.xlu0 %5723
  %5725 = vrot.lane.b32.xlu0 %v5637, 28
  %v5726 = vpop.permute.xlu0 %5725
  %5727 = vrot.lane.b32.xlu0 %v5638, 28
  %v5728 = vpop.permute.xlu0 %5727
  %5729 = vrot.lane.b32.xlu0 %v5639, 28
  %v5730 = vpop.permute.xlu0 %5729
  %5731 = vrot.lane.b32.xlu0 %v5640, 28
  %v5732 = vpop.permute.xlu0 %5731
  %5733 = vrot.lane.b32.xlu0 %v5641, 28
  %v5734 = vpop.permute.xlu0 %5733
  %5735 = vrot.lane.b32.xlu0 %v5642, 28
  %v5736 = vpop.permute.xlu0 %5735
  %5737 = vrot.lane.b32.xlu0 %v5643, 28
  %v5738 = vpop.permute.xlu0 %5737
  %5739 = vrot.lane.b32.xlu0 %v5644, 28
  %v5740 = vpop.permute.xlu0 %5739
  %5773 = vst.msk [vmem:[#allocation4] sm:$0xff] %vm1556, %v5678
  %5774 = vst.msk [vmem:[#allocation4 + $0x8] sm:$0xff] %vm1556, %v5680
  %5775 = vst.msk [vmem:[#allocation4 + $0x10] sm:$0xff] %vm1556, %v5682
  %5776 = vst.msk [vmem:[#allocation4 + $0x18] sm:$0xff] %vm1556, %v5684
  %5777 = vst.msk [vmem:[#allocation4 + $0x20] sm:$0xff] %vm1556, %v5686
  %5778 = vst.msk [vmem:[#allocation4 + $0x28] sm:$0xff] %vm1556, %v5688
  %5779 = vst.msk [vmem:[#allocation4 + $0x30] sm:$0xff] %vm1556, %v5690
  %5780 = vst.msk [vmem:[#allocation4 + $0x38] sm:$0xff] %vm1556, %v5692
  %5781 = vst.msk [vmem:[#allocation4 + $0x40] sm:$0xff] %vm1556, %v5694
  %5782 = vst.msk [vmem:[#allocation4 + $0x48] sm:$0xff] %vm1556, %v5696
  %5783 = vst.msk [vmem:[#allocation4 + $0x50] sm:$0xff] %vm1556, %v5698
  %5784 = vst.msk [vmem:[#allocation4 + $0x58] sm:$0xff] %vm1556, %v5700
  %5785 = vst.msk [vmem:[#allocation4 + $0x60] sm:$0xff] %vm1556, %v5702
  %5786 = vst.msk [vmem:[#allocation4 + $0x68] sm:$0xff] %vm1556, %v5704
  %5787 = vst.msk [vmem:[#allocation4 + $0x70] sm:$0xff] %vm1556, %v5706
  %5788 = vst.msk [vmem:[#allocation4 + $0x78] sm:$0xff] %vm1556, %v5708
  %5789 = vst.msk [vmem:[#allocation4 + $0x80] sm:$0xff] %vm1556, %v5710
  %5790 = vst.msk [vmem:[#allocation4 + $0x88] sm:$0xff] %vm1556, %v5712
  %5791 = vst.msk [vmem:[#allocation4 + $0x90] sm:$0xff] %vm1556, %v5714
  %5792 = vst.msk [vmem:[#allocation4 + $0x98] sm:$0xff] %vm1556, %v5716
  %5793 = vst.msk [vmem:[#allocation4 + $0xa0] sm:$0xff] %vm1556, %v5718
  %5794 = vst.msk [vmem:[#allocation4 + $0xa8] sm:$0xff] %vm1556, %v5720
  %5795 = vst.msk [vmem:[#allocation4 + $0xb0] sm:$0xff] %vm1556, %v5722
  %5796 = vst.msk [vmem:[#allocation4 + $0xb8] sm:$0xff] %vm1556, %v5724
  %5797 = vst.msk [vmem:[#allocation4 + $0xc0] sm:$0xff] %vm1556, %v5726
  %5798 = vst.msk [vmem:[#allocation4 + $0xc8] sm:$0xff] %vm1556, %v5728
  %5799 = vst.msk [vmem:[#allocation4 + $0xd0] sm:$0xff] %vm1556, %v5730
  %5800 = vst.msk [vmem:[#allocation4 + $0xd8] sm:$0xff] %vm1556, %v5732
  %5801 = vst.msk [vmem:[#allocation4 + $0xe0] sm:$0xff] %vm1556, %v5734
  %5802 = vst.msk [vmem:[#allocation4 + $0xe8] sm:$0xff] %vm1556, %v5736
  %5803 = vst.msk [vmem:[#allocation4 + $0xf0] sm:$0xff] %vm1556, %v5738
  %5804 = vst.msk [vmem:[#allocation4 + $0xf8] sm:$0xff] %vm1556, %v5740
  %v5805 = vld [vmem:[%s1202 + $0x2] sm:$0xff]
  %v5806 = vld [vmem:[%s1202 + $0xa] sm:$0xff]
  %v5807 = vld [vmem:[%s1202 + $0x1a] sm:$0xff]
  %v5808 = vld [vmem:[%s1202 + $0x22] sm:$0xff]
  %v5809 = vld [vmem:[%s1202 + $0x32] sm:$0xff]
  %v5810 = vld [vmem:[%s1202 + $0x3a] sm:$0xff]
  %v5811 = vld [vmem:[%s1202 + $0x4a] sm:$0xff]
  %v5812 = vld [vmem:[%s1202 + $0x52] sm:$0xff]
  %v5813 = vld [vmem:[%s1202 + $0x62] sm:$0xff]
  %v5814 = vld [vmem:[%s1202 + $0x6a] sm:$0xff]
  %v5815 = vld [vmem:[%s1202 + $0x7a] sm:$0xff]
  %v5816 = vld [vmem:[%s1202 + $0x82] sm:$0xff]
  %v5817 = vld [vmem:[%s1202 + $0x92] sm:$0xff]
  %v5818 = vld [vmem:[%s1202 + $0x9a] sm:$0xff]
  %v5819 = vld [vmem:[%s1202 + $0xaa] sm:$0xff]
  %v5820 = vld [vmem:[%s1202 + $0xb2] sm:$0xff]
  %v5821 = vld [vmem:[%s1202 + $0xc2] sm:$0xff]
  %v5822 = vld [vmem:[%s1202 + $0xca] sm:$0xff]
  %v5823 = vld [vmem:[%s1202 + $0xda] sm:$0xff]
  %v5824 = vld [vmem:[%s1202 + $0xe2] sm:$0xff]
  %v5825 = vld [vmem:[%s1202 + $0xf2] sm:$0xff]
  %v5826 = vld [vmem:[%s1202 + $0xfa] sm:$0xff]
  %v5827 = vld [vmem:[%s1202 + $0x10a] sm:$0xff]
  %v5828 = vld [vmem:[%s1202 + $0x112] sm:$0xff]
  %v5829 = vld [vmem:[%s1202 + $0x122] sm:$0xff]
  %v5830 = vld [vmem:[%s1202 + $0x12a] sm:$0xff]
  %v5831 = vld [vmem:[%s1202 + $0x13a] sm:$0xff]
  %v5832 = vld [vmem:[%s1202 + $0x142] sm:$0xff]
  %v5833 = vld [vmem:[%s1202 + $0x152] sm:$0xff]
  %v5834 = vld [vmem:[%s1202 + $0x15a] sm:$0xff]
  %v5835 = vld [vmem:[%s1202 + $0x16a] sm:$0xff]
  %v5836 = vld [vmem:[%s1202 + $0x172] sm:$0xff]
  %5869 = vrot.lane.b32.xlu0 %v5805, 32
  %v5870 = vpop.permute.xlu0 %5869
  %5871 = vrot.lane.b32.xlu0 %v5806, 32
  %v5872 = vpop.permute.xlu0 %5871
  %5873 = vrot.lane.b32.xlu0 %v5807, 32
  %v5874 = vpop.permute.xlu0 %5873
  %5875 = vrot.lane.b32.xlu0 %v5808, 32
  %v5876 = vpop.permute.xlu0 %5875
  %5877 = vrot.lane.b32.xlu0 %v5809, 32
  %v5878 = vpop.permute.xlu0 %5877
  %5879 = vrot.lane.b32.xlu0 %v5810, 32
  %v5880 = vpop.permute.xlu0 %5879
  %5881 = vrot.lane.b32.xlu0 %v5811, 32
  %v5882 = vpop.permute.xlu0 %5881
  %5883 = vrot.lane.b32.xlu0 %v5812, 32
  %v5884 = vpop.permute.xlu0 %5883
  %5885 = vrot.lane.b32.xlu0 %v5813, 32
  %v5886 = vpop.permute.xlu0 %5885
  %5887 = vrot.lane.b32.xlu0 %v5814, 32
  %v5888 = vpop.permute.xlu0 %5887
  %5889 = vrot.lane.b32.xlu0 %v5815, 32
  %v5890 = vpop.permute.xlu0 %5889
  %5891 = vrot.lane.b32.xlu0 %v5816, 32
  %v5892 = vpop.permute.xlu0 %5891
  %5893 = vrot.lane.b32.xlu0 %v5817, 32
  %v5894 = vpop.permute.xlu0 %5893
  %5895 = vrot.lane.b32.xlu0 %v5818, 32
  %v5896 = vpop.permute.xlu0 %5895
  %5897 = vrot.lane.b32.xlu0 %v5819, 32
  %v5898 = vpop.permute.xlu0 %5897
  %5899 = vrot.lane.b32.xlu0 %v5820, 32
  %v5900 = vpop.permute.xlu0 %5899
  %5901 = vrot.lane.b32.xlu0 %v5821, 32
  %v5902 = vpop.permute.xlu0 %5901
  %5903 = vrot.lane.b32.xlu0 %v5822, 32
  %v5904 = vpop.permute.xlu0 %5903
  %5905 = vrot.lane.b32.xlu0 %v5823, 32
  %v5906 = vpop.permute.xlu0 %5905
  %5907 = vrot.lane.b32.xlu0 %v5824, 32
  %v5908 = vpop.permute.xlu0 %5907
  %5909 = vrot.lane.b32.xlu0 %v5825, 32
  %v5910 = vpop.permute.xlu0 %5909
  %5911 = vrot.lane.b32.xlu0 %v5826, 32
  %v5912 = vpop.permute.xlu0 %5911
  %5913 = vrot.lane.b32.xlu0 %v5827, 32
  %v5914 = vpop.permute.xlu0 %5913
  %5915 = vrot.lane.b32.xlu0 %v5828, 32
  %v5916 = vpop.permute.xlu0 %5915
  %5917 = vrot.lane.b32.xlu0 %v5829, 32
  %v5918 = vpop.permute.xlu0 %5917
  %5919 = vrot.lane.b32.xlu0 %v5830, 32
  %v5920 = vpop.permute.xlu0 %5919
  %5921 = vrot.lane.b32.xlu0 %v5831, 32
  %v5922 = vpop.permute.xlu0 %5921
  %5923 = vrot.lane.b32.xlu0 %v5832, 32
  %v5924 = vpop.permute.xlu0 %5923
  %5925 = vrot.lane.b32.xlu0 %v5833, 32
  %v5926 = vpop.permute.xlu0 %5925
  %5927 = vrot.lane.b32.xlu0 %v5834, 32
  %v5928 = vpop.permute.xlu0 %5927
  %5929 = vrot.lane.b32.xlu0 %v5835, 32
  %v5930 = vpop.permute.xlu0 %5929
  %5931 = vrot.lane.b32.xlu0 %v5836, 32
  %v5932 = vpop.permute.xlu0 %5931
  %5965 = vst.msk [vmem:[#allocation4] sm:$0xff] %vm1749, %v5870
  %5966 = vst.msk [vmem:[#allocation4 + $0x8] sm:$0xff] %vm1749, %v5872
  %5967 = vst.msk [vmem:[#allocation4 + $0x10] sm:$0xff] %vm1749, %v5874
  %5968 = vst.msk [vmem:[#allocation4 + $0x18] sm:$0xff] %vm1749, %v5876
  %5969 = vst.msk [vmem:[#allocation4 + $0x20] sm:$0xff] %vm1749, %v5878
  %5970 = vst.msk [vmem:[#allocation4 + $0x28] sm:$0xff] %vm1749, %v5880
  %5971 = vst.msk [vmem:[#allocation4 + $0x30] sm:$0xff] %vm1749, %v5882
  %5972 = vst.msk [vmem:[#allocation4 + $0x38] sm:$0xff] %vm1749, %v5884
  %5973 = vst.msk [vmem:[#allocation4 + $0x40] sm:$0xff] %vm1749, %v5886
  %5974 = vst.msk [vmem:[#allocation4 + $0x48] sm:$0xff] %vm1749, %v5888
  %5975 = vst.msk [vmem:[#allocation4 + $0x50] sm:$0xff] %vm1749, %v5890
  %5976 = vst.msk [vmem:[#allocation4 + $0x58] sm:$0xff] %vm1749, %v5892
  %5977 = vst.msk [vmem:[#allocation4 + $0x60] sm:$0xff] %vm1749, %v5894
  %5978 = vst.msk [vmem:[#allocation4 + $0x68] sm:$0xff] %vm1749, %v5896
  %5979 = vst.msk [vmem:[#allocation4 + $0x70] sm:$0xff] %vm1749, %v5898
  %5980 = vst.msk [vmem:[#allocation4 + $0x78] sm:$0xff] %vm1749, %v5900
  %5981 = vst.msk [vmem:[#allocation4 + $0x80] sm:$0xff] %vm1749, %v5902
  %5982 = vst.msk [vmem:[#allocation4 + $0x88] sm:$0xff] %vm1749, %v5904
  %5983 = vst.msk [vmem:[#allocation4 + $0x90] sm:$0xff] %vm1749, %v5906
  %5984 = vst.msk [vmem:[#allocation4 + $0x98] sm:$0xff] %vm1749, %v5908
  %5985 = vst.msk [vmem:[#allocation4 + $0xa0] sm:$0xff] %vm1749, %v5910
  %5986 = vst.msk [vmem:[#allocation4 + $0xa8] sm:$0xff] %vm1749, %v5912
  %5987 = vst.msk [vmem:[#allocation4 + $0xb0] sm:$0xff] %vm1749, %v5914
  %5988 = vst.msk [vmem:[#allocation4 + $0xb8] sm:$0xff] %vm1749, %v5916
  %5989 = vst.msk [vmem:[#allocation4 + $0xc0] sm:$0xff] %vm1749, %v5918
  %5990 = vst.msk [vmem:[#allocation4 + $0xc8] sm:$0xff] %vm1749, %v5920
  %5991 = vst.msk [vmem:[#allocation4 + $0xd0] sm:$0xff] %vm1749, %v5922
  %5992 = vst.msk [vmem:[#allocation4 + $0xd8] sm:$0xff] %vm1749, %v5924
  %5993 = vst.msk [vmem:[#allocation4 + $0xe0] sm:$0xff] %vm1749, %v5926
  %5994 = vst.msk [vmem:[#allocation4 + $0xe8] sm:$0xff] %vm1749, %v5928
  %5995 = vst.msk [vmem:[#allocation4 + $0xf0] sm:$0xff] %vm1749, %v5930
  %5996 = vst.msk [vmem:[#allocation4 + $0xf8] sm:$0xff] %vm1749, %v5932
  %v5997 = vld [vmem:[#allocation4] sm:$0xff]
  %v5998 = vld [vmem:[#allocation4 + $0x8] sm:$0xff]
  %v5999 = vld [vmem:[#allocation4 + $0x10] sm:$0xff]
  %v6000 = vld [vmem:[#allocation4 + $0x18] sm:$0xff]
  %v6001 = vld [vmem:[#allocation4 + $0x20] sm:$0xff]
  %v6002 = vld [vmem:[#allocation4 + $0x28] sm:$0xff]
  %v6003 = vld [vmem:[#allocation4 + $0x30] sm:$0xff]
  %v6004 = vld [vmem:[#allocation4 + $0x38] sm:$0xff]
  %v6005 = vld [vmem:[#allocation4 + $0x40] sm:$0xff]
  %v6006 = vld [vmem:[#allocation4 + $0x48] sm:$0xff]
  %v6007 = vld [vmem:[#allocation4 + $0x50] sm:$0xff]
  %v6008 = vld [vmem:[#allocation4 + $0x58] sm:$0xff]
  %v6009 = vld [vmem:[#allocation4 + $0x60] sm:$0xff]
  %v6010 = vld [vmem:[#allocation4 + $0x68] sm:$0xff]
  %v6011 = vld [vmem:[#allocation4 + $0x70] sm:$0xff]
  %v6012 = vld [vmem:[#allocation4 + $0x78] sm:$0xff]
  %v6013 = vld [vmem:[#allocation4 + $0x80] sm:$0xff]
  %v6014 = vld [vmem:[#allocation4 + $0x88] sm:$0xff]
  %v6015 = vld [vmem:[#allocation4 + $0x90] sm:$0xff]
  %v6016 = vld [vmem:[#allocation4 + $0x98] sm:$0xff]
  %v6017 = vld [vmem:[#allocation4 + $0xa0] sm:$0xff]
  %v6018 = vld [vmem:[#allocation4 + $0xa8] sm:$0xff]
  %v6019 = vld [vmem:[#allocation4 + $0xb0] sm:$0xff]
  %v6020 = vld [vmem:[#allocation4 + $0xb8] sm:$0xff]
  %v6021 = vld [vmem:[#allocation4 + $0xc0] sm:$0xff]
  %v6022 = vld [vmem:[#allocation4 + $0xc8] sm:$0xff]
  %v6023 = vld [vmem:[#allocation4 + $0xd0] sm:$0xff]
  %v6024 = vld [vmem:[#allocation4 + $0xd8] sm:$0xff]
  %v6025 = vld [vmem:[#allocation4 + $0xe0] sm:$0xff]
  %v6026 = vld [vmem:[#allocation4 + $0xe8] sm:$0xff]
  %v6027 = vld [vmem:[#allocation4 + $0xf0] sm:$0xff]
  %v6028 = vld [vmem:[#allocation4 + $0xf8] sm:$0xff]
  %v6029 = vld [vmem:[%s1] sm:$0xff]
  %v6030 = vld [vmem:[%s1 + $0x8] sm:$0xff]
  %v6031 = vld [vmem:[%s1 + $0x10] sm:$0xff]
  %v6032 = vld [vmem:[%s1 + $0x18] sm:$0xff]
  %v6033 = vld [vmem:[%s1 + $0x20] sm:$0xf]
  %v6034 = vld [vmem:[%s2] sm:$0x1]
  %v6036 = vperm.slane %v6034, 0
  %v6039 = vsel %vm1823, %v5997, 0
  %v6042 = vsel %vm1823, %v5998, 0
  %v6045 = vsel %vm1823, %v5999, 0
  %v6048 = vsel %vm1823, %v6000, 0
  %v6051 = vsel %vm1823, %v6001, 0
  %v6054 = vsel %vm1823, %v6002, 0
  %v6057 = vsel %vm1823, %v6003, 0
  %v6060 = vsel %vm1823, %v6004, 0
  %v6063 = vsel %vm1823, %v6005, 0
  %v6066 = vsel %vm1823, %v6006, 0
  %v6069 = vsel %vm1823, %v6007, 0
  %v6072 = vsel %vm1823, %v6008, 0
  %v6075 = vsel %vm1823, %v6009, 0
  %v6078 = vsel %vm1823, %v6010, 0
  %v6081 = vsel %vm1823, %v6011, 0
  %v6084 = vsel %vm1823, %v6012, 0
  %v6087 = vsel %vm1823, %v6013, 0
  %v6090 = vsel %vm1823, %v6014, 0
  %v6093 = vsel %vm1823, %v6015, 0
  %v6096 = vsel %vm1823, %v6016, 0
  %v6099 = vsel %vm1823, %v6017, 0
  %v6102 = vsel %vm1823, %v6018, 0
  %v6105 = vsel %vm1823, %v6019, 0
  %v6108 = vsel %vm1823, %v6020, 0
  %v6111 = vsel %vm1823, %v6021, 0
  %v6114 = vsel %vm1823, %v6022, 0
  %v6117 = vsel %vm1823, %v6023, 0
  %v6120 = vsel %vm1823, %v6024, 0
  %v6123 = vsel %vm1823, %v6025, 0
  %v6126 = vsel %vm1823, %v6026, 0
  %v6129 = vsel %vm1823, %v6027, 0
  %v6132 = vsel %vm1823, %v6028, 0
  %v6135 = vsel %vm1920, %v6033, 0
  %6137 = vmatpush.msra.mxu0 0.0
  %6138 = vmatpush.msra.mxu0 0.0
  %6139 = vmatpush.msra.mxu0 0.0
  %6140 = vmatpush.msra.mxu0 0.0
  %6141 = vmatpush.msra.mxu0 0.0
  %6142 = vmatpush.msra.mxu0 0.0
  %6143 = vmatpush.msra.mxu0 0.0
  %6144 = vmatpush.msra.mxu0 0.0
  %6145 = vmatpush.msra.mxu0 0.0
  %6146 = vmatpush.msra.mxu0 0.0
  %6147 = vmatpush.msra.mxu0 0.0
  %6148 = vmatpush.msra.mxu0 %v6135
  %6149 = vmatpush.msra.mxu0 %v6032
  %6150 = vmatpush.msra.mxu0 %v6031
  %6151 = vmatpush.msra.mxu0 %v6030
  %6152 = vmatpush.msra.mxu0 %v6029
  %6153 = vmatmul.f32.gmra.mxu0 %v6039
  %v6154 = vpop.f32.mrf.mxu0
  %v6155 = vadd.f32 %v6036, %v6154
  %6156 = vmatmul.f32.gmra.mxu0 %v6042
  %v6157 = vpop.f32.mrf.mxu0
  %v6158 = vadd.f32 %v6036, %v6157
  %6159 = vmatmul.f32.gmra.mxu0 %v6045
  %v6160 = vpop.f32.mrf.mxu0
  %v6161 = vadd.f32 %v6036, %v6160
  %6162 = vmatmul.f32.gmra.mxu0 %v6048
  %v6163 = vpop.f32.mrf.mxu0
  %v6164 = vadd.f32 %v6036, %v6163
  %6165 = vmatmul.f32.gmra.mxu0 %v6051
  %v6166 = vpop.f32.mrf.mxu0
  %v6167 = vadd.f32 %v6036, %v6166
  %6168 = vmatmul.f32.gmra.mxu0 %v6054
  %v6169 = vpop.f32.mrf.mxu0
  %v6170 = vadd.f32 %v6036, %v6169
  %6171 = vmatmul.f32.gmra.mxu0 %v6057
  %v6172 = vpop.f32.mrf.mxu0
  %v6173 = vadd.f32 %v6036, %v6172
  %6174 = vmatmul.f32.gmra.mxu0 %v6060
  %v6175 = vpop.f32.mrf.mxu0
  %v6176 = vadd.f32 %v6036, %v6175
  %6177 = vmatmul.f32.gmra.mxu0 %v6063
  %v6178 = vpop.f32.mrf.mxu0
  %v6179 = vadd.f32 %v6036, %v6178
  %6180 = vmatmul.f32.gmra.mxu0 %v6066
  %v6181 = vpop.f32.mrf.mxu0
  %v6182 = vadd.f32 %v6036, %v6181
  %6183 = vmatmul.f32.gmra.mxu0 %v6069
  %v6184 = vpop.f32.mrf.mxu0
  %v6185 = vadd.f32 %v6036, %v6184
  %6186 = vmatmul.f32.gmra.mxu0 %v6072
  %v6187 = vpop.f32.mrf.mxu0
  %v6188 = vadd.f32 %v6036, %v6187
  %6189 = vmatmul.f32.gmra.mxu0 %v6075
  %v6190 = vpop.f32.mrf.mxu0
  %v6191 = vadd.f32 %v6036, %v6190
  %6192 = vmatmul.f32.gmra.mxu0 %v6078
  %v6193 = vpop.f32.mrf.mxu0
  %v6194 = vadd.f32 %v6036, %v6193
  %6195 = vmatmul.f32.gmra.mxu0 %v6081
  %v6196 = vpop.f32.mrf.mxu0
  %v6197 = vadd.f32 %v6036, %v6196
  %6198 = vmatmul.f32.gmra.mxu0 %v6084
  %v6199 = vpop.f32.mrf.mxu0
  %v6200 = vadd.f32 %v6036, %v6199
  %6201 = vmatmul.f32.gmra.mxu0 %v6087
  %v6202 = vpop.f32.mrf.mxu0
  %v6203 = vadd.f32 %v6036, %v6202
  %6204 = vmatmul.f32.gmra.mxu0 %v6090
  %v6205 = vpop.f32.mrf.mxu0
  %v6206 = vadd.f32 %v6036, %v6205
  %6207 = vmatmul.f32.gmra.mxu0 %v6093
  %v6208 = vpop.f32.mrf.mxu0
  %v6209 = vadd.f32 %v6036, %v6208
  %6210 = vmatmul.f32.gmra.mxu0 %v6096
  %v6211 = vpop.f32.mrf.mxu0
  %v6212 = vadd.f32 %v6036, %v6211
  %6213 = vmatmul.f32.gmra.mxu0 %v6099
  %v6214 = vpop.f32.mrf.mxu0
  %v6215 = vadd.f32 %v6036, %v6214
  %6216 = vmatmul.f32.gmra.mxu0 %v6102
  %v6217 = vpop.f32.mrf.mxu0
  %v6218 = vadd.f32 %v6036, %v6217
  %6219 = vmatmul.f32.gmra.mxu0 %v6105
  %v6220 = vpop.f32.mrf.mxu0
  %v6221 = vadd.f32 %v6036, %v6220
  %6222 = vmatmul.f32.gmra.mxu0 %v6108
  %v6223 = vpop.f32.mrf.mxu0
  %v6224 = vadd.f32 %v6036, %v6223
  %6225 = vmatmul.f32.gmra.mxu0 %v6111
  %v6226 = vpop.f32.mrf.mxu0
  %v6227 = vadd.f32 %v6036, %v6226
  %6228 = vmatmul.f32.gmra.mxu0 %v6114
  %v6229 = vpop.f32.mrf.mxu0
  %v6230 = vadd.f32 %v6036, %v6229
  %6231 = vmatmul.f32.gmra.mxu0 %v6117
  %v6232 = vpop.f32.mrf.mxu0
  %v6233 = vadd.f32 %v6036, %v6232
  %6234 = vmatmul.f32.gmra.mxu0 %v6120
  %v6235 = vpop.f32.mrf.mxu0
  %v6236 = vadd.f32 %v6036, %v6235
  %6237 = vmatmul.f32.gmra.mxu0 %v6123
  %v6238 = vpop.f32.mrf.mxu0
  %v6239 = vadd.f32 %v6036, %v6238
  %6240 = vmatmul.f32.gmra.mxu0 %v6126
  %v6241 = vpop.f32.mrf.mxu0
  %v6242 = vadd.f32 %v6036, %v6241
  %6243 = vmatmul.f32.gmra.mxu0 %v6129
  %v6244 = vpop.f32.mrf.mxu0
  %v6245 = vadd.f32 %v6036, %v6244
  %6246 = vmatmul.f32.gmra.mxu0 %v6132
  %v6247 = vpop.f32.mrf.mxu0
  %v6248 = vadd.f32 %v6036, %v6247
  %6249 = vdwg.mxu0
  %v6250 = vmax.f32 %v6155, 0.0
  %v6251 = vmax.f32 %v6158, 0.0
  %v6252 = vmax.f32 %v6161, 0.0
  %v6253 = vmax.f32 %v6164, 0.0
  %v6254 = vmax.f32 %v6167, 0.0
  %v6255 = vmax.f32 %v6170, 0.0
  %v6256 = vmax.f32 %v6173, 0.0
  %v6257 = vmax.f32 %v6176, 0.0
  %v6258 = vmax.f32 %v6179, 0.0
  %v6259 = vmax.f32 %v6182, 0.0
  %v6260 = vmax.f32 %v6185, 0.0
  %v6261 = vmax.f32 %v6188, 0.0
  %v6262 = vmax.f32 %v6191, 0.0
  %v6263 = vmax.f32 %v6194, 0.0
  %v6264 = vmax.f32 %v6197, 0.0
  %v6265 = vmax.f32 %v6200, 0.0
  %v6266 = vmax.f32 %v6203, 0.0
  %v6267 = vmax.f32 %v6206, 0.0
  %v6268 = vmax.f32 %v6209, 0.0
  %v6269 = vmax.f32 %v6212, 0.0
  %v6270 = vmax.f32 %v6215, 0.0
  %v6271 = vmax.f32 %v6218, 0.0
  %v6272 = vmax.f32 %v6221, 0.0
  %v6273 = vmax.f32 %v6224, 0.0
  %v6274 = vmax.f32 %v6227, 0.0
  %v6275 = vmax.f32 %v6230, 0.0
  %v6276 = vmax.f32 %v6233, 0.0
  %v6277 = vmax.f32 %v6236, 0.0
  %v6278 = vmax.f32 %v6239, 0.0
  %v6279 = vmax.f32 %v6242, 0.0
  %v6280 = vmax.f32 %v6245, 0.0
  %v6281 = vmax.f32 %v6248, 0.0
  %6282 = vst.msk [vmem:[%s76 + $0x1] sm:$0xff] %vm26, %v6250
  %6283 = vst.msk [vmem:[%s76 + $0x9] sm:$0xff] %vm26, %v6251
  %6284 = vst.msk [vmem:[%s76 + $0x19] sm:$0xff] %vm26, %v6252
  %6285 = vst.msk [vmem:[%s76 + $0x21] sm:$0xff] %vm26, %v6253
  %6286 = vst.msk [vmem:[%s76 + $0x31] sm:$0xff] %vm26, %v6254
  %6287 = vst.msk [vmem:[%s76 + $0x39] sm:$0xff] %vm26, %v6255
  %6288 = vst.msk [vmem:[%s76 + $0x49] sm:$0xff] %vm26, %v6256
  %6289 = vst.msk [vmem:[%s76 + $0x51] sm:$0xff] %vm26, %v6257
  %6290 = vst.msk [vmem:[%s76 + $0x61] sm:$0xff] %vm26, %v6258
  %6291 = vst.msk [vmem:[%s76 + $0x69] sm:$0xff] %vm26, %v6259
  %6292 = vst.msk [vmem:[%s76 + $0x79] sm:$0xff] %vm26, %v6260
  %6293 = vst.msk [vmem:[%s76 + $0x81] sm:$0xff] %vm26, %v6261
  %6294 = vst.msk [vmem:[%s76 + $0x91] sm:$0xff] %vm26, %v6262
  %6295 = vst.msk [vmem:[%s76 + $0x99] sm:$0xff] %vm26, %v6263
  %6296 = vst.msk [vmem:[%s76 + $0xa9] sm:$0xff] %vm26, %v6264
  %6297 = vst.msk [vmem:[%s76 + $0xb1] sm:$0xff] %vm26, %v6265
  %6298 = vst.msk [vmem:[%s76 + $0xc1] sm:$0xff] %vm26, %v6266
  %6299 = vst.msk [vmem:[%s76 + $0xc9] sm:$0xff] %vm26, %v6267
  %6300 = vst.msk [vmem:[%s76 + $0xd9] sm:$0xff] %vm26, %v6268
  %6301 = vst.msk [vmem:[%s76 + $0xe1] sm:$0xff] %vm26, %v6269
  %6302 = vst.msk [vmem:[%s76 + $0xf1] sm:$0xff] %vm26, %v6270
  %6303 = vst.msk [vmem:[%s76 + $0xf9] sm:$0xff] %vm26, %v6271
  %6304 = vst.msk [vmem:[%s76 + $0x109] sm:$0xff] %vm26, %v6272
  %6305 = vst.msk [vmem:[%s76 + $0x111] sm:$0xff] %vm26, %v6273
  %6306 = vst.msk [vmem:[%s76 + $0x121] sm:$0xff] %vm26, %v6274
  %6307 = vst.msk [vmem:[%s76 + $0x129] sm:$0xff] %vm26, %v6275
  %6308 = vst.msk [vmem:[%s76 + $0x139] sm:$0xff] %vm26, %v6276
  %6309 = vst.msk [vmem:[%s76 + $0x141] sm:$0xff] %vm26, %v6277
  %6310 = vst.msk [vmem:[%s76 + $0x151] sm:$0xff] %vm26, %v6278
  %6311 = vst.msk [vmem:[%s76 + $0x159] sm:$0xff] %vm26, %v6279
  %6312 = vst.msk [vmem:[%s76 + $0x169] sm:$0xff] %vm26, %v6280
  %6313 = vst.msk [vmem:[%s76 + $0x171] sm:$0xff] %vm26, %v6281
  %v6314 = vld [vmem:[#allocation3] sm:$0xff]
  %v6315 = vld [vmem:[#allocation3 + $0x8] sm:$0xff]
  %v6316 = vld [vmem:[#allocation3 + $0x18] sm:$0xff]
  %v6317 = vld [vmem:[#allocation3 + $0x20] sm:$0xff]
  %v6318 = vld [vmem:[#allocation3 + $0x30] sm:$0xff]
  %v6319 = vld [vmem:[#allocation3 + $0x38] sm:$0xff]
  %v6320 = vld [vmem:[#allocation3 + $0x48] sm:$0xff]
  %v6321 = vld [vmem:[#allocation3 + $0x50] sm:$0xff]
  %v6322 = vld [vmem:[#allocation3 + $0x60] sm:$0xff]
  %v6323 = vld [vmem:[#allocation3 + $0x68] sm:$0xff]
  %v6324 = vld [vmem:[#allocation3 + $0x78] sm:$0xff]
  %v6325 = vld [vmem:[#allocation3 + $0x80] sm:$0xff]
  %v6326 = vld [vmem:[#allocation3 + $0x90] sm:$0xff]
  %v6327 = vld [vmem:[#allocation3 + $0x98] sm:$0xff]
  %v6328 = vld [vmem:[#allocation3 + $0xa8] sm:$0xff]
  %v6329 = vld [vmem:[#allocation3 + $0xb0] sm:$0xff]
  %v6330 = vld [vmem:[#allocation3 + $0xc0] sm:$0xff]
  %v6331 = vld [vmem:[#allocation3 + $0xc8] sm:$0xff]
  %v6332 = vld [vmem:[#allocation3 + $0xd8] sm:$0xff]
  %v6333 = vld [vmem:[#allocation3 + $0xe0] sm:$0xff]
  %v6334 = vld [vmem:[#allocation3 + $0xf0] sm:$0xff]
  %v6335 = vld [vmem:[#allocation3 + $0xf8] sm:$0xff]
  %v6336 = vld [vmem:[#allocation3 + $0x108] sm:$0xff]
  %v6337 = vld [vmem:[#allocation3 + $0x110] sm:$0xff]
  %v6338 = vld [vmem:[#allocation3 + $0x120] sm:$0xff]
  %v6339 = vld [vmem:[#allocation3 + $0x128] sm:$0xff]
  %v6340 = vld [vmem:[#allocation3 + $0x138] sm:$0xff]
  %v6341 = vld [vmem:[#allocation3 + $0x140] sm:$0xff]
  %v6342 = vld [vmem:[#allocation3 + $0x150] sm:$0xff]
  %v6343 = vld [vmem:[#allocation3 + $0x158] sm:$0xff]
  %v6344 = vld [vmem:[#allocation3 + $0x168] sm:$0xff]
  %v6345 = vld [vmem:[#allocation3 + $0x170] sm:$0xff]
  %6346 = vst.msk [vmem:[#allocation4] sm:$0xff] %vm26, %v6314
  %6347 = vst.msk [vmem:[#allocation4 + $0x8] sm:$0xff] %vm26, %v6315
  %6348 = vst.msk [vmem:[#allocation4 + $0x10] sm:$0xff] %vm26, %v6316
  %6349 = vst.msk [vmem:[#allocation4 + $0x18] sm:$0xff] %vm26, %v6317
  %6350 = vst.msk [vmem:[#allocation4 + $0x20] sm:$0xff] %vm26, %v6318
  %6351 = vst.msk [vmem:[#allocation4 + $0x28] sm:$0xff] %vm26, %v6319
  %6352 = vst.msk [vmem:[#allocation4 + $0x30] sm:$0xff] %vm26, %v6320
  %6353 = vst.msk [vmem:[#allocation4 + $0x38] sm:$0xff] %vm26, %v6321
  %6354 = vst.msk [vmem:[#allocation4 + $0x40] sm:$0xff] %vm26, %v6322
  %6355 = vst.msk [vmem:[#allocation4 + $0x48] sm:$0xff] %vm26, %v6323
  %6356 = vst.msk [vmem:[#allocation4 + $0x50] sm:$0xff] %vm26, %v6324
  %6357 = vst.msk [vmem:[#allocation4 + $0x58] sm:$0xff] %vm26, %v6325
  %6358 = vst.msk [vmem:[#allocation4 + $0x60] sm:$0xff] %vm26, %v6326
  %6359 = vst.msk [vmem:[#allocation4 + $0x68] sm:$0xff] %vm26, %v6327
  %6360 = vst.msk [vmem:[#allocation4 + $0x70] sm:$0xff] %vm26, %v6328
  %6361 = vst.msk [vmem:[#allocation4 + $0x78] sm:$0xff] %vm26, %v6329
  %6362 = vst.msk [vmem:[#allocation4 + $0x80] sm:$0xff] %vm26, %v6330
  %6363 = vst.msk [vmem:[#allocation4 + $0x88] sm:$0xff] %vm26, %v6331
  %6364 = vst.msk [vmem:[#allocation4 + $0x90] sm:$0xff] %vm26, %v6332
  %6365 = vst.msk [vmem:[#allocation4 + $0x98] sm:$0xff] %vm26, %v6333
  %6366 = vst.msk [vmem:[#allocation4 + $0xa0] sm:$0xff] %vm26, %v6334
  %6367 = vst.msk [vmem:[#allocation4 + $0xa8] sm:$0xff] %vm26, %v6335
  %6368 = vst.msk [vmem:[#allocation4 + $0xb0] sm:$0xff] %vm26, %v6336
  %6369 = vst.msk [vmem:[#allocation4 + $0xb8] sm:$0xff] %vm26, %v6337
  %6370 = vst.msk [vmem:[#allocation4 + $0xc0] sm:$0xff] %vm26, %v6338
  %6371 = vst.msk [vmem:[#allocation4 + $0xc8] sm:$0xff] %vm26, %v6339
  %6372 = vst.msk [vmem:[#allocation4 + $0xd0] sm:$0xff] %vm26, %v6340
  %6373 = vst.msk [vmem:[#allocation4 + $0xd8] sm:$0xff] %vm26, %v6341
  %6374 = vst.msk [vmem:[#allocation4 + $0xe0] sm:$0xff] %vm26, %v6342
  %6375 = vst.msk [vmem:[#allocation4 + $0xe8] sm:$0xff] %vm26, %v6343
  %6376 = vst.msk [vmem:[#allocation4 + $0xf0] sm:$0xff] %vm26, %v6344
  %6377 = vst.msk [vmem:[#allocation4 + $0xf8] sm:$0xff] %vm26, %v6345
  %v6378 = vld [vmem:[#allocation3 + $0x1] sm:$0xff]
  %v6379 = vld [vmem:[#allocation3 + $0x9] sm:$0xff]
  %v6380 = vld [vmem:[#allocation3 + $0x19] sm:$0xff]
  %v6381 = vld [vmem:[#allocation3 + $0x21] sm:$0xff]
  %v6382 = vld [vmem:[#allocation3 + $0x31] sm:$0xff]
  %v6383 = vld [vmem:[#allocation3 + $0x39] sm:$0xff]
  %v6384 = vld [vmem:[#allocation3 + $0x49] sm:$0xff]
  %v6385 = vld [vmem:[#allocation3 + $0x51] sm:$0xff]
  %v6386 = vld [vmem:[#allocation3 + $0x61] sm:$0xff]
  %v6387 = vld [vmem:[#allocation3 + $0x69] sm:$0xff]
  %v6388 = vld [vmem:[#allocation3 + $0x79] sm:$0xff]
  %v6389 = vld [vmem:[#allocation3 + $0x81] sm:$0xff]
  %v6390 = vld [vmem:[#allocation3 + $0x91] sm:$0xff]
  %v6391 = vld [vmem:[#allocation3 + $0x99] sm:$0xff]
  %v6392 = vld [vmem:[#allocation3 + $0xa9] sm:$0xff]
  %v6393 = vld [vmem:[#allocation3 + $0xb1] sm:$0xff]
  %v6394 = vld [vmem:[#allocation3 + $0xc1] sm:$0xff]
  %v6395 = vld [vmem:[#allocation3 + $0xc9] sm:$0xff]
  %v6396 = vld [vmem:[#allocation3 + $0xd9] sm:$0xff]
  %v6397 = vld [vmem:[#allocation3 + $0xe1] sm:$0xff]
  %v6398 = vld [vmem:[#allocation3 + $0xf1] sm:$0xff]
  %v6399 = vld [vmem:[#allocation3 + $0xf9] sm:$0xff]
  %v6400 = vld [vmem:[#allocation3 + $0x109] sm:$0xff]
  %v6401 = vld [vmem:[#allocation3 + $0x111] sm:$0xff]
  %v6402 = vld [vmem:[#allocation3 + $0x121] sm:$0xff]
  %v6403 = vld [vmem:[#allocation3 + $0x129] sm:$0xff]
  %v6404 = vld [vmem:[#allocation3 + $0x139] sm:$0xff]
  %v6405 = vld [vmem:[#allocation3 + $0x141] sm:$0xff]
  %v6406 = vld [vmem:[#allocation3 + $0x151] sm:$0xff]
  %v6407 = vld [vmem:[#allocation3 + $0x159] sm:$0xff]
  %v6408 = vld [vmem:[#allocation3 + $0x169] sm:$0xff]
  %v6409 = vld [vmem:[#allocation3 + $0x171] sm:$0xff]
  %6442 = vrot.lane.b32.xlu0 %v6378, 4
  %v6443 = vpop.permute.xlu0 %6442
  %6444 = vrot.lane.b32.xlu0 %v6379, 4
  %v6445 = vpop.permute.xlu0 %6444
  %6446 = vrot.lane.b32.xlu0 %v6380, 4
  %v6447 = vpop.permute.xlu0 %6446
  %6448 = vrot.lane.b32.xlu0 %v6381, 4
  %v6449 = vpop.permute.xlu0 %6448
  %6450 = vrot.lane.b32.xlu0 %v6382, 4
  %v6451 = vpop.permute.xlu0 %6450
  %6452 = vrot.lane.b32.xlu0 %v6383, 4
  %v6453 = vpop.permute.xlu0 %6452
  %6454 = vrot.lane.b32.xlu0 %v6384, 4
  %v6455 = vpop.permute.xlu0 %6454
  %6456 = vrot.lane.b32.xlu0 %v6385, 4
  %v6457 = vpop.permute.xlu0 %6456
  %6458 = vrot.lane.b32.xlu0 %v6386, 4
  %v6459 = vpop.permute.xlu0 %6458
  %6460 = vrot.lane.b32.xlu0 %v6387, 4
  %v6461 = vpop.permute.xlu0 %6460
  %6462 = vrot.lane.b32.xlu0 %v6388, 4
  %v6463 = vpop.permute.xlu0 %6462
  %6464 = vrot.lane.b32.xlu0 %v6389, 4
  %v6465 = vpop.permute.xlu0 %6464
  %6466 = vrot.lane.b32.xlu0 %v6390, 4
  %v6467 = vpop.permute.xlu0 %6466
  %6468 = vrot.lane.b32.xlu0 %v6391, 4
  %v6469 = vpop.permute.xlu0 %6468
  %6470 = vrot.lane.b32.xlu0 %v6392, 4
  %v6471 = vpop.permute.xlu0 %6470
  %6472 = vrot.lane.b32.xlu0 %v6393, 4
  %v6473 = vpop.permute.xlu0 %6472
  %6474 = vrot.lane.b32.xlu0 %v6394, 4
  %v6475 = vpop.permute.xlu0 %6474
  %6476 = vrot.lane.b32.xlu0 %v6395, 4
  %v6477 = vpop.permute.xlu0 %6476
  %6478 = vrot.lane.b32.xlu0 %v6396, 4
  %v6479 = vpop.permute.xlu0 %6478
  %6480 = vrot.lane.b32.xlu0 %v6397, 4
  %v6481 = vpop.permute.xlu0 %6480
  %6482 = vrot.lane.b32.xlu0 %v6398, 4
  %v6483 = vpop.permute.xlu0 %6482
  %6484 = vrot.lane.b32.xlu0 %v6399, 4
  %v6485 = vpop.permute.xlu0 %6484
  %6486 = vrot.lane.b32.xlu0 %v6400, 4
  %v6487 = vpop.permute.xlu0 %6486
  %6488 = vrot.lane.b32.xlu0 %v6401, 4
  %v6489 = vpop.permute.xlu0 %6488
  %6490 = vrot.lane.b32.xlu0 %v6402, 4
  %v6491 = vpop.permute.xlu0 %6490
  %6492 = vrot.lane.b32.xlu0 %v6403, 4
  %v6493 = vpop.permute.xlu0 %6492
  %6494 = vrot.lane.b32.xlu0 %v6404, 4
  %v6495 = vpop.permute.xlu0 %6494
  %6496 = vrot.lane.b32.xlu0 %v6405, 4
  %v6497 = vpop.permute.xlu0 %6496
  %6498 = vrot.lane.b32.xlu0 %v6406, 4
  %v6499 = vpop.permute.xlu0 %6498
  %6500 = vrot.lane.b32.xlu0 %v6407, 4
  %v6501 = vpop.permute.xlu0 %6500
  %6502 = vrot.lane.b32.xlu0 %v6408, 4
  %v6503 = vpop.permute.xlu0 %6502
  %6504 = vrot.lane.b32.xlu0 %v6409, 4
  %v6505 = vpop.permute.xlu0 %6504
  %6538 = vst.msk [vmem:[#allocation4] sm:$0xff] %vm397, %v6443
  %6539 = vst.msk [vmem:[#allocation4 + $0x8] sm:$0xff] %vm397, %v6445
  %6540 = vst.msk [vmem:[#allocation4 + $0x10] sm:$0xff] %vm397, %v6447
  %6541 = vst.msk [vmem:[#allocation4 + $0x18] sm:$0xff] %vm397, %v6449
  %6542 = vst.msk [vmem:[#allocation4 + $0x20] sm:$0xff] %vm397, %v6451
  %6543 = vst.msk [vmem:[#allocation4 + $0x28] sm:$0xff] %vm397, %v6453
  %6544 = vst.msk [vmem:[#allocation4 + $0x30] sm:$0xff] %vm397, %v6455
  %6545 = vst.msk [vmem:[#allocation4 + $0x38] sm:$0xff] %vm397, %v6457
  %6546 = vst.msk [vmem:[#allocation4 + $0x40] sm:$0xff] %vm397, %v6459
  %6547 = vst.msk [vmem:[#allocation4 + $0x48] sm:$0xff] %vm397, %v6461
  %6548 = vst.msk [vmem:[#allocation4 + $0x50] sm:$0xff] %vm397, %v6463
  %6549 = vst.msk [vmem:[#allocation4 + $0x58] sm:$0xff] %vm397, %v6465
  %6550 = vst.msk [vmem:[#allocation4 + $0x60] sm:$0xff] %vm397, %v6467
  %6551 = vst.msk [vmem:[#allocation4 + $0x68] sm:$0xff] %vm397, %v6469
  %6552 = vst.msk [vmem:[#allocation4 + $0x70] sm:$0xff] %vm397, %v6471
  %6553 = vst.msk [vmem:[#allocation4 + $0x78] sm:$0xff] %vm397, %v6473
  %6554 = vst.msk [vmem:[#allocation4 + $0x80] sm:$0xff] %vm397, %v6475
  %6555 = vst.msk [vmem:[#allocation4 + $0x88] sm:$0xff] %vm397, %v6477
  %6556 = vst.msk [vmem:[#allocation4 + $0x90] sm:$0xff] %vm397, %v6479
  %6557 = vst.msk [vmem:[#allocation4 + $0x98] sm:$0xff] %vm397, %v6481
  %6558 = vst.msk [vmem:[#allocation4 + $0xa0] sm:$0xff] %vm397, %v6483
  %6559 = vst.msk [vmem:[#allocation4 + $0xa8] sm:$0xff] %vm397, %v6485
  %6560 = vst.msk [vmem:[#allocation4 + $0xb0] sm:$0xff] %vm397, %v6487
  %6561 = vst.msk [vmem:[#allocation4 + $0xb8] sm:$0xff] %vm397, %v6489
  %6562 = vst.msk [vmem:[#allocation4 + $0xc0] sm:$0xff] %vm397, %v6491
  %6563 = vst.msk [vmem:[#allocation4 + $0xc8] sm:$0xff] %vm397, %v6493
  %6564 = vst.msk [vmem:[#allocation4 + $0xd0] sm:$0xff] %vm397, %v6495
  %6565 = vst.msk [vmem:[#allocation4 + $0xd8] sm:$0xff] %vm397, %v6497
  %6566 = vst.msk [vmem:[#allocation4 + $0xe0] sm:$0xff] %vm397, %v6499
  %6567 = vst.msk [vmem:[#allocation4 + $0xe8] sm:$0xff] %vm397, %v6501
  %6568 = vst.msk [vmem:[#allocation4 + $0xf0] sm:$0xff] %vm397, %v6503
  %6569 = vst.msk [vmem:[#allocation4 + $0xf8] sm:$0xff] %vm397, %v6505
  %v6570 = vld [vmem:[#allocation3 + $0x2] sm:$0xff]
  %v6571 = vld [vmem:[#allocation3 + $0xa] sm:$0xff]
  %v6572 = vld [vmem:[#allocation3 + $0x1a] sm:$0xff]
  %v6573 = vld [vmem:[#allocation3 + $0x22] sm:$0xff]
  %v6574 = vld [vmem:[#allocation3 + $0x32] sm:$0xff]
  %v6575 = vld [vmem:[#allocation3 + $0x3a] sm:$0xff]
  %v6576 = vld [vmem:[#allocation3 + $0x4a] sm:$0xff]
  %v6577 = vld [vmem:[#allocation3 + $0x52] sm:$0xff]
  %v6578 = vld [vmem:[#allocation3 + $0x62] sm:$0xff]
  %v6579 = vld [vmem:[#allocation3 + $0x6a] sm:$0xff]
  %v6580 = vld [vmem:[#allocation3 + $0x7a] sm:$0xff]
  %v6581 = vld [vmem:[#allocation3 + $0x82] sm:$0xff]
  %v6582 = vld [vmem:[#allocation3 + $0x92] sm:$0xff]
  %v6583 = vld [vmem:[#allocation3 + $0x9a] sm:$0xff]
  %v6584 = vld [vmem:[#allocation3 + $0xaa] sm:$0xff]
  %v6585 = vld [vmem:[#allocation3 + $0xb2] sm:$0xff]
  %v6586 = vld [vmem:[#allocation3 + $0xc2] sm:$0xff]
  %v6587 = vld [vmem:[#allocation3 + $0xca] sm:$0xff]
  %v6588 = vld [vmem:[#allocation3 + $0xda] sm:$0xff]
  %v6589 = vld [vmem:[#allocation3 + $0xe2] sm:$0xff]
  %v6590 = vld [vmem:[#allocation3 + $0xf2] sm:$0xff]
  %v6591 = vld [vmem:[#allocation3 + $0xfa] sm:$0xff]
  %v6592 = vld [vmem:[#allocation3 + $0x10a] sm:$0xff]
  %v6593 = vld [vmem:[#allocation3 + $0x112] sm:$0xff]
  %v6594 = vld [vmem:[#allocation3 + $0x122] sm:$0xff]
  %v6595 = vld [vmem:[#allocation3 + $0x12a] sm:$0xff]
  %v6596 = vld [vmem:[#allocation3 + $0x13a] sm:$0xff]
  %v6597 = vld [vmem:[#allocation3 + $0x142] sm:$0xff]
  %v6598 = vld [vmem:[#allocation3 + $0x152] sm:$0xff]
  %v6599 = vld [vmem:[#allocation3 + $0x15a] sm:$0xff]
  %v6600 = vld [vmem:[#allocation3 + $0x16a] sm:$0xff]
  %v6601 = vld [vmem:[#allocation3 + $0x172] sm:$0xff]
  %6634 = vrot.lane.b32.xlu0 %v6570, 8
  %v6635 = vpop.permute.xlu0 %6634
  %6636 = vrot.lane.b32.xlu0 %v6571, 8
  %v6637 = vpop.permute.xlu0 %6636
  %6638 = vrot.lane.b32.xlu0 %v6572, 8
  %v6639 = vpop.permute.xlu0 %6638
  %6640 = vrot.lane.b32.xlu0 %v6573, 8
  %v6641 = vpop.permute.xlu0 %6640
  %6642 = vrot.lane.b32.xlu0 %v6574, 8
  %v6643 = vpop.permute.xlu0 %6642
  %6644 = vrot.lane.b32.xlu0 %v6575, 8
  %v6645 = vpop.permute.xlu0 %6644
  %6646 = vrot.lane.b32.xlu0 %v6576, 8
  %v6647 = vpop.permute.xlu0 %6646
  %6648 = vrot.lane.b32.xlu0 %v6577, 8
  %v6649 = vpop.permute.xlu0 %6648
  %6650 = vrot.lane.b32.xlu0 %v6578, 8
  %v6651 = vpop.permute.xlu0 %6650
  %6652 = vrot.lane.b32.xlu0 %v6579, 8
  %v6653 = vpop.permute.xlu0 %6652
  %6654 = vrot.lane.b32.xlu0 %v6580, 8
  %v6655 = vpop.permute.xlu0 %6654
  %6656 = vrot.lane.b32.xlu0 %v6581, 8
  %v6657 = vpop.permute.xlu0 %6656
  %6658 = vrot.lane.b32.xlu0 %v6582, 8
  %v6659 = vpop.permute.xlu0 %6658
  %6660 = vrot.lane.b32.xlu0 %v6583, 8
  %v6661 = vpop.permute.xlu0 %6660
  %6662 = vrot.lane.b32.xlu0 %v6584, 8
  %v6663 = vpop.permute.xlu0 %6662
  %6664 = vrot.lane.b32.xlu0 %v6585, 8
  %v6665 = vpop.permute.xlu0 %6664
  %6666 = vrot.lane.b32.xlu0 %v6586, 8
  %v6667 = vpop.permute.xlu0 %6666
  %6668 = vrot.lane.b32.xlu0 %v6587, 8
  %v6669 = vpop.permute.xlu0 %6668
  %6670 = vrot.lane.b32.xlu0 %v6588, 8
  %v6671 = vpop.permute.xlu0 %6670
  %6672 = vrot.lane.b32.xlu0 %v6589, 8
  %v6673 = vpop.permute.xlu0 %6672
  %6674 = vrot.lane.b32.xlu0 %v6590, 8
  %v6675 = vpop.permute.xlu0 %6674
  %6676 = vrot.lane.b32.xlu0 %v6591, 8
  %v6677 = vpop.permute.xlu0 %6676
  %6678 = vrot.lane.b32.xlu0 %v6592, 8
  %v6679 = vpop.permute.xlu0 %6678
  %6680 = vrot.lane.b32.xlu0 %v6593, 8
  %v6681 = vpop.permute.xlu0 %6680
  %6682 = vrot.lane.b32.xlu0 %v6594, 8
  %v6683 = vpop.permute.xlu0 %6682
  %6684 = vrot.lane.b32.xlu0 %v6595, 8
  %v6685 = vpop.permute.xlu0 %6684
  %6686 = vrot.lane.b32.xlu0 %v6596, 8
  %v6687 = vpop.permute.xlu0 %6686
  %6688 = vrot.lane.b32.xlu0 %v6597, 8
  %v6689 = vpop.permute.xlu0 %6688
  %6690 = vrot.lane.b32.xlu0 %v6598, 8
  %v6691 = vpop.permute.xlu0 %6690
  %6692 = vrot.lane.b32.xlu0 %v6599, 8
  %v6693 = vpop.permute.xlu0 %6692
  %6694 = vrot.lane.b32.xlu0 %v6600, 8
  %v6695 = vpop.permute.xlu0 %6694
  %6696 = vrot.lane.b32.xlu0 %v6601, 8
  %v6697 = vpop.permute.xlu0 %6696
  %6730 = vst.msk [vmem:[#allocation4] sm:$0xff] %vm590, %v6635
  %6731 = vst.msk [vmem:[#allocation4 + $0x8] sm:$0xff] %vm590, %v6637
  %6732 = vst.msk [vmem:[#allocation4 + $0x10] sm:$0xff] %vm590, %v6639
  %6733 = vst.msk [vmem:[#allocation4 + $0x18] sm:$0xff] %vm590, %v6641
  %6734 = vst.msk [vmem:[#allocation4 + $0x20] sm:$0xff] %vm590, %v6643
  %6735 = vst.msk [vmem:[#allocation4 + $0x28] sm:$0xff] %vm590, %v6645
  %6736 = vst.msk [vmem:[#allocation4 + $0x30] sm:$0xff] %vm590, %v6647
  %6737 = vst.msk [vmem:[#allocation4 + $0x38] sm:$0xff] %vm590, %v6649
  %6738 = vst.msk [vmem:[#allocation4 + $0x40] sm:$0xff] %vm590, %v6651
  %6739 = vst.msk [vmem:[#allocation4 + $0x48] sm:$0xff] %vm590, %v6653
  %6740 = vst.msk [vmem:[#allocation4 + $0x50] sm:$0xff] %vm590, %v6655
  %6741 = vst.msk [vmem:[#allocation4 + $0x58] sm:$0xff] %vm590, %v6657
  %6742 = vst.msk [vmem:[#allocation4 + $0x60] sm:$0xff] %vm590, %v6659
  %6743 = vst.msk [vmem:[#allocation4 + $0x68] sm:$0xff] %vm590, %v6661
  %6744 = vst.msk [vmem:[#allocation4 + $0x70] sm:$0xff] %vm590, %v6663
  %6745 = vst.msk [vmem:[#allocation4 + $0x78] sm:$0xff] %vm590, %v6665
  %6746 = vst.msk [vmem:[#allocation4 + $0x80] sm:$0xff] %vm590, %v6667
  %6747 = vst.msk [vmem:[#allocation4 + $0x88] sm:$0xff] %vm590, %v6669
  %6748 = vst.msk [vmem:[#allocation4 + $0x90] sm:$0xff] %vm590, %v6671
  %6749 = vst.msk [vmem:[#allocation4 + $0x98] sm:$0xff] %vm590, %v6673
  %6750 = vst.msk [vmem:[#allocation4 + $0xa0] sm:$0xff] %vm590, %v6675
  %6751 = vst.msk [vmem:[#allocation4 + $0xa8] sm:$0xff] %vm590, %v6677
  %6752 = vst.msk [vmem:[#allocation4 + $0xb0] sm:$0xff] %vm590, %v6679
  %6753 = vst.msk [vmem:[#allocation4 + $0xb8] sm:$0xff] %vm590, %v6681
  %6754 = vst.msk [vmem:[#allocation4 + $0xc0] sm:$0xff] %vm590, %v6683
  %6755 = vst.msk [vmem:[#allocation4 + $0xc8] sm:$0xff] %vm590, %v6685
  %6756 = vst.msk [vmem:[#allocation4 + $0xd0] sm:$0xff] %vm590, %v6687
  %6757 = vst.msk [vmem:[#allocation4 + $0xd8] sm:$0xff] %vm590, %v6689
  %6758 = vst.msk [vmem:[#allocation4 + $0xe0] sm:$0xff] %vm590, %v6691
  %6759 = vst.msk [vmem:[#allocation4 + $0xe8] sm:$0xff] %vm590, %v6693
  %6760 = vst.msk [vmem:[#allocation4 + $0xf0] sm:$0xff] %vm590, %v6695
  %6761 = vst.msk [vmem:[#allocation4 + $0xf8] sm:$0xff] %vm590, %v6697
  %v6762 = vld [vmem:[%s76] sm:$0xff]
  %v6763 = vld [vmem:[%s76 + $0x8] sm:$0xff]
  %v6764 = vld [vmem:[%s76 + $0x18] sm:$0xff]
  %v6765 = vld [vmem:[%s76 + $0x20] sm:$0xff]
  %v6766 = vld [vmem:[%s76 + $0x30] sm:$0xff]
  %v6767 = vld [vmem:[%s76 + $0x38] sm:$0xff]
  %v6768 = vld [vmem:[%s76 + $0x48] sm:$0xff]
  %v6769 = vld [vmem:[%s76 + $0x50] sm:$0xff]
  %v6770 = vld [vmem:[%s76 + $0x60] sm:$0xff]
  %v6771 = vld [vmem:[%s76 + $0x68] sm:$0xff]
  %v6772 = vld [vmem:[%s76 + $0x78] sm:$0xff]
  %v6773 = vld [vmem:[%s76 + $0x80] sm:$0xff]
  %v6774 = vld [vmem:[%s76 + $0x90] sm:$0xff]
  %v6775 = vld [vmem:[%s76 + $0x98] sm:$0xff]
  %v6776 = vld [vmem:[%s76 + $0xa8] sm:$0xff]
  %v6777 = vld [vmem:[%s76 + $0xb0] sm:$0xff]
  %v6778 = vld [vmem:[%s76 + $0xc0] sm:$0xff]
  %v6779 = vld [vmem:[%s76 + $0xc8] sm:$0xff]
  %v6780 = vld [vmem:[%s76 + $0xd8] sm:$0xff]
  %v6781 = vld [vmem:[%s76 + $0xe0] sm:$0xff]
  %v6782 = vld [vmem:[%s76 + $0xf0] sm:$0xff]
  %v6783 = vld [vmem:[%s76 + $0xf8] sm:$0xff]
  %v6784 = vld [vmem:[%s76 + $0x108] sm:$0xff]
  %v6785 = vld [vmem:[%s76 + $0x110] sm:$0xff]
  %v6786 = vld [vmem:[%s76 + $0x120] sm:$0xff]
  %v6787 = vld [vmem:[%s76 + $0x128] sm:$0xff]
  %v6788 = vld [vmem:[%s76 + $0x138] sm:$0xff]
  %v6789 = vld [vmem:[%s76 + $0x140] sm:$0xff]
  %v6790 = vld [vmem:[%s76 + $0x150] sm:$0xff]
  %v6791 = vld [vmem:[%s76 + $0x158] sm:$0xff]
  %v6792 = vld [vmem:[%s76 + $0x168] sm:$0xff]
  %v6793 = vld [vmem:[%s76 + $0x170] sm:$0xff]
  %6826 = vrot.lane.b32.xlu0 %v6762, 12
  %v6827 = vpop.permute.xlu0 %6826
  %6828 = vrot.lane.b32.xlu0 %v6763, 12
  %v6829 = vpop.permute.xlu0 %6828
  %6830 = vrot.lane.b32.xlu0 %v6764, 12
  %v6831 = vpop.permute.xlu0 %6830
  %6832 = vrot.lane.b32.xlu0 %v6765, 12
  %v6833 = vpop.permute.xlu0 %6832
  %6834 = vrot.lane.b32.xlu0 %v6766, 12
  %v6835 = vpop.permute.xlu0 %6834
  %6836 = vrot.lane.b32.xlu0 %v6767, 12
  %v6837 = vpop.permute.xlu0 %6836
  %6838 = vrot.lane.b32.xlu0 %v6768, 12
  %v6839 = vpop.permute.xlu0 %6838
  %6840 = vrot.lane.b32.xlu0 %v6769, 12
  %v6841 = vpop.permute.xlu0 %6840
  %6842 = vrot.lane.b32.xlu0 %v6770, 12
  %v6843 = vpop.permute.xlu0 %6842
  %6844 = vrot.lane.b32.xlu0 %v6771, 12
  %v6845 = vpop.permute.xlu0 %6844
  %6846 = vrot.lane.b32.xlu0 %v6772, 12
  %v6847 = vpop.permute.xlu0 %6846
  %6848 = vrot.lane.b32.xlu0 %v6773, 12
  %v6849 = vpop.permute.xlu0 %6848
  %6850 = vrot.lane.b32.xlu0 %v6774, 12
  %v6851 = vpop.permute.xlu0 %6850
  %6852 = vrot.lane.b32.xlu0 %v6775, 12
  %v6853 = vpop.permute.xlu0 %6852
  %6854 = vrot.lane.b32.xlu0 %v6776, 12
  %v6855 = vpop.permute.xlu0 %6854
  %6856 = vrot.lane.b32.xlu0 %v6777, 12
  %v6857 = vpop.permute.xlu0 %6856
  %6858 = vrot.lane.b32.xlu0 %v6778, 12
  %v6859 = vpop.permute.xlu0 %6858
  %6860 = vrot.lane.b32.xlu0 %v6779, 12
  %v6861 = vpop.permute.xlu0 %6860
  %6862 = vrot.lane.b32.xlu0 %v6780, 12
  %v6863 = vpop.permute.xlu0 %6862
  %6864 = vrot.lane.b32.xlu0 %v6781, 12
  %v6865 = vpop.permute.xlu0 %6864
  %6866 = vrot.lane.b32.xlu0 %v6782, 12
  %v6867 = vpop.permute.xlu0 %6866
  %6868 = vrot.lane.b32.xlu0 %v6783, 12
  %v6869 = vpop.permute.xlu0 %6868
  %6870 = vrot.lane.b32.xlu0 %v6784, 12
  %v6871 = vpop.permute.xlu0 %6870
  %6872 = vrot.lane.b32.xlu0 %v6785, 12
  %v6873 = vpop.permute.xlu0 %6872
  %6874 = vrot.lane.b32.xlu0 %v6786, 12
  %v6875 = vpop.permute.xlu0 %6874
  %6876 = vrot.lane.b32.xlu0 %v6787, 12
  %v6877 = vpop.permute.xlu0 %6876
  %6878 = vrot.lane.b32.xlu0 %v6788, 12
  %v6879 = vpop.permute.xlu0 %6878
  %6880 = vrot.lane.b32.xlu0 %v6789, 12
  %v6881 = vpop.permute.xlu0 %6880
  %6882 = vrot.lane.b32.xlu0 %v6790, 12
  %v6883 = vpop.permute.xlu0 %6882
  %6884 = vrot.lane.b32.xlu0 %v6791, 12
  %v6885 = vpop.permute.xlu0 %6884
  %6886 = vrot.lane.b32.xlu0 %v6792, 12
  %v6887 = vpop.permute.xlu0 %6886
  %6888 = vrot.lane.b32.xlu0 %v6793, 12
  %v6889 = vpop.permute.xlu0 %6888
  %6922 = vst.msk [vmem:[#allocation4] sm:$0xff] %vm783, %v6827
  %6923 = vst.msk [vmem:[#allocation4 + $0x8] sm:$0xff] %vm783, %v6829
  %6924 = vst.msk [vmem:[#allocation4 + $0x10] sm:$0xff] %vm783, %v6831
  %6925 = vst.msk [vmem:[#allocation4 + $0x18] sm:$0xff] %vm783, %v6833
  %6926 = vst.msk [vmem:[#allocation4 + $0x20] sm:$0xff] %vm783, %v6835
  %6927 = vst.msk [vmem:[#allocation4 + $0x28] sm:$0xff] %vm783, %v6837
  %6928 = vst.msk [vmem:[#allocation4 + $0x30] sm:$0xff] %vm783, %v6839
  %6929 = vst.msk [vmem:[#allocation4 + $0x38] sm:$0xff] %vm783, %v6841
  %6930 = vst.msk [vmem:[#allocation4 + $0x40] sm:$0xff] %vm783, %v6843
  %6931 = vst.msk [vmem:[#allocation4 + $0x48] sm:$0xff] %vm783, %v6845
  %6932 = vst.msk [vmem:[#allocation4 + $0x50] sm:$0xff] %vm783, %v6847
  %6933 = vst.msk [vmem:[#allocation4 + $0x58] sm:$0xff] %vm783, %v6849
  %6934 = vst.msk [vmem:[#allocation4 + $0x60] sm:$0xff] %vm783, %v6851
  %6935 = vst.msk [vmem:[#allocation4 + $0x68] sm:$0xff] %vm783, %v6853
  %6936 = vst.msk [vmem:[#allocation4 + $0x70] sm:$0xff] %vm783, %v6855
  %6937 = vst.msk [vmem:[#allocation4 + $0x78] sm:$0xff] %vm783, %v6857
  %6938 = vst.msk [vmem:[#allocation4 + $0x80] sm:$0xff] %vm783, %v6859
  %6939 = vst.msk [vmem:[#allocation4 + $0x88] sm:$0xff] %vm783, %v6861
  %6940 = vst.msk [vmem:[#allocation4 + $0x90] sm:$0xff] %vm783, %v6863
  %6941 = vst.msk [vmem:[#allocation4 + $0x98] sm:$0xff] %vm783, %v6865
  %6942 = vst.msk [vmem:[#allocation4 + $0xa0] sm:$0xff] %vm783, %v6867
  %6943 = vst.msk [vmem:[#allocation4 + $0xa8] sm:$0xff] %vm783, %v6869
  %6944 = vst.msk [vmem:[#allocation4 + $0xb0] sm:$0xff] %vm783, %v6871
  %6945 = vst.msk [vmem:[#allocation4 + $0xb8] sm:$0xff] %vm783, %v6873
  %6946 = vst.msk [vmem:[#allocation4 + $0xc0] sm:$0xff] %vm783, %v6875
  %6947 = vst.msk [vmem:[#allocation4 + $0xc8] sm:$0xff] %vm783, %v6877
  %6948 = vst.msk [vmem:[#allocation4 + $0xd0] sm:$0xff] %vm783, %v6879
  %6949 = vst.msk [vmem:[#allocation4 + $0xd8] sm:$0xff] %vm783, %v6881
  %6950 = vst.msk [vmem:[#allocation4 + $0xe0] sm:$0xff] %vm783, %v6883
  %6951 = vst.msk [vmem:[#allocation4 + $0xe8] sm:$0xff] %vm783, %v6885
  %6952 = vst.msk [vmem:[#allocation4 + $0xf0] sm:$0xff] %vm783, %v6887
  %6953 = vst.msk [vmem:[#allocation4 + $0xf8] sm:$0xff] %vm783, %v6889
  %v6954 = vld [vmem:[%s76 + $0x1] sm:$0xff]
  %v6955 = vld [vmem:[%s76 + $0x9] sm:$0xff]
  %v6956 = vld [vmem:[%s76 + $0x19] sm:$0xff]
  %v6957 = vld [vmem:[%s76 + $0x21] sm:$0xff]
  %v6958 = vld [vmem:[%s76 + $0x31] sm:$0xff]
  %v6959 = vld [vmem:[%s76 + $0x39] sm:$0xff]
  %v6960 = vld [vmem:[%s76 + $0x49] sm:$0xff]
  %v6961 = vld [vmem:[%s76 + $0x51] sm:$0xff]
  %v6962 = vld [vmem:[%s76 + $0x61] sm:$0xff]
  %v6963 = vld [vmem:[%s76 + $0x69] sm:$0xff]
  %v6964 = vld [vmem:[%s76 + $0x79] sm:$0xff]
  %v6965 = vld [vmem:[%s76 + $0x81] sm:$0xff]
  %v6966 = vld [vmem:[%s76 + $0x91] sm:$0xff]
  %v6967 = vld [vmem:[%s76 + $0x99] sm:$0xff]
  %v6968 = vld [vmem:[%s76 + $0xa9] sm:$0xff]
  %v6969 = vld [vmem:[%s76 + $0xb1] sm:$0xff]
  %v6970 = vld [vmem:[%s76 + $0xc1] sm:$0xff]
  %v6971 = vld [vmem:[%s76 + $0xc9] sm:$0xff]
  %v6972 = vld [vmem:[%s76 + $0xd9] sm:$0xff]
  %v6973 = vld [vmem:[%s76 + $0xe1] sm:$0xff]
  %v6974 = vld [vmem:[%s76 + $0xf1] sm:$0xff]
  %v6975 = vld [vmem:[%s76 + $0xf9] sm:$0xff]
  %v6976 = vld [vmem:[%s76 + $0x109] sm:$0xff]
  %v6977 = vld [vmem:[%s76 + $0x111] sm:$0xff]
  %v6978 = vld [vmem:[%s76 + $0x121] sm:$0xff]
  %v6979 = vld [vmem:[%s76 + $0x129] sm:$0xff]
  %v6980 = vld [vmem:[%s76 + $0x139] sm:$0xff]
  %v6981 = vld [vmem:[%s76 + $0x141] sm:$0xff]
  %v6982 = vld [vmem:[%s76 + $0x151] sm:$0xff]
  %v6983 = vld [vmem:[%s76 + $0x159] sm:$0xff]
  %v6984 = vld [vmem:[%s76 + $0x169] sm:$0xff]
  %v6985 = vld [vmem:[%s76 + $0x171] sm:$0xff]
  %7018 = vrot.lane.b32.xlu0 %v6954, 16
  %v7019 = vpop.permute.xlu0 %7018
  %7020 = vrot.lane.b32.xlu0 %v6955, 16
  %v7021 = vpop.permute.xlu0 %7020
  %7022 = vrot.lane.b32.xlu0 %v6956, 16
  %v7023 = vpop.permute.xlu0 %7022
  %7024 = vrot.lane.b32.xlu0 %v6957, 16
  %v7025 = vpop.permute.xlu0 %7024
  %7026 = vrot.lane.b32.xlu0 %v6958, 16
  %v7027 = vpop.permute.xlu0 %7026
  %7028 = vrot.lane.b32.xlu0 %v6959, 16
  %v7029 = vpop.permute.xlu0 %7028
  %7030 = vrot.lane.b32.xlu0 %v6960, 16
  %v7031 = vpop.permute.xlu0 %7030
  %7032 = vrot.lane.b32.xlu0 %v6961, 16
  %v7033 = vpop.permute.xlu0 %7032
  %7034 = vrot.lane.b32.xlu0 %v6962, 16
  %v7035 = vpop.permute.xlu0 %7034
  %7036 = vrot.lane.b32.xlu0 %v6963, 16
  %v7037 = vpop.permute.xlu0 %7036
  %7038 = vrot.lane.b32.xlu0 %v6964, 16
  %v7039 = vpop.permute.xlu0 %7038
  %7040 = vrot.lane.b32.xlu0 %v6965, 16
  %v7041 = vpop.permute.xlu0 %7040
  %7042 = vrot.lane.b32.xlu0 %v6966, 16
  %v7043 = vpop.permute.xlu0 %7042
  %7044 = vrot.lane.b32.xlu0 %v6967, 16
  %v7045 = vpop.permute.xlu0 %7044
  %7046 = vrot.lane.b32.xlu0 %v6968, 16
  %v7047 = vpop.permute.xlu0 %7046
  %7048 = vrot.lane.b32.xlu0 %v6969, 16
  %v7049 = vpop.permute.xlu0 %7048
  %7050 = vrot.lane.b32.xlu0 %v6970, 16
  %v7051 = vpop.permute.xlu0 %7050
  %7052 = vrot.lane.b32.xlu0 %v6971, 16
  %v7053 = vpop.permute.xlu0 %7052
  %7054 = vrot.lane.b32.xlu0 %v6972, 16
  %v7055 = vpop.permute.xlu0 %7054
  %7056 = vrot.lane.b32.xlu0 %v6973, 16
  %v7057 = vpop.permute.xlu0 %7056
  %7058 = vrot.lane.b32.xlu0 %v6974, 16
  %v7059 = vpop.permute.xlu0 %7058
  %7060 = vrot.lane.b32.xlu0 %v6975, 16
  %v7061 = vpop.permute.xlu0 %7060
  %7062 = vrot.lane.b32.xlu0 %v6976, 16
  %v7063 = vpop.permute.xlu0 %7062
  %7064 = vrot.lane.b32.xlu0 %v6977, 16
  %v7065 = vpop.permute.xlu0 %7064
  %7066 = vrot.lane.b32.xlu0 %v6978, 16
  %v7067 = vpop.permute.xlu0 %7066
  %7068 = vrot.lane.b32.xlu0 %v6979, 16
  %v7069 = vpop.permute.xlu0 %7068
  %7070 = vrot.lane.b32.xlu0 %v6980, 16
  %v7071 = vpop.permute.xlu0 %7070
  %7072 = vrot.lane.b32.xlu0 %v6981, 16
  %v7073 = vpop.permute.xlu0 %7072
  %7074 = vrot.lane.b32.xlu0 %v6982, 16
  %v7075 = vpop.permute.xlu0 %7074
  %7076 = vrot.lane.b32.xlu0 %v6983, 16
  %v7077 = vpop.permute.xlu0 %7076
  %7078 = vrot.lane.b32.xlu0 %v6984, 16
  %v7079 = vpop.permute.xlu0 %7078
  %7080 = vrot.lane.b32.xlu0 %v6985, 16
  %v7081 = vpop.permute.xlu0 %7080
  %7114 = vst.msk [vmem:[#allocation4] sm:$0xff] %vm976, %v7019
  %7115 = vst.msk [vmem:[#allocation4 + $0x8] sm:$0xff] %vm976, %v7021
  %7116 = vst.msk [vmem:[#allocation4 + $0x10] sm:$0xff] %vm976, %v7023
  %7117 = vst.msk [vmem:[#allocation4 + $0x18] sm:$0xff] %vm976, %v7025
  %7118 = vst.msk [vmem:[#allocation4 + $0x20] sm:$0xff] %vm976, %v7027
  %7119 = vst.msk [vmem:[#allocation4 + $0x28] sm:$0xff] %vm976, %v7029
  %7120 = vst.msk [vmem:[#allocation4 + $0x30] sm:$0xff] %vm976, %v7031
  %7121 = vst.msk [vmem:[#allocation4 + $0x38] sm:$0xff] %vm976, %v7033
  %7122 = vst.msk [vmem:[#allocation4 + $0x40] sm:$0xff] %vm976, %v7035
  %7123 = vst.msk [vmem:[#allocation4 + $0x48] sm:$0xff] %vm976, %v7037
  %7124 = vst.msk [vmem:[#allocation4 + $0x50] sm:$0xff] %vm976, %v7039
  %7125 = vst.msk [vmem:[#allocation4 + $0x58] sm:$0xff] %vm976, %v7041
  %7126 = vst.msk [vmem:[#allocation4 + $0x60] sm:$0xff] %vm976, %v7043
  %7127 = vst.msk [vmem:[#allocation4 + $0x68] sm:$0xff] %vm976, %v7045
  %7128 = vst.msk [vmem:[#allocation4 + $0x70] sm:$0xff] %vm976, %v7047
  %7129 = vst.msk [vmem:[#allocation4 + $0x78] sm:$0xff] %vm976, %v7049
  %7130 = vst.msk [vmem:[#allocation4 + $0x80] sm:$0xff] %vm976, %v7051
  %7131 = vst.msk [vmem:[#allocation4 + $0x88] sm:$0xff] %vm976, %v7053
  %7132 = vst.msk [vmem:[#allocation4 + $0x90] sm:$0xff] %vm976, %v7055
  %7133 = vst.msk [vmem:[#allocation4 + $0x98] sm:$0xff] %vm976, %v7057
  %7134 = vst.msk [vmem:[#allocation4 + $0xa0] sm:$0xff] %vm976, %v7059
  %7135 = vst.msk [vmem:[#allocation4 + $0xa8] sm:$0xff] %vm976, %v7061
  %7136 = vst.msk [vmem:[#allocation4 + $0xb0] sm:$0xff] %vm976, %v7063
  %7137 = vst.msk [vmem:[#allocation4 + $0xb8] sm:$0xff] %vm976, %v7065
  %7138 = vst.msk [vmem:[#allocation4 + $0xc0] sm:$0xff] %vm976, %v7067
  %7139 = vst.msk [vmem:[#allocation4 + $0xc8] sm:$0xff] %vm976, %v7069
  %7140 = vst.msk [vmem:[#allocation4 + $0xd0] sm:$0xff] %vm976, %v7071
  %7141 = vst.msk [vmem:[#allocation4 + $0xd8] sm:$0xff] %vm976, %v7073
  %7142 = vst.msk [vmem:[#allocation4 + $0xe0] sm:$0xff] %vm976, %v7075
  %7143 = vst.msk [vmem:[#allocation4 + $0xe8] sm:$0xff] %vm976, %v7077
  %7144 = vst.msk [vmem:[#allocation4 + $0xf0] sm:$0xff] %vm976, %v7079
  %7145 = vst.msk [vmem:[#allocation4 + $0xf8] sm:$0xff] %vm976, %v7081
  %v7146 = vld [vmem:[%s76 + $0x2] sm:$0xff]
  %v7147 = vld [vmem:[%s76 + $0xa] sm:$0xff]
  %v7148 = vld [vmem:[%s76 + $0x1a] sm:$0xff]
  %v7149 = vld [vmem:[%s76 + $0x22] sm:$0xff]
  %v7150 = vld [vmem:[%s76 + $0x32] sm:$0xff]
  %v7151 = vld [vmem:[%s76 + $0x3a] sm:$0xff]
  %v7152 = vld [vmem:[%s76 + $0x4a] sm:$0xff]
  %v7153 = vld [vmem:[%s76 + $0x52] sm:$0xff]
  %v7154 = vld [vmem:[%s76 + $0x62] sm:$0xff]
  %v7155 = vld [vmem:[%s76 + $0x6a] sm:$0xff]
  %v7156 = vld [vmem:[%s76 + $0x7a] sm:$0xff]
  %v7157 = vld [vmem:[%s76 + $0x82] sm:$0xff]
  %v7158 = vld [vmem:[%s76 + $0x92] sm:$0xff]
  %v7159 = vld [vmem:[%s76 + $0x9a] sm:$0xff]
  %v7160 = vld [vmem:[%s76 + $0xaa] sm:$0xff]
  %v7161 = vld [vmem:[%s76 + $0xb2] sm:$0xff]
  %v7162 = vld [vmem:[%s76 + $0xc2] sm:$0xff]
  %v7163 = vld [vmem:[%s76 + $0xca] sm:$0xff]
  %v7164 = vld [vmem:[%s76 + $0xda] sm:$0xff]
  %v7165 = vld [vmem:[%s76 + $0xe2] sm:$0xff]
  %v7166 = vld [vmem:[%s76 + $0xf2] sm:$0xff]
  %v7167 = vld [vmem:[%s76 + $0xfa] sm:$0xff]
  %v7168 = vld [vmem:[%s76 + $0x10a] sm:$0xff]
  %v7169 = vld [vmem:[%s76 + $0x112] sm:$0xff]
  %v7170 = vld [vmem:[%s76 + $0x122] sm:$0xff]
  %v7171 = vld [vmem:[%s76 + $0x12a] sm:$0xff]
  %v7172 = vld [vmem:[%s76 + $0x13a] sm:$0xff]
  %v7173 = vld [vmem:[%s76 + $0x142] sm:$0xff]
  %v7174 = vld [vmem:[%s76 + $0x152] sm:$0xff]
  %v7175 = vld [vmem:[%s76 + $0x15a] sm:$0xff]
  %v7176 = vld [vmem:[%s76 + $0x16a] sm:$0xff]
  %v7177 = vld [vmem:[%s76 + $0x172] sm:$0xff]
  %7210 = vrot.lane.b32.xlu0 %v7146, 20
  %v7211 = vpop.permute.xlu0 %7210
  %7212 = vrot.lane.b32.xlu0 %v7147, 20
  %v7213 = vpop.permute.xlu0 %7212
  %7214 = vrot.lane.b32.xlu0 %v7148, 20
  %v7215 = vpop.permute.xlu0 %7214
  %7216 = vrot.lane.b32.xlu0 %v7149, 20
  %v7217 = vpop.permute.xlu0 %7216
  %7218 = vrot.lane.b32.xlu0 %v7150, 20
  %v7219 = vpop.permute.xlu0 %7218
  %7220 = vrot.lane.b32.xlu0 %v7151, 20
  %v7221 = vpop.permute.xlu0 %7220
  %7222 = vrot.lane.b32.xlu0 %v7152, 20
  %v7223 = vpop.permute.xlu0 %7222
  %7224 = vrot.lane.b32.xlu0 %v7153, 20
  %v7225 = vpop.permute.xlu0 %7224
  %7226 = vrot.lane.b32.xlu0 %v7154, 20
  %v7227 = vpop.permute.xlu0 %7226
  %7228 = vrot.lane.b32.xlu0 %v7155, 20
  %v7229 = vpop.permute.xlu0 %7228
  %7230 = vrot.lane.b32.xlu0 %v7156, 20
  %v7231 = vpop.permute.xlu0 %7230
  %7232 = vrot.lane.b32.xlu0 %v7157, 20
  %v7233 = vpop.permute.xlu0 %7232
  %7234 = vrot.lane.b32.xlu0 %v7158, 20
  %v7235 = vpop.permute.xlu0 %7234
  %7236 = vrot.lane.b32.xlu0 %v7159, 20
  %v7237 = vpop.permute.xlu0 %7236
  %7238 = vrot.lane.b32.xlu0 %v7160, 20
  %v7239 = vpop.permute.xlu0 %7238
  %7240 = vrot.lane.b32.xlu0 %v7161, 20
  %v7241 = vpop.permute.xlu0 %7240
  %7242 = vrot.lane.b32.xlu0 %v7162, 20
  %v7243 = vpop.permute.xlu0 %7242
  %7244 = vrot.lane.b32.xlu0 %v7163, 20
  %v7245 = vpop.permute.xlu0 %7244
  %7246 = vrot.lane.b32.xlu0 %v7164, 20
  %v7247 = vpop.permute.xlu0 %7246
  %7248 = vrot.lane.b32.xlu0 %v7165, 20
  %v7249 = vpop.permute.xlu0 %7248
  %7250 = vrot.lane.b32.xlu0 %v7166, 20
  %v7251 = vpop.permute.xlu0 %7250
  %7252 = vrot.lane.b32.xlu0 %v7167, 20
  %v7253 = vpop.permute.xlu0 %7252
  %7254 = vrot.lane.b32.xlu0 %v7168, 20
  %v7255 = vpop.permute.xlu0 %7254
  %7256 = vrot.lane.b32.xlu0 %v7169, 20
  %v7257 = vpop.permute.xlu0 %7256
  %7258 = vrot.lane.b32.xlu0 %v7170, 20
  %v7259 = vpop.permute.xlu0 %7258
  %7260 = vrot.lane.b32.xlu0 %v7171, 20
  %v7261 = vpop.permute.xlu0 %7260
  %7262 = vrot.lane.b32.xlu0 %v7172, 20
  %v7263 = vpop.permute.xlu0 %7262
  %7264 = vrot.lane.b32.xlu0 %v7173, 20
  %v7265 = vpop.permute.xlu0 %7264
  %7266 = vrot.lane.b32.xlu0 %v7174, 20
  %v7267 = vpop.permute.xlu0 %7266
  %7268 = vrot.lane.b32.xlu0 %v7175, 20
  %v7269 = vpop.permute.xlu0 %7268
  %7270 = vrot.lane.b32.xlu0 %v7176, 20
  %v7271 = vpop.permute.xlu0 %7270
  %7272 = vrot.lane.b32.xlu0 %v7177, 20
  %v7273 = vpop.permute.xlu0 %7272
  %7306 = vst.msk [vmem:[#allocation4] sm:$0xff] %vm1169, %v7211
  %7307 = vst.msk [vmem:[#allocation4 + $0x8] sm:$0xff] %vm1169, %v7213
  %7308 = vst.msk [vmem:[#allocation4 + $0x10] sm:$0xff] %vm1169, %v7215
  %7309 = vst.msk [vmem:[#allocation4 + $0x18] sm:$0xff] %vm1169, %v7217
  %7310 = vst.msk [vmem:[#allocation4 + $0x20] sm:$0xff] %vm1169, %v7219
  %7311 = vst.msk [vmem:[#allocation4 + $0x28] sm:$0xff] %vm1169, %v7221
  %7312 = vst.msk [vmem:[#allocation4 + $0x30] sm:$0xff] %vm1169, %v7223
  %7313 = vst.msk [vmem:[#allocation4 + $0x38] sm:$0xff] %vm1169, %v7225
  %7314 = vst.msk [vmem:[#allocation4 + $0x40] sm:$0xff] %vm1169, %v7227
  %7315 = vst.msk [vmem:[#allocation4 + $0x48] sm:$0xff] %vm1169, %v7229
  %7316 = vst.msk [vmem:[#allocation4 + $0x50] sm:$0xff] %vm1169, %v7231
  %7317 = vst.msk [vmem:[#allocation4 + $0x58] sm:$0xff] %vm1169, %v7233
  %7318 = vst.msk [vmem:[#allocation4 + $0x60] sm:$0xff] %vm1169, %v7235
  %7319 = vst.msk [vmem:[#allocation4 + $0x68] sm:$0xff] %vm1169, %v7237
  %7320 = vst.msk [vmem:[#allocation4 + $0x70] sm:$0xff] %vm1169, %v7239
  %7321 = vst.msk [vmem:[#allocation4 + $0x78] sm:$0xff] %vm1169, %v7241
  %7322 = vst.msk [vmem:[#allocation4 + $0x80] sm:$0xff] %vm1169, %v7243
  %7323 = vst.msk [vmem:[#allocation4 + $0x88] sm:$0xff] %vm1169, %v7245
  %7324 = vst.msk [vmem:[#allocation4 + $0x90] sm:$0xff] %vm1169, %v7247
  %7325 = vst.msk [vmem:[#allocation4 + $0x98] sm:$0xff] %vm1169, %v7249
  %7326 = vst.msk [vmem:[#allocation4 + $0xa0] sm:$0xff] %vm1169, %v7251
  %7327 = vst.msk [vmem:[#allocation4 + $0xa8] sm:$0xff] %vm1169, %v7253
  %7328 = vst.msk [vmem:[#allocation4 + $0xb0] sm:$0xff] %vm1169, %v7255
  %7329 = vst.msk [vmem:[#allocation4 + $0xb8] sm:$0xff] %vm1169, %v7257
  %7330 = vst.msk [vmem:[#allocation4 + $0xc0] sm:$0xff] %vm1169, %v7259
  %7331 = vst.msk [vmem:[#allocation4 + $0xc8] sm:$0xff] %vm1169, %v7261
  %7332 = vst.msk [vmem:[#allocation4 + $0xd0] sm:$0xff] %vm1169, %v7263
  %7333 = vst.msk [vmem:[#allocation4 + $0xd8] sm:$0xff] %vm1169, %v7265
  %7334 = vst.msk [vmem:[#allocation4 + $0xe0] sm:$0xff] %vm1169, %v7267
  %7335 = vst.msk [vmem:[#allocation4 + $0xe8] sm:$0xff] %vm1169, %v7269
  %7336 = vst.msk [vmem:[#allocation4 + $0xf0] sm:$0xff] %vm1169, %v7271
  %7337 = vst.msk [vmem:[#allocation4 + $0xf8] sm:$0xff] %vm1169, %v7273
  %v7338 = vld [vmem:[%s3125] sm:$0xff]
  %v7339 = vld [vmem:[%s3125 + $0x8] sm:$0xff]
  %v7340 = vld [vmem:[%s3125 + $0x18] sm:$0xff]
  %v7341 = vld [vmem:[%s3125 + $0x20] sm:$0xff]
  %v7342 = vld [vmem:[%s3125 + $0x30] sm:$0xff]
  %v7343 = vld [vmem:[%s3125 + $0x38] sm:$0xff]
  %v7344 = vld [vmem:[%s3125 + $0x48] sm:$0xff]
  %v7345 = vld [vmem:[%s3125 + $0x50] sm:$0xff]
  %v7346 = vld [vmem:[%s3125 + $0x60] sm:$0xff]
  %v7347 = vld [vmem:[%s3125 + $0x68] sm:$0xff]
  %v7348 = vld [vmem:[%s3125 + $0x78] sm:$0xff]
  %v7349 = vld [vmem:[%s3125 + $0x80] sm:$0xff]
  %v7350 = vld [vmem:[%s3125 + $0x90] sm:$0xff]
  %v7351 = vld [vmem:[%s3125 + $0x98] sm:$0xff]
  %v7352 = vld [vmem:[%s3125 + $0xa8] sm:$0xff]
  %v7353 = vld [vmem:[%s3125 + $0xb0] sm:$0xff]
  %v7354 = vld [vmem:[%s3125 + $0xc0] sm:$0xff]
  %v7355 = vld [vmem:[%s3125 + $0xc8] sm:$0xff]
  %v7356 = vld [vmem:[%s3125 + $0xd8] sm:$0xff]
  %v7357 = vld [vmem:[%s3125 + $0xe0] sm:$0xff]
  %v7358 = vld [vmem:[%s3125 + $0xf0] sm:$0xff]
  %v7359 = vld [vmem:[%s3125 + $0xf8] sm:$0xff]
  %v7360 = vld [vmem:[%s3125 + $0x108] sm:$0xff]
  %v7361 = vld [vmem:[%s3125 + $0x110] sm:$0xff]
  %v7362 = vld [vmem:[%s3125 + $0x120] sm:$0xff]
  %v7363 = vld [vmem:[%s3125 + $0x128] sm:$0xff]
  %v7364 = vld [vmem:[%s3125 + $0x138] sm:$0xff]
  %v7365 = vld [vmem:[%s3125 + $0x140] sm:$0xff]
  %v7366 = vld [vmem:[%s3125 + $0x150] sm:$0xff]
  %v7367 = vld [vmem:[%s3125 + $0x158] sm:$0xff]
  %v7368 = vld [vmem:[%s3125 + $0x168] sm:$0xff]
  %v7369 = vld [vmem:[%s3125 + $0x170] sm:$0xff]
  %7402 = vrot.lane.b32.xlu0 %v7338, 24
  %v7403 = vpop.permute.xlu0 %7402
  %7404 = vrot.lane.b32.xlu0 %v7339, 24
  %v7405 = vpop.permute.xlu0 %7404
  %7406 = vrot.lane.b32.xlu0 %v7340, 24
  %v7407 = vpop.permute.xlu0 %7406
  %7408 = vrot.lane.b32.xlu0 %v7341, 24
  %v7409 = vpop.permute.xlu0 %7408
  %7410 = vrot.lane.b32.xlu0 %v7342, 24
  %v7411 = vpop.permute.xlu0 %7410
  %7412 = vrot.lane.b32.xlu0 %v7343, 24
  %v7413 = vpop.permute.xlu0 %7412
  %7414 = vrot.lane.b32.xlu0 %v7344, 24
  %v7415 = vpop.permute.xlu0 %7414
  %7416 = vrot.lane.b32.xlu0 %v7345, 24
  %v7417 = vpop.permute.xlu0 %7416
  %7418 = vrot.lane.b32.xlu0 %v7346, 24
  %v7419 = vpop.permute.xlu0 %7418
  %7420 = vrot.lane.b32.xlu0 %v7347, 24
  %v7421 = vpop.permute.xlu0 %7420
  %7422 = vrot.lane.b32.xlu0 %v7348, 24
  %v7423 = vpop.permute.xlu0 %7422
  %7424 = vrot.lane.b32.xlu0 %v7349, 24
  %v7425 = vpop.permute.xlu0 %7424
  %7426 = vrot.lane.b32.xlu0 %v7350, 24
  %v7427 = vpop.permute.xlu0 %7426
  %7428 = vrot.lane.b32.xlu0 %v7351, 24
  %v7429 = vpop.permute.xlu0 %7428
  %7430 = vrot.lane.b32.xlu0 %v7352, 24
  %v7431 = vpop.permute.xlu0 %7430
  %7432 = vrot.lane.b32.xlu0 %v7353, 24
  %v7433 = vpop.permute.xlu0 %7432
  %7434 = vrot.lane.b32.xlu0 %v7354, 24
  %v7435 = vpop.permute.xlu0 %7434
  %7436 = vrot.lane.b32.xlu0 %v7355, 24
  %v7437 = vpop.permute.xlu0 %7436
  %7438 = vrot.lane.b32.xlu0 %v7356, 24
  %v7439 = vpop.permute.xlu0 %7438
  %7440 = vrot.lane.b32.xlu0 %v7357, 24
  %v7441 = vpop.permute.xlu0 %7440
  %7442 = vrot.lane.b32.xlu0 %v7358, 24
  %v7443 = vpop.permute.xlu0 %7442
  %7444 = vrot.lane.b32.xlu0 %v7359, 24
  %v7445 = vpop.permute.xlu0 %7444
  %7446 = vrot.lane.b32.xlu0 %v7360, 24
  %v7447 = vpop.permute.xlu0 %7446
  %7448 = vrot.lane.b32.xlu0 %v7361, 24
  %v7449 = vpop.permute.xlu0 %7448
  %7450 = vrot.lane.b32.xlu0 %v7362, 24
  %v7451 = vpop.permute.xlu0 %7450
  %7452 = vrot.lane.b32.xlu0 %v7363, 24
  %v7453 = vpop.permute.xlu0 %7452
  %7454 = vrot.lane.b32.xlu0 %v7364, 24
  %v7455 = vpop.permute.xlu0 %7454
  %7456 = vrot.lane.b32.xlu0 %v7365, 24
  %v7457 = vpop.permute.xlu0 %7456
  %7458 = vrot.lane.b32.xlu0 %v7366, 24
  %v7459 = vpop.permute.xlu0 %7458
  %7460 = vrot.lane.b32.xlu0 %v7367, 24
  %v7461 = vpop.permute.xlu0 %7460
  %7462 = vrot.lane.b32.xlu0 %v7368, 24
  %v7463 = vpop.permute.xlu0 %7462
  %7464 = vrot.lane.b32.xlu0 %v7369, 24
  %v7465 = vpop.permute.xlu0 %7464
  %7498 = vst.msk [vmem:[#allocation4] sm:$0xff] %vm1363, %v7403
  %7499 = vst.msk [vmem:[#allocation4 + $0x8] sm:$0xff] %vm1363, %v7405
  %7500 = vst.msk [vmem:[#allocation4 + $0x10] sm:$0xff] %vm1363, %v7407
  %7501 = vst.msk [vmem:[#allocation4 + $0x18] sm:$0xff] %vm1363, %v7409
  %7502 = vst.msk [vmem:[#allocation4 + $0x20] sm:$0xff] %vm1363, %v7411
  %7503 = vst.msk [vmem:[#allocation4 + $0x28] sm:$0xff] %vm1363, %v7413
  %7504 = vst.msk [vmem:[#allocation4 + $0x30] sm:$0xff] %vm1363, %v7415
  %7505 = vst.msk [vmem:[#allocation4 + $0x38] sm:$0xff] %vm1363, %v7417
  %7506 = vst.msk [vmem:[#allocation4 + $0x40] sm:$0xff] %vm1363, %v7419
  %7507 = vst.msk [vmem:[#allocation4 + $0x48] sm:$0xff] %vm1363, %v7421
  %7508 = vst.msk [vmem:[#allocation4 + $0x50] sm:$0xff] %vm1363, %v7423
  %7509 = vst.msk [vmem:[#allocation4 + $0x58] sm:$0xff] %vm1363, %v7425
  %7510 = vst.msk [vmem:[#allocation4 + $0x60] sm:$0xff] %vm1363, %v7427
  %7511 = vst.msk [vmem:[#allocation4 + $0x68] sm:$0xff] %vm1363, %v7429
  %7512 = vst.msk [vmem:[#allocation4 + $0x70] sm:$0xff] %vm1363, %v7431
  %7513 = vst.msk [vmem:[#allocation4 + $0x78] sm:$0xff] %vm1363, %v7433
  %7514 = vst.msk [vmem:[#allocation4 + $0x80] sm:$0xff] %vm1363, %v7435
  %7515 = vst.msk [vmem:[#allocation4 + $0x88] sm:$0xff] %vm1363, %v7437
  %7516 = vst.msk [vmem:[#allocation4 + $0x90] sm:$0xff] %vm1363, %v7439
  %7517 = vst.msk [vmem:[#allocation4 + $0x98] sm:$0xff] %vm1363, %v7441
  %7518 = vst.msk [vmem:[#allocation4 + $0xa0] sm:$0xff] %vm1363, %v7443
  %7519 = vst.msk [vmem:[#allocation4 + $0xa8] sm:$0xff] %vm1363, %v7445
  %7520 = vst.msk [vmem:[#allocation4 + $0xb0] sm:$0xff] %vm1363, %v7447
  %7521 = vst.msk [vmem:[#allocation4 + $0xb8] sm:$0xff] %vm1363, %v7449
  %7522 = vst.msk [vmem:[#allocation4 + $0xc0] sm:$0xff] %vm1363, %v7451
  %7523 = vst.msk [vmem:[#allocation4 + $0xc8] sm:$0xff] %vm1363, %v7453
  %7524 = vst.msk [vmem:[#allocation4 + $0xd0] sm:$0xff] %vm1363, %v7455
  %7525 = vst.msk [vmem:[#allocation4 + $0xd8] sm:$0xff] %vm1363, %v7457
  %7526 = vst.msk [vmem:[#allocation4 + $0xe0] sm:$0xff] %vm1363, %v7459
  %7527 = vst.msk [vmem:[#allocation4 + $0xe8] sm:$0xff] %vm1363, %v7461
  %7528 = vst.msk [vmem:[#allocation4 + $0xf0] sm:$0xff] %vm1363, %v7463
  %7529 = vst.msk [vmem:[#allocation4 + $0xf8] sm:$0xff] %vm1363, %v7465
  %v7530 = vld [vmem:[%s3125 + $0x1] sm:$0xff]
  %v7531 = vld [vmem:[%s3125 + $0x9] sm:$0xff]
  %v7532 = vld [vmem:[%s3125 + $0x19] sm:$0xff]
  %v7533 = vld [vmem:[%s3125 + $0x21] sm:$0xff]
  %v7534 = vld [vmem:[%s3125 + $0x31] sm:$0xff]
  %v7535 = vld [vmem:[%s3125 + $0x39] sm:$0xff]
  %v7536 = vld [vmem:[%s3125 + $0x49] sm:$0xff]
  %v7537 = vld [vmem:[%s3125 + $0x51] sm:$0xff]
  %v7538 = vld [vmem:[%s3125 + $0x61] sm:$0xff]
  %v7539 = vld [vmem:[%s3125 + $0x69] sm:$0xff]
  %v7540 = vld [vmem:[%s3125 + $0x79] sm:$0xff]
  %v7541 = vld [vmem:[%s3125 + $0x81] sm:$0xff]
  %v7542 = vld [vmem:[%s3125 + $0x91] sm:$0xff]
  %v7543 = vld [vmem:[%s3125 + $0x99] sm:$0xff]
  %v7544 = vld [vmem:[%s3125 + $0xa9] sm:$0xff]
  %v7545 = vld [vmem:[%s3125 + $0xb1] sm:$0xff]
  %v7546 = vld [vmem:[%s3125 + $0xc1] sm:$0xff]
  %v7547 = vld [vmem:[%s3125 + $0xc9] sm:$0xff]
  %v7548 = vld [vmem:[%s3125 + $0xd9] sm:$0xff]
  %v7549 = vld [vmem:[%s3125 + $0xe1] sm:$0xff]
  %v7550 = vld [vmem:[%s3125 + $0xf1] sm:$0xff]
  %v7551 = vld [vmem:[%s3125 + $0xf9] sm:$0xff]
  %v7552 = vld [vmem:[%s3125 + $0x109] sm:$0xff]
  %v7553 = vld [vmem:[%s3125 + $0x111] sm:$0xff]
  %v7554 = vld [vmem:[%s3125 + $0x121] sm:$0xff]
  %v7555 = vld [vmem:[%s3125 + $0x129] sm:$0xff]
  %v7556 = vld [vmem:[%s3125 + $0x139] sm:$0xff]
  %v7557 = vld [vmem:[%s3125 + $0x141] sm:$0xff]
  %v7558 = vld [vmem:[%s3125 + $0x151] sm:$0xff]
  %v7559 = vld [vmem:[%s3125 + $0x159] sm:$0xff]
  %v7560 = vld [vmem:[%s3125 + $0x169] sm:$0xff]
  %v7561 = vld [vmem:[%s3125 + $0x171] sm:$0xff]
  %7594 = vrot.lane.b32.xlu0 %v7530, 28
  %v7595 = vpop.permute.xlu0 %7594
  %7596 = vrot.lane.b32.xlu0 %v7531, 28
  %v7597 = vpop.permute.xlu0 %7596
  %7598 = vrot.lane.b32.xlu0 %v7532, 28
  %v7599 = vpop.permute.xlu0 %7598
  %7600 = vrot.lane.b32.xlu0 %v7533, 28
  %v7601 = vpop.permute.xlu0 %7600
  %7602 = vrot.lane.b32.xlu0 %v7534, 28
  %v7603 = vpop.permute.xlu0 %7602
  %7604 = vrot.lane.b32.xlu0 %v7535, 28
  %v7605 = vpop.permute.xlu0 %7604
  %7606 = vrot.lane.b32.xlu0 %v7536, 28
  %v7607 = vpop.permute.xlu0 %7606
  %7608 = vrot.lane.b32.xlu0 %v7537, 28
  %v7609 = vpop.permute.xlu0 %7608
  %7610 = vrot.lane.b32.xlu0 %v7538, 28
  %v7611 = vpop.permute.xlu0 %7610
  %7612 = vrot.lane.b32.xlu0 %v7539, 28
  %v7613 = vpop.permute.xlu0 %7612
  %7614 = vrot.lane.b32.xlu0 %v7540, 28
  %v7615 = vpop.permute.xlu0 %7614
  %7616 = vrot.lane.b32.xlu0 %v7541, 28
  %v7617 = vpop.permute.xlu0 %7616
  %7618 = vrot.lane.b32.xlu0 %v7542, 28
  %v7619 = vpop.permute.xlu0 %7618
  %7620 = vrot.lane.b32.xlu0 %v7543, 28
  %v7621 = vpop.permute.xlu0 %7620
  %7622 = vrot.lane.b32.xlu0 %v7544, 28
  %v7623 = vpop.permute.xlu0 %7622
  %7624 = vrot.lane.b32.xlu0 %v7545, 28
  %v7625 = vpop.permute.xlu0 %7624
  %7626 = vrot.lane.b32.xlu0 %v7546, 28
  %v7627 = vpop.permute.xlu0 %7626
  %7628 = vrot.lane.b32.xlu0 %v7547, 28
  %v7629 = vpop.permute.xlu0 %7628
  %7630 = vrot.lane.b32.xlu0 %v7548, 28
  %v7631 = vpop.permute.xlu0 %7630
  %7632 = vrot.lane.b32.xlu0 %v7549, 28
  %v7633 = vpop.permute.xlu0 %7632
  %7634 = vrot.lane.b32.xlu0 %v7550, 28
  %v7635 = vpop.permute.xlu0 %7634
  %7636 = vrot.lane.b32.xlu0 %v7551, 28
  %v7637 = vpop.permute.xlu0 %7636
  %7638 = vrot.lane.b32.xlu0 %v7552, 28
  %v7639 = vpop.permute.xlu0 %7638
  %7640 = vrot.lane.b32.xlu0 %v7553, 28
  %v7641 = vpop.permute.xlu0 %7640
  %7642 = vrot.lane.b32.xlu0 %v7554, 28
  %v7643 = vpop.permute.xlu0 %7642
  %7644 = vrot.lane.b32.xlu0 %v7555, 28
  %v7645 = vpop.permute.xlu0 %7644
  %7646 = vrot.lane.b32.xlu0 %v7556, 28
  %v7647 = vpop.permute.xlu0 %7646
  %7648 = vrot.lane.b32.xlu0 %v7557, 28
  %v7649 = vpop.permute.xlu0 %7648
  %7650 = vrot.lane.b32.xlu0 %v7558, 28
  %v7651 = vpop.permute.xlu0 %7650
  %7652 = vrot.lane.b32.xlu0 %v7559, 28
  %v7653 = vpop.permute.xlu0 %7652
  %7654 = vrot.lane.b32.xlu0 %v7560, 28
  %v7655 = vpop.permute.xlu0 %7654
  %7656 = vrot.lane.b32.xlu0 %v7561, 28
  %v7657 = vpop.permute.xlu0 %7656
  %7690 = vst.msk [vmem:[#allocation4] sm:$0xff] %vm1556, %v7595
  %7691 = vst.msk [vmem:[#allocation4 + $0x8] sm:$0xff] %vm1556, %v7597
  %7692 = vst.msk [vmem:[#allocation4 + $0x10] sm:$0xff] %vm1556, %v7599
  %7693 = vst.msk [vmem:[#allocation4 + $0x18] sm:$0xff] %vm1556, %v7601
  %7694 = vst.msk [vmem:[#allocation4 + $0x20] sm:$0xff] %vm1556, %v7603
  %7695 = vst.msk [vmem:[#allocation4 + $0x28] sm:$0xff] %vm1556, %v7605
  %7696 = vst.msk [vmem:[#allocation4 + $0x30] sm:$0xff] %vm1556, %v7607
  %7697 = vst.msk [vmem:[#allocation4 + $0x38] sm:$0xff] %vm1556, %v7609
  %7698 = vst.msk [vmem:[#allocation4 + $0x40] sm:$0xff] %vm1556, %v7611
  %7699 = vst.msk [vmem:[#allocation4 + $0x48] sm:$0xff] %vm1556, %v7613
  %7700 = vst.msk [vmem:[#allocation4 + $0x50] sm:$0xff] %vm1556, %v7615
  %7701 = vst.msk [vmem:[#allocation4 + $0x58] sm:$0xff] %vm1556, %v7617
  %7702 = vst.msk [vmem:[#allocation4 + $0x60] sm:$0xff] %vm1556, %v7619
  %7703 = vst.msk [vmem:[#allocation4 + $0x68] sm:$0xff] %vm1556, %v7621
  %7704 = vst.msk [vmem:[#allocation4 + $0x70] sm:$0xff] %vm1556, %v7623
  %7705 = vst.msk [vmem:[#allocation4 + $0x78] sm:$0xff] %vm1556, %v7625
  %7706 = vst.msk [vmem:[#allocation4 + $0x80] sm:$0xff] %vm1556, %v7627
  %7707 = vst.msk [vmem:[#allocation4 + $0x88] sm:$0xff] %vm1556, %v7629
  %7708 = vst.msk [vmem:[#allocation4 + $0x90] sm:$0xff] %vm1556, %v7631
  %7709 = vst.msk [vmem:[#allocation4 + $0x98] sm:$0xff] %vm1556, %v7633
  %7710 = vst.msk [vmem:[#allocation4 + $0xa0] sm:$0xff] %vm1556, %v7635
  %7711 = vst.msk [vmem:[#allocation4 + $0xa8] sm:$0xff] %vm1556, %v7637
  %7712 = vst.msk [vmem:[#allocation4 + $0xb0] sm:$0xff] %vm1556, %v7639
  %7713 = vst.msk [vmem:[#allocation4 + $0xb8] sm:$0xff] %vm1556, %v7641
  %7714 = vst.msk [vmem:[#allocation4 + $0xc0] sm:$0xff] %vm1556, %v7643
  %7715 = vst.msk [vmem:[#allocation4 + $0xc8] sm:$0xff] %vm1556, %v7645
  %7716 = vst.msk [vmem:[#allocation4 + $0xd0] sm:$0xff] %vm1556, %v7647
  %7717 = vst.msk [vmem:[#allocation4 + $0xd8] sm:$0xff] %vm1556, %v7649
  %7718 = vst.msk [vmem:[#allocation4 + $0xe0] sm:$0xff] %vm1556, %v7651
  %7719 = vst.msk [vmem:[#allocation4 + $0xe8] sm:$0xff] %vm1556, %v7653
  %7720 = vst.msk [vmem:[#allocation4 + $0xf0] sm:$0xff] %vm1556, %v7655
  %7721 = vst.msk [vmem:[#allocation4 + $0xf8] sm:$0xff] %vm1556, %v7657
  %v7722 = vld [vmem:[%s3125 + $0x2] sm:$0xff]
  %v7723 = vld [vmem:[%s3125 + $0xa] sm:$0xff]
  %v7724 = vld [vmem:[%s3125 + $0x1a] sm:$0xff]
  %v7725 = vld [vmem:[%s3125 + $0x22] sm:$0xff]
  %v7726 = vld [vmem:[%s3125 + $0x32] sm:$0xff]
  %v7727 = vld [vmem:[%s3125 + $0x3a] sm:$0xff]
  %v7728 = vld [vmem:[%s3125 + $0x4a] sm:$0xff]
  %v7729 = vld [vmem:[%s3125 + $0x52] sm:$0xff]
  %v7730 = vld [vmem:[%s3125 + $0x62] sm:$0xff]
  %v7731 = vld [vmem:[%s3125 + $0x6a] sm:$0xff]
  %v7732 = vld [vmem:[%s3125 + $0x7a] sm:$0xff]
  %v7733 = vld [vmem:[%s3125 + $0x82] sm:$0xff]
  %v7734 = vld [vmem:[%s3125 + $0x92] sm:$0xff]
  %v7735 = vld [vmem:[%s3125 + $0x9a] sm:$0xff]
  %v7736 = vld [vmem:[%s3125 + $0xaa] sm:$0xff]
  %v7737 = vld [vmem:[%s3125 + $0xb2] sm:$0xff]
  %v7738 = vld [vmem:[%s3125 + $0xc2] sm:$0xff]
  %v7739 = vld [vmem:[%s3125 + $0xca] sm:$0xff]
  %v7740 = vld [vmem:[%s3125 + $0xda] sm:$0xff]
  %v7741 = vld [vmem:[%s3125 + $0xe2] sm:$0xff]
  %v7742 = vld [vmem:[%s3125 + $0xf2] sm:$0xff]
  %v7743 = vld [vmem:[%s3125 + $0xfa] sm:$0xff]
  %v7744 = vld [vmem:[%s3125 + $0x10a] sm:$0xff]
  %v7745 = vld [vmem:[%s3125 + $0x112] sm:$0xff]
  %v7746 = vld [vmem:[%s3125 + $0x122] sm:$0xff]
  %v7747 = vld [vmem:[%s3125 + $0x12a] sm:$0xff]
  %v7748 = vld [vmem:[%s3125 + $0x13a] sm:$0xff]
  %v7749 = vld [vmem:[%s3125 + $0x142] sm:$0xff]
  %v7750 = vld [vmem:[%s3125 + $0x152] sm:$0xff]
  %v7751 = vld [vmem:[%s3125 + $0x15a] sm:$0xff]
  %v7752 = vld [vmem:[%s3125 + $0x16a] sm:$0xff]
  %v7753 = vld [vmem:[%s3125 + $0x172] sm:$0xff]
  %7786 = vrot.lane.b32.xlu0 %v7722, 32
  %v7787 = vpop.permute.xlu0 %7786
  %7788 = vrot.lane.b32.xlu0 %v7723, 32
  %v7789 = vpop.permute.xlu0 %7788
  %7790 = vrot.lane.b32.xlu0 %v7724, 32
  %v7791 = vpop.permute.xlu0 %7790
  %7792 = vrot.lane.b32.xlu0 %v7725, 32
  %v7793 = vpop.permute.xlu0 %7792
  %7794 = vrot.lane.b32.xlu0 %v7726, 32
  %v7795 = vpop.permute.xlu0 %7794
  %7796 = vrot.lane.b32.xlu0 %v7727, 32
  %v7797 = vpop.permute.xlu0 %7796
  %7798 = vrot.lane.b32.xlu0 %v7728, 32
  %v7799 = vpop.permute.xlu0 %7798
  %7800 = vrot.lane.b32.xlu0 %v7729, 32
  %v7801 = vpop.permute.xlu0 %7800
  %7802 = vrot.lane.b32.xlu0 %v7730, 32
  %v7803 = vpop.permute.xlu0 %7802
  %7804 = vrot.lane.b32.xlu0 %v7731, 32
  %v7805 = vpop.permute.xlu0 %7804
  %7806 = vrot.lane.b32.xlu0 %v7732, 32
  %v7807 = vpop.permute.xlu0 %7806
  %7808 = vrot.lane.b32.xlu0 %v7733, 32
  %v7809 = vpop.permute.xlu0 %7808
  %7810 = vrot.lane.b32.xlu0 %v7734, 32
  %v7811 = vpop.permute.xlu0 %7810
  %7812 = vrot.lane.b32.xlu0 %v7735, 32
  %v7813 = vpop.permute.xlu0 %7812
  %7814 = vrot.lane.b32.xlu0 %v7736, 32
  %v7815 = vpop.permute.xlu0 %7814
  %7816 = vrot.lane.b32.xlu0 %v7737, 32
  %v7817 = vpop.permute.xlu0 %7816
  %7818 = vrot.lane.b32.xlu0 %v7738, 32
  %v7819 = vpop.permute.xlu0 %7818
  %7820 = vrot.lane.b32.xlu0 %v7739, 32
  %v7821 = vpop.permute.xlu0 %7820
  %7822 = vrot.lane.b32.xlu0 %v7740, 32
  %v7823 = vpop.permute.xlu0 %7822
  %7824 = vrot.lane.b32.xlu0 %v7741, 32
  %v7825 = vpop.permute.xlu0 %7824
  %7826 = vrot.lane.b32.xlu0 %v7742, 32
  %v7827 = vpop.permute.xlu0 %7826
  %7828 = vrot.lane.b32.xlu0 %v7743, 32
  %v7829 = vpop.permute.xlu0 %7828
  %7830 = vrot.lane.b32.xlu0 %v7744, 32
  %v7831 = vpop.permute.xlu0 %7830
  %7832 = vrot.lane.b32.xlu0 %v7745, 32
  %v7833 = vpop.permute.xlu0 %7832
  %7834 = vrot.lane.b32.xlu0 %v7746, 32
  %v7835 = vpop.permute.xlu0 %7834
  %7836 = vrot.lane.b32.xlu0 %v7747, 32
  %v7837 = vpop.permute.xlu0 %7836
  %7838 = vrot.lane.b32.xlu0 %v7748, 32
  %v7839 = vpop.permute.xlu0 %7838
  %7840 = vrot.lane.b32.xlu0 %v7749, 32
  %v7841 = vpop.permute.xlu0 %7840
  %7842 = vrot.lane.b32.xlu0 %v7750, 32
  %v7843 = vpop.permute.xlu0 %7842
  %7844 = vrot.lane.b32.xlu0 %v7751, 32
  %v7845 = vpop.permute.xlu0 %7844
  %7846 = vrot.lane.b32.xlu0 %v7752, 32
  %v7847 = vpop.permute.xlu0 %7846
  %7848 = vrot.lane.b32.xlu0 %v7753, 32
  %v7849 = vpop.permute.xlu0 %7848
  %7882 = vst.msk [vmem:[#allocation4] sm:$0xff] %vm1749, %v7787
  %7883 = vst.msk [vmem:[#allocation4 + $0x8] sm:$0xff] %vm1749, %v7789
  %7884 = vst.msk [vmem:[#allocation4 + $0x10] sm:$0xff] %vm1749, %v7791
  %7885 = vst.msk [vmem:[#allocation4 + $0x18] sm:$0xff] %vm1749, %v7793
  %7886 = vst.msk [vmem:[#allocation4 + $0x20] sm:$0xff] %vm1749, %v7795
  %7887 = vst.msk [vmem:[#allocation4 + $0x28] sm:$0xff] %vm1749, %v7797
  %7888 = vst.msk [vmem:[#allocation4 + $0x30] sm:$0xff] %vm1749, %v7799
  %7889 = vst.msk [vmem:[#allocation4 + $0x38] sm:$0xff] %vm1749, %v7801
  %7890 = vst.msk [vmem:[#allocation4 + $0x40] sm:$0xff] %vm1749, %v7803
  %7891 = vst.msk [vmem:[#allocation4 + $0x48] sm:$0xff] %vm1749, %v7805
  %7892 = vst.msk [vmem:[#allocation4 + $0x50] sm:$0xff] %vm1749, %v7807
  %7893 = vst.msk [vmem:[#allocation4 + $0x58] sm:$0xff] %vm1749, %v7809
  %7894 = vst.msk [vmem:[#allocation4 + $0x60] sm:$0xff] %vm1749, %v7811
  %7895 = vst.msk [vmem:[#allocation4 + $0x68] sm:$0xff] %vm1749, %v7813
  %7896 = vst.msk [vmem:[#allocation4 + $0x70] sm:$0xff] %vm1749, %v7815
  %7897 = vst.msk [vmem:[#allocation4 + $0x78] sm:$0xff] %vm1749, %v7817
  %7898 = vst.msk [vmem:[#allocation4 + $0x80] sm:$0xff] %vm1749, %v7819
  %7899 = vst.msk [vmem:[#allocation4 + $0x88] sm:$0xff] %vm1749, %v7821
  %7900 = vst.msk [vmem:[#allocation4 + $0x90] sm:$0xff] %vm1749, %v7823
  %7901 = vst.msk [vmem:[#allocation4 + $0x98] sm:$0xff] %vm1749, %v7825
  %7902 = vst.msk [vmem:[#allocation4 + $0xa0] sm:$0xff] %vm1749, %v7827
  %7903 = vst.msk [vmem:[#allocation4 + $0xa8] sm:$0xff] %vm1749, %v7829
  %7904 = vst.msk [vmem:[#allocation4 + $0xb0] sm:$0xff] %vm1749, %v7831
  %7905 = vst.msk [vmem:[#allocation4 + $0xb8] sm:$0xff] %vm1749, %v7833
  %7906 = vst.msk [vmem:[#allocation4 + $0xc0] sm:$0xff] %vm1749, %v7835
  %7907 = vst.msk [vmem:[#allocation4 + $0xc8] sm:$0xff] %vm1749, %v7837
  %7908 = vst.msk [vmem:[#allocation4 + $0xd0] sm:$0xff] %vm1749, %v7839
  %7909 = vst.msk [vmem:[#allocation4 + $0xd8] sm:$0xff] %vm1749, %v7841
  %7910 = vst.msk [vmem:[#allocation4 + $0xe0] sm:$0xff] %vm1749, %v7843
  %7911 = vst.msk [vmem:[#allocation4 + $0xe8] sm:$0xff] %vm1749, %v7845
  %7912 = vst.msk [vmem:[#allocation4 + $0xf0] sm:$0xff] %vm1749, %v7847
  %7913 = vst.msk [vmem:[#allocation4 + $0xf8] sm:$0xff] %vm1749, %v7849
  %v7914 = vld [vmem:[#allocation4] sm:$0xff]
  %v7915 = vld [vmem:[#allocation4 + $0x8] sm:$0xff]
  %v7916 = vld [vmem:[#allocation4 + $0x10] sm:$0xff]
  %v7917 = vld [vmem:[#allocation4 + $0x18] sm:$0xff]
  %v7918 = vld [vmem:[#allocation4 + $0x20] sm:$0xff]
  %v7919 = vld [vmem:[#allocation4 + $0x28] sm:$0xff]
  %v7920 = vld [vmem:[#allocation4 + $0x30] sm:$0xff]
  %v7921 = vld [vmem:[#allocation4 + $0x38] sm:$0xff]
  %v7922 = vld [vmem:[#allocation4 + $0x40] sm:$0xff]
  %v7923 = vld [vmem:[#allocation4 + $0x48] sm:$0xff]
  %v7924 = vld [vmem:[#allocation4 + $0x50] sm:$0xff]
  %v7925 = vld [vmem:[#allocation4 + $0x58] sm:$0xff]
  %v7926 = vld [vmem:[#allocation4 + $0x60] sm:$0xff]
  %v7927 = vld [vmem:[#allocation4 + $0x68] sm:$0xff]
  %v7928 = vld [vmem:[#allocation4 + $0x70] sm:$0xff]
  %v7929 = vld [vmem:[#allocation4 + $0x78] sm:$0xff]
  %v7930 = vld [vmem:[#allocation4 + $0x80] sm:$0xff]
  %v7931 = vld [vmem:[#allocation4 + $0x88] sm:$0xff]
  %v7932 = vld [vmem:[#allocation4 + $0x90] sm:$0xff]
  %v7933 = vld [vmem:[#allocation4 + $0x98] sm:$0xff]
  %v7934 = vld [vmem:[#allocation4 + $0xa0] sm:$0xff]
  %v7935 = vld [vmem:[#allocation4 + $0xa8] sm:$0xff]
  %v7936 = vld [vmem:[#allocation4 + $0xb0] sm:$0xff]
  %v7937 = vld [vmem:[#allocation4 + $0xb8] sm:$0xff]
  %v7938 = vld [vmem:[#allocation4 + $0xc0] sm:$0xff]
  %v7939 = vld [vmem:[#allocation4 + $0xc8] sm:$0xff]
  %v7940 = vld [vmem:[#allocation4 + $0xd0] sm:$0xff]
  %v7941 = vld [vmem:[#allocation4 + $0xd8] sm:$0xff]
  %v7942 = vld [vmem:[#allocation4 + $0xe0] sm:$0xff]
  %v7943 = vld [vmem:[#allocation4 + $0xe8] sm:$0xff]
  %v7944 = vld [vmem:[#allocation4 + $0xf0] sm:$0xff]
  %v7945 = vld [vmem:[#allocation4 + $0xf8] sm:$0xff]
  %v7946 = vld [vmem:[%s3] sm:$0xff]
  %v7947 = vld [vmem:[%s3 + $0x8] sm:$0xff]
  %v7948 = vld [vmem:[%s3 + $0x10] sm:$0xff]
  %v7949 = vld [vmem:[%s3 + $0x18] sm:$0xff]
  %v7950 = vld [vmem:[%s3 + $0x20] sm:$0xf]
  %v7951 = vld [vmem:[%s4] sm:$0x1]
  %v7953 = vperm.slane %v7951, 0
  %v7956 = vsel %vm1823, %v7914, 0
  %v7959 = vsel %vm1823, %v7915, 0
  %v7962 = vsel %vm1823, %v7916, 0
  %v7965 = vsel %vm1823, %v7917, 0
  %v7968 = vsel %vm1823, %v7918, 0
  %v7971 = vsel %vm1823, %v7919, 0
  %v7974 = vsel %vm1823, %v7920, 0
  %v7977 = vsel %vm1823, %v7921, 0
  %v7980 = vsel %vm1823, %v7922, 0
  %v7983 = vsel %vm1823, %v7923, 0
  %v7986 = vsel %vm1823, %v7924, 0
  %v7989 = vsel %vm1823, %v7925, 0
  %v7992 = vsel %vm1823, %v7926, 0
  %v7995 = vsel %vm1823, %v7927, 0
  %v7998 = vsel %vm1823, %v7928, 0
  %v8001 = vsel %vm1823, %v7929, 0
  %v8004 = vsel %vm1823, %v7930, 0
  %v8007 = vsel %vm1823, %v7931, 0
  %v8010 = vsel %vm1823, %v7932, 0
  %v8013 = vsel %vm1823, %v7933, 0
  %v8016 = vsel %vm1823, %v7934, 0
  %v8019 = vsel %vm1823, %v7935, 0
  %v8022 = vsel %vm1823, %v7936, 0
  %v8025 = vsel %vm1823, %v7937, 0
  %v8028 = vsel %vm1823, %v7938, 0
  %v8031 = vsel %vm1823, %v7939, 0
  %v8034 = vsel %vm1823, %v7940, 0
  %v8037 = vsel %vm1823, %v7941, 0
  %v8040 = vsel %vm1823, %v7942, 0
  %v8043 = vsel %vm1823, %v7943, 0
  %v8046 = vsel %vm1823, %v7944, 0
  %v8049 = vsel %vm1823, %v7945, 0
  %v8052 = vsel %vm1920, %v7950, 0
  %8054 = vmatpush.msra.mxu0 0.0
  %8055 = vmatpush.msra.mxu0 0.0
  %8056 = vmatpush.msra.mxu0 0.0
  %8057 = vmatpush.msra.mxu0 0.0
  %8058 = vmatpush.msra.mxu0 0.0
  %8059 = vmatpush.msra.mxu0 0.0
  %8060 = vmatpush.msra.mxu0 0.0
  %8061 = vmatpush.msra.mxu0 0.0
  %8062 = vmatpush.msra.mxu0 0.0
  %8063 = vmatpush.msra.mxu0 0.0
  %8064 = vmatpush.msra.mxu0 0.0
  %8065 = vmatpush.msra.mxu0 %v8052
  %8066 = vmatpush.msra.mxu0 %v7949
  %8067 = vmatpush.msra.mxu0 %v7948
  %8068 = vmatpush.msra.mxu0 %v7947
  %8069 = vmatpush.msra.mxu0 %v7946
  %8070 = vmatmul.f32.gmra.mxu0 %v7956
  %v8071 = vpop.f32.mrf.mxu0
  %v8072 = vadd.f32 %v7953, %v8071
  %8073 = vmatmul.f32.gmra.mxu0 %v7959
  %v8074 = vpop.f32.mrf.mxu0
  %v8075 = vadd.f32 %v7953, %v8074
  %8076 = vmatmul.f32.gmra.mxu0 %v7962
  %v8077 = vpop.f32.mrf.mxu0
  %v8078 = vadd.f32 %v7953, %v8077
  %8079 = vmatmul.f32.gmra.mxu0 %v7965
  %v8080 = vpop.f32.mrf.mxu0
  %v8081 = vadd.f32 %v7953, %v8080
  %8082 = vmatmul.f32.gmra.mxu0 %v7968
  %v8083 = vpop.f32.mrf.mxu0
  %v8084 = vadd.f32 %v7953, %v8083
  %8085 = vmatmul.f32.gmra.mxu0 %v7971
  %v8086 = vpop.f32.mrf.mxu0
  %v8087 = vadd.f32 %v7953, %v8086
  %8088 = vmatmul.f32.gmra.mxu0 %v7974
  %v8089 = vpop.f32.mrf.mxu0
  %v8090 = vadd.f32 %v7953, %v8089
  %8091 = vmatmul.f32.gmra.mxu0 %v7977
  %v8092 = vpop.f32.mrf.mxu0
  %v8093 = vadd.f32 %v7953, %v8092
  %8094 = vmatmul.f32.gmra.mxu0 %v7980
  %v8095 = vpop.f32.mrf.mxu0
  %v8096 = vadd.f32 %v7953, %v8095
  %8097 = vmatmul.f32.gmra.mxu0 %v7983
  %v8098 = vpop.f32.mrf.mxu0
  %v8099 = vadd.f32 %v7953, %v8098
  %8100 = vmatmul.f32.gmra.mxu0 %v7986
  %v8101 = vpop.f32.mrf.mxu0
  %v8102 = vadd.f32 %v7953, %v8101
  %8103 = vmatmul.f32.gmra.mxu0 %v7989
  %v8104 = vpop.f32.mrf.mxu0
  %v8105 = vadd.f32 %v7953, %v8104
  %8106 = vmatmul.f32.gmra.mxu0 %v7992
  %v8107 = vpop.f32.mrf.mxu0
  %v8108 = vadd.f32 %v7953, %v8107
  %8109 = vmatmul.f32.gmra.mxu0 %v7995
  %v8110 = vpop.f32.mrf.mxu0
  %v8111 = vadd.f32 %v7953, %v8110
  %8112 = vmatmul.f32.gmra.mxu0 %v7998
  %v8113 = vpop.f32.mrf.mxu0
  %v8114 = vadd.f32 %v7953, %v8113
  %8115 = vmatmul.f32.gmra.mxu0 %v8001
  %v8116 = vpop.f32.mrf.mxu0
  %v8117 = vadd.f32 %v7953, %v8116
  %8118 = vmatmul.f32.gmra.mxu0 %v8004
  %v8119 = vpop.f32.mrf.mxu0
  %v8120 = vadd.f32 %v7953, %v8119
  %8121 = vmatmul.f32.gmra.mxu0 %v8007
  %v8122 = vpop.f32.mrf.mxu0
  %v8123 = vadd.f32 %v7953, %v8122
  %8124 = vmatmul.f32.gmra.mxu0 %v8010
  %v8125 = vpop.f32.mrf.mxu0
  %v8126 = vadd.f32 %v7953, %v8125
  %8127 = vmatmul.f32.gmra.mxu0 %v8013
  %v8128 = vpop.f32.mrf.mxu0
  %v8129 = vadd.f32 %v7953, %v8128
  %8130 = vmatmul.f32.gmra.mxu0 %v8016
  %v8131 = vpop.f32.mrf.mxu0
  %v8132 = vadd.f32 %v7953, %v8131
  %8133 = vmatmul.f32.gmra.mxu0 %v8019
  %v8134 = vpop.f32.mrf.mxu0
  %v8135 = vadd.f32 %v7953, %v8134
  %8136 = vmatmul.f32.gmra.mxu0 %v8022
  %v8137 = vpop.f32.mrf.mxu0
  %v8138 = vadd.f32 %v7953, %v8137
  %8139 = vmatmul.f32.gmra.mxu0 %v8025
  %v8140 = vpop.f32.mrf.mxu0
  %v8141 = vadd.f32 %v7953, %v8140
  %8142 = vmatmul.f32.gmra.mxu0 %v8028
  %v8143 = vpop.f32.mrf.mxu0
  %v8144 = vadd.f32 %v7953, %v8143
  %8145 = vmatmul.f32.gmra.mxu0 %v8031
  %v8146 = vpop.f32.mrf.mxu0
  %v8147 = vadd.f32 %v7953, %v8146
  %8148 = vmatmul.f32.gmra.mxu0 %v8034
  %v8149 = vpop.f32.mrf.mxu0
  %v8150 = vadd.f32 %v7953, %v8149
  %8151 = vmatmul.f32.gmra.mxu0 %v8037
  %v8152 = vpop.f32.mrf.mxu0
  %v8153 = vadd.f32 %v7953, %v8152
  %8154 = vmatmul.f32.gmra.mxu0 %v8040
  %v8155 = vpop.f32.mrf.mxu0
  %v8156 = vadd.f32 %v7953, %v8155
  %8157 = vmatmul.f32.gmra.mxu0 %v8043
  %v8158 = vpop.f32.mrf.mxu0
  %v8159 = vadd.f32 %v7953, %v8158
  %8160 = vmatmul.f32.gmra.mxu0 %v8046
  %v8161 = vpop.f32.mrf.mxu0
  %v8162 = vadd.f32 %v7953, %v8161
  %8163 = vmatmul.f32.gmra.mxu0 %v8049
  %v8164 = vpop.f32.mrf.mxu0
  %v8165 = vadd.f32 %v7953, %v8164
  %8166 = vdwg.mxu0
  %v8167 = vmax.f32 %v8072, 0.0
  %v8168 = vmax.f32 %v8075, 0.0
  %v8169 = vmax.f32 %v8078, 0.0
  %v8170 = vmax.f32 %v8081, 0.0
  %v8171 = vmax.f32 %v8084, 0.0
  %v8172 = vmax.f32 %v8087, 0.0
  %v8173 = vmax.f32 %v8090, 0.0
  %v8174 = vmax.f32 %v8093, 0.0
  %v8175 = vmax.f32 %v8096, 0.0
  %v8176 = vmax.f32 %v8099, 0.0
  %v8177 = vmax.f32 %v8102, 0.0
  %v8178 = vmax.f32 %v8105, 0.0
  %v8179 = vmax.f32 %v8108, 0.0
  %v8180 = vmax.f32 %v8111, 0.0
  %v8181 = vmax.f32 %v8114, 0.0
  %v8182 = vmax.f32 %v8117, 0.0
  %v8183 = vmax.f32 %v8120, 0.0
  %v8184 = vmax.f32 %v8123, 0.0
  %v8185 = vmax.f32 %v8126, 0.0
  %v8186 = vmax.f32 %v8129, 0.0
  %v8187 = vmax.f32 %v8132, 0.0
  %v8188 = vmax.f32 %v8135, 0.0
  %v8189 = vmax.f32 %v8138, 0.0
  %v8190 = vmax.f32 %v8141, 0.0
  %v8191 = vmax.f32 %v8144, 0.0
  %v8192 = vmax.f32 %v8147, 0.0
  %v8193 = vmax.f32 %v8150, 0.0
  %v8194 = vmax.f32 %v8153, 0.0
  %v8195 = vmax.f32 %v8156, 0.0
  %v8196 = vmax.f32 %v8159, 0.0
  %v8197 = vmax.f32 %v8162, 0.0
  %v8198 = vmax.f32 %v8165, 0.0
  %v8199 = vld [vmem:[%s5] sm:$0xf]
  %v8200 = vld [vmem:[%s6] sm:$0x1]
  %v8202 = vperm.slane %v8200, 0
  %v8205 = vsel %vm26, %v8167, 0
  %v8208 = vsel %vm26, %v8168, 0
  %v8211 = vsel %vm26, %v8169, 0
  %v8214 = vsel %vm26, %v8170, 0
  %v8217 = vsel %vm26, %v8171, 0
  %v8220 = vsel %vm26, %v8172, 0
  %v8223 = vsel %vm26, %v8173, 0
  %v8226 = vsel %vm26, %v8174, 0
  %v8229 = vsel %vm26, %v8175, 0
  %v8232 = vsel %vm26, %v8176, 0
  %v8235 = vsel %vm26, %v8177, 0
  %v8238 = vsel %vm26, %v8178, 0
  %v8241 = vsel %vm26, %v8179, 0
  %v8244 = vsel %vm26, %v8180, 0
  %v8247 = vsel %vm26, %v8181, 0
  %v8250 = vsel %vm26, %v8182, 0
  %v8253 = vsel %vm26, %v8183, 0
  %v8256 = vsel %vm26, %v8184, 0
  %v8259 = vsel %vm26, %v8185, 0
  %v8262 = vsel %vm26, %v8186, 0
  %v8265 = vsel %vm26, %v8187, 0
  %v8268 = vsel %vm26, %v8188, 0
  %v8271 = vsel %vm26, %v8189, 0
  %v8274 = vsel %vm26, %v8190, 0
  %v8277 = vsel %vm26, %v8191, 0
  %v8280 = vsel %vm26, %v8192, 0
  %v8283 = vsel %vm26, %v8193, 0
  %v8286 = vsel %vm26, %v8194, 0
  %v8289 = vsel %vm26, %v8195, 0
  %v8292 = vsel %vm26, %v8196, 0
  %v8295 = vsel %vm26, %v8197, 0
  %v8298 = vsel %vm26, %v8198, 0
  %v8301 = vsel %vm1920, %v8199, 0
  %8303 = vmatpush.msra.mxu0 0.0
  %8304 = vmatpush.msra.mxu0 0.0
  %8305 = vmatpush.msra.mxu0 0.0
  %8306 = vmatpush.msra.mxu0 0.0
  %8307 = vmatpush.msra.mxu0 0.0
  %8308 = vmatpush.msra.mxu0 0.0
  %8309 = vmatpush.msra.mxu0 0.0
  %8310 = vmatpush.msra.mxu0 0.0
  %8311 = vmatpush.msra.mxu0 0.0
  %8312 = vmatpush.msra.mxu0 0.0
  %8313 = vmatpush.msra.mxu0 0.0
  %8314 = vmatpush.msra.mxu0 0.0
  %8315 = vmatpush.msra.mxu0 0.0
  %8316 = vmatpush.msra.mxu0 0.0
  %8317 = vmatpush.msra.mxu0 0.0
  %8318 = vmatpush.msra.mxu0 %v8301
  %8319 = vmatmul.f32.gmra.mxu0 %v8205
  %v8320 = vpop.f32.mrf.mxu0
  %v8321 = vadd.f32 %v8202, %v8320
  %8322 = vmatmul.f32.gmra.mxu0 %v8208
  %v8323 = vpop.f32.mrf.mxu0
  %v8324 = vadd.f32 %v8202, %v8323
  %8325 = vmatmul.f32.gmra.mxu0 %v8211
  %v8326 = vpop.f32.mrf.mxu0
  %v8327 = vadd.f32 %v8202, %v8326
  %8328 = vmatmul.f32.gmra.mxu0 %v8214
  %v8329 = vpop.f32.mrf.mxu0
  %v8330 = vadd.f32 %v8202, %v8329
  %8331 = vmatmul.f32.gmra.mxu0 %v8217
  %v8332 = vpop.f32.mrf.mxu0
  %v8333 = vadd.f32 %v8202, %v8332
  %8334 = vmatmul.f32.gmra.mxu0 %v8220
  %v8335 = vpop.f32.mrf.mxu0
  %v8336 = vadd.f32 %v8202, %v8335
  %8337 = vmatmul.f32.gmra.mxu0 %v8223
  %v8338 = vpop.f32.mrf.mxu0
  %v8339 = vadd.f32 %v8202, %v8338
  %8340 = vmatmul.f32.gmra.mxu0 %v8226
  %v8341 = vpop.f32.mrf.mxu0
  %v8342 = vadd.f32 %v8202, %v8341
  %8343 = vmatmul.f32.gmra.mxu0 %v8229
  %v8344 = vpop.f32.mrf.mxu0
  %v8345 = vadd.f32 %v8202, %v8344
  %8346 = vmatmul.f32.gmra.mxu0 %v8232
  %v8347 = vpop.f32.mrf.mxu0
  %v8348 = vadd.f32 %v8202, %v8347
  %8349 = vmatmul.f32.gmra.mxu0 %v8235
  %v8350 = vpop.f32.mrf.mxu0
  %v8351 = vadd.f32 %v8202, %v8350
  %8352 = vmatmul.f32.gmra.mxu0 %v8238
  %v8353 = vpop.f32.mrf.mxu0
  %v8354 = vadd.f32 %v8202, %v8353
  %8355 = vmatmul.f32.gmra.mxu0 %v8241
  %v8356 = vpop.f32.mrf.mxu0
  %v8357 = vadd.f32 %v8202, %v8356
  %8358 = vmatmul.f32.gmra.mxu0 %v8244
  %v8359 = vpop.f32.mrf.mxu0
  %v8360 = vadd.f32 %v8202, %v8359
  %8361 = vmatmul.f32.gmra.mxu0 %v8247
  %v8362 = vpop.f32.mrf.mxu0
  %v8363 = vadd.f32 %v8202, %v8362
  %8364 = vmatmul.f32.gmra.mxu0 %v8250
  %v8365 = vpop.f32.mrf.mxu0
  %v8366 = vadd.f32 %v8202, %v8365
  %8367 = vmatmul.f32.gmra.mxu0 %v8253
  %v8368 = vpop.f32.mrf.mxu0
  %v8369 = vadd.f32 %v8202, %v8368
  %8370 = vmatmul.f32.gmra.mxu0 %v8256
  %v8371 = vpop.f32.mrf.mxu0
  %v8372 = vadd.f32 %v8202, %v8371
  %8373 = vmatmul.f32.gmra.mxu0 %v8259
  %v8374 = vpop.f32.mrf.mxu0
  %v8375 = vadd.f32 %v8202, %v8374
  %8376 = vmatmul.f32.gmra.mxu0 %v8262
  %v8377 = vpop.f32.mrf.mxu0
  %v8378 = vadd.f32 %v8202, %v8377
  %8379 = vmatmul.f32.gmra.mxu0 %v8265
  %v8380 = vpop.f32.mrf.mxu0
  %v8381 = vadd.f32 %v8202, %v8380
  %8382 = vmatmul.f32.gmra.mxu0 %v8268
  %v8383 = vpop.f32.mrf.mxu0
  %v8384 = vadd.f32 %v8202, %v8383
  %8385 = vmatmul.f32.gmra.mxu0 %v8271
  %v8386 = vpop.f32.mrf.mxu0
  %v8387 = vadd.f32 %v8202, %v8386
  %8388 = vmatmul.f32.gmra.mxu0 %v8274
  %v8389 = vpop.f32.mrf.mxu0
  %v8390 = vadd.f32 %v8202, %v8389
  %8391 = vmatmul.f32.gmra.mxu0 %v8277
  %v8392 = vpop.f32.mrf.mxu0
  %v8393 = vadd.f32 %v8202, %v8392
  %8394 = vmatmul.f32.gmra.mxu0 %v8280
  %v8395 = vpop.f32.mrf.mxu0
  %v8396 = vadd.f32 %v8202, %v8395
  %8397 = vmatmul.f32.gmra.mxu0 %v8283
  %v8398 = vpop.f32.mrf.mxu0
  %v8399 = vadd.f32 %v8202, %v8398
  %8400 = vmatmul.f32.gmra.mxu0 %v8286
  %v8401 = vpop.f32.mrf.mxu0
  %v8402 = vadd.f32 %v8202, %v8401
  %8403 = vmatmul.f32.gmra.mxu0 %v8289
  %v8404 = vpop.f32.mrf.mxu0
  %v8405 = vadd.f32 %v8202, %v8404
  %8406 = vmatmul.f32.gmra.mxu0 %v8292
  %v8407 = vpop.f32.mrf.mxu0
  %v8408 = vadd.f32 %v8202, %v8407
  %8409 = vmatmul.f32.gmra.mxu0 %v8295
  %v8410 = vpop.f32.mrf.mxu0
  %v8411 = vadd.f32 %v8202, %v8410
  %8412 = vmatmul.f32.gmra.mxu0 %v8298
  %v8413 = vpop.f32.mrf.mxu0
  %v8414 = vadd.f32 %v8202, %v8413
  %8415 = vdwg.mxu0
  %v8416 = vld [vmem:[%s4332] sm:$0xff]
  %v8417 = vld [vmem:[%s4332 + $0x8] sm:$0xff]
  %v8418 = vld [vmem:[%s4332 + $0x10] sm:$0xff]
  %v8419 = vld [vmem:[%s4332 + $0x18] sm:$0xff]
  %v8420 = vld [vmem:[%s4332 + $0x20] sm:$0xff]
  %v8421 = vld [vmem:[%s4332 + $0x28] sm:$0xff]
  %v8422 = vld [vmem:[%s4332 + $0x30] sm:$0xff]
  %v8423 = vld [vmem:[%s4332 + $0x38] sm:$0xff]
  %v8424 = vld [vmem:[%s4332 + $0x40] sm:$0xff]
  %v8425 = vld [vmem:[%s4332 + $0x48] sm:$0xff]
  %v8426 = vld [vmem:[%s4332 + $0x50] sm:$0xff]
  %v8427 = vld [vmem:[%s4332 + $0x58] sm:$0xff]
  %v8428 = vld [vmem:[%s4332 + $0x60] sm:$0xff]
  %v8429 = vld [vmem:[%s4332 + $0x68] sm:$0xff]
  %v8430 = vld [vmem:[%s4332 + $0x70] sm:$0xff]
  %v8431 = vld [vmem:[%s4332 + $0x78] sm:$0xff]
  %v8432 = vld [vmem:[%s4332 + $0x80] sm:$0xff]
  %v8433 = vld [vmem:[%s4332 + $0x88] sm:$0xff]
  %v8434 = vld [vmem:[%s4332 + $0x90] sm:$0xff]
  %v8435 = vld [vmem:[%s4332 + $0x98] sm:$0xff]
  %v8436 = vld [vmem:[%s4332 + $0xa0] sm:$0xff]
  %v8437 = vld [vmem:[%s4332 + $0xa8] sm:$0xff]
  %v8438 = vld [vmem:[%s4332 + $0xb0] sm:$0xff]
  %v8439 = vld [vmem:[%s4332 + $0xb8] sm:$0xff]
  %v8440 = vld [vmem:[%s4332 + $0xc0] sm:$0xff]
  %v8441 = vld [vmem:[%s4332 + $0xc8] sm:$0xff]
  %v8442 = vld [vmem:[%s4332 + $0xd0] sm:$0xff]
  %v8443 = vld [vmem:[%s4332 + $0xd8] sm:$0xff]
  %v8444 = vld [vmem:[%s4332 + $0xe0] sm:$0xff]
  %v8445 = vld [vmem:[%s4332 + $0xe8] sm:$0xff]
  %v8446 = vld [vmem:[%s4332 + $0xf0] sm:$0xff]
  %v8447 = vld [vmem:[%s4332 + $0xf8] sm:$0xff]
  %v8448 = vadd.f32 %v8321, %v8416
  %v8449 = vadd.f32 %v8324, %v8417
  %v8450 = vadd.f32 %v8327, %v8418
  %v8451 = vadd.f32 %v8330, %v8419
  %v8452 = vadd.f32 %v8333, %v8420
  %v8453 = vadd.f32 %v8336, %v8421
  %v8454 = vadd.f32 %v8339, %v8422
  %v8455 = vadd.f32 %v8342, %v8423
  %v8456 = vadd.f32 %v8345, %v8424
  %v8457 = vadd.f32 %v8348, %v8425
  %v8458 = vadd.f32 %v8351, %v8426
  %v8459 = vadd.f32 %v8354, %v8427
  %v8460 = vadd.f32 %v8357, %v8428
  %v8461 = vadd.f32 %v8360, %v8429
  %v8462 = vadd.f32 %v8363, %v8430
  %v8463 = vadd.f32 %v8366, %v8431
  %v8464 = vadd.f32 %v8369, %v8432
  %v8465 = vadd.f32 %v8372, %v8433
  %v8466 = vadd.f32 %v8375, %v8434
  %v8467 = vadd.f32 %v8378, %v8435
  %v8468 = vadd.f32 %v8381, %v8436
  %v8469 = vadd.f32 %v8384, %v8437
  %v8470 = vadd.f32 %v8387, %v8438
  %v8471 = vadd.f32 %v8390, %v8439
  %v8472 = vadd.f32 %v8393, %v8440
  %v8473 = vadd.f32 %v8396, %v8441
  %v8474 = vadd.f32 %v8399, %v8442
  %v8475 = vadd.f32 %v8402, %v8443
  %v8476 = vadd.f32 %v8405, %v8444
  %v8477 = vadd.f32 %v8408, %v8445
  %v8478 = vadd.f32 %v8411, %v8446
  %v8479 = vadd.f32 %v8414, %v8447
  %v8480 = vmax.f32 %v8448, 0.0
  %v8481 = vmax.f32 %v8449, 0.0
  %v8482 = vmax.f32 %v8450, 0.0
  %v8483 = vmax.f32 %v8451, 0.0
  %v8484 = vmax.f32 %v8452, 0.0
  %v8485 = vmax.f32 %v8453, 0.0
  %v8486 = vmax.f32 %v8454, 0.0
  %v8487 = vmax.f32 %v8455, 0.0
  %v8488 = vmax.f32 %v8456, 0.0
  %v8489 = vmax.f32 %v8457, 0.0
  %v8490 = vmax.f32 %v8458, 0.0
  %v8491 = vmax.f32 %v8459, 0.0
  %v8492 = vmax.f32 %v8460, 0.0
  %v8493 = vmax.f32 %v8461, 0.0
  %v8494 = vmax.f32 %v8462, 0.0
  %v8495 = vmax.f32 %v8463, 0.0
  %v8496 = vmax.f32 %v8464, 0.0
  %v8497 = vmax.f32 %v8465, 0.0
  %v8498 = vmax.f32 %v8466, 0.0
  %v8499 = vmax.f32 %v8467, 0.0
  %v8500 = vmax.f32 %v8468, 0.0
  %v8501 = vmax.f32 %v8469, 0.0
  %v8502 = vmax.f32 %v8470, 0.0
  %v8503 = vmax.f32 %v8471, 0.0
  %v8504 = vmax.f32 %v8472, 0.0
  %v8505 = vmax.f32 %v8473, 0.0
  %v8506 = vmax.f32 %v8474, 0.0
  %v8507 = vmax.f32 %v8475, 0.0
  %v8508 = vmax.f32 %v8476, 0.0
  %v8509 = vmax.f32 %v8477, 0.0
  %v8510 = vmax.f32 %v8478, 0.0
  %v8511 = vmax.f32 %v8479, 0.0
  %s8512 = scalar_lea.vmem %s7, 256
  %8513 = vst.msk [vmem:[%s8512] sm:$0xff] %vm26, %v8480
  %8514 = vst.msk [vmem:[%s8512 + $0x8] sm:$0xff] %vm26, %v8481
  %8515 = vst.msk [vmem:[%s8512 + $0x10] sm:$0xff] %vm26, %v8482
  %8516 = vst.msk [vmem:[%s8512 + $0x18] sm:$0xff] %vm26, %v8483
  %8517 = vst.msk [vmem:[%s8512 + $0x20] sm:$0xff] %vm26, %v8484
  %8518 = vst.msk [vmem:[%s8512 + $0x28] sm:$0xff] %vm26, %v8485
  %8519 = vst.msk [vmem:[%s8512 + $0x30] sm:$0xff] %vm26, %v8486
  %8520 = vst.msk [vmem:[%s8512 + $0x38] sm:$0xff] %vm26, %v8487
  %8521 = vst.msk [vmem:[%s8512 + $0x40] sm:$0xff] %vm26, %v8488
  %8522 = vst.msk [vmem:[%s8512 + $0x48] sm:$0xff] %vm26, %v8489
  %8523 = vst.msk [vmem:[%s8512 + $0x50] sm:$0xff] %vm26, %v8490
  %8524 = vst.msk [vmem:[%s8512 + $0x58] sm:$0xff] %vm26, %v8491
  %8525 = vst.msk [vmem:[%s8512 + $0x60] sm:$0xff] %vm26, %v8492
  %8526 = vst.msk [vmem:[%s8512 + $0x68] sm:$0xff] %vm26, %v8493
  %8527 = vst.msk [vmem:[%s8512 + $0x70] sm:$0xff] %vm26, %v8494
  %8528 = vst.msk [vmem:[%s8512 + $0x78] sm:$0xff] %vm26, %v8495
  %8529 = vst.msk [vmem:[%s8512 + $0x80] sm:$0xff] %vm26, %v8496
  %8530 = vst.msk [vmem:[%s8512 + $0x88] sm:$0xff] %vm26, %v8497
  %8531 = vst.msk [vmem:[%s8512 + $0x90] sm:$0xff] %vm26, %v8498
  %8532 = vst.msk [vmem:[%s8512 + $0x98] sm:$0xff] %vm26, %v8499
  %8533 = vst.msk [vmem:[%s8512 + $0xa0] sm:$0xff] %vm26, %v8500
  %8534 = vst.msk [vmem:[%s8512 + $0xa8] sm:$0xff] %vm26, %v8501
  %8535 = vst.msk [vmem:[%s8512 + $0xb0] sm:$0xff] %vm26, %v8502
  %8536 = vst.msk [vmem:[%s8512 + $0xb8] sm:$0xff] %vm26, %v8503
  %8537 = vst.msk [vmem:[%s8512 + $0xc0] sm:$0xff] %vm26, %v8504
  %8538 = vst.msk [vmem:[%s8512 + $0xc8] sm:$0xff] %vm26, %v8505
  %8539 = vst.msk [vmem:[%s8512 + $0xd0] sm:$0xff] %vm26, %v8506
  %8540 = vst.msk [vmem:[%s8512 + $0xd8] sm:$0xff] %vm26, %v8507
  %8541 = vst.msk [vmem:[%s8512 + $0xe0] sm:$0xff] %vm26, %v8508
  %8542 = vst.msk [vmem:[%s8512 + $0xe8] sm:$0xff] %vm26, %v8509
  %8543 = vst.msk [vmem:[%s8512 + $0xf0] sm:$0xff] %vm26, %v8510
  %8544 = vst.msk [vmem:[%s8512 + $0xf8] sm:$0xff] %vm26, %v8511
  // Predicated region
  $region30: #{tpu_custom_call.1} parent=0 // pred_check
    _
  $region31: #{tpu_custom_call.1} parent=0 // pred_check_branch
    %8546 = sbr.rel (0) target = $region33
  $region32: #{tpu_custom_call.1} parent=0 // pred_region
    _
  $region33: #{tpu_custom_call.1} parent=0 // pred_fallthru
    _
  // Predicated region
  $region34: #{tpu_custom_call.1} parent=0 // pred_check
    _
  $region35: #{tpu_custom_call.1} parent=0 // pred_check_branch
    %8548 = sbr.rel (0) target = $region37
  $region36: #{tpu_custom_call.1} parent=0 // pred_region
    _
  $region37: #{tpu_custom_call.1} parent=0 // pred_fallthru
    _

</llo_original>
